<compile_context>
chip_gen: v7x
topology: tpu7x:2x2x1
jax: 0.10.0
libtpu: 0.0.40
codegen_flags: <defaults>
</compile_context>

<pallas_src>
import math

import jax
import jax.numpy as jnp
from jax.experimental import pallas as pl
from jax.experimental.pallas import tpu as pltpu

# ----------------------------- configuration --------------------------------
B = 2              # batch
S = 8              # sequence length
H = 32             # hidden size (config.hidden_size)
NH = 4             # attention heads
DH = H // NH
FF = 64            # FFN intermediate size
VOCAB = 50
M = 5              # args.num_generated_triples
NUM_CLASSES = 6    # class head outputs NUM_CLASSES + 1
NUM_ENC_LAYERS = 1
NUM_DEC_LAYERS = 2  # args.num_decoder_layers
NUM_SPAN_HEADS = 4  # head_start / head_end / tail_start / tail_end
LN_EPS = 1e-12
NEG_INF = -10000.0

assert H % NH == 0
assert 2 * H == FF                     # ca_kv_w shares the (H, 64) weight family with fi_w
assert NUM_SPAN_HEADS * H <= 128       # span W1/W2/b1/b2/w3_flat fit one 128-lane row
assert 3 * H <= 128                    # fused QKV bias fits one 128-lane row

OUT_COLS = NUM_SPAN_HEADS * S + NUM_CLASSES + 1   # packed output lanes (32 + 7)

# --------------------- packed parameter layout (static) ---------------------
VEC_COLS = 128


def _build_vec_layout():
    layout = []

    def add(name, rows, cols):
        layout.append((name, rows, cols))

    add("query_embed", M, H)
    add("emb_ln_g", 1, H); add("emb_ln_b", 1, H)
    for l in range(NUM_ENC_LAYERS):
        add(f"enc{l}_qkv_b", 1, 3 * H); add(f"enc{l}_ao_b", 1, H)
        add(f"enc{l}_aln_g", 1, H); add(f"enc{l}_aln_b", 1, H)
        add(f"enc{l}_fi_b", 1, FF); add(f"enc{l}_fo_b", 1, H)
        add(f"enc{l}_fln_g", 1, H); add(f"enc{l}_fln_b", 1, H)
    add("qln_g", 1, H); add("qln_b", 1, H)
    for l in range(NUM_DEC_LAYERS):
        add(f"dec{l}_sa_qkv_b", 1, 3 * H); add(f"dec{l}_sa_o_b", 1, H)
        add(f"dec{l}_sa_ln_g", 1, H); add(f"dec{l}_sa_ln_b", 1, H)
        add(f"dec{l}_ca_q_b", 1, H); add(f"dec{l}_ca_kv_b", 1, 2 * H)
        add(f"dec{l}_ca_o_b", 1, H); add(f"dec{l}_ca_ln_g", 1, H)
        add(f"dec{l}_ca_ln_b", 1, H)
        add(f"dec{l}_fi_b", 1, FF); add(f"dec{l}_fo_b", 1, H)
        add(f"dec{l}_fln_g", 1, H); add(f"dec{l}_fln_b", 1, H)
    add("cls_b", 1, NUM_CLASSES + 1)
    add("b1", 1, NUM_SPAN_HEADS * H); add("b2", 1, NUM_SPAN_HEADS * H)
    add("w3_flat", 1, NUM_SPAN_HEADS * H)

    index, row = {}, 0
    for name, rows, cols in layout:
        index[name] = (row, rows, cols)
        row += rows
    return tuple(layout), index, row


VEC_LAYOUT, VEC_INDEX, VEC_ROWS = _build_vec_layout()

# bf16 matmul-weight families (stacked along a leading index, static in-kernel)
W3H_NAMES = tuple([f"enc{l}_qkv_w" for l in range(NUM_ENC_LAYERS)]
                  + [f"dec{l}_sa_qkv_w" for l in range(NUM_DEC_LAYERS)])    # (H, 3H)
WHH_NAMES = tuple([f"enc{l}_ao_w" for l in range(NUM_ENC_LAYERS)]
                  + [n for l in range(NUM_DEC_LAYERS)
                     for n in (f"dec{l}_sa_o_w", f"dec{l}_ca_q_w",
                               f"dec{l}_ca_o_w")])                           # (H, H)
WH64_NAMES = tuple([f"enc{l}_fi_w" for l in range(NUM_ENC_LAYERS)]
                   + [n for l in range(NUM_DEC_LAYERS)
                      for n in (f"dec{l}_fi_w", f"dec{l}_ca_kv_w")])         # (H, 64)
W64H_NAMES = tuple([f"enc{l}_fo_w" for l in range(NUM_ENC_LAYERS)]
                   + [f"dec{l}_fo_w" for l in range(NUM_DEC_LAYERS)])        # (FF, H)
WH128_NAMES = ("w1", "w2", "cls_w")                                          # (H, 4H), cls_w lane-padded

W3H_IDX = {n: i for i, n in enumerate(W3H_NAMES)}
WHH_IDX = {n: i for i, n in enumerate(WHH_NAMES)}
WH64_IDX = {n: i for i, n in enumerate(WH64_NAMES)}
W64H_IDX = {n: i for i, n in enumerate(W64H_NAMES)}
WH128_IDX = {n: i for i, n in enumerate(WH128_NAMES)}

# one f32 slab for all attention / span masks (8-aligned row offsets)
def _r8(x):
    return ((x + 7) // 8) * 8

MASK_ENC_ROW = 0
MASK_DSELF_ROW = MASK_ENC_ROW + _r8(B * S)
MASK_CROSS_ROW = MASK_DSELF_ROW + _r8(B * M)
MASK_SPAN_ROW = MASK_CROSS_ROW + _r8(B * M)
MASK_ROWS = MASK_SPAN_ROW + _r8(B * M)
MASK_COLS = max(B * S, B * M, NUM_SPAN_HEADS * S)


# ========================= in-kernel helper functions ========================

def _mm(a, b):
    """MXU matmul: bf16 operands, f32 accumulation (weights already bf16)."""
    return jnp.dot(a.astype(jnp.bfloat16), b.astype(jnp.bfloat16),
                   preferred_element_type=jnp.float32)


def _mm_nt(a, b):
    """a @ b.T via dot_general (no explicit transpose); bf16 in, f32 out."""
    return jax.lax.dot_general(
        a.astype(jnp.bfloat16), b.astype(jnp.bfloat16),
        dimension_numbers=(((1,), (1,)), ((), ())),
        preferred_element_type=jnp.float32)


def _layernorm(x, g, b):
    mu = jnp.mean(x, axis=-1, keepdims=True)
    var = jnp.mean((x - mu) ** 2, axis=-1, keepdims=True)
    return (x - mu) * jax.lax.rsqrt(var + LN_EPS) * g + b


def _softmax_last(s):
    s = s - jnp.max(s, axis=-1, keepdims=True)
    p = jnp.exp(s)
    return p * pl.reciprocal(jnp.sum(p, axis=-1, keepdims=True), approx=True)


def _mha(q, k, v, o_w, o_b, neg):
    """Multi-head attention on batch-folded rows. q (Lq,H), k/v (Lk,H).
    Per-head score matmuls (depth DH), ONE stacked softmax over (NH,Lq,Lk),
    then lane-concat of per-head contexts and ONE depth-H output projection."""
    scale = 1.0 / math.sqrt(DH)
    s = jnp.stack(
        [_mm_nt(q[:, h * DH:(h + 1) * DH], k[:, h * DH:(h + 1) * DH])
         for h in range(NH)], axis=0) * scale                      # (NH, Lq, Lk)
    if neg is not None:
        s = s + neg[None, :, :]                                    # additive key mask
    p = _softmax_last(s)                                           # one softmax chain
    ctx = jnp.concatenate(
        [_mm(p[h], v[:, h * DH:(h + 1) * DH]) for h in range(NH)], axis=-1)  # (Lq, H)
    return _mm(ctx, o_w) + o_b


def _self_attention(x, qkv_w, qkv_b, o_w, o_b, ln_g, ln_b, neg):
    qkv = _mm(x, qkv_w) + qkv_b                   # fused Q|K|V projection (H,3H)
    q, k, v = qkv[:, :H], qkv[:, H:2 * H], qkv[:, 2 * H:]
    att = _mha(q, k, v, o_w, o_b, neg)
    return _layernorm(att + x, ln_g, ln_b)        # dropout = identity (eval)


def _cross_attention(x, enc, q_w, q_b, kv_w, kv_b, o_w, o_b, ln_g, ln_b, neg):
    q = _mm(x, q_w) + q_b
    kv = _mm(enc, kv_w) + kv_b                    # fused K|V projection (H,2H)
    k, v = kv[:, :H], kv[:, H:]
    att = _mha(q, k, v, o_w, o_b, neg)
    return _layernorm(att + x, ln_g, ln_b)


def _ffn(x, i_w, i_b, o_w, o_b, ln_g, ln_b):
    # TODO(synk): HF BERT default is exact erf-GELU; tanh-approx kept for
    # robust Mosaic lowering (encoder is synthetic anyway).
    inter = jax.nn.gelu(_mm(x, i_w) + i_b)
    out = _mm(inter, o_w) + o_b
    return _layernorm(out + x, ln_g, ln_b)


# ================================ fused kernel ===============================

def _spn4re_kernel(emb_ref, masks_ref, vecs_ref, w3h_ref, whh_ref,
                   wh64_ref, w64h_ref, wh128_ref, out_ref):
    vall = vecs_ref[...]                           # (VEC_ROWS, 128) f32, loaded once
    mall = masks_ref[...]                          # (MASK_ROWS, MASK_COLS) f32

    def vec(name):
        row, rows, cols = VEC_INDEX[name]
        return vall[row:row + rows, 0:cols]

    w3h = lambda n: w3h_ref[W3H_IDX[n]]
    whh = lambda n: whh_ref[WHH_IDX[n]]
    wh64 = lambda n: wh64_ref[WH64_IDX[n]]
    w64h = lambda n: w64h_ref[W64H_IDX[n]]
    wh128 = lambda n: wh128_ref[WH128_IDX[n]]

    enc_neg = mall[MASK_ENC_ROW:MASK_ENC_ROW + B * S, 0:B * S]              # (B*S, B*S)
    dec_self_neg = mall[MASK_DSELF_ROW:MASK_DSELF_ROW + B * M, 0:B * M]     # (B*M, B*M)
    cross_neg = mall[MASK_CROSS_ROW:MASK_CROSS_ROW + B * M, 0:B * S]        # (B*M, B*S)
    span_keep = mall[MASK_SPAN_ROW:MASK_SPAN_ROW + B * M,
                     0:NUM_SPAN_HEADS * S]                                  # (B*M, 4*S)

    # ------------------------- encoder (batch folded) ------------------------
    x = _layernorm(emb_ref[...], vec("emb_ln_g"), vec("emb_ln_b"))          # (B*S, H)
    for l in range(NUM_ENC_LAYERS):                                         # static
        x = _self_attention(x, w3h(f"enc{l}_qkv_w"), vec(f"enc{l}_qkv_b"),
                            whh(f"enc{l}_ao_w"), vec(f"enc{l}_ao_b"),
                            vec(f"enc{l}_aln_g"), vec(f"enc{l}_aln_b"), enc_neg)
        x = _ffn(x, wh64(f"enc{l}_fi_w"), vec(f"enc{l}_fi_b"),
                 w64h(f"enc{l}_fo_w"), vec(f"enc{l}_fo_b"),
                 vec(f"enc{l}_fln_g"), vec(f"enc{l}_fln_b"))
    enc = x                                                                  # (B*S, H)
    # TODO(synk): BERT pooler_output is unused on the targets=None path; skipped.

    # ------------------------- decoder (batch folded) ------------------------
    qe = vec("query_embed")                                                  # (M, H)
    hq = _layernorm(jnp.concatenate([qe] * B, axis=0),
                    vec("qln_g"), vec("qln_b"))                              # (B*M, H)
    for l in range(NUM_DEC_LAYERS):                                          # static
        hq = _self_attention(hq, w3h(f"dec{l}_sa_qkv_w"), vec(f"dec{l}_sa_qkv_b"),
                             whh(f"dec{l}_sa_o_w"), vec(f"dec{l}_sa_o_b"),
                             vec(f"dec{l}_sa_ln_g"), vec(f"dec{l}_sa_ln_b"),
                             dec_self_neg)
        hq = _cross_attention(hq, enc,
                              whh(f"dec{l}_ca_q_w"), vec(f"dec{l}_ca_q_b"),
                              wh64(f"dec{l}_ca_kv_w"), vec(f"dec{l}_ca_kv_b"),
                              whh(f"dec{l}_ca_o_w"), vec(f"dec{l}_ca_o_b"),
                              vec(f"dec{l}_ca_ln_g"), vec(f"dec{l}_ca_ln_b"),
                              cross_neg)
        hq = _ffn(hq, wh64(f"dec{l}_fi_w"), vec(f"dec{l}_fi_b"),
                  w64h(f"dec{l}_fo_w"), vec(f"dec{l}_fo_b"),
                  vec(f"dec{l}_fln_g"), vec(f"dec{l}_fln_b"))

    # class head (cls_w is lane-padded inside the (H,4H) family; take C+1 lanes)
    cls = _mm(hq, wh128("cls_w"))[:, :NUM_CLASSES + 1] + vec("cls_b")        # (B*M, C+1)

    # 4 span heads fused: shared (H,4H) W1/W2 matmuls, one tanh over all heads,
    # per-head lane-slice reductions, masked_fill fused, assembled in registers.
    a_all = _mm(hq, wh128("w1")) + vec("b1")                                 # (B*M, 4H)
    e_all = _mm(enc, wh128("w2")) + vec("b2")                                # (B*S, 4H)
    w3_flat = vec("w3_flat")                                                 # (1, 4H)
    span_rows = []
    for b in range(B):                                                       # static
        a_b = a_all[b * M:(b + 1) * M, :]                                    # (M, 4H)
        e_b = e_all[b * S:(b + 1) * S, :]                                    # (S, 4H)
        tw = jnp.tanh(a_b[:, None, :] + e_b[None, :, :]) * w3_flat[None, :, :]  # (M,S,4H)
        heads = [jnp.sum(tw[:, :, h * H:(h + 1) * H], axis=-1)
                 for h in range(NUM_SPAN_HEADS)]                             # 4 x (M, S)
        span_rows.append(jnp.concatenate(heads, axis=-1))                    # (M, 4*S)
    span = jnp.concatenate(span_rows, axis=0)                                # (B*M, 4*S)
    span = jnp.where(span_keep > 0.5, span, NEG_INF)                         # masked_fill

    out_ref[...] = jnp.concatenate([span, cls], axis=-1)                     # ONE store


# ================================ host wrappers ==============================

def _full_spec(shape):
    nd = len(shape)
    return pl.BlockSpec(tuple(shape), lambda i, _nd=nd: (0,) * _nd)


def pack_masks(attention_mask):
    """Build the block-diagonal additive attention masks + span keep mask and
    pack them into a single (MASK_ROWS, MASK_COLS) f32 slab."""
    am = attention_mask.astype(jnp.float32)                          # (B, S)
    key_valid = am.reshape(1, B * S)                                 # (1, B*S)
    bid_s = jnp.repeat(jnp.arange(B), S)                             # (B*S,)
    bid_m = jnp.repeat(jnp.arange(B), M)                             # (B*M,)
    same_ss = (bid_s[:, None] == bid_s[None, :]).astype(jnp.float32)
    same_mm = (bid_m[:, None] == bid_m[None, :]).astype(jnp.float32)
    same_ms = (bid_m[:, None] == bid_s[None, :]).astype(jnp.float32)
    enc_neg = (1.0 - same_ss * key_valid) * NEG_INF                  # (B*S, B*S)
    dec_self_neg = (1.0 - same_mm) * NEG_INF                         # (B*M, B*M)
    cross_neg = (1.0 - same_ms * key_valid) * NEG_INF                # (B*M, B*S)
    span_keep = jnp.repeat(jnp.tile(am, (1, NUM_SPAN_HEADS)), M, axis=0)  # (B*M, 4*S)

    slab = jnp.zeros((MASK_ROWS, MASK_COLS), jnp.float32)
    slab = slab.at[MASK_ENC_ROW:MASK_ENC_ROW + B * S, 0:B * S].set(enc_neg)
    slab = slab.at[MASK_DSELF_ROW:MASK_DSELF_ROW + B * M, 0:B * M].set(dec_self_neg)
    slab = slab.at[MASK_CROSS_ROW:MASK_CROSS_ROW + B * M, 0:B * S].set(cross_neg)
    slab = slab.at[MASK_SPAN_ROW:MASK_SPAN_ROW + B * M,
                   0:NUM_SPAN_HEADS * S].set(span_keep)
    return slab


def pack_params(p):
    """Pack the ~45 raw parameter arrays into 1 f32 vector slab + 5 bf16
    matmul-weight family slabs (plus the XLA-side embedding tables)."""
    vecs = jnp.zeros((VEC_ROWS, VEC_COLS), jnp.float32)
    for name, rows, cols in VEC_LAYOUT:
        src = p["w3"] if name == "w3_flat" else p[name]
        val = jnp.asarray(src, jnp.float32).reshape(rows, cols)
        row = VEC_INDEX[name][0]
        vecs = vecs.at[row:row + rows, 0:cols].set(val)

    def stack_family(names, shape):
        mats = []
        for n in names:
            w = jnp.asarray(p[n], jnp.float32)
            if w.shape != shape:
                buf = jnp.zeros(shape, jnp.float32)
                buf = buf.at[:w.shape[0], :w.shape[1]].set(w)
                w = buf
            mats.append(w)
        return jnp.stack(mats, axis=0).astype(jnp.bfloat16)

    return dict(
        word_emb=p["word_emb"], pos_emb=p["pos_emb"], type_emb=p["type_emb"],
        vecs=vecs,
        w3h=stack_family(W3H_NAMES, (H, 3 * H)),
        whh=stack_family(WHH_NAMES, (H, H)),
        wh64=stack_family(WH64_NAMES, (H, 2 * H)),
        w64h=stack_family(W64H_NAMES, (FF, H)),
        wh128=stack_family(WH128_NAMES, (H, NUM_SPAN_HEADS * H)),
    )


def set_pred4re_forward(packed, input_ids, attention_mask):
    # TODO(synk): embedding gather stays in XLA (no clean tiny-Pallas gather).
    emb = (packed["word_emb"][input_ids]
           + packed["pos_emb"][None, :S, :]
           + packed["type_emb"][0][None, None, :])
    emb = emb.reshape(B * S, H).astype(jnp.float32)
    masks = pack_masks(attention_mask)

    out = pl.pallas_call(
        _spn4re_kernel,
        out_shape=jax.ShapeDtypeStruct((B * M, OUT_COLS), jnp.float32),
        grid=(1,),
        in_specs=[_full_spec(emb.shape),
                  _full_spec(masks.shape),
                  _full_spec(packed["vecs"].shape),
                  _full_spec(packed["w3h"].shape),
                  _full_spec(packed["whh"].shape),
                  _full_spec(packed["wh64"].shape),
                  _full_spec(packed["w64h"].shape),
                  _full_spec(packed["wh128"].shape)],
        out_specs=_full_spec((B * M, OUT_COLS)),
        compiler_params=pltpu.CompilerParams(dimension_semantics=("arbitrary",)),
    )(emb, masks, packed["vecs"], packed["w3h"], packed["whh"],
      packed["wh64"], packed["w64h"], packed["wh128"])

    out = out.reshape(B, M, OUT_COLS)
    span = out[:, :, :NUM_SPAN_HEADS * S]
    cls = out[:, :, NUM_SPAN_HEADS * S:]
    # masked_fill((1 - attention_mask.unsqueeze(1)).bool(), -10000.0) fused in kernel.
    return {"pred_rel_logits": cls,
            "head_start_logits": span[:, :, 0 * S:1 * S],
            "head_end_logits": span[:, :, 1 * S:2 * S],
            "tail_start_logits": span[:, :, 2 * S:3 * S],
            "tail_end_logits": span[:, :, 3 * S:4 * S]}


# ============================== parameter init ===============================

def init_params(key):
    keys = jax.random.split(key, 64)
    it = iter(range(64))

    def nxt(*shape, scale=0.02):
        return scale * jax.random.normal(keys[next(it)], shape, dtype=jnp.float32)

    zeros = lambda *s: jnp.zeros(s, jnp.float32)
    ones = lambda *s: jnp.ones(s, jnp.float32)

    p = dict(
        word_emb=nxt(VOCAB, H), pos_emb=nxt(S, H), type_emb=nxt(2, H),
        emb_ln_g=ones(H), emb_ln_b=zeros(H),
        query_embed=nxt(M, H, scale=1.0),   # nn.Embedding (orthogonal init approximated)
        qln_g=ones(H), qln_b=zeros(H),
        cls_w=nxt(H, NUM_CLASSES + 1), cls_b=zeros(NUM_CLASSES + 1),
        w1=nxt(H, NUM_SPAN_HEADS * H), b1=zeros(NUM_SPAN_HEADS * H),
        w2=nxt(H, NUM_SPAN_HEADS * H), b2=zeros(NUM_SPAN_HEADS * H),
        w3=nxt(NUM_SPAN_HEADS, H),
    )
    for l in range(NUM_ENC_LAYERS):
        p.update({
            f"enc{l}_qkv_w": nxt(H, 3 * H), f"enc{l}_qkv_b": zeros(3 * H),
            f"enc{l}_ao_w": nxt(H, H), f"enc{l}_ao_b": zeros(H),
            f"enc{l}_aln_g": ones(H), f"enc{l}_aln_b": zeros(H),
            f"enc{l}_fi_w": nxt(H, FF), f"enc{l}_fi_b": zeros(FF),
            f"enc{l}_fo_w": nxt(FF, H), f"enc{l}_fo_b": zeros(H),
            f"enc{l}_fln_g": ones(H), f"enc{l}_fln_b": zeros(H),
        })
    for l in range(NUM_DEC_LAYERS):
        p.update({
            f"dec{l}_sa_qkv_w": nxt(H, 3 * H), f"dec{l}_sa_qkv_b": zeros(3 * H),
            f"dec{l}_sa_o_w": nxt(H, H), f"dec{l}_sa_o_b": zeros(H),
            f"dec{l}_sa_ln_g": ones(H), f"dec{l}_sa_ln_b": zeros(H),
            f"dec{l}_ca_q_w": nxt(H, H), f"dec{l}_ca_q_b": zeros(H),
            f"dec{l}_ca_kv_w": nxt(H, 2 * H), f"dec{l}_ca_kv_b": zeros(2 * H),
            f"dec{l}_ca_o_w": nxt(H, H), f"dec{l}_ca_o_b": zeros(H),
            f"dec{l}_ca_ln_g": ones(H), f"dec{l}_ca_ln_b": zeros(H),
            f"dec{l}_fi_w": nxt(H, FF), f"dec{l}_fi_b": zeros(FF),
            f"dec{l}_fo_w": nxt(FF, H), f"dec{l}_fo_b": zeros(H),
            f"dec{l}_fln_g": ones(H), f"dec{l}_fln_b": zeros(H),
        })
    return p


# =================================== main ====================================

if __name__ == "__main__":
    root = jax.random.PRNGKey(0)
    pkey, dkey = jax.random.split(root)
    params = init_params(pkey)
    packed = pack_params(params)

    input_ids = jax.random.randint(dkey, (B, S), 0, VOCAB)
    lengths = jnp.array([S, 5], dtype=jnp.int32)
    attention_mask = (jnp.arange(S)[None, :] < lengths[:, None]).astype(jnp.float32)

    outputs = jax.jit(set_pred4re_forward)(packed, input_ids, attention_mask)
    outputs = jax.block_until_ready(outputs)

    assert outputs["pred_rel_logits"].shape == (B, M, NUM_CLASSES + 1)
    for k in ("head_start_logits", "head_end_logits",
              "tail_start_logits", "tail_end_logits"):
        assert outputs[k].shape == (B, M, S)
        # masked positions must be exactly -10000.0 (masked_fill semantics)
        assert bool(jnp.all(outputs[k][1, :, 5:] == NEG_INF))

    print("KERNEL_OK")
</pallas_src>

<mosaic_0001>
module attributes {stable_mosaic.version = 11 : i64} {
  func.func @_spn4re_kernel(%arg0: i32, %arg1: memref<16x32xf32, #tpu.memory_space<vmem>>, %arg2: memref<64x32xf32, #tpu.memory_space<vmem>>, %arg3: memref<47x128xf32, #tpu.memory_space<vmem>>, %arg4: memref<3x32x96xbf16, #tpu.memory_space<vmem>>, %arg5: memref<7x32x32xbf16, #tpu.memory_space<vmem>>, %arg6: memref<5x32x64xbf16, #tpu.memory_space<vmem>>, %arg7: memref<3x64x32xbf16, #tpu.memory_space<vmem>>, %arg8: memref<3x32x128xbf16, #tpu.memory_space<vmem>>, %arg9: memref<10x39xf32, #tpu.memory_space<vmem>>) attributes {dimension_semantics = [#tpu.dimension_semantics<arbitrary>], iteration_bounds = array<i64: 1>, scalar_prefetch = 0 : i64, scratch_operands = 0 : i64, tpu.core_type = #tpu.core_type<tc>, window_params = [{pipeline_mode = #tpu.pipeline_mode<synchronous>, transform_indices = @transform_0, window_bounds = array<i64: 16, 32>}, {pipeline_mode = #tpu.pipeline_mode<synchronous>, transform_indices = @transform_1, window_bounds = array<i64: 64, 32>}, {pipeline_mode = #tpu.pipeline_mode<synchronous>, transform_indices = @transform_2, window_bounds = array<i64: 47, 128>}, {pipeline_mode = #tpu.pipeline_mode<synchronous>, transform_indices = @transform_3, window_bounds = array<i64: 3, 32, 96>}, {pipeline_mode = #tpu.pipeline_mode<synchronous>, transform_indices = @transform_4, window_bounds = array<i64: 7, 32, 32>}, {pipeline_mode = #tpu.pipeline_mode<synchronous>, transform_indices = @transform_5, window_bounds = array<i64: 5, 32, 64>}, {pipeline_mode = #tpu.pipeline_mode<synchronous>, transform_indices = @transform_6, window_bounds = array<i64: 3, 64, 32>}, {pipeline_mode = #tpu.pipeline_mode<synchronous>, transform_indices = @transform_7, window_bounds = array<i64: 3, 32, 128>}, {pipeline_mode = #tpu.pipeline_mode<synchronous>, transform_indices = @transform_8, window_bounds = array<i64: 10, 39>}]} {
    %c0 = arith.constant 0 : index
    %c0_0 = arith.constant 0 : index
    %0 = vector.load %arg3[%c0, %c0_0] : memref<47x128xf32, #tpu.memory_space<vmem>>, vector<47x128xf32>
    %c0_1 = arith.constant 0 : index
    %c0_2 = arith.constant 0 : index
    %1 = vector.load %arg2[%c0_1, %c0_2] : memref<64x32xf32, #tpu.memory_space<vmem>>, vector<64x32xf32>
    %2 = vector.extract_strided_slice %1 {offsets = [0, 0], sizes = [16, 16], strides = [1, 1]} : vector<64x32xf32> to vector<16x16xf32>
    %3 = vector.extract_strided_slice %1 {offsets = [16, 0], sizes = [10, 10], strides = [1, 1]} : vector<64x32xf32> to vector<10x10xf32>
    %4 = vector.extract_strided_slice %1 {offsets = [32, 0], sizes = [10, 16], strides = [1, 1]} : vector<64x32xf32> to vector<10x16xf32>
    %5 = vector.extract_strided_slice %1 {offsets = [48, 0], sizes = [10, 32], strides = [1, 1]} : vector<64x32xf32> to vector<10x32xf32>
    %c0_3 = arith.constant 0 : index
    %c0_4 = arith.constant 0 : index
    %6 = vector.load %arg1[%c0_3, %c0_4] : memref<16x32xf32, #tpu.memory_space<vmem>>, vector<16x32xf32>
    %7 = vector.extract_strided_slice %0 {offsets = [5, 0], sizes = [1, 32], strides = [1, 1]} : vector<47x128xf32> to vector<1x32xf32>
    %8 = vector.extract_strided_slice %0 {offsets = [6, 0], sizes = [1, 32], strides = [1, 1]} : vector<47x128xf32> to vector<1x32xf32>
    %cst = arith.constant dense<0.000000e+00> : vector<16xf32>
    %9 = vector.multi_reduction <add>, %6, %cst [1] : vector<16x32xf32> to vector<16xf32>
    %10 = vector.shape_cast %9 : vector<16xf32> to vector<16x1xf32>
    %cst_5 = arith.constant 3.200000e+01 : f32
    %11 = vector.broadcast %cst_5 : f32 to vector<16x1xf32>
    %12 = arith.divf %10, %11 : vector<16x1xf32>
    %13 = vector.broadcast %12 : vector<16x1xf32> to vector<16x32xf32>
    %14 = arith.subf %6, %13 : vector<16x32xf32>
    %15 = arith.mulf %14, %14 : vector<16x32xf32>
    %cst_6 = arith.constant dense<0.000000e+00> : vector<16xf32>
    %16 = vector.multi_reduction <add>, %15, %cst_6 [1] : vector<16x32xf32> to vector<16xf32>
    %17 = vector.shape_cast %16 : vector<16xf32> to vector<16x1xf32>
    %cst_7 = arith.constant 3.200000e+01 : f32
    %18 = vector.broadcast %cst_7 : f32 to vector<16x1xf32>
    %19 = arith.divf %17, %18 : vector<16x1xf32>
    %20 = vector.broadcast %12 : vector<16x1xf32> to vector<16x32xf32>
    %21 = arith.subf %6, %20 : vector<16x32xf32>
    %cst_8 = arith.constant 9.99999996E-13 : f32
    %22 = vector.broadcast %cst_8 : f32 to vector<16x1xf32>
    %23 = arith.addf %19, %22 : vector<16x1xf32>
    %24 = math.rsqrt %23 : vector<16x1xf32>
    %25 = vector.broadcast %24 : vector<16x1xf32> to vector<16x32xf32>
    %26 = arith.mulf %21, %25 : vector<16x32xf32>
    %27 = vector.broadcast %7 : vector<1x32xf32> to vector<16x32xf32>
    %28 = arith.mulf %26, %27 : vector<16x32xf32>
    %29 = vector.broadcast %8 : vector<1x32xf32> to vector<16x32xf32>
    %30 = arith.addf %28, %29 : vector<16x32xf32>
    %c0_9 = arith.constant 0 : index
    %c0_10 = arith.constant 0 : index
    %c0_11 = arith.constant 0 : index
    %31 = vector.load %arg4[%c0_9, %c0_10, %c0_11] : memref<3x32x96xbf16, #tpu.memory_space<vmem>>, vector<1x32x96xbf16>
    %32 = vector.shape_cast %31 : vector<1x32x96xbf16> to vector<32x96xbf16>
    %33 = vector.extract_strided_slice %0 {offsets = [7, 0], sizes = [1, 96], strides = [1, 1]} : vector<47x128xf32> to vector<1x96xf32>
    %c0_12 = arith.constant 0 : index
    %c0_13 = arith.constant 0 : index
    %c0_14 = arith.constant 0 : index
    %34 = vector.load %arg5[%c0_12, %c0_13, %c0_14] : memref<7x32x32xbf16, #tpu.memory_space<vmem>>, vector<1x32x32xbf16>
    %35 = vector.shape_cast %34 : vector<1x32x32xbf16> to vector<32x32xbf16>
    %36 = vector.extract_strided_slice %0 {offsets = [8, 0], sizes = [1, 32], strides = [1, 1]} : vector<47x128xf32> to vector<1x32xf32>
    %37 = vector.extract_strided_slice %0 {offsets = [9, 0], sizes = [1, 32], strides = [1, 1]} : vector<47x128xf32> to vector<1x32xf32>
    %38 = vector.extract_strided_slice %0 {offsets = [10, 0], sizes = [1, 32], strides = [1, 1]} : vector<47x128xf32> to vector<1x32xf32>
    %39 = arith.truncf %30 : vector<16x32xf32> to vector<16x32xbf16>
    %cst_15 = arith.constant dense<0.000000e+00> : vector<16x96xf32>
    %40 = tpu.matmul %39, %32, %cst_15 {dimension_numbers = #tpu.dot_dimension_numbers<[1], [0], [0], [1], [0, 0, 1, 1], [], []>} : vector<16x32xbf16>, vector<32x96xbf16>, vector<16x96xf32> -> vector<16x96xf32>
    %41 = vector.broadcast %33 : vector<1x96xf32> to vector<16x96xf32>
    %42 = arith.addf %40, %41 : vector<16x96xf32>
    %43 = vector.extract_strided_slice %42 {offsets = [0, 0], sizes = [16, 32], strides = [1, 1]} : vector<16x96xf32> to vector<16x32xf32>
    %44 = vector.extract_strided_slice %42 {offsets = [0, 32], sizes = [16, 32], strides = [1, 1]} : vector<16x96xf32> to vector<16x32xf32>
    %45 = vector.extract_strided_slice %42 {offsets = [0, 64], sizes = [16, 32], strides = [1, 1]} : vector<16x96xf32> to vector<16x32xf32>
    %46 = vector.extract_strided_slice %43 {offsets = [0, 0], sizes = [16, 8], strides = [1, 1]} : vector<16x32xf32> to vector<16x8xf32>
    %47 = vector.extract_strided_slice %44 {offsets = [0, 0], sizes = [16, 8], strides = [1, 1]} : vector<16x32xf32> to vector<16x8xf32>
    %48 = arith.truncf %46 : vector<16x8xf32> to vector<16x8xbf16>
    %49 = arith.truncf %47 : vector<16x8xf32> to vector<16x8xbf16>
    %cst_16 = arith.constant dense<0.000000e+00> : vector<16x16xf32>
    %50 = tpu.matmul %48, %49, %cst_16 {dimension_numbers = #tpu.dot_dimension_numbers<[1], [1], [0], [0], [0, 0, 1, 0], [], []>} : vector<16x8xbf16>, vector<16x8xbf16>, vector<16x16xf32> -> vector<16x16xf32>
    %51 = vector.extract_strided_slice %43 {offsets = [0, 8], sizes = [16, 8], strides = [1, 1]} : vector<16x32xf32> to vector<16x8xf32>
    %52 = vector.extract_strided_slice %44 {offsets = [0, 8], sizes = [16, 8], strides = [1, 1]} : vector<16x32xf32> to vector<16x8xf32>
    %53 = arith.truncf %51 : vector<16x8xf32> to vector<16x8xbf16>
    %54 = arith.truncf %52 : vector<16x8xf32> to vector<16x8xbf16>
    %cst_17 = arith.constant dense<0.000000e+00> : vector<16x16xf32>
    %55 = tpu.matmul %53, %54, %cst_17 {dimension_numbers = #tpu.dot_dimension_numbers<[1], [1], [0], [0], [0, 0, 1, 0], [], []>} : vector<16x8xbf16>, vector<16x8xbf16>, vector<16x16xf32> -> vector<16x16xf32>
    %56 = vector.extract_strided_slice %43 {offsets = [0, 16], sizes = [16, 8], strides = [1, 1]} : vector<16x32xf32> to vector<16x8xf32>
    %57 = vector.extract_strided_slice %44 {offsets = [0, 16], sizes = [16, 8], strides = [1, 1]} : vector<16x32xf32> to vector<16x8xf32>
    %58 = arith.truncf %56 : vector<16x8xf32> to vector<16x8xbf16>
    %59 = arith.truncf %57 : vector<16x8xf32> to vector<16x8xbf16>
    %cst_18 = arith.constant dense<0.000000e+00> : vector<16x16xf32>
    %60 = tpu.matmul %58, %59, %cst_18 {dimension_numbers = #tpu.dot_dimension_numbers<[1], [1], [0], [0], [0, 0, 1, 0], [], []>} : vector<16x8xbf16>, vector<16x8xbf16>, vector<16x16xf32> -> vector<16x16xf32>
    %61 = vector.extract_strided_slice %43 {offsets = [0, 24], sizes = [16, 8], strides = [1, 1]} : vector<16x32xf32> to vector<16x8xf32>
    %62 = vector.extract_strided_slice %44 {offsets = [0, 24], sizes = [16, 8], strides = [1, 1]} : vector<16x32xf32> to vector<16x8xf32>
    %63 = arith.truncf %61 : vector<16x8xf32> to vector<16x8xbf16>
    %64 = arith.truncf %62 : vector<16x8xf32> to vector<16x8xbf16>
    %cst_19 = arith.constant dense<0.000000e+00> : vector<16x16xf32>
    %65 = tpu.matmul %63, %64, %cst_19 {dimension_numbers = #tpu.dot_dimension_numbers<[1], [1], [0], [0], [0, 0, 1, 0], [], []>} : vector<16x8xbf16>, vector<16x8xbf16>, vector<16x16xf32> -> vector<16x16xf32>
    %66 = vector.shape_cast %50 : vector<16x16xf32> to vector<1x16x16xf32>
    %67 = vector.shape_cast %55 : vector<16x16xf32> to vector<1x16x16xf32>
    %68 = vector.shape_cast %60 : vector<16x16xf32> to vector<1x16x16xf32>
    %69 = vector.shape_cast %65 : vector<16x16xf32> to vector<1x16x16xf32>
    %70 = tpu.concatenate %66, %67, %68, %69 in 0 : vector<1x16x16xf32>, vector<1x16x16xf32>, vector<1x16x16xf32>, vector<1x16x16xf32> -> vector<4x16x16xf32>
    %cst_20 = arith.constant 0.353553385 : f32
    %71 = vector.broadcast %cst_20 : f32 to vector<4x16x16xf32>
    %72 = arith.mulf %70, %71 : vector<4x16x16xf32>
    %73 = vector.shape_cast %2 : vector<16x16xf32> to vector<1x16x16xf32>
    %74 = vector.broadcast %73 : vector<1x16x16xf32> to vector<4x16x16xf32>
    %75 = arith.addf %72, %74 : vector<4x16x16xf32>
    %cst_21 = arith.constant dense<0xFF800000> : vector<4x16xf32>
    %76 = vector.multi_reduction <maximumf>, %75, %cst_21 [2] : vector<4x16x16xf32> to vector<4x16xf32>
    %77 = vector.shape_cast %76 : vector<4x16xf32> to vector<4x16x1xf32>
    %78 = vector.broadcast %77 : vector<4x16x1xf32> to vector<4x16x16xf32>
    %79 = arith.subf %75, %78 : vector<4x16x16xf32>
    %80 = math.exp %79 : vector<4x16x16xf32>
    %cst_22 = arith.constant dense<0.000000e+00> : vector<4x16xf32>
    %81 = vector.multi_reduction <add>, %80, %cst_22 [2] : vector<4x16x16xf32> to vector<4x16xf32>
    %82 = vector.shape_cast %81 : vector<4x16xf32> to vector<4x16x1xf32>
    %83 = tpu.reciprocal %82 {approx = true} : vector<4x16x1xf32> -> vector<4x16x1xf32>
    %84 = vector.broadcast %83 : vector<4x16x1xf32> to vector<4x16x16xf32>
    %85 = arith.mulf %80, %84 : vector<4x16x16xf32>
    %86 = vector.extract_strided_slice %85 {offsets = [0, 0, 0], sizes = [1, 16, 16], strides = [1, 1, 1]} : vector<4x16x16xf32> to vector<1x16x16xf32>
    %87 = vector.shape_cast %86 : vector<1x16x16xf32> to vector<16x16xf32>
    %88 = vector.extract_strided_slice %45 {offsets = [0, 0], sizes = [16, 8], strides = [1, 1]} : vector<16x32xf32> to vector<16x8xf32>
    %89 = arith.truncf %87 : vector<16x16xf32> to vector<16x16xbf16>
    %90 = arith.truncf %88 : vector<16x8xf32> to vector<16x8xbf16>
    %cst_23 = arith.constant dense<0.000000e+00> : vector<16x8xf32>
    %91 = tpu.matmul %89, %90, %cst_23 {dimension_numbers = #tpu.dot_dimension_numbers<[1], [0], [0], [1], [0, 0, 1, 1], [], []>} : vector<16x16xbf16>, vector<16x8xbf16>, vector<16x8xf32> -> vector<16x8xf32>
    %92 = vector.extract_strided_slice %85 {offsets = [1, 0, 0], sizes = [1, 16, 16], strides = [1, 1, 1]} : vector<4x16x16xf32> to vector<1x16x16xf32>
    %93 = vector.shape_cast %92 : vector<1x16x16xf32> to vector<16x16xf32>
    %94 = vector.extract_strided_slice %45 {offsets = [0, 8], sizes = [16, 8], strides = [1, 1]} : vector<16x32xf32> to vector<16x8xf32>
    %95 = arith.truncf %93 : vector<16x16xf32> to vector<16x16xbf16>
    %96 = arith.truncf %94 : vector<16x8xf32> to vector<16x8xbf16>
    %cst_24 = arith.constant dense<0.000000e+00> : vector<16x8xf32>
    %97 = tpu.matmul %95, %96, %cst_24 {dimension_numbers = #tpu.dot_dimension_numbers<[1], [0], [0], [1], [0, 0, 1, 1], [], []>} : vector<16x16xbf16>, vector<16x8xbf16>, vector<16x8xf32> -> vector<16x8xf32>
    %98 = vector.extract_strided_slice %85 {offsets = [2, 0, 0], sizes = [1, 16, 16], strides = [1, 1, 1]} : vector<4x16x16xf32> to vector<1x16x16xf32>
    %99 = vector.shape_cast %98 : vector<1x16x16xf32> to vector<16x16xf32>
    %100 = vector.extract_strided_slice %45 {offsets = [0, 16], sizes = [16, 8], strides = [1, 1]} : vector<16x32xf32> to vector<16x8xf32>
    %101 = arith.truncf %99 : vector<16x16xf32> to vector<16x16xbf16>
    %102 = arith.truncf %100 : vector<16x8xf32> to vector<16x8xbf16>
    %cst_25 = arith.constant dense<0.000000e+00> : vector<16x8xf32>
    %103 = tpu.matmul %101, %102, %cst_25 {dimension_numbers = #tpu.dot_dimension_numbers<[1], [0], [0], [1], [0, 0, 1, 1], [], []>} : vector<16x16xbf16>, vector<16x8xbf16>, vector<16x8xf32> -> vector<16x8xf32>
    %104 = vector.extract_strided_slice %85 {offsets = [3, 0, 0], sizes = [1, 16, 16], strides = [1, 1, 1]} : vector<4x16x16xf32> to vector<1x16x16xf32>
    %105 = vector.shape_cast %104 : vector<1x16x16xf32> to vector<16x16xf32>
    %106 = vector.extract_strided_slice %45 {offsets = [0, 24], sizes = [16, 8], strides = [1, 1]} : vector<16x32xf32> to vector<16x8xf32>
    %107 = arith.truncf %105 : vector<16x16xf32> to vector<16x16xbf16>
    %108 = arith.truncf %106 : vector<16x8xf32> to vector<16x8xbf16>
    %cst_26 = arith.constant dense<0.000000e+00> : vector<16x8xf32>
    %109 = tpu.matmul %107, %108, %cst_26 {dimension_numbers = #tpu.dot_dimension_numbers<[1], [0], [0], [1], [0, 0, 1, 1], [], []>} : vector<16x16xbf16>, vector<16x8xbf16>, vector<16x8xf32> -> vector<16x8xf32>
    %110 = tpu.concatenate %91, %97, %103, %109 in 1 : vector<16x8xf32>, vector<16x8xf32>, vector<16x8xf32>, vector<16x8xf32> -> vector<16x32xf32>
    %111 = arith.truncf %110 : vector<16x32xf32> to vector<16x32xbf16>
    %cst_27 = arith.constant dense<0.000000e+00> : vector<16x32xf32>
    %112 = tpu.matmul %111, %35, %cst_27 {dimension_numbers = #tpu.dot_dimension_numbers<[1], [0], [0], [1], [0, 0, 1, 1], [], []>} : vector<16x32xbf16>, vector<32x32xbf16>, vector<16x32xf32> -> vector<16x32xf32>
    %113 = vector.broadcast %36 : vector<1x32xf32> to vector<16x32xf32>
    %114 = arith.addf %112, %113 : vector<16x32xf32>
    %115 = arith.addf %114, %30 : vector<16x32xf32>
    %cst_28 = arith.constant dense<0.000000e+00> : vector<16xf32>
    %116 = vector.multi_reduction <add>, %115, %cst_28 [1] : vector<16x32xf32> to vector<16xf32>
    %117 = vector.shape_cast %116 : vector<16xf32> to vector<16x1xf32>
    %cst_29 = arith.constant 3.200000e+01 : f32
    %118 = vector.broadcast %cst_29 : f32 to vector<16x1xf32>
    %119 = arith.divf %117, %118 : vector<16x1xf32>
    %120 = vector.broadcast %119 : vector<16x1xf32> to vector<16x32xf32>
    %121 = arith.subf %115, %120 : vector<16x32xf32>
    %122 = arith.mulf %121, %121 : vector<16x32xf32>
    %cst_30 = arith.constant dense<0.000000e+00> : vector<16xf32>
    %123 = vector.multi_reduction <add>, %122, %cst_30 [1] : vector<16x32xf32> to vector<16xf32>
    %124 = vector.shape_cast %123 : vector<16xf32> to vector<16x1xf32>
    %cst_31 = arith.constant 3.200000e+01 : f32
    %125 = vector.broadcast %cst_31 : f32 to vector<16x1xf32>
    %126 = arith.divf %124, %125 : vector<16x1xf32>
    %127 = vector.broadcast %119 : vector<16x1xf32> to vector<16x32xf32>
    %128 = arith.subf %115, %127 : vector<16x32xf32>
    %cst_32 = arith.constant 9.99999996E-13 : f32
    %129 = vector.broadcast %cst_32 : f32 to vector<16x1xf32>
    %130 = arith.addf %126, %129 : vector<16x1xf32>
    %131 = math.rsqrt %130 : vector<16x1xf32>
    %132 = vector.broadcast %131 : vector<16x1xf32> to vector<16x32xf32>
    %133 = arith.mulf %128, %132 : vector<16x32xf32>
    %134 = vector.broadcast %37 : vector<1x32xf32> to vector<16x32xf32>
    %135 = arith.mulf %133, %134 : vector<16x32xf32>
    %136 = vector.broadcast %38 : vector<1x32xf32> to vector<16x32xf32>
    %137 = arith.addf %135, %136 : vector<16x32xf32>
    %c0_33 = arith.constant 0 : index
    %c0_34 = arith.constant 0 : index
    %c0_35 = arith.constant 0 : index
    %138 = vector.load %arg6[%c0_33, %c0_34, %c0_35] : memref<5x32x64xbf16, #tpu.memory_space<vmem>>, vector<1x32x64xbf16>
    %139 = vector.shape_cast %138 : vector<1x32x64xbf16> to vector<32x64xbf16>
    %140 = vector.extract_strided_slice %0 {offsets = [11, 0], sizes = [1, 64], strides = [1, 1]} : vector<47x128xf32> to vector<1x64xf32>
    %c0_36 = arith.constant 0 : index
    %c0_37 = arith.constant 0 : index
    %c0_38 = arith.constant 0 : index
    %141 = vector.load %arg7[%c0_36, %c0_37, %c0_38] : memref<3x64x32xbf16, #tpu.memory_space<vmem>>, vector<1x64x32xbf16>
    %142 = vector.shape_cast %141 : vector<1x64x32xbf16> to vector<64x32xbf16>
    %143 = vector.extract_strided_slice %0 {offsets = [12, 0], sizes = [1, 32], strides = [1, 1]} : vector<47x128xf32> to vector<1x32xf32>
    %144 = vector.extract_strided_slice %0 {offsets = [13, 0], sizes = [1, 32], strides = [1, 1]} : vector<47x128xf32> to vector<1x32xf32>
    %145 = vector.extract_strided_slice %0 {offsets = [14, 0], sizes = [1, 32], strides = [1, 1]} : vector<47x128xf32> to vector<1x32xf32>
    %146 = arith.truncf %137 : vector<16x32xf32> to vector<16x32xbf16>
    %cst_39 = arith.constant dense<0.000000e+00> : vector<16x64xf32>
    %147 = tpu.matmul %146, %139, %cst_39 {dimension_numbers = #tpu.dot_dimension_numbers<[1], [0], [0], [1], [0, 0, 1, 1], [], []>} : vector<16x32xbf16>, vector<32x64xbf16>, vector<16x64xf32> -> vector<16x64xf32>
    %148 = vector.broadcast %140 : vector<1x64xf32> to vector<16x64xf32>
    %149 = arith.addf %147, %148 : vector<16x64xf32>
    %150 = arith.mulf %149, %149 : vector<16x64xf32>
    %151 = arith.mulf %149, %150 : vector<16x64xf32>
    %cst_40 = arith.constant 4.471500e-02 : f32
    %152 = vector.broadcast %cst_40 : f32 to vector<16x64xf32>
    %153 = arith.mulf %152, %151 : vector<16x64xf32>
    %154 = arith.addf %149, %153 : vector<16x64xf32>
    %cst_41 = arith.constant 0.797884583 : f32
    %155 = vector.broadcast %cst_41 : f32 to vector<16x64xf32>
    %156 = arith.mulf %155, %154 : vector<16x64xf32>
    %157 = math.tanh %156 : vector<16x64xf32>
    %cst_42 = arith.constant 1.000000e+00 : f32
    %158 = vector.broadcast %cst_42 : f32 to vector<16x64xf32>
    %159 = arith.addf %158, %157 : vector<16x64xf32>
    %cst_43 = arith.constant 5.000000e-01 : f32
    %160 = vector.broadcast %cst_43 : f32 to vector<16x64xf32>
    %161 = arith.mulf %160, %159 : vector<16x64xf32>
    %162 = arith.mulf %149, %161 : vector<16x64xf32>
    %163 = arith.truncf %162 : vector<16x64xf32> to vector<16x64xbf16>
    %cst_44 = arith.constant dense<0.000000e+00> : vector<16x32xf32>
    %164 = tpu.matmul %163, %142, %cst_44 {dimension_numbers = #tpu.dot_dimension_numbers<[1], [0], [0], [1], [0, 0, 1, 1], [], []>} : vector<16x64xbf16>, vector<64x32xbf16>, vector<16x32xf32> -> vector<16x32xf32>
    %165 = vector.broadcast %143 : vector<1x32xf32> to vector<16x32xf32>
    %166 = arith.addf %164, %165 : vector<16x32xf32>
    %167 = arith.addf %166, %137 : vector<16x32xf32>
    %cst_45 = arith.constant dense<0.000000e+00> : vector<16xf32>
    %168 = vector.multi_reduction <add>, %167, %cst_45 [1] : vector<16x32xf32> to vector<16xf32>
    %169 = vector.shape_cast %168 : vector<16xf32> to vector<16x1xf32>
    %cst_46 = arith.constant 3.200000e+01 : f32
    %170 = vector.broadcast %cst_46 : f32 to vector<16x1xf32>
    %171 = arith.divf %169, %170 : vector<16x1xf32>
    %172 = vector.broadcast %171 : vector<16x1xf32> to vector<16x32xf32>
    %173 = arith.subf %167, %172 : vector<16x32xf32>
    %174 = arith.mulf %173, %173 : vector<16x32xf32>
    %cst_47 = arith.constant dense<0.000000e+00> : vector<16xf32>
    %175 = vector.multi_reduction <add>, %174, %cst_47 [1] : vector<16x32xf32> to vector<16xf32>
    %176 = vector.shape_cast %175 : vector<16xf32> to vector<16x1xf32>
    %cst_48 = arith.constant 3.200000e+01 : f32
    %177 = vector.broadcast %cst_48 : f32 to vector<16x1xf32>
    %178 = arith.divf %176, %177 : vector<16x1xf32>
    %179 = vector.broadcast %171 : vector<16x1xf32> to vector<16x32xf32>
    %180 = arith.subf %167, %179 : vector<16x32xf32>
    %cst_49 = arith.constant 9.99999996E-13 : f32
    %181 = vector.broadcast %cst_49 : f32 to vector<16x1xf32>
    %182 = arith.addf %178, %181 : vector<16x1xf32>
    %183 = math.rsqrt %182 : vector<16x1xf32>
    %184 = vector.broadcast %183 : vector<16x1xf32> to vector<16x32xf32>
    %185 = arith.mulf %180, %184 : vector<16x32xf32>
    %186 = vector.broadcast %144 : vector<1x32xf32> to vector<16x32xf32>
    %187 = arith.mulf %185, %186 : vector<16x32xf32>
    %188 = vector.broadcast %145 : vector<1x32xf32> to vector<16x32xf32>
    %189 = arith.addf %187, %188 : vector<16x32xf32>
    %190 = vector.extract_strided_slice %0 {offsets = [0, 0], sizes = [5, 32], strides = [1, 1]} : vector<47x128xf32> to vector<5x32xf32>
    %191 = tpu.concatenate %190, %190 in 0 : vector<5x32xf32>, vector<5x32xf32> -> vector<10x32xf32>
    %192 = vector.extract_strided_slice %0 {offsets = [15, 0], sizes = [1, 32], strides = [1, 1]} : vector<47x128xf32> to vector<1x32xf32>
    %193 = vector.extract_strided_slice %0 {offsets = [16, 0], sizes = [1, 32], strides = [1, 1]} : vector<47x128xf32> to vector<1x32xf32>
    %cst_50 = arith.constant dense<0.000000e+00> : vector<10xf32>
    %194 = vector.multi_reduction <add>, %191, %cst_50 [1] : vector<10x32xf32> to vector<10xf32>
    %195 = vector.shape_cast %194 : vector<10xf32> to vector<10x1xf32>
    %cst_51 = arith.constant 3.200000e+01 : f32
    %196 = vector.broadcast %cst_51 : f32 to vector<10x1xf32>
    %197 = arith.divf %195, %196 : vector<10x1xf32>
    %198 = vector.broadcast %197 : vector<10x1xf32> to vector<10x32xf32>
    %199 = arith.subf %191, %198 : vector<10x32xf32>
    %200 = arith.mulf %199, %199 : vector<10x32xf32>
    %cst_52 = arith.constant dense<0.000000e+00> : vector<10xf32>
    %201 = vector.multi_reduction <add>, %200, %cst_52 [1] : vector<10x32xf32> to vector<10xf32>
    %202 = vector.shape_cast %201 : vector<10xf32> to vector<10x1xf32>
    %cst_53 = arith.constant 3.200000e+01 : f32
    %203 = vector.broadcast %cst_53 : f32 to vector<10x1xf32>
    %204 = arith.divf %202, %203 : vector<10x1xf32>
    %205 = vector.broadcast %197 : vector<10x1xf32> to vector<10x32xf32>
    %206 = arith.subf %191, %205 : vector<10x32xf32>
    %cst_54 = arith.constant 9.99999996E-13 : f32
    %207 = vector.broadcast %cst_54 : f32 to vector<10x1xf32>
    %208 = arith.addf %204, %207 : vector<10x1xf32>
    %209 = math.rsqrt %208 : vector<10x1xf32>
    %210 = vector.broadcast %209 : vector<10x1xf32> to vector<10x32xf32>
    %211 = arith.mulf %206, %210 : vector<10x32xf32>
    %212 = vector.broadcast %192 : vector<1x32xf32> to vector<10x32xf32>
    %213 = arith.mulf %211, %212 : vector<10x32xf32>
    %214 = vector.broadcast %193 : vector<1x32xf32> to vector<10x32xf32>
    %215 = arith.addf %213, %214 : vector<10x32xf32>
    %c1 = arith.constant 1 : index
    %c0_55 = arith.constant 0 : index
    %c0_56 = arith.constant 0 : index
    %216 = vector.load %arg4[%c1, %c0_55, %c0_56] : memref<3x32x96xbf16, #tpu.memory_space<vmem>>, vector<1x32x96xbf16>
    %217 = vector.shape_cast %216 : vector<1x32x96xbf16> to vector<32x96xbf16>
    %218 = vector.extract_strided_slice %0 {offsets = [17, 0], sizes = [1, 96], strides = [1, 1]} : vector<47x128xf32> to vector<1x96xf32>
    %c1_57 = arith.constant 1 : index
    %c0_58 = arith.constant 0 : index
    %c0_59 = arith.constant 0 : index
    %219 = vector.load %arg5[%c1_57, %c0_58, %c0_59] : memref<7x32x32xbf16, #tpu.memory_space<vmem>>, vector<1x32x32xbf16>
    %220 = vector.shape_cast %219 : vector<1x32x32xbf16> to vector<32x32xbf16>
    %221 = vector.extract_strided_slice %0 {offsets = [18, 0], sizes = [1, 32], strides = [1, 1]} : vector<47x128xf32> to vector<1x32xf32>
    %222 = vector.extract_strided_slice %0 {offsets = [19, 0], sizes = [1, 32], strides = [1, 1]} : vector<47x128xf32> to vector<1x32xf32>
    %223 = vector.extract_strided_slice %0 {offsets = [20, 0], sizes = [1, 32], strides = [1, 1]} : vector<47x128xf32> to vector<1x32xf32>
    %224 = arith.truncf %215 : vector<10x32xf32> to vector<10x32xbf16>
    %cst_60 = arith.constant dense<0.000000e+00> : vector<10x96xf32>
    %225 = tpu.matmul %224, %217, %cst_60 {dimension_numbers = #tpu.dot_dimension_numbers<[1], [0], [0], [1], [0, 0, 1, 1], [], []>} : vector<10x32xbf16>, vector<32x96xbf16>, vector<10x96xf32> -> vector<10x96xf32>
    %226 = vector.broadcast %218 : vector<1x96xf32> to vector<10x96xf32>
    %227 = arith.addf %225, %226 : vector<10x96xf32>
    %228 = vector.extract_strided_slice %227 {offsets = [0, 0], sizes = [10, 32], strides = [1, 1]} : vector<10x96xf32> to vector<10x32xf32>
    %229 = vector.extract_strided_slice %227 {offsets = [0, 32], sizes = [10, 32], strides = [1, 1]} : vector<10x96xf32> to vector<10x32xf32>
    %230 = vector.extract_strided_slice %227 {offsets = [0, 64], sizes = [10, 32], strides = [1, 1]} : vector<10x96xf32> to vector<10x32xf32>
    %231 = vector.extract_strided_slice %228 {offsets = [0, 0], sizes = [10, 8], strides = [1, 1]} : vector<10x32xf32> to vector<10x8xf32>
    %232 = vector.extract_strided_slice %229 {offsets = [0, 0], sizes = [10, 8], strides = [1, 1]} : vector<10x32xf32> to vector<10x8xf32>
    %233 = arith.truncf %231 : vector<10x8xf32> to vector<10x8xbf16>
    %234 = arith.truncf %232 : vector<10x8xf32> to vector<10x8xbf16>
    %cst_61 = arith.constant dense<0.000000e+00> : vector<10x10xf32>
    %235 = tpu.matmul %233, %234, %cst_61 {dimension_numbers = #tpu.dot_dimension_numbers<[1], [1], [0], [0], [0, 0, 1, 0], [], []>} : vector<10x8xbf16>, vector<10x8xbf16>, vector<10x10xf32> -> vector<10x10xf32>
    %236 = vector.extract_strided_slice %228 {offsets = [0, 8], sizes = [10, 8], strides = [1, 1]} : vector<10x32xf32> to vector<10x8xf32>
    %237 = vector.extract_strided_slice %229 {offsets = [0, 8], sizes = [10, 8], strides = [1, 1]} : vector<10x32xf32> to vector<10x8xf32>
    %238 = arith.truncf %236 : vector<10x8xf32> to vector<10x8xbf16>
    %239 = arith.truncf %237 : vector<10x8xf32> to vector<10x8xbf16>
    %cst_62 = arith.constant dense<0.000000e+00> : vector<10x10xf32>
    %240 = tpu.matmul %238, %239, %cst_62 {dimension_numbers = #tpu.dot_dimension_numbers<[1], [1], [0], [0], [0, 0, 1, 0], [], []>} : vector<10x8xbf16>, vector<10x8xbf16>, vector<10x10xf32> -> vector<10x10xf32>
    %241 = vector.extract_strided_slice %228 {offsets = [0, 16], sizes = [10, 8], strides = [1, 1]} : vector<10x32xf32> to vector<10x8xf32>
    %242 = vector.extract_strided_slice %229 {offsets = [0, 16], sizes = [10, 8], strides = [1, 1]} : vector<10x32xf32> to vector<10x8xf32>
    %243 = arith.truncf %241 : vector<10x8xf32> to vector<10x8xbf16>
    %244 = arith.truncf %242 : vector<10x8xf32> to vector<10x8xbf16>
    %cst_63 = arith.constant dense<0.000000e+00> : vector<10x10xf32>
    %245 = tpu.matmul %243, %244, %cst_63 {dimension_numbers = #tpu.dot_dimension_numbers<[1], [1], [0], [0], [0, 0, 1, 0], [], []>} : vector<10x8xbf16>, vector<10x8xbf16>, vector<10x10xf32> -> vector<10x10xf32>
    %246 = vector.extract_strided_slice %228 {offsets = [0, 24], sizes = [10, 8], strides = [1, 1]} : vector<10x32xf32> to vector<10x8xf32>
    %247 = vector.extract_strided_slice %229 {offsets = [0, 24], sizes = [10, 8], strides = [1, 1]} : vector<10x32xf32> to vector<10x8xf32>
    %248 = arith.truncf %246 : vector<10x8xf32> to vector<10x8xbf16>
    %249 = arith.truncf %247 : vector<10x8xf32> to vector<10x8xbf16>
    %cst_64 = arith.constant dense<0.000000e+00> : vector<10x10xf32>
    %250 = tpu.matmul %248, %249, %cst_64 {dimension_numbers = #tpu.dot_dimension_numbers<[1], [1], [0], [0], [0, 0, 1, 0], [], []>} : vector<10x8xbf16>, vector<10x8xbf16>, vector<10x10xf32> -> vector<10x10xf32>
    %251 = vector.shape_cast %235 : vector<10x10xf32> to vector<1x10x10xf32>
    %252 = vector.shape_cast %240 : vector<10x10xf32> to vector<1x10x10xf32>
    %253 = vector.shape_cast %245 : vector<10x10xf32> to vector<1x10x10xf32>
    %254 = vector.shape_cast %250 : vector<10x10xf32> to vector<1x10x10xf32>
    %255 = tpu.concatenate %251, %252, %253, %254 in 0 : vector<1x10x10xf32>, vector<1x10x10xf32>, vector<1x10x10xf32>, vector<1x10x10xf32> -> vector<4x10x10xf32>
    %cst_65 = arith.constant 0.353553385 : f32
    %256 = vector.broadcast %cst_65 : f32 to vector<4x10x10xf32>
    %257 = arith.mulf %255, %256 : vector<4x10x10xf32>
    %258 = vector.shape_cast %3 : vector<10x10xf32> to vector<1x10x10xf32>
    %259 = vector.broadcast %258 : vector<1x10x10xf32> to vector<4x10x10xf32>
    %260 = arith.addf %257, %259 : vector<4x10x10xf32>
    %cst_66 = arith.constant dense<0xFF800000> : vector<4x10xf32>
    %261 = vector.multi_reduction <maximumf>, %260, %cst_66 [2] : vector<4x10x10xf32> to vector<4x10xf32>
    %262 = vector.shape_cast %261 : vector<4x10xf32> to vector<4x10x1xf32>
    %263 = vector.broadcast %262 : vector<4x10x1xf32> to vector<4x10x10xf32>
    %264 = arith.subf %260, %263 : vector<4x10x10xf32>
    %265 = math.exp %264 : vector<4x10x10xf32>
    %cst_67 = arith.constant dense<0.000000e+00> : vector<4x10xf32>
    %266 = vector.multi_reduction <add>, %265, %cst_67 [2] : vector<4x10x10xf32> to vector<4x10xf32>
    %267 = vector.shape_cast %266 : vector<4x10xf32> to vector<4x10x1xf32>
    %268 = tpu.reciprocal %267 {approx = true} : vector<4x10x1xf32> -> vector<4x10x1xf32>
    %269 = vector.broadcast %268 : vector<4x10x1xf32> to vector<4x10x10xf32>
    %270 = arith.mulf %265, %269 : vector<4x10x10xf32>
    %271 = vector.extract_strided_slice %270 {offsets = [0, 0, 0], sizes = [1, 10, 10], strides = [1, 1, 1]} : vector<4x10x10xf32> to vector<1x10x10xf32>
    %272 = vector.shape_cast %271 : vector<1x10x10xf32> to vector<10x10xf32>
    %273 = vector.extract_strided_slice %230 {offsets = [0, 0], sizes = [10, 8], strides = [1, 1]} : vector<10x32xf32> to vector<10x8xf32>
    %274 = arith.truncf %272 : vector<10x10xf32> to vector<10x10xbf16>
    %275 = arith.truncf %273 : vector<10x8xf32> to vector<10x8xbf16>
    %cst_68 = arith.constant dense<0.000000e+00> : vector<10x8xf32>
    %276 = tpu.matmul %274, %275, %cst_68 {dimension_numbers = #tpu.dot_dimension_numbers<[1], [0], [0], [1], [0, 0, 1, 1], [], []>} : vector<10x10xbf16>, vector<10x8xbf16>, vector<10x8xf32> -> vector<10x8xf32>
    %277 = vector.extract_strided_slice %270 {offsets = [1, 0, 0], sizes = [1, 10, 10], strides = [1, 1, 1]} : vector<4x10x10xf32> to vector<1x10x10xf32>
    %278 = vector.shape_cast %277 : vector<1x10x10xf32> to vector<10x10xf32>
    %279 = vector.extract_strided_slice %230 {offsets = [0, 8], sizes = [10, 8], strides = [1, 1]} : vector<10x32xf32> to vector<10x8xf32>
    %280 = arith.truncf %278 : vector<10x10xf32> to vector<10x10xbf16>
    %281 = arith.truncf %279 : vector<10x8xf32> to vector<10x8xbf16>
    %cst_69 = arith.constant dense<0.000000e+00> : vector<10x8xf32>
    %282 = tpu.matmul %280, %281, %cst_69 {dimension_numbers = #tpu.dot_dimension_numbers<[1], [0], [0], [1], [0, 0, 1, 1], [], []>} : vector<10x10xbf16>, vector<10x8xbf16>, vector<10x8xf32> -> vector<10x8xf32>
    %283 = vector.extract_strided_slice %270 {offsets = [2, 0, 0], sizes = [1, 10, 10], strides = [1, 1, 1]} : vector<4x10x10xf32> to vector<1x10x10xf32>
    %284 = vector.shape_cast %283 : vector<1x10x10xf32> to vector<10x10xf32>
    %285 = vector.extract_strided_slice %230 {offsets = [0, 16], sizes = [10, 8], strides = [1, 1]} : vector<10x32xf32> to vector<10x8xf32>
    %286 = arith.truncf %284 : vector<10x10xf32> to vector<10x10xbf16>
    %287 = arith.truncf %285 : vector<10x8xf32> to vector<10x8xbf16>
    %cst_70 = arith.constant dense<0.000000e+00> : vector<10x8xf32>
    %288 = tpu.matmul %286, %287, %cst_70 {dimension_numbers = #tpu.dot_dimension_numbers<[1], [0], [0], [1], [0, 0, 1, 1], [], []>} : vector<10x10xbf16>, vector<10x8xbf16>, vector<10x8xf32> -> vector<10x8xf32>
    %289 = vector.extract_strided_slice %270 {offsets = [3, 0, 0], sizes = [1, 10, 10], strides = [1, 1, 1]} : vector<4x10x10xf32> to vector<1x10x10xf32>
    %290 = vector.shape_cast %289 : vector<1x10x10xf32> to vector<10x10xf32>
    %291 = vector.extract_strided_slice %230 {offsets = [0, 24], sizes = [10, 8], strides = [1, 1]} : vector<10x32xf32> to vector<10x8xf32>
    %292 = arith.truncf %290 : vector<10x10xf32> to vector<10x10xbf16>
    %293 = arith.truncf %291 : vector<10x8xf32> to vector<10x8xbf16>
    %cst_71 = arith.constant dense<0.000000e+00> : vector<10x8xf32>
    %294 = tpu.matmul %292, %293, %cst_71 {dimension_numbers = #tpu.dot_dimension_numbers<[1], [0], [0], [1], [0, 0, 1, 1], [], []>} : vector<10x10xbf16>, vector<10x8xbf16>, vector<10x8xf32> -> vector<10x8xf32>
    %295 = tpu.concatenate %276, %282, %288, %294 in 1 : vector<10x8xf32>, vector<10x8xf32>, vector<10x8xf32>, vector<10x8xf32> -> vector<10x32xf32>
    %296 = arith.truncf %295 : vector<10x32xf32> to vector<10x32xbf16>
    %cst_72 = arith.constant dense<0.000000e+00> : vector<10x32xf32>
    %297 = tpu.matmul %296, %220, %cst_72 {dimension_numbers = #tpu.dot_dimension_numbers<[1], [0], [0], [1], [0, 0, 1, 1], [], []>} : vector<10x32xbf16>, vector<32x32xbf16>, vector<10x32xf32> -> vector<10x32xf32>
    %298 = vector.broadcast %221 : vector<1x32xf32> to vector<10x32xf32>
    %299 = arith.addf %297, %298 : vector<10x32xf32>
    %300 = arith.addf %299, %215 : vector<10x32xf32>
    %cst_73 = arith.constant dense<0.000000e+00> : vector<10xf32>
    %301 = vector.multi_reduction <add>, %300, %cst_73 [1] : vector<10x32xf32> to vector<10xf32>
    %302 = vector.shape_cast %301 : vector<10xf32> to vector<10x1xf32>
    %cst_74 = arith.constant 3.200000e+01 : f32
    %303 = vector.broadcast %cst_74 : f32 to vector<10x1xf32>
    %304 = arith.divf %302, %303 : vector<10x1xf32>
    %305 = vector.broadcast %304 : vector<10x1xf32> to vector<10x32xf32>
    %306 = arith.subf %300, %305 : vector<10x32xf32>
    %307 = arith.mulf %306, %306 : vector<10x32xf32>
    %cst_75 = arith.constant dense<0.000000e+00> : vector<10xf32>
    %308 = vector.multi_reduction <add>, %307, %cst_75 [1] : vector<10x32xf32> to vector<10xf32>
    %309 = vector.shape_cast %308 : vector<10xf32> to vector<10x1xf32>
    %cst_76 = arith.constant 3.200000e+01 : f32
    %310 = vector.broadcast %cst_76 : f32 to vector<10x1xf32>
    %311 = arith.divf %309, %310 : vector<10x1xf32>
    %312 = vector.broadcast %304 : vector<10x1xf32> to vector<10x32xf32>
    %313 = arith.subf %300, %312 : vector<10x32xf32>
    %cst_77 = arith.constant 9.99999996E-13 : f32
    %314 = vector.broadcast %cst_77 : f32 to vector<10x1xf32>
    %315 = arith.addf %311, %314 : vector<10x1xf32>
    %316 = math.rsqrt %315 : vector<10x1xf32>
    %317 = vector.broadcast %316 : vector<10x1xf32> to vector<10x32xf32>
    %318 = arith.mulf %313, %317 : vector<10x32xf32>
    %319 = vector.broadcast %222 : vector<1x32xf32> to vector<10x32xf32>
    %320 = arith.mulf %318, %319 : vector<10x32xf32>
    %321 = vector.broadcast %223 : vector<1x32xf32> to vector<10x32xf32>
    %322 = arith.addf %320, %321 : vector<10x32xf32>
    %c2 = arith.constant 2 : index
    %c0_78 = arith.constant 0 : index
    %c0_79 = arith.constant 0 : index
    %323 = vector.load %arg5[%c2, %c0_78, %c0_79] : memref<7x32x32xbf16, #tpu.memory_space<vmem>>, vector<1x32x32xbf16>
    %324 = vector.shape_cast %323 : vector<1x32x32xbf16> to vector<32x32xbf16>
    %325 = vector.extract_strided_slice %0 {offsets = [21, 0], sizes = [1, 32], strides = [1, 1]} : vector<47x128xf32> to vector<1x32xf32>
    %c2_80 = arith.constant 2 : index
    %c0_81 = arith.constant 0 : index
    %c0_82 = arith.constant 0 : index
    %326 = vector.load %arg6[%c2_80, %c0_81, %c0_82] : memref<5x32x64xbf16, #tpu.memory_space<vmem>>, vector<1x32x64xbf16>
    %327 = vector.shape_cast %326 : vector<1x32x64xbf16> to vector<32x64xbf16>
    %328 = vector.extract_strided_slice %0 {offsets = [22, 0], sizes = [1, 64], strides = [1, 1]} : vector<47x128xf32> to vector<1x64xf32>
    %c3 = arith.constant 3 : index
    %c0_83 = arith.constant 0 : index
    %c0_84 = arith.constant 0 : index
    %329 = vector.load %arg5[%c3, %c0_83, %c0_84] : memref<7x32x32xbf16, #tpu.memory_space<vmem>>, vector<1x32x32xbf16>
    %330 = vector.shape_cast %329 : vector<1x32x32xbf16> to vector<32x32xbf16>
    %331 = vector.extract_strided_slice %0 {offsets = [23, 0], sizes = [1, 32], strides = [1, 1]} : vector<47x128xf32> to vector<1x32xf32>
    %332 = vector.extract_strided_slice %0 {offsets = [24, 0], sizes = [1, 32], strides = [1, 1]} : vector<47x128xf32> to vector<1x32xf32>
    %333 = vector.extract_strided_slice %0 {offsets = [25, 0], sizes = [1, 32], strides = [1, 1]} : vector<47x128xf32> to vector<1x32xf32>
    %334 = arith.truncf %322 : vector<10x32xf32> to vector<10x32xbf16>
    %cst_85 = arith.constant dense<0.000000e+00> : vector<10x32xf32>
    %335 = tpu.matmul %334, %324, %cst_85 {dimension_numbers = #tpu.dot_dimension_numbers<[1], [0], [0], [1], [0, 0, 1, 1], [], []>} : vector<10x32xbf16>, vector<32x32xbf16>, vector<10x32xf32> -> vector<10x32xf32>
    %336 = vector.broadcast %325 : vector<1x32xf32> to vector<10x32xf32>
    %337 = arith.addf %335, %336 : vector<10x32xf32>
    %338 = arith.truncf %189 : vector<16x32xf32> to vector<16x32xbf16>
    %cst_86 = arith.constant dense<0.000000e+00> : vector<16x64xf32>
    %339 = tpu.matmul %338, %327, %cst_86 {dimension_numbers = #tpu.dot_dimension_numbers<[1], [0], [0], [1], [0, 0, 1, 1], [], []>} : vector<16x32xbf16>, vector<32x64xbf16>, vector<16x64xf32> -> vector<16x64xf32>
    %340 = vector.broadcast %328 : vector<1x64xf32> to vector<16x64xf32>
    %341 = arith.addf %339, %340 : vector<16x64xf32>
    %342 = vector.extract_strided_slice %341 {offsets = [0, 0], sizes = [16, 32], strides = [1, 1]} : vector<16x64xf32> to vector<16x32xf32>
    %343 = vector.extract_strided_slice %341 {offsets = [0, 32], sizes = [16, 32], strides = [1, 1]} : vector<16x64xf32> to vector<16x32xf32>
    %344 = vector.extract_strided_slice %337 {offsets = [0, 0], sizes = [10, 8], strides = [1, 1]} : vector<10x32xf32> to vector<10x8xf32>
    %345 = vector.extract_strided_slice %342 {offsets = [0, 0], sizes = [16, 8], strides = [1, 1]} : vector<16x32xf32> to vector<16x8xf32>
    %346 = arith.truncf %344 : vector<10x8xf32> to vector<10x8xbf16>
    %347 = arith.truncf %345 : vector<16x8xf32> to vector<16x8xbf16>
    %cst_87 = arith.constant dense<0.000000e+00> : vector<10x16xf32>
    %348 = tpu.matmul %346, %347, %cst_87 {dimension_numbers = #tpu.dot_dimension_numbers<[1], [1], [0], [0], [0, 0, 1, 0], [], []>} : vector<10x8xbf16>, vector<16x8xbf16>, vector<10x16xf32> -> vector<10x16xf32>
    %349 = vector.extract_strided_slice %337 {offsets = [0, 8], sizes = [10, 8], strides = [1, 1]} : vector<10x32xf32> to vector<10x8xf32>
    %350 = vector.extract_strided_slice %342 {offsets = [0, 8], sizes = [16, 8], strides = [1, 1]} : vector<16x32xf32> to vector<16x8xf32>
    %351 = arith.truncf %349 : vector<10x8xf32> to vector<10x8xbf16>
    %352 = arith.truncf %350 : vector<16x8xf32> to vector<16x8xbf16>
    %cst_88 = arith.constant dense<0.000000e+00> : vector<10x16xf32>
    %353 = tpu.matmul %351, %352, %cst_88 {dimension_numbers = #tpu.dot_dimension_numbers<[1], [1], [0], [0], [0, 0, 1, 0], [], []>} : vector<10x8xbf16>, vector<16x8xbf16>, vector<10x16xf32> -> vector<10x16xf32>
    %354 = vector.extract_strided_slice %337 {offsets = [0, 16], sizes = [10, 8], strides = [1, 1]} : vector<10x32xf32> to vector<10x8xf32>
    %355 = vector.extract_strided_slice %342 {offsets = [0, 16], sizes = [16, 8], strides = [1, 1]} : vector<16x32xf32> to vector<16x8xf32>
    %356 = arith.truncf %354 : vector<10x8xf32> to vector<10x8xbf16>
    %357 = arith.truncf %355 : vector<16x8xf32> to vector<16x8xbf16>
    %cst_89 = arith.constant dense<0.000000e+00> : vector<10x16xf32>
    %358 = tpu.matmul %356, %357, %cst_89 {dimension_numbers = #tpu.dot_dimension_numbers<[1], [1], [0], [0], [0, 0, 1, 0], [], []>} : vector<10x8xbf16>, vector<16x8xbf16>, vector<10x16xf32> -> vector<10x16xf32>
    %359 = vector.extract_strided_slice %337 {offsets = [0, 24], sizes = [10, 8], strides = [1, 1]} : vector<10x32xf32> to vector<10x8xf32>
    %360 = vector.extract_strided_slice %342 {offsets = [0, 24], sizes = [16, 8], strides = [1, 1]} : vector<16x32xf32> to vector<16x8xf32>
    %361 = arith.truncf %359 : vector<10x8xf32> to vector<10x8xbf16>
    %362 = arith.truncf %360 : vector<16x8xf32> to vector<16x8xbf16>
    %cst_90 = arith.constant dense<0.000000e+00> : vector<10x16xf32>
    %363 = tpu.matmul %361, %362, %cst_90 {dimension_numbers = #tpu.dot_dimension_numbers<[1], [1], [0], [0], [0, 0, 1, 0], [], []>} : vector<10x8xbf16>, vector<16x8xbf16>, vector<10x16xf32> -> vector<10x16xf32>
    %364 = vector.shape_cast %348 : vector<10x16xf32> to vector<1x10x16xf32>
    %365 = vector.shape_cast %353 : vector<10x16xf32> to vector<1x10x16xf32>
    %366 = vector.shape_cast %358 : vector<10x16xf32> to vector<1x10x16xf32>
    %367 = vector.shape_cast %363 : vector<10x16xf32> to vector<1x10x16xf32>
    %368 = tpu.concatenate %364, %365, %366, %367 in 0 : vector<1x10x16xf32>, vector<1x10x16xf32>, vector<1x10x16xf32>, vector<1x10x16xf32> -> vector<4x10x16xf32>
    %cst_91 = arith.constant 0.353553385 : f32
    %369 = vector.broadcast %cst_91 : f32 to vector<4x10x16xf32>
    %370 = arith.mulf %368, %369 : vector<4x10x16xf32>
    %371 = vector.shape_cast %4 : vector<10x16xf32> to vector<1x10x16xf32>
    %372 = vector.broadcast %371 : vector<1x10x16xf32> to vector<4x10x16xf32>
    %373 = arith.addf %370, %372 : vector<4x10x16xf32>
    %cst_92 = arith.constant dense<0xFF800000> : vector<4x10xf32>
    %374 = vector.multi_reduction <maximumf>, %373, %cst_92 [2] : vector<4x10x16xf32> to vector<4x10xf32>
    %375 = vector.shape_cast %374 : vector<4x10xf32> to vector<4x10x1xf32>
    %376 = vector.broadcast %375 : vector<4x10x1xf32> to vector<4x10x16xf32>
    %377 = arith.subf %373, %376 : vector<4x10x16xf32>
    %378 = math.exp %377 : vector<4x10x16xf32>
    %cst_93 = arith.constant dense<0.000000e+00> : vector<4x10xf32>
    %379 = vector.multi_reduction <add>, %378, %cst_93 [2] : vector<4x10x16xf32> to vector<4x10xf32>
    %380 = vector.shape_cast %379 : vector<4x10xf32> to vector<4x10x1xf32>
    %381 = tpu.reciprocal %380 {approx = true} : vector<4x10x1xf32> -> vector<4x10x1xf32>
    %382 = vector.broadcast %381 : vector<4x10x1xf32> to vector<4x10x16xf32>
    %383 = arith.mulf %378, %382 : vector<4x10x16xf32>
    %384 = vector.extract_strided_slice %383 {offsets = [0, 0, 0], sizes = [1, 10, 16], strides = [1, 1, 1]} : vector<4x10x16xf32> to vector<1x10x16xf32>
    %385 = vector.shape_cast %384 : vector<1x10x16xf32> to vector<10x16xf32>
    %386 = vector.extract_strided_slice %343 {offsets = [0, 0], sizes = [16, 8], strides = [1, 1]} : vector<16x32xf32> to vector<16x8xf32>
    %387 = arith.truncf %385 : vector<10x16xf32> to vector<10x16xbf16>
    %388 = arith.truncf %386 : vector<16x8xf32> to vector<16x8xbf16>
    %cst_94 = arith.constant dense<0.000000e+00> : vector<10x8xf32>
    %389 = tpu.matmul %387, %388, %cst_94 {dimension_numbers = #tpu.dot_dimension_numbers<[1], [0], [0], [1], [0, 0, 1, 1], [], []>} : vector<10x16xbf16>, vector<16x8xbf16>, vector<10x8xf32> -> vector<10x8xf32>
    %390 = vector.extract_strided_slice %383 {offsets = [1, 0, 0], sizes = [1, 10, 16], strides = [1, 1, 1]} : vector<4x10x16xf32> to vector<1x10x16xf32>
    %391 = vector.shape_cast %390 : vector<1x10x16xf32> to vector<10x16xf32>
    %392 = vector.extract_strided_slice %343 {offsets = [0, 8], sizes = [16, 8], strides = [1, 1]} : vector<16x32xf32> to vector<16x8xf32>
    %393 = arith.truncf %391 : vector<10x16xf32> to vector<10x16xbf16>
    %394 = arith.truncf %392 : vector<16x8xf32> to vector<16x8xbf16>
    %cst_95 = arith.constant dense<0.000000e+00> : vector<10x8xf32>
    %395 = tpu.matmul %393, %394, %cst_95 {dimension_numbers = #tpu.dot_dimension_numbers<[1], [0], [0], [1], [0, 0, 1, 1], [], []>} : vector<10x16xbf16>, vector<16x8xbf16>, vector<10x8xf32> -> vector<10x8xf32>
    %396 = vector.extract_strided_slice %383 {offsets = [2, 0, 0], sizes = [1, 10, 16], strides = [1, 1, 1]} : vector<4x10x16xf32> to vector<1x10x16xf32>
    %397 = vector.shape_cast %396 : vector<1x10x16xf32> to vector<10x16xf32>
    %398 = vector.extract_strided_slice %343 {offsets = [0, 16], sizes = [16, 8], strides = [1, 1]} : vector<16x32xf32> to vector<16x8xf32>
    %399 = arith.truncf %397 : vector<10x16xf32> to vector<10x16xbf16>
    %400 = arith.truncf %398 : vector<16x8xf32> to vector<16x8xbf16>
    %cst_96 = arith.constant dense<0.000000e+00> : vector<10x8xf32>
    %401 = tpu.matmul %399, %400, %cst_96 {dimension_numbers = #tpu.dot_dimension_numbers<[1], [0], [0], [1], [0, 0, 1, 1], [], []>} : vector<10x16xbf16>, vector<16x8xbf16>, vector<10x8xf32> -> vector<10x8xf32>
    %402 = vector.extract_strided_slice %383 {offsets = [3, 0, 0], sizes = [1, 10, 16], strides = [1, 1, 1]} : vector<4x10x16xf32> to vector<1x10x16xf32>
    %403 = vector.shape_cast %402 : vector<1x10x16xf32> to vector<10x16xf32>
    %404 = vector.extract_strided_slice %343 {offsets = [0, 24], sizes = [16, 8], strides = [1, 1]} : vector<16x32xf32> to vector<16x8xf32>
    %405 = arith.truncf %403 : vector<10x16xf32> to vector<10x16xbf16>
    %406 = arith.truncf %404 : vector<16x8xf32> to vector<16x8xbf16>
    %cst_97 = arith.constant dense<0.000000e+00> : vector<10x8xf32>
    %407 = tpu.matmul %405, %406, %cst_97 {dimension_numbers = #tpu.dot_dimension_numbers<[1], [0], [0], [1], [0, 0, 1, 1], [], []>} : vector<10x16xbf16>, vector<16x8xbf16>, vector<10x8xf32> -> vector<10x8xf32>
    %408 = tpu.concatenate %389, %395, %401, %407 in 1 : vector<10x8xf32>, vector<10x8xf32>, vector<10x8xf32>, vector<10x8xf32> -> vector<10x32xf32>
    %409 = arith.truncf %408 : vector<10x32xf32> to vector<10x32xbf16>
    %cst_98 = arith.constant dense<0.000000e+00> : vector<10x32xf32>
    %410 = tpu.matmul %409, %330, %cst_98 {dimension_numbers = #tpu.dot_dimension_numbers<[1], [0], [0], [1], [0, 0, 1, 1], [], []>} : vector<10x32xbf16>, vector<32x32xbf16>, vector<10x32xf32> -> vector<10x32xf32>
    %411 = vector.broadcast %331 : vector<1x32xf32> to vector<10x32xf32>
    %412 = arith.addf %410, %411 : vector<10x32xf32>
    %413 = arith.addf %412, %322 : vector<10x32xf32>
    %cst_99 = arith.constant dense<0.000000e+00> : vector<10xf32>
    %414 = vector.multi_reduction <add>, %413, %cst_99 [1] : vector<10x32xf32> to vector<10xf32>
    %415 = vector.shape_cast %414 : vector<10xf32> to vector<10x1xf32>
    %cst_100 = arith.constant 3.200000e+01 : f32
    %416 = vector.broadcast %cst_100 : f32 to vector<10x1xf32>
    %417 = arith.divf %415, %416 : vector<10x1xf32>
    %418 = vector.broadcast %417 : vector<10x1xf32> to vector<10x32xf32>
    %419 = arith.subf %413, %418 : vector<10x32xf32>
    %420 = arith.mulf %419, %419 : vector<10x32xf32>
    %cst_101 = arith.constant dense<0.000000e+00> : vector<10xf32>
    %421 = vector.multi_reduction <add>, %420, %cst_101 [1] : vector<10x32xf32> to vector<10xf32>
    %422 = vector.shape_cast %421 : vector<10xf32> to vector<10x1xf32>
    %cst_102 = arith.constant 3.200000e+01 : f32
    %423 = vector.broadcast %cst_102 : f32 to vector<10x1xf32>
    %424 = arith.divf %422, %423 : vector<10x1xf32>
    %425 = vector.broadcast %417 : vector<10x1xf32> to vector<10x32xf32>
    %426 = arith.subf %413, %425 : vector<10x32xf32>
    %cst_103 = arith.constant 9.99999996E-13 : f32
    %427 = vector.broadcast %cst_103 : f32 to vector<10x1xf32>
    %428 = arith.addf %424, %427 : vector<10x1xf32>
    %429 = math.rsqrt %428 : vector<10x1xf32>
    %430 = vector.broadcast %429 : vector<10x1xf32> to vector<10x32xf32>
    %431 = arith.mulf %426, %430 : vector<10x32xf32>
    %432 = vector.broadcast %332 : vector<1x32xf32> to vector<10x32xf32>
    %433 = arith.mulf %431, %432 : vector<10x32xf32>
    %434 = vector.broadcast %333 : vector<1x32xf32> to vector<10x32xf32>
    %435 = arith.addf %433, %434 : vector<10x32xf32>
    %c1_104 = arith.constant 1 : index
    %c0_105 = arith.constant 0 : index
    %c0_106 = arith.constant 0 : index
    %436 = vector.load %arg6[%c1_104, %c0_105, %c0_106] : memref<5x32x64xbf16, #tpu.memory_space<vmem>>, vector<1x32x64xbf16>
    %437 = vector.shape_cast %436 : vector<1x32x64xbf16> to vector<32x64xbf16>
    %438 = vector.extract_strided_slice %0 {offsets = [26, 0], sizes = [1, 64], strides = [1, 1]} : vector<47x128xf32> to vector<1x64xf32>
    %c1_107 = arith.constant 1 : index
    %c0_108 = arith.constant 0 : index
    %c0_109 = arith.constant 0 : index
    %439 = vector.load %arg7[%c1_107, %c0_108, %c0_109] : memref<3x64x32xbf16, #tpu.memory_space<vmem>>, vector<1x64x32xbf16>
    %440 = vector.shape_cast %439 : vector<1x64x32xbf16> to vector<64x32xbf16>
    %441 = vector.extract_strided_slice %0 {offsets = [27, 0], sizes = [1, 32], strides = [1, 1]} : vector<47x128xf32> to vector<1x32xf32>
    %442 = vector.extract_strided_slice %0 {offsets = [28, 0], sizes = [1, 32], strides = [1, 1]} : vector<47x128xf32> to vector<1x32xf32>
    %443 = vector.extract_strided_slice %0 {offsets = [29, 0], sizes = [1, 32], strides = [1, 1]} : vector<47x128xf32> to vector<1x32xf32>
    %444 = arith.truncf %435 : vector<10x32xf32> to vector<10x32xbf16>
    %cst_110 = arith.constant dense<0.000000e+00> : vector<10x64xf32>
    %445 = tpu.matmul %444, %437, %cst_110 {dimension_numbers = #tpu.dot_dimension_numbers<[1], [0], [0], [1], [0, 0, 1, 1], [], []>} : vector<10x32xbf16>, vector<32x64xbf16>, vector<10x64xf32> -> vector<10x64xf32>
    %446 = vector.broadcast %438 : vector<1x64xf32> to vector<10x64xf32>
    %447 = arith.addf %445, %446 : vector<10x64xf32>
    %448 = arith.mulf %447, %447 : vector<10x64xf32>
    %449 = arith.mulf %447, %448 : vector<10x64xf32>
    %cst_111 = arith.constant 4.471500e-02 : f32
    %450 = vector.broadcast %cst_111 : f32 to vector<10x64xf32>
    %451 = arith.mulf %450, %449 : vector<10x64xf32>
    %452 = arith.addf %447, %451 : vector<10x64xf32>
    %cst_112 = arith.constant 0.797884583 : f32
    %453 = vector.broadcast %cst_112 : f32 to vector<10x64xf32>
    %454 = arith.mulf %453, %452 : vector<10x64xf32>
    %455 = math.tanh %454 : vector<10x64xf32>
    %cst_113 = arith.constant 1.000000e+00 : f32
    %456 = vector.broadcast %cst_113 : f32 to vector<10x64xf32>
    %457 = arith.addf %456, %455 : vector<10x64xf32>
    %cst_114 = arith.constant 5.000000e-01 : f32
    %458 = vector.broadcast %cst_114 : f32 to vector<10x64xf32>
    %459 = arith.mulf %458, %457 : vector<10x64xf32>
    %460 = arith.mulf %447, %459 : vector<10x64xf32>
    %461 = arith.truncf %460 : vector<10x64xf32> to vector<10x64xbf16>
    %cst_115 = arith.constant dense<0.000000e+00> : vector<10x32xf32>
    %462 = tpu.matmul %461, %440, %cst_115 {dimension_numbers = #tpu.dot_dimension_numbers<[1], [0], [0], [1], [0, 0, 1, 1], [], []>} : vector<10x64xbf16>, vector<64x32xbf16>, vector<10x32xf32> -> vector<10x32xf32>
    %463 = vector.broadcast %441 : vector<1x32xf32> to vector<10x32xf32>
    %464 = arith.addf %462, %463 : vector<10x32xf32>
    %465 = arith.addf %464, %435 : vector<10x32xf32>
    %cst_116 = arith.constant dense<0.000000e+00> : vector<10xf32>
    %466 = vector.multi_reduction <add>, %465, %cst_116 [1] : vector<10x32xf32> to vector<10xf32>
    %467 = vector.shape_cast %466 : vector<10xf32> to vector<10x1xf32>
    %cst_117 = arith.constant 3.200000e+01 : f32
    %468 = vector.broadcast %cst_117 : f32 to vector<10x1xf32>
    %469 = arith.divf %467, %468 : vector<10x1xf32>
    %470 = vector.broadcast %469 : vector<10x1xf32> to vector<10x32xf32>
    %471 = arith.subf %465, %470 : vector<10x32xf32>
    %472 = arith.mulf %471, %471 : vector<10x32xf32>
    %cst_118 = arith.constant dense<0.000000e+00> : vector<10xf32>
    %473 = vector.multi_reduction <add>, %472, %cst_118 [1] : vector<10x32xf32> to vector<10xf32>
    %474 = vector.shape_cast %473 : vector<10xf32> to vector<10x1xf32>
    %cst_119 = arith.constant 3.200000e+01 : f32
    %475 = vector.broadcast %cst_119 : f32 to vector<10x1xf32>
    %476 = arith.divf %474, %475 : vector<10x1xf32>
    %477 = vector.broadcast %469 : vector<10x1xf32> to vector<10x32xf32>
    %478 = arith.subf %465, %477 : vector<10x32xf32>
    %cst_120 = arith.constant 9.99999996E-13 : f32
    %479 = vector.broadcast %cst_120 : f32 to vector<10x1xf32>
    %480 = arith.addf %476, %479 : vector<10x1xf32>
    %481 = math.rsqrt %480 : vector<10x1xf32>
    %482 = vector.broadcast %481 : vector<10x1xf32> to vector<10x32xf32>
    %483 = arith.mulf %478, %482 : vector<10x32xf32>
    %484 = vector.broadcast %442 : vector<1x32xf32> to vector<10x32xf32>
    %485 = arith.mulf %483, %484 : vector<10x32xf32>
    %486 = vector.broadcast %443 : vector<1x32xf32> to vector<10x32xf32>
    %487 = arith.addf %485, %486 : vector<10x32xf32>
    %c2_121 = arith.constant 2 : index
    %c0_122 = arith.constant 0 : index
    %c0_123 = arith.constant 0 : index
    %488 = vector.load %arg4[%c2_121, %c0_122, %c0_123] : memref<3x32x96xbf16, #tpu.memory_space<vmem>>, vector<1x32x96xbf16>
    %489 = vector.shape_cast %488 : vector<1x32x96xbf16> to vector<32x96xbf16>
    %490 = vector.extract_strided_slice %0 {offsets = [30, 0], sizes = [1, 96], strides = [1, 1]} : vector<47x128xf32> to vector<1x96xf32>
    %c4 = arith.constant 4 : index
    %c0_124 = arith.constant 0 : index
    %c0_125 = arith.constant 0 : index
    %491 = vector.load %arg5[%c4, %c0_124, %c0_125] : memref<7x32x32xbf16, #tpu.memory_space<vmem>>, vector<1x32x32xbf16>
    %492 = vector.shape_cast %491 : vector<1x32x32xbf16> to vector<32x32xbf16>
    %493 = vector.extract_strided_slice %0 {offsets = [31, 0], sizes = [1, 32], strides = [1, 1]} : vector<47x128xf32> to vector<1x32xf32>
    %494 = vector.extract_strided_slice %0 {offsets = [32, 0], sizes = [1, 32], strides = [1, 1]} : vector<47x128xf32> to vector<1x32xf32>
    %495 = vector.extract_strided_slice %0 {offsets = [33, 0], sizes = [1, 32], strides = [1, 1]} : vector<47x128xf32> to vector<1x32xf32>
    %496 = arith.truncf %487 : vector<10x32xf32> to vector<10x32xbf16>
    %cst_126 = arith.constant dense<0.000000e+00> : vector<10x96xf32>
    %497 = tpu.matmul %496, %489, %cst_126 {dimension_numbers = #tpu.dot_dimension_numbers<[1], [0], [0], [1], [0, 0, 1, 1], [], []>} : vector<10x32xbf16>, vector<32x96xbf16>, vector<10x96xf32> -> vector<10x96xf32>
    %498 = vector.broadcast %490 : vector<1x96xf32> to vector<10x96xf32>
    %499 = arith.addf %497, %498 : vector<10x96xf32>
    %500 = vector.extract_strided_slice %499 {offsets = [0, 0], sizes = [10, 32], strides = [1, 1]} : vector<10x96xf32> to vector<10x32xf32>
    %501 = vector.extract_strided_slice %499 {offsets = [0, 32], sizes = [10, 32], strides = [1, 1]} : vector<10x96xf32> to vector<10x32xf32>
    %502 = vector.extract_strided_slice %499 {offsets = [0, 64], sizes = [10, 32], strides = [1, 1]} : vector<10x96xf32> to vector<10x32xf32>
    %503 = vector.extract_strided_slice %500 {offsets = [0, 0], sizes = [10, 8], strides = [1, 1]} : vector<10x32xf32> to vector<10x8xf32>
    %504 = vector.extract_strided_slice %501 {offsets = [0, 0], sizes = [10, 8], strides = [1, 1]} : vector<10x32xf32> to vector<10x8xf32>
    %505 = arith.truncf %503 : vector<10x8xf32> to vector<10x8xbf16>
    %506 = arith.truncf %504 : vector<10x8xf32> to vector<10x8xbf16>
    %cst_127 = arith.constant dense<0.000000e+00> : vector<10x10xf32>
    %507 = tpu.matmul %505, %506, %cst_127 {dimension_numbers = #tpu.dot_dimension_numbers<[1], [1], [0], [0], [0, 0, 1, 0], [], []>} : vector<10x8xbf16>, vector<10x8xbf16>, vector<10x10xf32> -> vector<10x10xf32>
    %508 = vector.extract_strided_slice %500 {offsets = [0, 8], sizes = [10, 8], strides = [1, 1]} : vector<10x32xf32> to vector<10x8xf32>
    %509 = vector.extract_strided_slice %501 {offsets = [0, 8], sizes = [10, 8], strides = [1, 1]} : vector<10x32xf32> to vector<10x8xf32>
    %510 = arith.truncf %508 : vector<10x8xf32> to vector<10x8xbf16>
    %511 = arith.truncf %509 : vector<10x8xf32> to vector<10x8xbf16>
    %cst_128 = arith.constant dense<0.000000e+00> : vector<10x10xf32>
    %512 = tpu.matmul %510, %511, %cst_128 {dimension_numbers = #tpu.dot_dimension_numbers<[1], [1], [0], [0], [0, 0, 1, 0], [], []>} : vector<10x8xbf16>, vector<10x8xbf16>, vector<10x10xf32> -> vector<10x10xf32>
    %513 = vector.extract_strided_slice %500 {offsets = [0, 16], sizes = [10, 8], strides = [1, 1]} : vector<10x32xf32> to vector<10x8xf32>
    %514 = vector.extract_strided_slice %501 {offsets = [0, 16], sizes = [10, 8], strides = [1, 1]} : vector<10x32xf32> to vector<10x8xf32>
    %515 = arith.truncf %513 : vector<10x8xf32> to vector<10x8xbf16>
    %516 = arith.truncf %514 : vector<10x8xf32> to vector<10x8xbf16>
    %cst_129 = arith.constant dense<0.000000e+00> : vector<10x10xf32>
    %517 = tpu.matmul %515, %516, %cst_129 {dimension_numbers = #tpu.dot_dimension_numbers<[1], [1], [0], [0], [0, 0, 1, 0], [], []>} : vector<10x8xbf16>, vector<10x8xbf16>, vector<10x10xf32> -> vector<10x10xf32>
    %518 = vector.extract_strided_slice %500 {offsets = [0, 24], sizes = [10, 8], strides = [1, 1]} : vector<10x32xf32> to vector<10x8xf32>
    %519 = vector.extract_strided_slice %501 {offsets = [0, 24], sizes = [10, 8], strides = [1, 1]} : vector<10x32xf32> to vector<10x8xf32>
    %520 = arith.truncf %518 : vector<10x8xf32> to vector<10x8xbf16>
    %521 = arith.truncf %519 : vector<10x8xf32> to vector<10x8xbf16>
    %cst_130 = arith.constant dense<0.000000e+00> : vector<10x10xf32>
    %522 = tpu.matmul %520, %521, %cst_130 {dimension_numbers = #tpu.dot_dimension_numbers<[1], [1], [0], [0], [0, 0, 1, 0], [], []>} : vector<10x8xbf16>, vector<10x8xbf16>, vector<10x10xf32> -> vector<10x10xf32>
    %523 = vector.shape_cast %507 : vector<10x10xf32> to vector<1x10x10xf32>
    %524 = vector.shape_cast %512 : vector<10x10xf32> to vector<1x10x10xf32>
    %525 = vector.shape_cast %517 : vector<10x10xf32> to vector<1x10x10xf32>
    %526 = vector.shape_cast %522 : vector<10x10xf32> to vector<1x10x10xf32>
    %527 = tpu.concatenate %523, %524, %525, %526 in 0 : vector<1x10x10xf32>, vector<1x10x10xf32>, vector<1x10x10xf32>, vector<1x10x10xf32> -> vector<4x10x10xf32>
    %cst_131 = arith.constant 0.353553385 : f32
    %528 = vector.broadcast %cst_131 : f32 to vector<4x10x10xf32>
    %529 = arith.mulf %527, %528 : vector<4x10x10xf32>
    %530 = vector.shape_cast %3 : vector<10x10xf32> to vector<1x10x10xf32>
    %531 = vector.broadcast %530 : vector<1x10x10xf32> to vector<4x10x10xf32>
    %532 = arith.addf %529, %531 : vector<4x10x10xf32>
    %cst_132 = arith.constant dense<0xFF800000> : vector<4x10xf32>
    %533 = vector.multi_reduction <maximumf>, %532, %cst_132 [2] : vector<4x10x10xf32> to vector<4x10xf32>
    %534 = vector.shape_cast %533 : vector<4x10xf32> to vector<4x10x1xf32>
    %535 = vector.broadcast %534 : vector<4x10x1xf32> to vector<4x10x10xf32>
    %536 = arith.subf %532, %535 : vector<4x10x10xf32>
    %537 = math.exp %536 : vector<4x10x10xf32>
    %cst_133 = arith.constant dense<0.000000e+00> : vector<4x10xf32>
    %538 = vector.multi_reduction <add>, %537, %cst_133 [2] : vector<4x10x10xf32> to vector<4x10xf32>
    %539 = vector.shape_cast %538 : vector<4x10xf32> to vector<4x10x1xf32>
    %540 = tpu.reciprocal %539 {approx = true} : vector<4x10x1xf32> -> vector<4x10x1xf32>
    %541 = vector.broadcast %540 : vector<4x10x1xf32> to vector<4x10x10xf32>
    %542 = arith.mulf %537, %541 : vector<4x10x10xf32>
    %543 = vector.extract_strided_slice %542 {offsets = [0, 0, 0], sizes = [1, 10, 10], strides = [1, 1, 1]} : vector<4x10x10xf32> to vector<1x10x10xf32>
    %544 = vector.shape_cast %543 : vector<1x10x10xf32> to vector<10x10xf32>
    %545 = vector.extract_strided_slice %502 {offsets = [0, 0], sizes = [10, 8], strides = [1, 1]} : vector<10x32xf32> to vector<10x8xf32>
    %546 = arith.truncf %544 : vector<10x10xf32> to vector<10x10xbf16>
    %547 = arith.truncf %545 : vector<10x8xf32> to vector<10x8xbf16>
    %cst_134 = arith.constant dense<0.000000e+00> : vector<10x8xf32>
    %548 = tpu.matmul %546, %547, %cst_134 {dimension_numbers = #tpu.dot_dimension_numbers<[1], [0], [0], [1], [0, 0, 1, 1], [], []>} : vector<10x10xbf16>, vector<10x8xbf16>, vector<10x8xf32> -> vector<10x8xf32>
    %549 = vector.extract_strided_slice %542 {offsets = [1, 0, 0], sizes = [1, 10, 10], strides = [1, 1, 1]} : vector<4x10x10xf32> to vector<1x10x10xf32>
    %550 = vector.shape_cast %549 : vector<1x10x10xf32> to vector<10x10xf32>
    %551 = vector.extract_strided_slice %502 {offsets = [0, 8], sizes = [10, 8], strides = [1, 1]} : vector<10x32xf32> to vector<10x8xf32>
    %552 = arith.truncf %550 : vector<10x10xf32> to vector<10x10xbf16>
    %553 = arith.truncf %551 : vector<10x8xf32> to vector<10x8xbf16>
    %cst_135 = arith.constant dense<0.000000e+00> : vector<10x8xf32>
    %554 = tpu.matmul %552, %553, %cst_135 {dimension_numbers = #tpu.dot_dimension_numbers<[1], [0], [0], [1], [0, 0, 1, 1], [], []>} : vector<10x10xbf16>, vector<10x8xbf16>, vector<10x8xf32> -> vector<10x8xf32>
    %555 = vector.extract_strided_slice %542 {offsets = [2, 0, 0], sizes = [1, 10, 10], strides = [1, 1, 1]} : vector<4x10x10xf32> to vector<1x10x10xf32>
    %556 = vector.shape_cast %555 : vector<1x10x10xf32> to vector<10x10xf32>
    %557 = vector.extract_strided_slice %502 {offsets = [0, 16], sizes = [10, 8], strides = [1, 1]} : vector<10x32xf32> to vector<10x8xf32>
    %558 = arith.truncf %556 : vector<10x10xf32> to vector<10x10xbf16>
    %559 = arith.truncf %557 : vector<10x8xf32> to vector<10x8xbf16>
    %cst_136 = arith.constant dense<0.000000e+00> : vector<10x8xf32>
    %560 = tpu.matmul %558, %559, %cst_136 {dimension_numbers = #tpu.dot_dimension_numbers<[1], [0], [0], [1], [0, 0, 1, 1], [], []>} : vector<10x10xbf16>, vector<10x8xbf16>, vector<10x8xf32> -> vector<10x8xf32>
    %561 = vector.extract_strided_slice %542 {offsets = [3, 0, 0], sizes = [1, 10, 10], strides = [1, 1, 1]} : vector<4x10x10xf32> to vector<1x10x10xf32>
    %562 = vector.shape_cast %561 : vector<1x10x10xf32> to vector<10x10xf32>
    %563 = vector.extract_strided_slice %502 {offsets = [0, 24], sizes = [10, 8], strides = [1, 1]} : vector<10x32xf32> to vector<10x8xf32>
    %564 = arith.truncf %562 : vector<10x10xf32> to vector<10x10xbf16>
    %565 = arith.truncf %563 : vector<10x8xf32> to vector<10x8xbf16>
    %cst_137 = arith.constant dense<0.000000e+00> : vector<10x8xf32>
    %566 = tpu.matmul %564, %565, %cst_137 {dimension_numbers = #tpu.dot_dimension_numbers<[1], [0], [0], [1], [0, 0, 1, 1], [], []>} : vector<10x10xbf16>, vector<10x8xbf16>, vector<10x8xf32> -> vector<10x8xf32>
    %567 = tpu.concatenate %548, %554, %560, %566 in 1 : vector<10x8xf32>, vector<10x8xf32>, vector<10x8xf32>, vector<10x8xf32> -> vector<10x32xf32>
    %568 = arith.truncf %567 : vector<10x32xf32> to vector<10x32xbf16>
    %cst_138 = arith.constant dense<0.000000e+00> : vector<10x32xf32>
    %569 = tpu.matmul %568, %492, %cst_138 {dimension_numbers = #tpu.dot_dimension_numbers<[1], [0], [0], [1], [0, 0, 1, 1], [], []>} : vector<10x32xbf16>, vector<32x32xbf16>, vector<10x32xf32> -> vector<10x32xf32>
    %570 = vector.broadcast %493 : vector<1x32xf32> to vector<10x32xf32>
    %571 = arith.addf %569, %570 : vector<10x32xf32>
    %572 = arith.addf %571, %487 : vector<10x32xf32>
    %cst_139 = arith.constant dense<0.000000e+00> : vector<10xf32>
    %573 = vector.multi_reduction <add>, %572, %cst_139 [1] : vector<10x32xf32> to vector<10xf32>
    %574 = vector.shape_cast %573 : vector<10xf32> to vector<10x1xf32>
    %cst_140 = arith.constant 3.200000e+01 : f32
    %575 = vector.broadcast %cst_140 : f32 to vector<10x1xf32>
    %576 = arith.divf %574, %575 : vector<10x1xf32>
    %577 = vector.broadcast %576 : vector<10x1xf32> to vector<10x32xf32>
    %578 = arith.subf %572, %577 : vector<10x32xf32>
    %579 = arith.mulf %578, %578 : vector<10x32xf32>
    %cst_141 = arith.constant dense<0.000000e+00> : vector<10xf32>
    %580 = vector.multi_reduction <add>, %579, %cst_141 [1] : vector<10x32xf32> to vector<10xf32>
    %581 = vector.shape_cast %580 : vector<10xf32> to vector<10x1xf32>
    %cst_142 = arith.constant 3.200000e+01 : f32
    %582 = vector.broadcast %cst_142 : f32 to vector<10x1xf32>
    %583 = arith.divf %581, %582 : vector<10x1xf32>
    %584 = vector.broadcast %576 : vector<10x1xf32> to vector<10x32xf32>
    %585 = arith.subf %572, %584 : vector<10x32xf32>
    %cst_143 = arith.constant 9.99999996E-13 : f32
    %586 = vector.broadcast %cst_143 : f32 to vector<10x1xf32>
    %587 = arith.addf %583, %586 : vector<10x1xf32>
    %588 = math.rsqrt %587 : vector<10x1xf32>
    %589 = vector.broadcast %588 : vector<10x1xf32> to vector<10x32xf32>
    %590 = arith.mulf %585, %589 : vector<10x32xf32>
    %591 = vector.broadcast %494 : vector<1x32xf32> to vector<10x32xf32>
    %592 = arith.mulf %590, %591 : vector<10x32xf32>
    %593 = vector.broadcast %495 : vector<1x32xf32> to vector<10x32xf32>
    %594 = arith.addf %592, %593 : vector<10x32xf32>
    %c5 = arith.constant 5 : index
    %c0_144 = arith.constant 0 : index
    %c0_145 = arith.constant 0 : index
    %595 = vector.load %arg5[%c5, %c0_144, %c0_145] : memref<7x32x32xbf16, #tpu.memory_space<vmem>>, vector<1x32x32xbf16>
    %596 = vector.shape_cast %595 : vector<1x32x32xbf16> to vector<32x32xbf16>
    %597 = vector.extract_strided_slice %0 {offsets = [34, 0], sizes = [1, 32], strides = [1, 1]} : vector<47x128xf32> to vector<1x32xf32>
    %c4_146 = arith.constant 4 : index
    %c0_147 = arith.constant 0 : index
    %c0_148 = arith.constant 0 : index
    %598 = vector.load %arg6[%c4_146, %c0_147, %c0_148] : memref<5x32x64xbf16, #tpu.memory_space<vmem>>, vector<1x32x64xbf16>
    %599 = vector.shape_cast %598 : vector<1x32x64xbf16> to vector<32x64xbf16>
    %600 = vector.extract_strided_slice %0 {offsets = [35, 0], sizes = [1, 64], strides = [1, 1]} : vector<47x128xf32> to vector<1x64xf32>
    %c6 = arith.constant 6 : index
    %c0_149 = arith.constant 0 : index
    %c0_150 = arith.constant 0 : index
    %601 = vector.load %arg5[%c6, %c0_149, %c0_150] : memref<7x32x32xbf16, #tpu.memory_space<vmem>>, vector<1x32x32xbf16>
    %602 = vector.shape_cast %601 : vector<1x32x32xbf16> to vector<32x32xbf16>
    %603 = vector.extract_strided_slice %0 {offsets = [36, 0], sizes = [1, 32], strides = [1, 1]} : vector<47x128xf32> to vector<1x32xf32>
    %604 = vector.extract_strided_slice %0 {offsets = [37, 0], sizes = [1, 32], strides = [1, 1]} : vector<47x128xf32> to vector<1x32xf32>
    %605 = vector.extract_strided_slice %0 {offsets = [38, 0], sizes = [1, 32], strides = [1, 1]} : vector<47x128xf32> to vector<1x32xf32>
    %606 = arith.truncf %594 : vector<10x32xf32> to vector<10x32xbf16>
    %cst_151 = arith.constant dense<0.000000e+00> : vector<10x32xf32>
    %607 = tpu.matmul %606, %596, %cst_151 {dimension_numbers = #tpu.dot_dimension_numbers<[1], [0], [0], [1], [0, 0, 1, 1], [], []>} : vector<10x32xbf16>, vector<32x32xbf16>, vector<10x32xf32> -> vector<10x32xf32>
    %608 = vector.broadcast %597 : vector<1x32xf32> to vector<10x32xf32>
    %609 = arith.addf %607, %608 : vector<10x32xf32>
    %610 = arith.truncf %189 : vector<16x32xf32> to vector<16x32xbf16>
    %cst_152 = arith.constant dense<0.000000e+00> : vector<16x64xf32>
    %611 = tpu.matmul %610, %599, %cst_152 {dimension_numbers = #tpu.dot_dimension_numbers<[1], [0], [0], [1], [0, 0, 1, 1], [], []>} : vector<16x32xbf16>, vector<32x64xbf16>, vector<16x64xf32> -> vector<16x64xf32>
    %612 = vector.broadcast %600 : vector<1x64xf32> to vector<16x64xf32>
    %613 = arith.addf %611, %612 : vector<16x64xf32>
    %614 = vector.extract_strided_slice %613 {offsets = [0, 0], sizes = [16, 32], strides = [1, 1]} : vector<16x64xf32> to vector<16x32xf32>
    %615 = vector.extract_strided_slice %613 {offsets = [0, 32], sizes = [16, 32], strides = [1, 1]} : vector<16x64xf32> to vector<16x32xf32>
    %616 = vector.extract_strided_slice %609 {offsets = [0, 0], sizes = [10, 8], strides = [1, 1]} : vector<10x32xf32> to vector<10x8xf32>
    %617 = vector.extract_strided_slice %614 {offsets = [0, 0], sizes = [16, 8], strides = [1, 1]} : vector<16x32xf32> to vector<16x8xf32>
    %618 = arith.truncf %616 : vector<10x8xf32> to vector<10x8xbf16>
    %619 = arith.truncf %617 : vector<16x8xf32> to vector<16x8xbf16>
    %cst_153 = arith.constant dense<0.000000e+00> : vector<10x16xf32>
    %620 = tpu.matmul %618, %619, %cst_153 {dimension_numbers = #tpu.dot_dimension_numbers<[1], [1], [0], [0], [0, 0, 1, 0], [], []>} : vector<10x8xbf16>, vector<16x8xbf16>, vector<10x16xf32> -> vector<10x16xf32>
    %621 = vector.extract_strided_slice %609 {offsets = [0, 8], sizes = [10, 8], strides = [1, 1]} : vector<10x32xf32> to vector<10x8xf32>
    %622 = vector.extract_strided_slice %614 {offsets = [0, 8], sizes = [16, 8], strides = [1, 1]} : vector<16x32xf32> to vector<16x8xf32>
    %623 = arith.truncf %621 : vector<10x8xf32> to vector<10x8xbf16>
    %624 = arith.truncf %622 : vector<16x8xf32> to vector<16x8xbf16>
    %cst_154 = arith.constant dense<0.000000e+00> : vector<10x16xf32>
    %625 = tpu.matmul %623, %624, %cst_154 {dimension_numbers = #tpu.dot_dimension_numbers<[1], [1], [0], [0], [0, 0, 1, 0], [], []>} : vector<10x8xbf16>, vector<16x8xbf16>, vector<10x16xf32> -> vector<10x16xf32>
    %626 = vector.extract_strided_slice %609 {offsets = [0, 16], sizes = [10, 8], strides = [1, 1]} : vector<10x32xf32> to vector<10x8xf32>
    %627 = vector.extract_strided_slice %614 {offsets = [0, 16], sizes = [16, 8], strides = [1, 1]} : vector<16x32xf32> to vector<16x8xf32>
    %628 = arith.truncf %626 : vector<10x8xf32> to vector<10x8xbf16>
    %629 = arith.truncf %627 : vector<16x8xf32> to vector<16x8xbf16>
    %cst_155 = arith.constant dense<0.000000e+00> : vector<10x16xf32>
    %630 = tpu.matmul %628, %629, %cst_155 {dimension_numbers = #tpu.dot_dimension_numbers<[1], [1], [0], [0], [0, 0, 1, 0], [], []>} : vector<10x8xbf16>, vector<16x8xbf16>, vector<10x16xf32> -> vector<10x16xf32>
    %631 = vector.extract_strided_slice %609 {offsets = [0, 24], sizes = [10, 8], strides = [1, 1]} : vector<10x32xf32> to vector<10x8xf32>
    %632 = vector.extract_strided_slice %614 {offsets = [0, 24], sizes = [16, 8], strides = [1, 1]} : vector<16x32xf32> to vector<16x8xf32>
    %633 = arith.truncf %631 : vector<10x8xf32> to vector<10x8xbf16>
    %634 = arith.truncf %632 : vector<16x8xf32> to vector<16x8xbf16>
    %cst_156 = arith.constant dense<0.000000e+00> : vector<10x16xf32>
    %635 = tpu.matmul %633, %634, %cst_156 {dimension_numbers = #tpu.dot_dimension_numbers<[1], [1], [0], [0], [0, 0, 1, 0], [], []>} : vector<10x8xbf16>, vector<16x8xbf16>, vector<10x16xf32> -> vector<10x16xf32>
    %636 = vector.shape_cast %620 : vector<10x16xf32> to vector<1x10x16xf32>
    %637 = vector.shape_cast %625 : vector<10x16xf32> to vector<1x10x16xf32>
    %638 = vector.shape_cast %630 : vector<10x16xf32> to vector<1x10x16xf32>
    %639 = vector.shape_cast %635 : vector<10x16xf32> to vector<1x10x16xf32>
    %640 = tpu.concatenate %636, %637, %638, %639 in 0 : vector<1x10x16xf32>, vector<1x10x16xf32>, vector<1x10x16xf32>, vector<1x10x16xf32> -> vector<4x10x16xf32>
    %cst_157 = arith.constant 0.353553385 : f32
    %641 = vector.broadcast %cst_157 : f32 to vector<4x10x16xf32>
    %642 = arith.mulf %640, %641 : vector<4x10x16xf32>
    %643 = vector.shape_cast %4 : vector<10x16xf32> to vector<1x10x16xf32>
    %644 = vector.broadcast %643 : vector<1x10x16xf32> to vector<4x10x16xf32>
    %645 = arith.addf %642, %644 : vector<4x10x16xf32>
    %cst_158 = arith.constant dense<0xFF800000> : vector<4x10xf32>
    %646 = vector.multi_reduction <maximumf>, %645, %cst_158 [2] : vector<4x10x16xf32> to vector<4x10xf32>
    %647 = vector.shape_cast %646 : vector<4x10xf32> to vector<4x10x1xf32>
    %648 = vector.broadcast %647 : vector<4x10x1xf32> to vector<4x10x16xf32>
    %649 = arith.subf %645, %648 : vector<4x10x16xf32>
    %650 = math.exp %649 : vector<4x10x16xf32>
    %cst_159 = arith.constant dense<0.000000e+00> : vector<4x10xf32>
    %651 = vector.multi_reduction <add>, %650, %cst_159 [2] : vector<4x10x16xf32> to vector<4x10xf32>
    %652 = vector.shape_cast %651 : vector<4x10xf32> to vector<4x10x1xf32>
    %653 = tpu.reciprocal %652 {approx = true} : vector<4x10x1xf32> -> vector<4x10x1xf32>
    %654 = vector.broadcast %653 : vector<4x10x1xf32> to vector<4x10x16xf32>
    %655 = arith.mulf %650, %654 : vector<4x10x16xf32>
    %656 = vector.extract_strided_slice %655 {offsets = [0, 0, 0], sizes = [1, 10, 16], strides = [1, 1, 1]} : vector<4x10x16xf32> to vector<1x10x16xf32>
    %657 = vector.shape_cast %656 : vector<1x10x16xf32> to vector<10x16xf32>
    %658 = vector.extract_strided_slice %615 {offsets = [0, 0], sizes = [16, 8], strides = [1, 1]} : vector<16x32xf32> to vector<16x8xf32>
    %659 = arith.truncf %657 : vector<10x16xf32> to vector<10x16xbf16>
    %660 = arith.truncf %658 : vector<16x8xf32> to vector<16x8xbf16>
    %cst_160 = arith.constant dense<0.000000e+00> : vector<10x8xf32>
    %661 = tpu.matmul %659, %660, %cst_160 {dimension_numbers = #tpu.dot_dimension_numbers<[1], [0], [0], [1], [0, 0, 1, 1], [], []>} : vector<10x16xbf16>, vector<16x8xbf16>, vector<10x8xf32> -> vector<10x8xf32>
    %662 = vector.extract_strided_slice %655 {offsets = [1, 0, 0], sizes = [1, 10, 16], strides = [1, 1, 1]} : vector<4x10x16xf32> to vector<1x10x16xf32>
    %663 = vector.shape_cast %662 : vector<1x10x16xf32> to vector<10x16xf32>
    %664 = vector.extract_strided_slice %615 {offsets = [0, 8], sizes = [16, 8], strides = [1, 1]} : vector<16x32xf32> to vector<16x8xf32>
    %665 = arith.truncf %663 : vector<10x16xf32> to vector<10x16xbf16>
    %666 = arith.truncf %664 : vector<16x8xf32> to vector<16x8xbf16>
    %cst_161 = arith.constant dense<0.000000e+00> : vector<10x8xf32>
    %667 = tpu.matmul %665, %666, %cst_161 {dimension_numbers = #tpu.dot_dimension_numbers<[1], [0], [0], [1], [0, 0, 1, 1], [], []>} : vector<10x16xbf16>, vector<16x8xbf16>, vector<10x8xf32> -> vector<10x8xf32>
    %668 = vector.extract_strided_slice %655 {offsets = [2, 0, 0], sizes = [1, 10, 16], strides = [1, 1, 1]} : vector<4x10x16xf32> to vector<1x10x16xf32>
    %669 = vector.shape_cast %668 : vector<1x10x16xf32> to vector<10x16xf32>
    %670 = vector.extract_strided_slice %615 {offsets = [0, 16], sizes = [16, 8], strides = [1, 1]} : vector<16x32xf32> to vector<16x8xf32>
    %671 = arith.truncf %669 : vector<10x16xf32> to vector<10x16xbf16>
    %672 = arith.truncf %670 : vector<16x8xf32> to vector<16x8xbf16>
    %cst_162 = arith.constant dense<0.000000e+00> : vector<10x8xf32>
    %673 = tpu.matmul %671, %672, %cst_162 {dimension_numbers = #tpu.dot_dimension_numbers<[1], [0], [0], [1], [0, 0, 1, 1], [], []>} : vector<10x16xbf16>, vector<16x8xbf16>, vector<10x8xf32> -> vector<10x8xf32>
    %674 = vector.extract_strided_slice %655 {offsets = [3, 0, 0], sizes = [1, 10, 16], strides = [1, 1, 1]} : vector<4x10x16xf32> to vector<1x10x16xf32>
    %675 = vector.shape_cast %674 : vector<1x10x16xf32> to vector<10x16xf32>
    %676 = vector.extract_strided_slice %615 {offsets = [0, 24], sizes = [16, 8], strides = [1, 1]} : vector<16x32xf32> to vector<16x8xf32>
    %677 = arith.truncf %675 : vector<10x16xf32> to vector<10x16xbf16>
    %678 = arith.truncf %676 : vector<16x8xf32> to vector<16x8xbf16>
    %cst_163 = arith.constant dense<0.000000e+00> : vector<10x8xf32>
    %679 = tpu.matmul %677, %678, %cst_163 {dimension_numbers = #tpu.dot_dimension_numbers<[1], [0], [0], [1], [0, 0, 1, 1], [], []>} : vector<10x16xbf16>, vector<16x8xbf16>, vector<10x8xf32> -> vector<10x8xf32>
    %680 = tpu.concatenate %661, %667, %673, %679 in 1 : vector<10x8xf32>, vector<10x8xf32>, vector<10x8xf32>, vector<10x8xf32> -> vector<10x32xf32>
    %681 = arith.truncf %680 : vector<10x32xf32> to vector<10x32xbf16>
    %cst_164 = arith.constant dense<0.000000e+00> : vector<10x32xf32>
    %682 = tpu.matmul %681, %602, %cst_164 {dimension_numbers = #tpu.dot_dimension_numbers<[1], [0], [0], [1], [0, 0, 1, 1], [], []>} : vector<10x32xbf16>, vector<32x32xbf16>, vector<10x32xf32> -> vector<10x32xf32>
    %683 = vector.broadcast %603 : vector<1x32xf32> to vector<10x32xf32>
    %684 = arith.addf %682, %683 : vector<10x32xf32>
    %685 = arith.addf %684, %594 : vector<10x32xf32>
    %cst_165 = arith.constant dense<0.000000e+00> : vector<10xf32>
    %686 = vector.multi_reduction <add>, %685, %cst_165 [1] : vector<10x32xf32> to vector<10xf32>
    %687 = vector.shape_cast %686 : vector<10xf32> to vector<10x1xf32>
    %cst_166 = arith.constant 3.200000e+01 : f32
    %688 = vector.broadcast %cst_166 : f32 to vector<10x1xf32>
    %689 = arith.divf %687, %688 : vector<10x1xf32>
    %690 = vector.broadcast %689 : vector<10x1xf32> to vector<10x32xf32>
    %691 = arith.subf %685, %690 : vector<10x32xf32>
    %692 = arith.mulf %691, %691 : vector<10x32xf32>
    %cst_167 = arith.constant dense<0.000000e+00> : vector<10xf32>
    %693 = vector.multi_reduction <add>, %692, %cst_167 [1] : vector<10x32xf32> to vector<10xf32>
    %694 = vector.shape_cast %693 : vector<10xf32> to vector<10x1xf32>
    %cst_168 = arith.constant 3.200000e+01 : f32
    %695 = vector.broadcast %cst_168 : f32 to vector<10x1xf32>
    %696 = arith.divf %694, %695 : vector<10x1xf32>
    %697 = vector.broadcast %689 : vector<10x1xf32> to vector<10x32xf32>
    %698 = arith.subf %685, %697 : vector<10x32xf32>
    %cst_169 = arith.constant 9.99999996E-13 : f32
    %699 = vector.broadcast %cst_169 : f32 to vector<10x1xf32>
    %700 = arith.addf %696, %699 : vector<10x1xf32>
    %701 = math.rsqrt %700 : vector<10x1xf32>
    %702 = vector.broadcast %701 : vector<10x1xf32> to vector<10x32xf32>
    %703 = arith.mulf %698, %702 : vector<10x32xf32>
    %704 = vector.broadcast %604 : vector<1x32xf32> to vector<10x32xf32>
    %705 = arith.mulf %703, %704 : vector<10x32xf32>
    %706 = vector.broadcast %605 : vector<1x32xf32> to vector<10x32xf32>
    %707 = arith.addf %705, %706 : vector<10x32xf32>
    %c3_170 = arith.constant 3 : index
    %c0_171 = arith.constant 0 : index
    %c0_172 = arith.constant 0 : index
    %708 = vector.load %arg6[%c3_170, %c0_171, %c0_172] : memref<5x32x64xbf16, #tpu.memory_space<vmem>>, vector<1x32x64xbf16>
    %709 = vector.shape_cast %708 : vector<1x32x64xbf16> to vector<32x64xbf16>
    %710 = vector.extract_strided_slice %0 {offsets = [39, 0], sizes = [1, 64], strides = [1, 1]} : vector<47x128xf32> to vector<1x64xf32>
    %c2_173 = arith.constant 2 : index
    %c0_174 = arith.constant 0 : index
    %c0_175 = arith.constant 0 : index
    %711 = vector.load %arg7[%c2_173, %c0_174, %c0_175] : memref<3x64x32xbf16, #tpu.memory_space<vmem>>, vector<1x64x32xbf16>
    %712 = vector.shape_cast %711 : vector<1x64x32xbf16> to vector<64x32xbf16>
    %713 = vector.extract_strided_slice %0 {offsets = [40, 0], sizes = [1, 32], strides = [1, 1]} : vector<47x128xf32> to vector<1x32xf32>
    %714 = vector.extract_strided_slice %0 {offsets = [41, 0], sizes = [1, 32], strides = [1, 1]} : vector<47x128xf32> to vector<1x32xf32>
    %715 = vector.extract_strided_slice %0 {offsets = [42, 0], sizes = [1, 32], strides = [1, 1]} : vector<47x128xf32> to vector<1x32xf32>
    %716 = arith.truncf %707 : vector<10x32xf32> to vector<10x32xbf16>
    %cst_176 = arith.constant dense<0.000000e+00> : vector<10x64xf32>
    %717 = tpu.matmul %716, %709, %cst_176 {dimension_numbers = #tpu.dot_dimension_numbers<[1], [0], [0], [1], [0, 0, 1, 1], [], []>} : vector<10x32xbf16>, vector<32x64xbf16>, vector<10x64xf32> -> vector<10x64xf32>
    %718 = vector.broadcast %710 : vector<1x64xf32> to vector<10x64xf32>
    %719 = arith.addf %717, %718 : vector<10x64xf32>
    %720 = arith.mulf %719, %719 : vector<10x64xf32>
    %721 = arith.mulf %719, %720 : vector<10x64xf32>
    %cst_177 = arith.constant 4.471500e-02 : f32
    %722 = vector.broadcast %cst_177 : f32 to vector<10x64xf32>
    %723 = arith.mulf %722, %721 : vector<10x64xf32>
    %724 = arith.addf %719, %723 : vector<10x64xf32>
    %cst_178 = arith.constant 0.797884583 : f32
    %725 = vector.broadcast %cst_178 : f32 to vector<10x64xf32>
    %726 = arith.mulf %725, %724 : vector<10x64xf32>
    %727 = math.tanh %726 : vector<10x64xf32>
    %cst_179 = arith.constant 1.000000e+00 : f32
    %728 = vector.broadcast %cst_179 : f32 to vector<10x64xf32>
    %729 = arith.addf %728, %727 : vector<10x64xf32>
    %cst_180 = arith.constant 5.000000e-01 : f32
    %730 = vector.broadcast %cst_180 : f32 to vector<10x64xf32>
    %731 = arith.mulf %730, %729 : vector<10x64xf32>
    %732 = arith.mulf %719, %731 : vector<10x64xf32>
    %733 = arith.truncf %732 : vector<10x64xf32> to vector<10x64xbf16>
    %cst_181 = arith.constant dense<0.000000e+00> : vector<10x32xf32>
    %734 = tpu.matmul %733, %712, %cst_181 {dimension_numbers = #tpu.dot_dimension_numbers<[1], [0], [0], [1], [0, 0, 1, 1], [], []>} : vector<10x64xbf16>, vector<64x32xbf16>, vector<10x32xf32> -> vector<10x32xf32>
    %735 = vector.broadcast %713 : vector<1x32xf32> to vector<10x32xf32>
    %736 = arith.addf %734, %735 : vector<10x32xf32>
    %737 = arith.addf %736, %707 : vector<10x32xf32>
    %cst_182 = arith.constant dense<0.000000e+00> : vector<10xf32>
    %738 = vector.multi_reduction <add>, %737, %cst_182 [1] : vector<10x32xf32> to vector<10xf32>
    %739 = vector.shape_cast %738 : vector<10xf32> to vector<10x1xf32>
    %cst_183 = arith.constant 3.200000e+01 : f32
    %740 = vector.broadcast %cst_183 : f32 to vector<10x1xf32>
    %741 = arith.divf %739, %740 : vector<10x1xf32>
    %742 = vector.broadcast %741 : vector<10x1xf32> to vector<10x32xf32>
    %743 = arith.subf %737, %742 : vector<10x32xf32>
    %744 = arith.mulf %743, %743 : vector<10x32xf32>
    %cst_184 = arith.constant dense<0.000000e+00> : vector<10xf32>
    %745 = vector.multi_reduction <add>, %744, %cst_184 [1] : vector<10x32xf32> to vector<10xf32>
    %746 = vector.shape_cast %745 : vector<10xf32> to vector<10x1xf32>
    %cst_185 = arith.constant 3.200000e+01 : f32
    %747 = vector.broadcast %cst_185 : f32 to vector<10x1xf32>
    %748 = arith.divf %746, %747 : vector<10x1xf32>
    %749 = vector.broadcast %741 : vector<10x1xf32> to vector<10x32xf32>
    %750 = arith.subf %737, %749 : vector<10x32xf32>
    %cst_186 = arith.constant 9.99999996E-13 : f32
    %751 = vector.broadcast %cst_186 : f32 to vector<10x1xf32>
    %752 = arith.addf %748, %751 : vector<10x1xf32>
    %753 = math.rsqrt %752 : vector<10x1xf32>
    %754 = vector.broadcast %753 : vector<10x1xf32> to vector<10x32xf32>
    %755 = arith.mulf %750, %754 : vector<10x32xf32>
    %756 = vector.broadcast %714 : vector<1x32xf32> to vector<10x32xf32>
    %757 = arith.mulf %755, %756 : vector<10x32xf32>
    %758 = vector.broadcast %715 : vector<1x32xf32> to vector<10x32xf32>
    %759 = arith.addf %757, %758 : vector<10x32xf32>
    %c2_187 = arith.constant 2 : index
    %c0_188 = arith.constant 0 : index
    %c0_189 = arith.constant 0 : index
    %760 = vector.load %arg8[%c2_187, %c0_188, %c0_189] : memref<3x32x128xbf16, #tpu.memory_space<vmem>>, vector<1x32x128xbf16>
    %761 = vector.shape_cast %760 : vector<1x32x128xbf16> to vector<32x128xbf16>
    %762 = arith.truncf %759 : vector<10x32xf32> to vector<10x32xbf16>
    %cst_190 = arith.constant dense<0.000000e+00> : vector<10x128xf32>
    %763 = tpu.matmul %762, %761, %cst_190 {dimension_numbers = #tpu.dot_dimension_numbers<[1], [0], [0], [1], [0, 0, 1, 1], [], []>} : vector<10x32xbf16>, vector<32x128xbf16>, vector<10x128xf32> -> vector<10x128xf32>
    %764 = vector.extract_strided_slice %763 {offsets = [0, 0], sizes = [10, 7], strides = [1, 1]} : vector<10x128xf32> to vector<10x7xf32>
    %765 = vector.extract_strided_slice %0 {offsets = [43, 0], sizes = [1, 7], strides = [1, 1]} : vector<47x128xf32> to vector<1x7xf32>
    %766 = vector.broadcast %765 : vector<1x7xf32> to vector<10x7xf32>
    %767 = arith.addf %764, %766 : vector<10x7xf32>
    %c0_191 = arith.constant 0 : index
    %c0_192 = arith.constant 0 : index
    %c0_193 = arith.constant 0 : index
    %768 = vector.load %arg8[%c0_191, %c0_192, %c0_193] : memref<3x32x128xbf16, #tpu.memory_space<vmem>>, vector<1x32x128xbf16>
    %769 = vector.shape_cast %768 : vector<1x32x128xbf16> to vector<32x128xbf16>
    %770 = arith.truncf %759 : vector<10x32xf32> to vector<10x32xbf16>
    %cst_194 = arith.constant dense<0.000000e+00> : vector<10x128xf32>
    %771 = tpu.matmul %770, %769, %cst_194 {dimension_numbers = #tpu.dot_dimension_numbers<[1], [0], [0], [1], [0, 0, 1, 1], [], []>} : vector<10x32xbf16>, vector<32x128xbf16>, vector<10x128xf32> -> vector<10x128xf32>
    %772 = vector.extract_strided_slice %0 {offsets = [44, 0], sizes = [1, 128], strides = [1, 1]} : vector<47x128xf32> to vector<1x128xf32>
    %773 = vector.broadcast %772 : vector<1x128xf32> to vector<10x128xf32>
    %774 = arith.addf %771, %773 : vector<10x128xf32>
    %c1_195 = arith.constant 1 : index
    %c0_196 = arith.constant 0 : index
    %c0_197 = arith.constant 0 : index
    %775 = vector.load %arg8[%c1_195, %c0_196, %c0_197] : memref<3x32x128xbf16, #tpu.memory_space<vmem>>, vector<1x32x128xbf16>
    %776 = vector.shape_cast %775 : vector<1x32x128xbf16> to vector<32x128xbf16>
    %777 = arith.truncf %189 : vector<16x32xf32> to vector<16x32xbf16>
    %cst_198 = arith.constant dense<0.000000e+00> : vector<16x128xf32>
    %778 = tpu.matmul %777, %776, %cst_198 {dimension_numbers = #tpu.dot_dimension_numbers<[1], [0], [0], [1], [0, 0, 1, 1], [], []>} : vector<16x32xbf16>, vector<32x128xbf16>, vector<16x128xf32> -> vector<16x128xf32>
    %779 = vector.extract_strided_slice %0 {offsets = [45, 0], sizes = [1, 128], strides = [1, 1]} : vector<47x128xf32> to vector<1x128xf32>
    %780 = vector.broadcast %779 : vector<1x128xf32> to vector<16x128xf32>
    %781 = arith.addf %778, %780 : vector<16x128xf32>
    %782 = vector.extract_strided_slice %0 {offsets = [46, 0], sizes = [1, 128], strides = [1, 1]} : vector<47x128xf32> to vector<1x128xf32>
    %783 = vector.extract_strided_slice %774 {offsets = [0, 0], sizes = [5, 128], strides = [1, 1]} : vector<10x128xf32> to vector<5x128xf32>
    %784 = vector.extract_strided_slice %781 {offsets = [0, 0], sizes = [8, 128], strides = [1, 1]} : vector<16x128xf32> to vector<8x128xf32>
    %785 = vector.shape_cast %783 : vector<5x128xf32> to vector<5x1x128xf32>
    %786 = vector.shape_cast %784 : vector<8x128xf32> to vector<1x8x128xf32>
    %787 = vector.broadcast %785 : vector<5x1x128xf32> to vector<5x8x128xf32>
    %788 = vector.broadcast %786 : vector<1x8x128xf32> to vector<5x8x128xf32>
    %789 = arith.addf %787, %788 : vector<5x8x128xf32>
    %790 = math.tanh %789 : vector<5x8x128xf32>
    %791 = vector.shape_cast %782 : vector<1x128xf32> to vector<1x1x128xf32>
    %792 = vector.broadcast %791 : vector<1x1x128xf32> to vector<5x8x128xf32>
    %793 = arith.mulf %790, %792 : vector<5x8x128xf32>
    %794 = vector.extract_strided_slice %793 {offsets = [0, 0, 0], sizes = [5, 8, 32], strides = [1, 1, 1]} : vector<5x8x128xf32> to vector<5x8x32xf32>
    %cst_199 = arith.constant dense<0.000000e+00> : vector<5x8xf32>
    %795 = vector.multi_reduction <add>, %794, %cst_199 [2] : vector<5x8x32xf32> to vector<5x8xf32>
    %796 = vector.extract_strided_slice %793 {offsets = [0, 0, 32], sizes = [5, 8, 32], strides = [1, 1, 1]} : vector<5x8x128xf32> to vector<5x8x32xf32>
    %cst_200 = arith.constant dense<0.000000e+00> : vector<5x8xf32>
    %797 = vector.multi_reduction <add>, %796, %cst_200 [2] : vector<5x8x32xf32> to vector<5x8xf32>
    %798 = vector.extract_strided_slice %793 {offsets = [0, 0, 64], sizes = [5, 8, 32], strides = [1, 1, 1]} : vector<5x8x128xf32> to vector<5x8x32xf32>
    %cst_201 = arith.constant dense<0.000000e+00> : vector<5x8xf32>
    %799 = vector.multi_reduction <add>, %798, %cst_201 [2] : vector<5x8x32xf32> to vector<5x8xf32>
    %800 = vector.extract_strided_slice %793 {offsets = [0, 0, 96], sizes = [5, 8, 32], strides = [1, 1, 1]} : vector<5x8x128xf32> to vector<5x8x32xf32>
    %cst_202 = arith.constant dense<0.000000e+00> : vector<5x8xf32>
    %801 = vector.multi_reduction <add>, %800, %cst_202 [2] : vector<5x8x32xf32> to vector<5x8xf32>
    %802 = tpu.concatenate %795, %797, %799, %801 in 1 : vector<5x8xf32>, vector<5x8xf32>, vector<5x8xf32>, vector<5x8xf32> -> vector<5x32xf32>
    %803 = vector.extract_strided_slice %774 {offsets = [5, 0], sizes = [5, 128], strides = [1, 1]} : vector<10x128xf32> to vector<5x128xf32>
    %804 = vector.extract_strided_slice %781 {offsets = [8, 0], sizes = [8, 128], strides = [1, 1]} : vector<16x128xf32> to vector<8x128xf32>
    %805 = vector.shape_cast %803 : vector<5x128xf32> to vector<5x1x128xf32>
    %806 = vector.shape_cast %804 : vector<8x128xf32> to vector<1x8x128xf32>
    %807 = vector.broadcast %805 : vector<5x1x128xf32> to vector<5x8x128xf32>
    %808 = vector.broadcast %806 : vector<1x8x128xf32> to vector<5x8x128xf32>
    %809 = arith.addf %807, %808 : vector<5x8x128xf32>
    %810 = math.tanh %809 : vector<5x8x128xf32>
    %811 = vector.shape_cast %782 : vector<1x128xf32> to vector<1x1x128xf32>
    %812 = vector.broadcast %811 : vector<1x1x128xf32> to vector<5x8x128xf32>
    %813 = arith.mulf %810, %812 : vector<5x8x128xf32>
    %814 = vector.extract_strided_slice %813 {offsets = [0, 0, 0], sizes = [5, 8, 32], strides = [1, 1, 1]} : vector<5x8x128xf32> to vector<5x8x32xf32>
    %cst_203 = arith.constant dense<0.000000e+00> : vector<5x8xf32>
    %815 = vector.multi_reduction <add>, %814, %cst_203 [2] : vector<5x8x32xf32> to vector<5x8xf32>
    %816 = vector.extract_strided_slice %813 {offsets = [0, 0, 32], sizes = [5, 8, 32], strides = [1, 1, 1]} : vector<5x8x128xf32> to vector<5x8x32xf32>
    %cst_204 = arith.constant dense<0.000000e+00> : vector<5x8xf32>
    %817 = vector.multi_reduction <add>, %816, %cst_204 [2] : vector<5x8x32xf32> to vector<5x8xf32>
    %818 = vector.extract_strided_slice %813 {offsets = [0, 0, 64], sizes = [5, 8, 32], strides = [1, 1, 1]} : vector<5x8x128xf32> to vector<5x8x32xf32>
    %cst_205 = arith.constant dense<0.000000e+00> : vector<5x8xf32>
    %819 = vector.multi_reduction <add>, %818, %cst_205 [2] : vector<5x8x32xf32> to vector<5x8xf32>
    %820 = vector.extract_strided_slice %813 {offsets = [0, 0, 96], sizes = [5, 8, 32], strides = [1, 1, 1]} : vector<5x8x128xf32> to vector<5x8x32xf32>
    %cst_206 = arith.constant dense<0.000000e+00> : vector<5x8xf32>
    %821 = vector.multi_reduction <add>, %820, %cst_206 [2] : vector<5x8x32xf32> to vector<5x8xf32>
    %822 = tpu.concatenate %815, %817, %819, %821 in 1 : vector<5x8xf32>, vector<5x8xf32>, vector<5x8xf32>, vector<5x8xf32> -> vector<5x32xf32>
    %823 = tpu.concatenate %802, %822 in 0 : vector<5x32xf32>, vector<5x32xf32> -> vector<10x32xf32>
    %cst_207 = arith.constant 5.000000e-01 : f32
    %824 = vector.broadcast %cst_207 : f32 to vector<10x32xf32>
    %825 = arith.cmpf ogt, %5, %824 : vector<10x32xf32>
    %cst_208 = arith.constant -1.000000e+04 : f32
    %826 = vector.broadcast %cst_208 : f32 to vector<10x32xf32>
    %827 = arith.select %825, %823, %826 : vector<10x32xi1>, vector<10x32xf32>
    %828 = tpu.concatenate %827, %767 in 1 : vector<10x32xf32>, vector<10x7xf32> -> vector<10x39xf32>
    %c0_209 = arith.constant 0 : index
    %c0_210 = arith.constant 0 : index
    %829 = vector.load %arg9[%c0_209, %c0_210] : memref<10x39xf32, #tpu.memory_space<vmem>>, vector<10x39xf32>
    tpu.vector_store %arg9[%c0_209, %c0_210], %828 {strides = array<i32>} : memref<10x39xf32, #tpu.memory_space<vmem>>, vector<10x39xf32>,
    return
  }
  func.func @transform_0(%arg0: i32) -> (i32, i32) {
    %c0_i32 = arith.constant 0 : i32
    %c0_i32_0 = arith.constant 0 : i32
    %c0_i32_1 = arith.constant 0 : i32
    return %c0_i32, %c0_i32_0 : i32, i32
  }
  func.func @transform_1(%arg0: i32) -> (i32, i32) {
    %c0_i32 = arith.constant 0 : i32
    %c0_i32_0 = arith.constant 0 : i32
    %c0_i32_1 = arith.constant 0 : i32
    return %c0_i32, %c0_i32_0 : i32, i32
  }
  func.func @transform_2(%arg0: i32) -> (i32, i32) {
    %c0_i32 = arith.constant 0 : i32
    %c0_i32_0 = arith.constant 0 : i32
    %c0_i32_1 = arith.constant 0 : i32
    return %c0_i32, %c0_i32_0 : i32, i32
  }
  func.func @transform_3(%arg0: i32) -> (i32, i32, i32) {
    %c0_i32 = arith.constant 0 : i32
    %c0_i32_0 = arith.constant 0 : i32
    %c0_i32_1 = arith.constant 0 : i32
    %c0_i32_2 = arith.constant 0 : i32
    return %c0_i32, %c0_i32_0, %c0_i32_1 : i32, i32, i32
  }
  func.func @transform_4(%arg0: i32) -> (i32, i32, i32) {
    %c0_i32 = arith.constant 0 : i32
    %c0_i32_0 = arith.constant 0 : i32
    %c0_i32_1 = arith.constant 0 : i32
    %c0_i32_2 = arith.constant 0 : i32
    return %c0_i32, %c0_i32_0, %c0_i32_1 : i32, i32, i32
  }
  func.func @transform_5(%arg0: i32) -> (i32, i32, i32) {
    %c0_i32 = arith.constant 0 : i32
    %c0_i32_0 = arith.constant 0 : i32
    %c0_i32_1 = arith.constant 0 : i32
    %c0_i32_2 = arith.constant 0 : i32
    return %c0_i32, %c0_i32_0, %c0_i32_1 : i32, i32, i32
  }
  func.func @transform_6(%arg0: i32) -> (i32, i32, i32) {
    %c0_i32 = arith.constant 0 : i32
    %c0_i32_0 = arith.constant 0 : i32
    %c0_i32_1 = arith.constant 0 : i32
    %c0_i32_2 = arith.constant 0 : i32
    return %c0_i32, %c0_i32_0, %c0_i32_1 : i32, i32, i32
  }
  func.func @transform_7(%arg0: i32) -> (i32, i32, i32) {
    %c0_i32 = arith.constant 0 : i32
    %c0_i32_0 = arith.constant 0 : i32
    %c0_i32_1 = arith.constant 0 : i32
    %c0_i32_2 = arith.constant 0 : i32
    return %c0_i32, %c0_i32_0, %c0_i32_1 : i32, i32, i32
  }
  func.func @transform_8(%arg0: i32) -> (i32, i32) {
    %c0_i32 = arith.constant 0 : i32
    %c0_i32_0 = arith.constant 0 : i32
    %c0_i32_1 = arith.constant 0 : i32
    return %c0_i32, %c0_i32_0 : i32, i32
  }
}

</mosaic_0001>

<llo_original>
// kernel: mul.18
$region0: #{mul.18}
  %s0 = inlined_call_operand.vmem [shape: f32[2,8], index: 0, kind: input, shape index: {}]
  %s1 = inlined_call_operand.vmem [shape: f32[16], index: 1, kind: output, shape index: {}]
  $region1: #{mul.18} parent=0
    #allocation0 [shape = 'u8[4096]{0}', space=vmem, size = 0x1000, scoped, tag = 'scoped mem for output reshape']
    #allocation1 [shape = 'u8[4096]{0}', space=vmem, size = 0x1000, scoped, tag = 'scoped mem for input reshape']
    %s3 = sshllo.u32 0, 2
    %v4 = vld [vmem:[%s0] sm:%s3]
    %5 = vst [vmem:[#allocation1] sm:%s3] %v4
    %v6 = vld [vmem:[#allocation1] sm:$0x1]
    %vm7 = vcmask 64512
    %8 = vst.msk [vmem:[#allocation0] sm:$0x1] %vm7, %v6
    %s9 = scalar_lea.vmem [#allocation1], 1
    %v10 = vld [vmem:[%s9] sm:$0x1]
    %11 = vrot.lane.b32.xlu0 %v10, 8
    %v12 = vpop.permute.xlu0 %11
    %vm13 = vcmask 130112
    %14 = vst.msk [vmem:[#allocation0] sm:$0x1] %vm13, %v12
    %s16 = sshllo.u32 0, 1
    %v18 = vld [vmem:[#allocation0] sm:%s16]
    %s19 = sshllo.u32 0, 1
    %20 = vst [vmem:[%s1] sm:%s19] %v18

// kernel: eq.29
$region0: #{eq.29}
  %s0 = inlined_call_operand.vmem [shape: s32[2,5], index: 0, kind: input, shape index: {}]
  %s1 = inlined_call_operand.vmem [shape: s32[10], index: 1, kind: output, shape index: {}]
  $region1: #{eq.29} parent=0
    #allocation0 [shape = 'u8[4096]{0}', space=vmem, size = 0x1000, scoped, tag = 'scoped mem for output reshape']
    #allocation1 [shape = 'u8[4096]{0}', space=vmem, size = 0x1000, scoped, tag = 'scoped mem for input reshape']
    %s3 = sshllo.u32 0, 2
    %v4 = vld [vmem:[%s0] sm:%s3]
    %5 = vst [vmem:[#allocation1] sm:%s3] %v4
    %v6 = vld [vmem:[#allocation1] sm:$0x1]
    %vm7 = vcmask 39936
    %8 = vst.msk [vmem:[#allocation0] sm:$0x1] %vm7, %v6
    %s9 = scalar_lea.vmem [#allocation1], 1
    %v10 = vld [vmem:[%s9] sm:$0x1]
    %11 = vrot.lane.b32.xlu0 %v10, 5
    %v12 = vpop.permute.xlu0 %11
    %vm13 = vcmask 80936
    %14 = vst.msk [vmem:[#allocation0] sm:$0x1] %vm13, %v12
    %s16 = sshllo.u32 0, 1
    %v18 = vld [vmem:[#allocation0] sm:%s16]
    %s19 = sshllo.u32 0, 1
    %20 = vst [vmem:[%s1] sm:%s19] %v18

// kernel: tile.9
$region0: #{tile.9}
  %s0 = inlined_call_operand.vmem [shape: f32[2,4,8], index: 0, kind: input, shape index: {}]
  %s1 = inlined_call_operand.vmem [shape: f32[2,32], index: 1, kind: output, shape index: {}]
  $region1: #{tile.9} parent=0
    #allocation0 [shape = 'u8[4096]{0}', space=vmem, size = 0x1000, scoped, tag = 'scoped mem for output reshape']
    #allocation1 [shape = 'u8[8192]{0}', space=vmem, size = 0x2000, scoped, tag = 'scoped mem for input reshape']
    %s3 = sshllo.u32 0, 4
    %s4 = scalar_lea.vmem %s0, 4
    %v5 = vld [vmem:[%s4] sm:%s3]
    %s6 = scalar_lea.vmem [#allocation1], 8
    %7 = vst [vmem:[%s6] sm:%s3] %v5
    %v8 = vld [vmem:[%s0] sm:%s3]
    %9 = vst [vmem:[#allocation1] sm:%s3] %v8
    %s10 = smov 3
    %v11 = vld [vmem:[#allocation1] ss:$8 sm:%s10]
    %vm12 = vcmask 64512
    %13 = vst.msk [vmem:[#allocation0] sm:$0x3] %vm12, %v11
    %s14 = scalar_lea.vmem [#allocation1], 3
    %s15 = smov 3
    %v16 = vld [vmem:[%s14] ss:$8 sm:%s15]
    %17 = vrot.lane.b32.xlu0 %v16, 24
    %v18 = vpop.permute.xlu0 %17
    %vm19 = vcmask 261312
    %20 = vst.msk [vmem:[#allocation0] sm:$0x3] %vm19, %v18
    %s21 = scalar_lea.vmem [#allocation1], 2
    %s22 = smov 3
    %v23 = vld [vmem:[%s21] ss:$8 sm:%s22]
    %24 = vrot.lane.b32.xlu0 %v23, 16
    %v25 = vpop.permute.xlu0 %24
    %vm26 = vcmask 195712
    %27 = vst.msk [vmem:[#allocation0] sm:$0x3] %vm26, %v25
    %s28 = scalar_lea.vmem [#allocation1], 1
    %s29 = smov 3
    %v30 = vld [vmem:[%s28] ss:$8 sm:%s29]
    %31 = vrot.lane.b32.xlu0 %v30, 8
    %v32 = vpop.permute.xlu0 %31
    %vm33 = vcmask 130112
    %34 = vst.msk [vmem:[#allocation0] sm:$0x3] %vm33, %v32
    %s36 = sshllo.u32 0, 2
    %v38 = vld [vmem:[#allocation0] sm:%s36]
    %s39 = sshllo.u32 0, 2
    %40 = vst [vmem:[%s1] sm:%s39] %v38

// kernel: set_pred4re_forward.1
$region0: #{set_pred4re_forward.1}
  #allocation0 [shape = 'u32[]', space=smem, size = 0x4, offset = 0x4, fixed_abs, tag = 'smem constant byte address 0x4 - core index']
  #allocation1 [shape = 'u32[144,128]{1,0:T(1,128)}', space=vmem, size = 0x12000, scoped, tag = 'internal scratch']
  %s0 = inlined_call_operand.vmem [shape: f32[16,32], index: 0, kind: input, shape index: {}]
  %s1 = inlined_call_operand.vmem [shape: f32[64,32], index: 1, kind: input, shape index: {}]
  %s2 = inlined_call_operand.vmem [shape: f32[47,128], index: 2, kind: input, shape index: {}]
  %s3 = inlined_call_operand.vmem [shape: bf16[3,32,96], index: 3, kind: input, shape index: {}]
  %s4 = inlined_call_operand.vmem [shape: bf16[7,32,32], index: 4, kind: input, shape index: {}]
  %s5 = inlined_call_operand.vmem [shape: bf16[5,32,64], index: 5, kind: input, shape index: {}]
  %s6 = inlined_call_operand.vmem [shape: bf16[3,64,32], index: 6, kind: input, shape index: {}]
  %s7 = inlined_call_operand.vmem [shape: bf16[3,32,128], index: 7, kind: input, shape index: {}]
  %s8 = inlined_call_operand.vmem [shape: f32[10,39], index: 8, kind: output, shape index: {}]
  %s9 = sld [smem:[#allocation0]]
  $region42: #{set_pred4re_forward.1} parent=0
    _
  %s11 = ssub.s32 1, %s9
  %s12 = scalar_select 0, %s11, %s9
  // Predicated region
  $region2: #{set_pred4re_forward.1} parent=0 // pred_check
    _
  $region3: #{set_pred4re_forward.1} parent=0 // pred_check_branch
    %14 = sbr.rel (0) target = $region5
  $region4: #{set_pred4re_forward.1} parent=0 // pred_region
    _
  $region5: #{set_pred4re_forward.1} parent=0 // pred_fallthru
    _
  // Predicated region
  $region6: #{set_pred4re_forward.1} parent=0 // pred_check
    _
  $region7: #{set_pred4re_forward.1} parent=0 // pred_check_branch
    %16 = sbr.rel (0) target = $region9
  $region8: #{set_pred4re_forward.1} parent=0 // pred_region
    _
  $region9: #{set_pred4re_forward.1} parent=0 // pred_fallthru
    _
  // Predicated region
  $region10: #{set_pred4re_forward.1} parent=0 // pred_check
    _
  $region11: #{set_pred4re_forward.1} parent=0 // pred_check_branch
    %18 = sbr.rel (0) target = $region13
  $region12: #{set_pred4re_forward.1} parent=0 // pred_region
    _
  $region13: #{set_pred4re_forward.1} parent=0 // pred_fallthru
    _
  // Predicated region
  $region14: #{set_pred4re_forward.1} parent=0 // pred_check
    _
  $region15: #{set_pred4re_forward.1} parent=0 // pred_check_branch
    %20 = sbr.rel (0) target = $region17
  $region16: #{set_pred4re_forward.1} parent=0 // pred_region
    _
  $region17: #{set_pred4re_forward.1} parent=0 // pred_fallthru
    _
  // Predicated region
  $region18: #{set_pred4re_forward.1} parent=0 // pred_check
    _
  $region19: #{set_pred4re_forward.1} parent=0 // pred_check_branch
    %22 = sbr.rel (0) target = $region21
  $region20: #{set_pred4re_forward.1} parent=0 // pred_region
    _
  $region21: #{set_pred4re_forward.1} parent=0 // pred_fallthru
    _
  // Predicated region
  $region22: #{set_pred4re_forward.1} parent=0 // pred_check
    _
  $region23: #{set_pred4re_forward.1} parent=0 // pred_check_branch
    %24 = sbr.rel (0) target = $region25
  $region24: #{set_pred4re_forward.1} parent=0 // pred_region
    _
  $region25: #{set_pred4re_forward.1} parent=0 // pred_fallthru
    _
  // Predicated region
  $region26: #{set_pred4re_forward.1} parent=0 // pred_check
    _
  $region27: #{set_pred4re_forward.1} parent=0 // pred_check_branch
    %26 = sbr.rel (0) target = $region29
  $region28: #{set_pred4re_forward.1} parent=0 // pred_region
    _
  $region29: #{set_pred4re_forward.1} parent=0 // pred_fallthru
    _
  // Predicated region
  $region30: #{set_pred4re_forward.1} parent=0 // pred_check
    _
  $region31: #{set_pred4re_forward.1} parent=0 // pred_check_branch
    %28 = sbr.rel (0) target = $region33
  $region32: #{set_pred4re_forward.1} parent=0 // pred_region
    _
  $region33: #{set_pred4re_forward.1} parent=0 // pred_fallthru
    _
  %v30 = vld [vmem:[%s2] sm:$0xff]
  %v31 = vld [vmem:[%s2 + $0x8] sm:$0xff]
  %v32 = vld [vmem:[%s2 + $0x10] sm:$0xff]
  %v33 = vld [vmem:[%s2 + $0x18] sm:$0xff]
  %v34 = vld [vmem:[%s2 + $0x20] sm:$0xff]
  %v35 = vld [vmem:[%s2 + $0x28] sm:$0x7f]
  %v36 = vld [vmem:[%s1] sm:$0xff]
  %v37 = vld [vmem:[%s1 + $0x8] sm:$0xff]
  %v38 = vld [vmem:[%s1 + $0x10] sm:$0xff]
  %v39 = vld [vmem:[%s1 + $0x18] sm:$0xff]
  %v40 = vld [vmem:[%s1 + $0x20] sm:$0xff]
  %v41 = vld [vmem:[%s1 + $0x28] sm:$0xff]
  %v42 = vld [vmem:[%s1 + $0x30] sm:$0xff]
  %v43 = vld [vmem:[%s1 + $0x38] sm:$0xff]
  %v44 = vld [vmem:[%s0] sm:$0xff]
  %v45 = vld [vmem:[%s0 + $0x8] sm:$0xff]
  %vm46 = vcmask 261120
  %v47 = vsel %vm46, %v44, 0.0
  %48 = vadd.xlane.f32.xlu0 %v47
  %v49 = vpop.xlane.xlu0 %48
  %v50 = vsel %vm46, %v45, 0.0
  %51 = vadd.xlane.f32.xlu0 %v50
  %v52 = vpop.xlane.xlu0 %51
  %v53 = vrcp.pop 32.0
  %v54 = vmul.f32 %v49, %v53
  %v55 = vmul.f32 %v52, %v53
  %v56 = vsub.f32 %v44, %v54
  %v57 = vsub.f32 %v45, %v55
  %v58 = vmul.f32 %v56, %v56
  %v59 = vmul.f32 %v57, %v57
  %v60 = vsel %vm46, %v58, 0.0
  %61 = vadd.xlane.f32.xlu0 %v60
  %v62 = vpop.xlane.xlu0 %61
  %v63 = vsel %vm46, %v59, 0.0
  %64 = vadd.xlane.f32.xlu0 %v63
  %v65 = vpop.xlane.xlu0 %64
  %v66 = vmul.f32 %v62, %v53
  %v67 = vmul.f32 %v65, %v53
  %v68 = vadd.f32 %v66, 1e-12
  %v69 = vadd.f32 %v67, 1e-12
  %v70 = vrsqrt.pop %v68
  %v71 = vrsqrt.pop %v69
  %v72 = vmul.f32 %v56, %v70
  %v73 = vmul.f32 %v57, %v71
  %v74 = vlaneseq
  %v75 = vshrl.u32 %v74, 7
  %v76 = vsub.s32 5, %v75
  %v77 = vrot.slane %v30, %v76
  %v78 = vmul.f32 %v72, %v77
  %v79 = vmul.f32 %v73, %v77
  %v80 = vlaneseq
  %v81 = vshrl.u32 %v80, 7
  %v82 = vsub.s32 6, %v81
  %v83 = vrot.slane %v30, %v82
  %v84 = vadd.f32 %v78, %v83
  %v85 = vadd.f32 %v79, %v83
  %v86 = vld [vmem:[%s3] sm:$0xf]
  %v87 = vld [vmem:[%s3 + $0x4] sm:$0xf]
  %v88 = vld [vmem:[%s3 + $0x8] sm:$0xf]
  %v89 = vld [vmem:[%s3 + $0xc] sm:$0xf]
  %v90 = vld [vmem:[%s4] sm:$0xf]
  %v91 = vld [vmem:[%s4 + $0x4] sm:$0xf]
  %v92 = vld [vmem:[%s4 + $0x8] sm:$0xf]
  %v93 = vld [vmem:[%s4 + $0xc] sm:$0xf]
  %v94 = vpack.c.bf16 %v85, %v84
  %v95 = vlaneseq
  %v96 = vshrl.u32 %v95, 7
  %v97 = vsub.s32 7, %v96
  %v98 = vrot.slane %v30, %v97
  %v103 = vunpack.c.l.b16 %v86
  %v104 = vunpack.c.l.b16 %v87
  %v105 = vunpack.c.l.b16 %v88
  %v106 = vunpack.c.l.b16 %v89
  %v107 = vpack.c.b16 %v104, %v103
  %v108 = vpack.c.b16 %v106, %v105
  %v112 = vsel %vm46, %v94, 0
  %114 = vmatprep.subr.bf16.mxu0 0
  %115 = vmatpush1.bf16.msra.mxu0 %v107
  %116 = vmatprep.subr.bf16.mxu0 0
  %117 = vmatpush1.bf16.msra.mxu0 %v108
  %118 = vmatprep.subr.bf16.mxu0 0
  %119 = vmatpush1.bf16.msra.mxu0 0
  %120 = vmatprep.subr.bf16.mxu0 0
  %121 = vmatpush1.bf16.msra.mxu0 0
  %122 = vmatprep.subr.bf16.mxu0 0
  %123 = vmatpush1.bf16.msra.mxu0 0
  %124 = vmatprep.subr.bf16.mxu0 0
  %125 = vmatpush1.bf16.msra.mxu0 0
  %126 = vmatprep.subr.bf16.mxu0 0
  %127 = vmatpush1.bf16.msra.mxu0 0
  %128 = vmatprep.subr.bf16.mxu0 0
  %129 = vmatpush1.bf16.msra.mxu0 0
  %130 = vmatprep.subr.bf16.mxu0 0
  %131 = vmatpush1.bf16.msra.mxu0 0
  %132 = vmatprep.subr.bf16.mxu0 0
  %133 = vmatpush1.bf16.msra.mxu0 0
  %134 = vmatprep.subr.bf16.mxu0 0
  %135 = vmatpush1.bf16.msra.mxu0 0
  %136 = vmatprep.subr.bf16.mxu0 0
  %137 = vmatpush1.bf16.msra.mxu0 0
  %138 = vmatprep.subr.bf16.mxu0 0
  %139 = vmatpush1.bf16.msra.mxu0 0
  %140 = vmatprep.subr.bf16.mxu0 0
  %141 = vmatpush1.bf16.msra.mxu0 0
  %142 = vmatprep.subr.bf16.mxu0 0
  %143 = vmatpush1.bf16.msra.mxu0 0
  %144 = vmatprep.subr.bf16.mxu0 0
  %145 = vmatpush1.bf16.msra.mxu0 0
  %146 = vmatprep.mubr.bf16.mxu0 0
  %147 = vmatmul.mubr.bf16.gmra.mrb[0].mxu0 %v112
  %v148 = vpop.f32.mrb[0].mxu0
  %v149 = vadd.f32 %v98, %v148
  %v150 = vpop.f32.mrb[0].mxu0
  %v151 = vpop.f32.mrb[0].mxu0
  %v152 = vadd.f32 %v98, %v151
  %v153 = vpop.f32.mrb[0].mxu0
  %154 = vdwg.mxu0
  %v155 = vpack.c.bf16 %v152, %v149
  %157 = vrot.lane.b32.xlu0 %v155, 96
  %v158 = vpop.permute.xlu0 %157
  %vm159 = vcmask 64512
  %v161 = vsel %vm159, %v155, 0
  %v164 = vsel %vm159, %v158, 0
  %166 = vmatprep.subr.bf16.mxu0 0
  %167 = vmatpush1.bf16.xpose.msra.mxu0 %v164
  %168 = vmatprep.subr.bf16.mxu0 0
  %169 = vmatpush1.bf16.xpose.msra.mxu0 0
  %170 = vmatprep.subr.bf16.mxu0 0
  %171 = vmatpush1.bf16.xpose.msra.mxu0 0
  %172 = vmatprep.subr.bf16.mxu0 0
  %173 = vmatpush1.bf16.xpose.msra.mxu0 0
  %174 = vmatprep.subr.bf16.mxu0 0
  %175 = vmatpush1.bf16.xpose.msra.mxu0 0
  %176 = vmatprep.subr.bf16.mxu0 0
  %177 = vmatpush1.bf16.xpose.msra.mxu0 0
  %178 = vmatprep.subr.bf16.mxu0 0
  %179 = vmatpush1.bf16.xpose.msra.mxu0 0
  %180 = vmatprep.subr.bf16.mxu0 0
  %181 = vmatpush1.bf16.xpose.msra.mxu0 0
  %182 = vmatprep.subr.bf16.mxu0 0
  %183 = vmatpush1.bf16.xpose.msra.mxu0 0
  %184 = vmatprep.subr.bf16.mxu0 0
  %185 = vmatpush1.bf16.xpose.msra.mxu0 0
  %186 = vmatprep.subr.bf16.mxu0 0
  %187 = vmatpush1.bf16.xpose.msra.mxu0 0
  %188 = vmatprep.subr.bf16.mxu0 0
  %189 = vmatpush1.bf16.xpose.msra.mxu0 0
  %190 = vmatprep.subr.bf16.mxu0 0
  %191 = vmatpush1.bf16.xpose.msra.mxu0 0
  %192 = vmatprep.subr.bf16.mxu0 0
  %193 = vmatpush1.bf16.xpose.msra.mxu0 0
  %194 = vmatprep.subr.bf16.mxu0 0
  %195 = vmatpush1.bf16.xpose.msra.mxu0 0
  %196 = vmatprep.subr.bf16.mxu0 0
  %197 = vmatpush1.bf16.xpose.msra.mxu0 0
  %198 = vmatprep.mubr.bf16.mxu0 0
  %199 = vmatmul.mubr.bf16.gmra.mrb[0].mxu0 %v161
  %v200 = vpop.f32.mrb[0].mxu0
  %v201 = vadd.f32 0.0, %v200
  %v202 = vpop.f32.mrb[0].mxu0
  %v203 = vpop.f32.mrb[0].mxu0
  %v204 = vadd.f32 0.0, %v203
  %v205 = vpop.f32.mrb[0].mxu0
  %206 = vdwg.mxu0
  %207 = vrot.lane.b32.xlu0 %v155, 120
  %v208 = vpop.permute.xlu0 %207
  %209 = vrot.lane.b32.xlu0 %v155, 88
  %v210 = vpop.permute.xlu0 %209
  %v212 = vsel %vm159, %v208, 0
  %v215 = vsel %vm159, %v210, 0
  %217 = vmatprep.subr.bf16.mxu0 0
  %218 = vmatpush1.bf16.xpose.msra.mxu0 %v215
  %219 = vmatprep.subr.bf16.mxu0 0
  %220 = vmatpush1.bf16.xpose.msra.mxu0 0
  %221 = vmatprep.subr.bf16.mxu0 0
  %222 = vmatpush1.bf16.xpose.msra.mxu0 0
  %223 = vmatprep.subr.bf16.mxu0 0
  %224 = vmatpush1.bf16.xpose.msra.mxu0 0
  %225 = vmatprep.subr.bf16.mxu0 0
  %226 = vmatpush1.bf16.xpose.msra.mxu0 0
  %227 = vmatprep.subr.bf16.mxu0 0
  %228 = vmatpush1.bf16.xpose.msra.mxu0 0
  %229 = vmatprep.subr.bf16.mxu0 0
  %230 = vmatpush1.bf16.xpose.msra.mxu0 0
  %231 = vmatprep.subr.bf16.mxu0 0
  %232 = vmatpush1.bf16.xpose.msra.mxu0 0
  %233 = vmatprep.subr.bf16.mxu0 0
  %234 = vmatpush1.bf16.xpose.msra.mxu0 0
  %235 = vmatprep.subr.bf16.mxu0 0
  %236 = vmatpush1.bf16.xpose.msra.mxu0 0
  %237 = vmatprep.subr.bf16.mxu0 0
  %238 = vmatpush1.bf16.xpose.msra.mxu0 0
  %239 = vmatprep.subr.bf16.mxu0 0
  %240 = vmatpush1.bf16.xpose.msra.mxu0 0
  %241 = vmatprep.subr.bf16.mxu0 0
  %242 = vmatpush1.bf16.xpose.msra.mxu0 0
  %243 = vmatprep.subr.bf16.mxu0 0
  %244 = vmatpush1.bf16.xpose.msra.mxu0 0
  %245 = vmatprep.subr.bf16.mxu0 0
  %246 = vmatpush1.bf16.xpose.msra.mxu0 0
  %247 = vmatprep.subr.bf16.mxu0 0
  %248 = vmatpush1.bf16.xpose.msra.mxu0 0
  %249 = vmatprep.mubr.bf16.mxu0 0
  %250 = vmatmul.mubr.bf16.gmra.mrb[0].mxu0 %v212
  %v251 = vpop.f32.mrb[0].mxu0
  %v252 = vadd.f32 0.0, %v251
  %v253 = vpop.f32.mrb[0].mxu0
  %v254 = vpop.f32.mrb[0].mxu0
  %v255 = vadd.f32 0.0, %v254
  %v256 = vpop.f32.mrb[0].mxu0
  %257 = vdwg.mxu0
  %258 = vrot.lane.b32.xlu0 %v155, 112
  %v259 = vpop.permute.xlu0 %258
  %260 = vrot.lane.b32.xlu0 %v155, 80
  %v261 = vpop.permute.xlu0 %260
  %v263 = vsel %vm159, %v259, 0
  %v266 = vsel %vm159, %v261, 0
  %268 = vmatprep.subr.bf16.mxu0 0
  %269 = vmatpush1.bf16.xpose.msra.mxu0 %v266
  %270 = vmatprep.subr.bf16.mxu0 0
  %271 = vmatpush1.bf16.xpose.msra.mxu0 0
  %272 = vmatprep.subr.bf16.mxu0 0
  %273 = vmatpush1.bf16.xpose.msra.mxu0 0
  %274 = vmatprep.subr.bf16.mxu0 0
  %275 = vmatpush1.bf16.xpose.msra.mxu0 0
  %276 = vmatprep.subr.bf16.mxu0 0
  %277 = vmatpush1.bf16.xpose.msra.mxu0 0
  %278 = vmatprep.subr.bf16.mxu0 0
  %279 = vmatpush1.bf16.xpose.msra.mxu0 0
  %280 = vmatprep.subr.bf16.mxu0 0
  %281 = vmatpush1.bf16.xpose.msra.mxu0 0
  %282 = vmatprep.subr.bf16.mxu0 0
  %283 = vmatpush1.bf16.xpose.msra.mxu0 0
  %284 = vmatprep.subr.bf16.mxu0 0
  %285 = vmatpush1.bf16.xpose.msra.mxu0 0
  %286 = vmatprep.subr.bf16.mxu0 0
  %287 = vmatpush1.bf16.xpose.msra.mxu0 0
  %288 = vmatprep.subr.bf16.mxu0 0
  %289 = vmatpush1.bf16.xpose.msra.mxu0 0
  %290 = vmatprep.subr.bf16.mxu0 0
  %291 = vmatpush1.bf16.xpose.msra.mxu0 0
  %292 = vmatprep.subr.bf16.mxu0 0
  %293 = vmatpush1.bf16.xpose.msra.mxu0 0
  %294 = vmatprep.subr.bf16.mxu0 0
  %295 = vmatpush1.bf16.xpose.msra.mxu0 0
  %296 = vmatprep.subr.bf16.mxu0 0
  %297 = vmatpush1.bf16.xpose.msra.mxu0 0
  %298 = vmatprep.subr.bf16.mxu0 0
  %299 = vmatpush1.bf16.xpose.msra.mxu0 0
  %300 = vmatprep.mubr.bf16.mxu0 0
  %301 = vmatmul.mubr.bf16.gmra.mrb[0].mxu0 %v263
  %v302 = vpop.f32.mrb[0].mxu0
  %v303 = vadd.f32 0.0, %v302
  %v304 = vpop.f32.mrb[0].mxu0
  %v305 = vpop.f32.mrb[0].mxu0
  %v306 = vadd.f32 0.0, %v305
  %v307 = vpop.f32.mrb[0].mxu0
  %308 = vdwg.mxu0
  %309 = vrot.lane.b32.xlu0 %v155, 104
  %v310 = vpop.permute.xlu0 %309
  %311 = vrot.lane.b32.xlu0 %v155, 72
  %v312 = vpop.permute.xlu0 %311
  %v314 = vsel %vm159, %v310, 0
  %v317 = vsel %vm159, %v312, 0
  %319 = vmatprep.subr.bf16.mxu0 0
  %320 = vmatpush1.bf16.xpose.msra.mxu0 %v317
  %321 = vmatprep.subr.bf16.mxu0 0
  %322 = vmatpush1.bf16.xpose.msra.mxu0 0
  %323 = vmatprep.subr.bf16.mxu0 0
  %324 = vmatpush1.bf16.xpose.msra.mxu0 0
  %325 = vmatprep.subr.bf16.mxu0 0
  %326 = vmatpush1.bf16.xpose.msra.mxu0 0
  %327 = vmatprep.subr.bf16.mxu0 0
  %328 = vmatpush1.bf16.xpose.msra.mxu0 0
  %329 = vmatprep.subr.bf16.mxu0 0
  %330 = vmatpush1.bf16.xpose.msra.mxu0 0
  %331 = vmatprep.subr.bf16.mxu0 0
  %332 = vmatpush1.bf16.xpose.msra.mxu0 0
  %333 = vmatprep.subr.bf16.mxu0 0
  %334 = vmatpush1.bf16.xpose.msra.mxu0 0
  %335 = vmatprep.subr.bf16.mxu0 0
  %336 = vmatpush1.bf16.xpose.msra.mxu0 0
  %337 = vmatprep.subr.bf16.mxu0 0
  %338 = vmatpush1.bf16.xpose.msra.mxu0 0
  %339 = vmatprep.subr.bf16.mxu0 0
  %340 = vmatpush1.bf16.xpose.msra.mxu0 0
  %341 = vmatprep.subr.bf16.mxu0 0
  %342 = vmatpush1.bf16.xpose.msra.mxu0 0
  %343 = vmatprep.subr.bf16.mxu0 0
  %344 = vmatpush1.bf16.xpose.msra.mxu0 0
  %345 = vmatprep.subr.bf16.mxu0 0
  %346 = vmatpush1.bf16.xpose.msra.mxu0 0
  %347 = vmatprep.subr.bf16.mxu0 0
  %348 = vmatpush1.bf16.xpose.msra.mxu0 0
  %349 = vmatprep.subr.bf16.mxu0 0
  %350 = vmatpush1.bf16.xpose.msra.mxu0 0
  %351 = vmatprep.mubr.bf16.mxu0 0
  %352 = vmatmul.mubr.bf16.gmra.mrb[0].mxu0 %v314
  %v353 = vpop.f32.mrb[0].mxu0
  %v354 = vadd.f32 0.0, %v353
  %v355 = vpop.f32.mrb[0].mxu0
  %v356 = vpop.f32.mrb[0].mxu0
  %v357 = vadd.f32 0.0, %v356
  %v358 = vpop.f32.mrb[0].mxu0
  %359 = vdwg.mxu0
  %v360 = vmul.f32 %v201, 0.35355338
  %v361 = vmul.f32 %v204, 0.35355338
  %v362 = vmul.f32 %v252, 0.35355338
  %v363 = vmul.f32 %v255, 0.35355338
  %v364 = vmul.f32 %v303, 0.35355338
  %v365 = vmul.f32 %v306, 0.35355338
  %v366 = vmul.f32 %v354, 0.35355338
  %v367 = vmul.f32 %v357, 0.35355338
  %v368 = vadd.f32 %v360, %v36
  %v369 = vadd.f32 %v361, %v37
  %v370 = vadd.f32 %v362, %v36
  %v371 = vadd.f32 %v363, %v37
  %v372 = vadd.f32 %v364, %v36
  %v373 = vadd.f32 %v365, %v37
  %v374 = vadd.f32 %v366, %v36
  %v375 = vadd.f32 %v367, %v37
  %vm376 = vcmask 130048
  %v377 = vsel %vm376, %v368, -inf
  %378 = vmax.xlane.f32.xlu0 %v377
  %v379 = vpop.xlane.xlu0 %378
  %v380 = vsel %vm376, %v369, -inf
  %381 = vmax.xlane.f32.xlu0 %v380
  %v382 = vpop.xlane.xlu0 %381
  %v383 = vsel %vm376, %v370, -inf
  %384 = vmax.xlane.f32.xlu0 %v383
  %v385 = vpop.xlane.xlu0 %384
  %v386 = vsel %vm376, %v371, -inf
  %387 = vmax.xlane.f32.xlu0 %v386
  %v388 = vpop.xlane.xlu0 %387
  %v389 = vsel %vm376, %v372, -inf
  %390 = vmax.xlane.f32.xlu0 %v389
  %v391 = vpop.xlane.xlu0 %390
  %v392 = vsel %vm376, %v373, -inf
  %393 = vmax.xlane.f32.xlu0 %v392
  %v394 = vpop.xlane.xlu0 %393
  %v395 = vsel %vm376, %v374, -inf
  %396 = vmax.xlane.f32.xlu0 %v395
  %v397 = vpop.xlane.xlu0 %396
  %v398 = vsel %vm376, %v375, -inf
  %399 = vmax.xlane.f32.xlu0 %v398
  %v400 = vpop.xlane.xlu0 %399
  %v401 = vsub.f32 %v368, %v379
  %v402 = vsub.f32 %v369, %v382
  %v403 = vsub.f32 %v370, %v385
  %v404 = vsub.f32 %v371, %v388
  %v405 = vsub.f32 %v372, %v391
  %v406 = vsub.f32 %v373, %v394
  %v407 = vsub.f32 %v374, %v397
  %v408 = vsub.f32 %v375, %v400
  %v409 = vmul.f32 %v401, 1.442695
  %v410 = vpow.pop %v409
  %v411 = vmul.f32 %v402, 1.442695
  %v412 = vpow.pop %v411
  %v413 = vmul.f32 %v403, 1.442695
  %v414 = vpow.pop %v413
  %v415 = vmul.f32 %v404, 1.442695
  %v416 = vpow.pop %v415
  %v417 = vmul.f32 %v405, 1.442695
  %v418 = vpow.pop %v417
  %v419 = vmul.f32 %v406, 1.442695
  %v420 = vpow.pop %v419
  %v421 = vmul.f32 %v407, 1.442695
  %v422 = vpow.pop %v421
  %v423 = vmul.f32 %v408, 1.442695
  %v424 = vpow.pop %v423
  %v425 = vsel %vm376, %v410, 0.0
  %426 = vadd.xlane.f32.xlu0 %v425
  %v427 = vpop.xlane.xlu0 %426
  %v428 = vsel %vm376, %v412, 0.0
  %429 = vadd.xlane.f32.xlu0 %v428
  %v430 = vpop.xlane.xlu0 %429
  %v431 = vsel %vm376, %v414, 0.0
  %432 = vadd.xlane.f32.xlu0 %v431
  %v433 = vpop.xlane.xlu0 %432
  %v434 = vsel %vm376, %v416, 0.0
  %435 = vadd.xlane.f32.xlu0 %v434
  %v436 = vpop.xlane.xlu0 %435
  %v437 = vsel %vm376, %v418, 0.0
  %438 = vadd.xlane.f32.xlu0 %v437
  %v439 = vpop.xlane.xlu0 %438
  %v440 = vsel %vm376, %v420, 0.0
  %441 = vadd.xlane.f32.xlu0 %v440
  %v442 = vpop.xlane.xlu0 %441
  %v443 = vsel %vm376, %v422, 0.0
  %444 = vadd.xlane.f32.xlu0 %v443
  %v445 = vpop.xlane.xlu0 %444
  %v446 = vsel %vm376, %v424, 0.0
  %447 = vadd.xlane.f32.xlu0 %v446
  %v448 = vpop.xlane.xlu0 %447
  %v449 = vrcp.pop %v427
  %v450 = vrcp.pop %v430
  %v451 = vrcp.pop %v433
  %v452 = vrcp.pop %v436
  %v453 = vrcp.pop %v439
  %v454 = vrcp.pop %v442
  %v455 = vrcp.pop %v445
  %v456 = vrcp.pop %v448
  %v457 = vmul.f32 %v410, %v449
  %v458 = vmul.f32 %v412, %v450
  %v459 = vmul.f32 %v414, %v451
  %v460 = vmul.f32 %v416, %v452
  %v461 = vmul.f32 %v418, %v453
  %v462 = vmul.f32 %v420, %v454
  %v463 = vmul.f32 %v422, %v455
  %v464 = vmul.f32 %v424, %v456
  %v465 = vpack.c.bf16 %v458, %v457
  %466 = vrot.lane.b32.xlu0 %v155, 64
  %v467 = vpop.permute.xlu0 %466
  %v470 = vsel %vm376, %v465, 0
  %472 = vmatprep.subr.bf16.mxu0 0
  %473 = vmatpush1.bf16.msra.mxu0 %v467
  %474 = vmatprep.subr.bf16.mxu0 0
  %475 = vmatpush1.bf16.msra.mxu0 0
  %476 = vmatprep.subr.bf16.mxu0 0
  %477 = vmatpush1.bf16.msra.mxu0 0
  %478 = vmatprep.subr.bf16.mxu0 0
  %479 = vmatpush1.bf16.msra.mxu0 0
  %480 = vmatprep.subr.bf16.mxu0 0
  %481 = vmatpush1.bf16.msra.mxu0 0
  %482 = vmatprep.subr.bf16.mxu0 0
  %483 = vmatpush1.bf16.msra.mxu0 0
  %484 = vmatprep.subr.bf16.mxu0 0
  %485 = vmatpush1.bf16.msra.mxu0 0
  %486 = vmatprep.subr.bf16.mxu0 0
  %487 = vmatpush1.bf16.msra.mxu0 0
  %488 = vmatprep.subr.bf16.mxu0 0
  %489 = vmatpush1.bf16.msra.mxu0 0
  %490 = vmatprep.subr.bf16.mxu0 0
  %491 = vmatpush1.bf16.msra.mxu0 0
  %492 = vmatprep.subr.bf16.mxu0 0
  %493 = vmatpush1.bf16.msra.mxu0 0
  %494 = vmatprep.subr.bf16.mxu0 0
  %495 = vmatpush1.bf16.msra.mxu0 0
  %496 = vmatprep.subr.bf16.mxu0 0
  %497 = vmatpush1.bf16.msra.mxu0 0
  %498 = vmatprep.subr.bf16.mxu0 0
  %499 = vmatpush1.bf16.msra.mxu0 0
  %500 = vmatprep.subr.bf16.mxu0 0
  %501 = vmatpush1.bf16.msra.mxu0 0
  %502 = vmatprep.subr.bf16.mxu0 0
  %503 = vmatpush1.bf16.msra.mxu0 0
  %504 = vmatprep.mubr.bf16.mxu0 0
  %505 = vmatmul.mubr.bf16.gmra.mrb[0].mxu0 %v470
  %v506 = vpop.f32.mrb[0].mxu0
  %v507 = vadd.f32 0.0, %v506
  %v508 = vpop.f32.mrb[0].mxu0
  %v509 = vpop.f32.mrb[0].mxu0
  %v510 = vadd.f32 0.0, %v509
  %v511 = vpop.f32.mrb[0].mxu0
  %512 = vdwg.mxu0
  %v513 = vpack.c.bf16 %v460, %v459
  %514 = vrot.lane.b32.xlu0 %v155, 56
  %v515 = vpop.permute.xlu0 %514
  %v518 = vsel %vm376, %v513, 0
  %520 = vmatprep.subr.bf16.mxu0 0
  %521 = vmatpush1.bf16.msra.mxu0 %v515
  %522 = vmatprep.subr.bf16.mxu0 0
  %523 = vmatpush1.bf16.msra.mxu0 0
  %524 = vmatprep.subr.bf16.mxu0 0
  %525 = vmatpush1.bf16.msra.mxu0 0
  %526 = vmatprep.subr.bf16.mxu0 0
  %527 = vmatpush1.bf16.msra.mxu0 0
  %528 = vmatprep.subr.bf16.mxu0 0
  %529 = vmatpush1.bf16.msra.mxu0 0
  %530 = vmatprep.subr.bf16.mxu0 0
  %531 = vmatpush1.bf16.msra.mxu0 0
  %532 = vmatprep.subr.bf16.mxu0 0
  %533 = vmatpush1.bf16.msra.mxu0 0
  %534 = vmatprep.subr.bf16.mxu0 0
  %535 = vmatpush1.bf16.msra.mxu0 0
  %536 = vmatprep.subr.bf16.mxu0 0
  %537 = vmatpush1.bf16.msra.mxu0 0
  %538 = vmatprep.subr.bf16.mxu0 0
  %539 = vmatpush1.bf16.msra.mxu0 0
  %540 = vmatprep.subr.bf16.mxu0 0
  %541 = vmatpush1.bf16.msra.mxu0 0
  %542 = vmatprep.subr.bf16.mxu0 0
  %543 = vmatpush1.bf16.msra.mxu0 0
  %544 = vmatprep.subr.bf16.mxu0 0
  %545 = vmatpush1.bf16.msra.mxu0 0
  %546 = vmatprep.subr.bf16.mxu0 0
  %547 = vmatpush1.bf16.msra.mxu0 0
  %548 = vmatprep.subr.bf16.mxu0 0
  %549 = vmatpush1.bf16.msra.mxu0 0
  %550 = vmatprep.subr.bf16.mxu0 0
  %551 = vmatpush1.bf16.msra.mxu0 0
  %552 = vmatprep.mubr.bf16.mxu0 0
  %553 = vmatmul.mubr.bf16.gmra.mrb[0].mxu0 %v518
  %v554 = vpop.f32.mrb[0].mxu0
  %v555 = vadd.f32 0.0, %v554
  %v556 = vpop.f32.mrb[0].mxu0
  %v557 = vpop.f32.mrb[0].mxu0
  %v558 = vadd.f32 0.0, %v557
  %v559 = vpop.f32.mrb[0].mxu0
  %560 = vdwg.mxu0
  %v561 = vpack.c.bf16 %v462, %v461
  %562 = vrot.lane.b32.xlu0 %v155, 48
  %v563 = vpop.permute.xlu0 %562
  %v566 = vsel %vm376, %v561, 0
  %568 = vmatprep.subr.bf16.mxu0 0
  %569 = vmatpush1.bf16.msra.mxu0 %v563
  %570 = vmatprep.subr.bf16.mxu0 0
  %571 = vmatpush1.bf16.msra.mxu0 0
  %572 = vmatprep.subr.bf16.mxu0 0
  %573 = vmatpush1.bf16.msra.mxu0 0
  %574 = vmatprep.subr.bf16.mxu0 0
  %575 = vmatpush1.bf16.msra.mxu0 0
  %576 = vmatprep.subr.bf16.mxu0 0
  %577 = vmatpush1.bf16.msra.mxu0 0
  %578 = vmatprep.subr.bf16.mxu0 0
  %579 = vmatpush1.bf16.msra.mxu0 0
  %580 = vmatprep.subr.bf16.mxu0 0
  %581 = vmatpush1.bf16.msra.mxu0 0
  %582 = vmatprep.subr.bf16.mxu0 0
  %583 = vmatpush1.bf16.msra.mxu0 0
  %584 = vmatprep.subr.bf16.mxu0 0
  %585 = vmatpush1.bf16.msra.mxu0 0
  %586 = vmatprep.subr.bf16.mxu0 0
  %587 = vmatpush1.bf16.msra.mxu0 0
  %588 = vmatprep.subr.bf16.mxu0 0
  %589 = vmatpush1.bf16.msra.mxu0 0
  %590 = vmatprep.subr.bf16.mxu0 0
  %591 = vmatpush1.bf16.msra.mxu0 0
  %592 = vmatprep.subr.bf16.mxu0 0
  %593 = vmatpush1.bf16.msra.mxu0 0
  %594 = vmatprep.subr.bf16.mxu0 0
  %595 = vmatpush1.bf16.msra.mxu0 0
  %596 = vmatprep.subr.bf16.mxu0 0
  %597 = vmatpush1.bf16.msra.mxu0 0
  %598 = vmatprep.subr.bf16.mxu0 0
  %599 = vmatpush1.bf16.msra.mxu0 0
  %600 = vmatprep.mubr.bf16.mxu0 0
  %601 = vmatmul.mubr.bf16.gmra.mrb[0].mxu0 %v566
  %v602 = vpop.f32.mrb[0].mxu0
  %v603 = vadd.f32 0.0, %v602
  %v604 = vpop.f32.mrb[0].mxu0
  %v605 = vpop.f32.mrb[0].mxu0
  %v606 = vadd.f32 0.0, %v605
  %v607 = vpop.f32.mrb[0].mxu0
  %608 = vdwg.mxu0
  %v609 = vpack.c.bf16 %v464, %v463
  %610 = vrot.lane.b32.xlu0 %v155, 40
  %v611 = vpop.permute.xlu0 %610
  %v614 = vsel %vm376, %v609, 0
  %616 = vmatprep.subr.bf16.mxu0 0
  %617 = vmatpush1.bf16.msra.mxu0 %v611
  %618 = vmatprep.subr.bf16.mxu0 0
  %619 = vmatpush1.bf16.msra.mxu0 0
  %620 = vmatprep.subr.bf16.mxu0 0
  %621 = vmatpush1.bf16.msra.mxu0 0
  %622 = vmatprep.subr.bf16.mxu0 0
  %623 = vmatpush1.bf16.msra.mxu0 0
  %624 = vmatprep.subr.bf16.mxu0 0
  %625 = vmatpush1.bf16.msra.mxu0 0
  %626 = vmatprep.subr.bf16.mxu0 0
  %627 = vmatpush1.bf16.msra.mxu0 0
  %628 = vmatprep.subr.bf16.mxu0 0
  %629 = vmatpush1.bf16.msra.mxu0 0
  %630 = vmatprep.subr.bf16.mxu0 0
  %631 = vmatpush1.bf16.msra.mxu0 0
  %632 = vmatprep.subr.bf16.mxu0 0
  %633 = vmatpush1.bf16.msra.mxu0 0
  %634 = vmatprep.subr.bf16.mxu0 0
  %635 = vmatpush1.bf16.msra.mxu0 0
  %636 = vmatprep.subr.bf16.mxu0 0
  %637 = vmatpush1.bf16.msra.mxu0 0
  %638 = vmatprep.subr.bf16.mxu0 0
  %639 = vmatpush1.bf16.msra.mxu0 0
  %640 = vmatprep.subr.bf16.mxu0 0
  %641 = vmatpush1.bf16.msra.mxu0 0
  %642 = vmatprep.subr.bf16.mxu0 0
  %643 = vmatpush1.bf16.msra.mxu0 0
  %644 = vmatprep.subr.bf16.mxu0 0
  %645 = vmatpush1.bf16.msra.mxu0 0
  %646 = vmatprep.subr.bf16.mxu0 0
  %647 = vmatpush1.bf16.msra.mxu0 0
  %648 = vmatprep.mubr.bf16.mxu0 0
  %649 = vmatmul.mubr.bf16.gmra.mrb[0].mxu0 %v614
  %v650 = vpop.f32.mrb[0].mxu0
  %v651 = vadd.f32 0.0, %v650
  %v652 = vpop.f32.mrb[0].mxu0
  %v653 = vpop.f32.mrb[0].mxu0
  %v654 = vadd.f32 0.0, %v653
  %v655 = vpop.f32.mrb[0].mxu0
  %656 = vdwg.mxu0
  %659 = vrot.lane.b32.xlu0 %v555, 8
  %v660 = vpop.permute.xlu0 %659
  %661 = vrot.lane.b32.xlu0 %v558, 8
  %v662 = vpop.permute.xlu0 %661
  %667 = vrot.lane.b32.xlu0 %v603, 16
  %v668 = vpop.permute.xlu0 %667
  %669 = vrot.lane.b32.xlu0 %v606, 16
  %v670 = vpop.permute.xlu0 %669
  %675 = vrot.lane.b32.xlu0 %v651, 24
  %v676 = vpop.permute.xlu0 %675
  %677 = vrot.lane.b32.xlu0 %v654, 24
  %v678 = vpop.permute.xlu0 %677
  %v681 = vsel %vm159, %v507, %v660
  %v682 = vsel %vm159, %v510, %v662
  %v683 = vsel %vm376, %v681, %v668
  %v684 = vsel %vm376, %v682, %v670
  %vm685 = vcmask 195584
  %v686 = vsel %vm685, %v683, %v676
  %v687 = vsel %vm685, %v684, %v678
  %v688 = vpack.c.bf16 %v687, %v686
  %v689 = vlaneseq
  %v690 = vshrl.u32 %v689, 7
  %v691 = vsub.s32 0, %v690
  %v692 = vrot.slane %v31, %v691
  %v697 = vunpack.c.l.b16 %v90
  %v698 = vunpack.c.l.b16 %v91
  %v699 = vunpack.c.l.b16 %v92
  %v700 = vunpack.c.l.b16 %v93
  %v701 = vpack.c.b16 %v698, %v697
  %v702 = vpack.c.b16 %v700, %v699
  %v706 = vsel %vm46, %v688, 0
  %708 = vmatprep.subr.bf16.mxu0 0
  %709 = vmatpush1.bf16.msra.mxu0 %v701
  %710 = vmatprep.subr.bf16.mxu0 0
  %711 = vmatpush1.bf16.msra.mxu0 %v702
  %712 = vmatprep.subr.bf16.mxu0 0
  %713 = vmatpush1.bf16.msra.mxu0 0
  %714 = vmatprep.subr.bf16.mxu0 0
  %715 = vmatpush1.bf16.msra.mxu0 0
  %716 = vmatprep.subr.bf16.mxu0 0
  %717 = vmatpush1.bf16.msra.mxu0 0
  %718 = vmatprep.subr.bf16.mxu0 0
  %719 = vmatpush1.bf16.msra.mxu0 0
  %720 = vmatprep.subr.bf16.mxu0 0
  %721 = vmatpush1.bf16.msra.mxu0 0
  %722 = vmatprep.subr.bf16.mxu0 0
  %723 = vmatpush1.bf16.msra.mxu0 0
  %724 = vmatprep.subr.bf16.mxu0 0
  %725 = vmatpush1.bf16.msra.mxu0 0
  %726 = vmatprep.subr.bf16.mxu0 0
  %727 = vmatpush1.bf16.msra.mxu0 0
  %728 = vmatprep.subr.bf16.mxu0 0
  %729 = vmatpush1.bf16.msra.mxu0 0
  %730 = vmatprep.subr.bf16.mxu0 0
  %731 = vmatpush1.bf16.msra.mxu0 0
  %732 = vmatprep.subr.bf16.mxu0 0
  %733 = vmatpush1.bf16.msra.mxu0 0
  %734 = vmatprep.subr.bf16.mxu0 0
  %735 = vmatpush1.bf16.msra.mxu0 0
  %736 = vmatprep.subr.bf16.mxu0 0
  %737 = vmatpush1.bf16.msra.mxu0 0
  %738 = vmatprep.subr.bf16.mxu0 0
  %739 = vmatpush1.bf16.msra.mxu0 0
  %740 = vmatprep.mubr.bf16.mxu0 0
  %741 = vmatmul.mubr.bf16.gmra.mrb[0].mxu0 %v706
  %v742 = vpop.f32.mrb[0].mxu0
  %v743 = vadd.f32 %v692, %v742
  %v744 = vpop.f32.mrb[0].mxu0
  %v745 = vpop.f32.mrb[0].mxu0
  %v746 = vadd.f32 %v692, %v745
  %v747 = vpop.f32.mrb[0].mxu0
  %748 = vdwg.mxu0
  %v749 = vadd.f32 %v743, %v84
  %v750 = vadd.f32 %v746, %v85
  %v751 = vsel %vm46, %v749, 0.0
  %752 = vadd.xlane.f32.xlu0 %v751
  %v753 = vpop.xlane.xlu0 %752
  %v754 = vsel %vm46, %v750, 0.0
  %755 = vadd.xlane.f32.xlu0 %v754
  %v756 = vpop.xlane.xlu0 %755
  %v757 = vmul.f32 %v753, %v53
  %v758 = vmul.f32 %v756, %v53
  %v759 = vsub.f32 %v749, %v757
  %v760 = vsub.f32 %v750, %v758
  %v761 = vmul.f32 %v759, %v759
  %v762 = vmul.f32 %v760, %v760
  %v763 = vsel %vm46, %v761, 0.0
  %764 = vadd.xlane.f32.xlu0 %v763
  %v765 = vpop.xlane.xlu0 %764
  %v766 = vsel %vm46, %v762, 0.0
  %767 = vadd.xlane.f32.xlu0 %v766
  %v768 = vpop.xlane.xlu0 %767
  %v769 = vmul.f32 %v765, %v53
  %v770 = vmul.f32 %v768, %v53
  %v771 = vadd.f32 %v769, 1e-12
  %v772 = vadd.f32 %v770, 1e-12
  %v773 = vrsqrt.pop %v771
  %v774 = vrsqrt.pop %v772
  %v775 = vmul.f32 %v759, %v773
  %v776 = vmul.f32 %v760, %v774
  %v777 = vlaneseq
  %v778 = vshrl.u32 %v777, 7
  %v779 = vsub.s32 1, %v778
  %v780 = vrot.slane %v31, %v779
  %v781 = vmul.f32 %v775, %v780
  %v782 = vmul.f32 %v776, %v780
  %v783 = vlaneseq
  %v784 = vshrl.u32 %v783, 7
  %v785 = vsub.s32 2, %v784
  %v786 = vrot.slane %v31, %v785
  %v787 = vadd.f32 %v781, %v786
  %v788 = vadd.f32 %v782, %v786
  %v789 = vld [vmem:[%s5] sm:$0xf]
  %v790 = vld [vmem:[%s5 + $0x4] sm:$0xf]
  %v791 = vld [vmem:[%s5 + $0x8] sm:$0xf]
  %v792 = vld [vmem:[%s5 + $0xc] sm:$0xf]
  %v793 = vld [vmem:[%s6] sm:$0xf]
  %v794 = vld [vmem:[%s6 + $0x4] sm:$0xf]
  %v795 = vld [vmem:[%s6 + $0x8] sm:$0xf]
  %v796 = vld [vmem:[%s6 + $0xc] sm:$0xf]
  %v797 = vld [vmem:[%s6 + $0x10] sm:$0xf]
  %v798 = vld [vmem:[%s6 + $0x14] sm:$0xf]
  %v799 = vld [vmem:[%s6 + $0x18] sm:$0xf]
  %v800 = vld [vmem:[%s6 + $0x1c] sm:$0xf]
  %v801 = vpack.c.bf16 %v788, %v787
  %v802 = vlaneseq
  %v803 = vshrl.u32 %v802, 7
  %v804 = vsub.s32 3, %v803
  %v805 = vrot.slane %v31, %v804
  %v810 = vunpack.c.l.b16 %v789
  %v811 = vunpack.c.l.b16 %v790
  %v812 = vunpack.c.l.b16 %v791
  %v813 = vunpack.c.l.b16 %v792
  %v814 = vpack.c.b16 %v811, %v810
  %v815 = vpack.c.b16 %v813, %v812
  %v819 = vsel %vm46, %v801, 0
  %821 = vmatprep.subr.bf16.mxu0 0
  %822 = vmatpush1.bf16.msra.mxu0 %v814
  %823 = vmatprep.subr.bf16.mxu0 0
  %824 = vmatpush1.bf16.msra.mxu0 %v815
  %825 = vmatprep.subr.bf16.mxu0 0
  %826 = vmatpush1.bf16.msra.mxu0 0
  %827 = vmatprep.subr.bf16.mxu0 0
  %828 = vmatpush1.bf16.msra.mxu0 0
  %829 = vmatprep.subr.bf16.mxu0 0
  %830 = vmatpush1.bf16.msra.mxu0 0
  %831 = vmatprep.subr.bf16.mxu0 0
  %832 = vmatpush1.bf16.msra.mxu0 0
  %833 = vmatprep.subr.bf16.mxu0 0
  %834 = vmatpush1.bf16.msra.mxu0 0
  %835 = vmatprep.subr.bf16.mxu0 0
  %836 = vmatpush1.bf16.msra.mxu0 0
  %837 = vmatprep.subr.bf16.mxu0 0
  %838 = vmatpush1.bf16.msra.mxu0 0
  %839 = vmatprep.subr.bf16.mxu0 0
  %840 = vmatpush1.bf16.msra.mxu0 0
  %841 = vmatprep.subr.bf16.mxu0 0
  %842 = vmatpush1.bf16.msra.mxu0 0
  %843 = vmatprep.subr.bf16.mxu0 0
  %844 = vmatpush1.bf16.msra.mxu0 0
  %845 = vmatprep.subr.bf16.mxu0 0
  %846 = vmatpush1.bf16.msra.mxu0 0
  %847 = vmatprep.subr.bf16.mxu0 0
  %848 = vmatpush1.bf16.msra.mxu0 0
  %849 = vmatprep.subr.bf16.mxu0 0
  %850 = vmatpush1.bf16.msra.mxu0 0
  %851 = vmatprep.subr.bf16.mxu0 0
  %852 = vmatpush1.bf16.msra.mxu0 0
  %853 = vmatprep.mubr.bf16.mxu0 0
  %854 = vmatmul.mubr.bf16.gmra.mrb[0].mxu0 %v819
  %v855 = vpop.f32.mrb[0].mxu0
  %v856 = vadd.f32 %v805, %v855
  %v857 = vpop.f32.mrb[0].mxu0
  %v858 = vpop.f32.mrb[0].mxu0
  %v859 = vadd.f32 %v805, %v858
  %v860 = vpop.f32.mrb[0].mxu0
  %861 = vdwg.mxu0
  %v862 = vmul.f32 %v856, %v856
  %v863 = vmul.f32 %v859, %v859
  %v864 = vmul.f32 %v856, %v862
  %v865 = vmul.f32 %v859, %v863
  %v866 = vmul.f32 %v864, 0.044715
  %v867 = vmul.f32 %v865, 0.044715
  %v868 = vadd.f32 %v856, %v866
  %v869 = vadd.f32 %v859, %v867
  %v870 = vmul.f32 %v868, 0.7978846
  %v871 = vmul.f32 %v869, 0.7978846
  %v872 = vtanh.pop %v870
  %v873 = vtanh.pop %v871
  %v874 = vadd.f32 %v872, 1.0
  %v875 = vadd.f32 %v873, 1.0
  %v876 = vmul.f32 %v874, 0.5
  %v877 = vmul.f32 %v875, 0.5
  %v878 = vmul.f32 %v856, %v876
  %v879 = vmul.f32 %v859, %v877
  %v880 = vpack.c.bf16 %v879, %v878
  %v881 = vlaneseq
  %v882 = vshrl.u32 %v881, 7
  %v883 = vsub.s32 4, %v882
  %v884 = vrot.slane %v31, %v883
  %v893 = vunpack.c.l.b16 %v793
  %v894 = vunpack.c.l.b16 %v794
  %v895 = vunpack.c.l.b16 %v795
  %v896 = vunpack.c.l.b16 %v796
  %v897 = vunpack.c.l.b16 %v797
  %v898 = vunpack.c.l.b16 %v798
  %v899 = vunpack.c.l.b16 %v799
  %v900 = vunpack.c.l.b16 %v800
  %v901 = vpack.c.b16 %v894, %v893
  %v902 = vpack.c.b16 %v896, %v895
  %v903 = vpack.c.b16 %v898, %v897
  %v904 = vpack.c.b16 %v900, %v899
  %vm909 = vcmask 523264
  %v911 = vsel %vm909, %v880, 0
  %913 = vmatprep.subr.bf16.mxu0 0
  %914 = vmatpush1.bf16.msra.mxu0 %v901
  %915 = vmatprep.subr.bf16.mxu0 0
  %916 = vmatpush1.bf16.msra.mxu0 %v902
  %917 = vmatprep.subr.bf16.mxu0 0
  %918 = vmatpush1.bf16.msra.mxu0 %v903
  %919 = vmatprep.subr.bf16.mxu0 0
  %920 = vmatpush1.bf16.msra.mxu0 %v904
  %921 = vmatprep.subr.bf16.mxu0 0
  %922 = vmatpush1.bf16.msra.mxu0 0
  %923 = vmatprep.subr.bf16.mxu0 0
  %924 = vmatpush1.bf16.msra.mxu0 0
  %925 = vmatprep.subr.bf16.mxu0 0
  %926 = vmatpush1.bf16.msra.mxu0 0
  %927 = vmatprep.subr.bf16.mxu0 0
  %928 = vmatpush1.bf16.msra.mxu0 0
  %929 = vmatprep.subr.bf16.mxu0 0
  %930 = vmatpush1.bf16.msra.mxu0 0
  %931 = vmatprep.subr.bf16.mxu0 0
  %932 = vmatpush1.bf16.msra.mxu0 0
  %933 = vmatprep.subr.bf16.mxu0 0
  %934 = vmatpush1.bf16.msra.mxu0 0
  %935 = vmatprep.subr.bf16.mxu0 0
  %936 = vmatpush1.bf16.msra.mxu0 0
  %937 = vmatprep.subr.bf16.mxu0 0
  %938 = vmatpush1.bf16.msra.mxu0 0
  %939 = vmatprep.subr.bf16.mxu0 0
  %940 = vmatpush1.bf16.msra.mxu0 0
  %941 = vmatprep.subr.bf16.mxu0 0
  %942 = vmatpush1.bf16.msra.mxu0 0
  %943 = vmatprep.subr.bf16.mxu0 0
  %944 = vmatpush1.bf16.msra.mxu0 0
  %945 = vmatprep.mubr.bf16.mxu0 0
  %946 = vmatmul.mubr.bf16.gmra.mrb[0].mxu0 %v911
  %v947 = vpop.f32.mrb[0].mxu0
  %v948 = vadd.f32 %v884, %v947
  %v949 = vpop.f32.mrb[0].mxu0
  %v950 = vpop.f32.mrb[0].mxu0
  %v951 = vadd.f32 %v884, %v950
  %v952 = vpop.f32.mrb[0].mxu0
  %953 = vdwg.mxu0
  %v954 = vadd.f32 %v948, %v787
  %v955 = vadd.f32 %v951, %v788
  %v956 = vsel %vm46, %v954, 0.0
  %957 = vadd.xlane.f32.xlu0 %v956
  %v958 = vpop.xlane.xlu0 %957
  %v959 = vsel %vm46, %v955, 0.0
  %960 = vadd.xlane.f32.xlu0 %v959
  %v961 = vpop.xlane.xlu0 %960
  %v962 = vmul.f32 %v958, %v53
  %v963 = vmul.f32 %v961, %v53
  %v964 = vsub.f32 %v954, %v962
  %v965 = vsub.f32 %v955, %v963
  %v966 = vmul.f32 %v964, %v964
  %v967 = vmul.f32 %v965, %v965
  %v968 = vsel %vm46, %v966, 0.0
  %969 = vadd.xlane.f32.xlu0 %v968
  %v970 = vpop.xlane.xlu0 %969
  %v971 = vsel %vm46, %v967, 0.0
  %972 = vadd.xlane.f32.xlu0 %v971
  %v973 = vpop.xlane.xlu0 %972
  %v974 = vmul.f32 %v970, %v53
  %v975 = vmul.f32 %v973, %v53
  %v976 = vadd.f32 %v974, 1e-12
  %v977 = vadd.f32 %v975, 1e-12
  %v978 = vrsqrt.pop %v976
  %v979 = vrsqrt.pop %v977
  %v980 = vmul.f32 %v964, %v978
  %v981 = vmul.f32 %v965, %v979
  %v982 = vlaneseq
  %v983 = vshrl.u32 %v982, 7
  %v984 = vsub.s32 5, %v983
  %v985 = vrot.slane %v31, %v984
  %v986 = vmul.f32 %v980, %v985
  %v987 = vmul.f32 %v981, %v985
  %v988 = vlaneseq
  %v989 = vshrl.u32 %v988, 7
  %v990 = vsub.s32 6, %v989
  %v991 = vrot.slane %v31, %v990
  %v992 = vadd.f32 %v986, %v991
  %v993 = vadd.f32 %v987, %v991
  %v995 = vrot.slane %v30, 3
  %vm997 = vcmask 1044480
  %v998 = vsel %vm997, %v30, %v995
  %v999 = vsel %vm46, %v998, 0.0
  %1000 = vadd.xlane.f32.xlu0 %v999
  %v1001 = vpop.xlane.xlu0 %1000
  %vm1002 = vcmask 254976
  %v1003 = vsel %vm1002, %v995, 0.0
  %1004 = vadd.xlane.f32.xlu0 %v1003
  %v1005 = vpop.xlane.xlu0 %1004
  %v1006 = vmul.f32 %v1001, %v53
  %v1007 = vmul.f32 %v1005, %v53
  %v1008 = vsub.f32 %v998, %v1006
  %v1009 = vsub.f32 %v995, %v1007
  %v1010 = vmul.f32 %v1008, %v1008
  %v1011 = vmul.f32 %v1009, %v1009
  %v1012 = vsel %vm46, %v1010, 0.0
  %1013 = vadd.xlane.f32.xlu0 %v1012
  %v1014 = vpop.xlane.xlu0 %1013
  %v1015 = vsel %vm1002, %v1011, 0.0
  %1016 = vadd.xlane.f32.xlu0 %v1015
  %v1017 = vpop.xlane.xlu0 %1016
  %v1018 = vmul.f32 %v1014, %v53
  %v1019 = vmul.f32 %v1017, %v53
  %v1020 = vadd.f32 %v1018, 1e-12
  %v1021 = vadd.f32 %v1019, 1e-12
  %v1022 = vrsqrt.pop %v1020
  %v1023 = vrsqrt.pop %v1021
  %v1024 = vmul.f32 %v1008, %v1022
  %v1025 = vmul.f32 %v1009, %v1023
  %v1026 = vlaneseq
  %v1027 = vshrl.u32 %v1026, 7
  %v1028 = vsub.s32 7, %v1027
  %v1029 = vrot.slane %v31, %v1028
  %v1030 = vmul.f32 %v1024, %v1029
  %v1031 = vmul.f32 %v1025, %v1029
  %v1032 = vlaneseq
  %v1033 = vshrl.u32 %v1032, 7
  %v1034 = vsub.s32 0, %v1033
  %v1035 = vrot.slane %v32, %v1034
  %v1036 = vadd.f32 %v1030, %v1035
  %v1037 = vadd.f32 %v1031, %v1035
  %s1038 = scalar_lea.vmem %s3, 16
  %v1039 = vld [vmem:[%s1038] sm:$0xf]
  %v1040 = vld [vmem:[%s1038 + $0x4] sm:$0xf]
  %v1041 = vld [vmem:[%s1038 + $0x8] sm:$0xf]
  %v1042 = vld [vmem:[%s1038 + $0xc] sm:$0xf]
  %s1043 = scalar_lea.vmem %s4, 16
  %v1044 = vld [vmem:[%s1043] sm:$0xf]
  %v1045 = vld [vmem:[%s1043 + $0x4] sm:$0xf]
  %v1046 = vld [vmem:[%s1043 + $0x8] sm:$0xf]
  %v1047 = vld [vmem:[%s1043 + $0xc] sm:$0xf]
  %v1048 = vpack.c.bf16 %v1037, %v1036
  %v1049 = vlaneseq
  %v1050 = vshrl.u32 %v1049, 7
  %v1051 = vsub.s32 1, %v1050
  %v1052 = vrot.slane %v32, %v1051
  %v1057 = vunpack.c.l.b16 %v1039
  %v1058 = vunpack.c.l.b16 %v1040
  %v1059 = vunpack.c.l.b16 %v1041
  %v1060 = vunpack.c.l.b16 %v1042
  %v1061 = vpack.c.b16 %v1058, %v1057
  %v1062 = vpack.c.b16 %v1060, %v1059
  %v1066 = vsel %vm46, %v1048, 0
  %1068 = vmatprep.subr.bf16.mxu0 0
  %1069 = vmatpush1.bf16.msra.mxu0 %v1061
  %1070 = vmatprep.subr.bf16.mxu0 0
  %1071 = vmatpush1.bf16.msra.mxu0 %v1062
  %1072 = vmatprep.subr.bf16.mxu0 0
  %1073 = vmatpush1.bf16.msra.mxu0 0
  %1074 = vmatprep.subr.bf16.mxu0 0
  %1075 = vmatpush1.bf16.msra.mxu0 0
  %1076 = vmatprep.subr.bf16.mxu0 0
  %1077 = vmatpush1.bf16.msra.mxu0 0
  %1078 = vmatprep.subr.bf16.mxu0 0
  %1079 = vmatpush1.bf16.msra.mxu0 0
  %1080 = vmatprep.subr.bf16.mxu0 0
  %1081 = vmatpush1.bf16.msra.mxu0 0
  %1082 = vmatprep.subr.bf16.mxu0 0
  %1083 = vmatpush1.bf16.msra.mxu0 0
  %1084 = vmatprep.subr.bf16.mxu0 0
  %1085 = vmatpush1.bf16.msra.mxu0 0
  %1086 = vmatprep.subr.bf16.mxu0 0
  %1087 = vmatpush1.bf16.msra.mxu0 0
  %1088 = vmatprep.subr.bf16.mxu0 0
  %1089 = vmatpush1.bf16.msra.mxu0 0
  %1090 = vmatprep.subr.bf16.mxu0 0
  %1091 = vmatpush1.bf16.msra.mxu0 0
  %1092 = vmatprep.subr.bf16.mxu0 0
  %1093 = vmatpush1.bf16.msra.mxu0 0
  %1094 = vmatprep.subr.bf16.mxu0 0
  %1095 = vmatpush1.bf16.msra.mxu0 0
  %1096 = vmatprep.subr.bf16.mxu0 0
  %1097 = vmatpush1.bf16.msra.mxu0 0
  %1098 = vmatprep.subr.bf16.mxu0 0
  %1099 = vmatpush1.bf16.msra.mxu0 0
  %1100 = vmatprep.mubr.bf16.mxu0 0
  %1101 = vmatmul.mubr.bf16.gmra.mrb[0].mxu0 %v1066
  %v1102 = vpop.f32.mrb[0].mxu0
  %v1103 = vadd.f32 %v1052, %v1102
  %v1104 = vpop.f32.mrb[0].mxu0
  %v1105 = vpop.f32.mrb[0].mxu0
  %v1106 = vadd.f32 %v1052, %v1105
  %v1107 = vpop.f32.mrb[0].mxu0
  %1108 = vdwg.mxu0
  %v1109 = vpack.c.bf16 %v1106, %v1103
  %1111 = vrot.lane.b32.xlu0 %v1109, 96
  %v1112 = vpop.permute.xlu0 %1111
  %v1114 = vsel %vm159, %v1109, 0
  %v1117 = vsel %vm159, %v1112, 0
  %1119 = vmatprep.subr.bf16.mxu0 0
  %1120 = vmatpush1.bf16.xpose.msra.mxu0 %v1117
  %1121 = vmatprep.subr.bf16.mxu0 0
  %1122 = vmatpush1.bf16.xpose.msra.mxu0 0
  %1123 = vmatprep.subr.bf16.mxu0 0
  %1124 = vmatpush1.bf16.xpose.msra.mxu0 0
  %1125 = vmatprep.subr.bf16.mxu0 0
  %1126 = vmatpush1.bf16.xpose.msra.mxu0 0
  %1127 = vmatprep.subr.bf16.mxu0 0
  %1128 = vmatpush1.bf16.xpose.msra.mxu0 0
  %1129 = vmatprep.subr.bf16.mxu0 0
  %1130 = vmatpush1.bf16.xpose.msra.mxu0 0
  %1131 = vmatprep.subr.bf16.mxu0 0
  %1132 = vmatpush1.bf16.xpose.msra.mxu0 0
  %1133 = vmatprep.subr.bf16.mxu0 0
  %1134 = vmatpush1.bf16.xpose.msra.mxu0 0
  %1135 = vmatprep.subr.bf16.mxu0 0
  %1136 = vmatpush1.bf16.xpose.msra.mxu0 0
  %1137 = vmatprep.subr.bf16.mxu0 0
  %1138 = vmatpush1.bf16.xpose.msra.mxu0 0
  %1139 = vmatprep.subr.bf16.mxu0 0
  %1140 = vmatpush1.bf16.xpose.msra.mxu0 0
  %1141 = vmatprep.subr.bf16.mxu0 0
  %1142 = vmatpush1.bf16.xpose.msra.mxu0 0
  %1143 = vmatprep.subr.bf16.mxu0 0
  %1144 = vmatpush1.bf16.xpose.msra.mxu0 0
  %1145 = vmatprep.subr.bf16.mxu0 0
  %1146 = vmatpush1.bf16.xpose.msra.mxu0 0
  %1147 = vmatprep.subr.bf16.mxu0 0
  %1148 = vmatpush1.bf16.xpose.msra.mxu0 0
  %1149 = vmatprep.subr.bf16.mxu0 0
  %1150 = vmatpush1.bf16.xpose.msra.mxu0 0
  %1151 = vmatprep.mubr.bf16.mxu0 0
  %1152 = vmatmul.mubr.bf16.gmra.mrb[0].mxu0 %v1114
  %v1153 = vpop.f32.mrb[0].mxu0
  %v1154 = vadd.f32 0.0, %v1153
  %v1155 = vpop.f32.mrb[0].mxu0
  %v1156 = vpop.f32.mrb[0].mxu0
  %v1157 = vadd.f32 0.0, %v1156
  %v1158 = vpop.f32.mrb[0].mxu0
  %1159 = vdwg.mxu0
  %1160 = vrot.lane.b32.xlu0 %v1109, 120
  %v1161 = vpop.permute.xlu0 %1160
  %1162 = vrot.lane.b32.xlu0 %v1109, 88
  %v1163 = vpop.permute.xlu0 %1162
  %v1165 = vsel %vm159, %v1161, 0
  %v1168 = vsel %vm159, %v1163, 0
  %1170 = vmatprep.subr.bf16.mxu0 0
  %1171 = vmatpush1.bf16.xpose.msra.mxu0 %v1168
  %1172 = vmatprep.subr.bf16.mxu0 0
  %1173 = vmatpush1.bf16.xpose.msra.mxu0 0
  %1174 = vmatprep.subr.bf16.mxu0 0
  %1175 = vmatpush1.bf16.xpose.msra.mxu0 0
  %1176 = vmatprep.subr.bf16.mxu0 0
  %1177 = vmatpush1.bf16.xpose.msra.mxu0 0
  %1178 = vmatprep.subr.bf16.mxu0 0
  %1179 = vmatpush1.bf16.xpose.msra.mxu0 0
  %1180 = vmatprep.subr.bf16.mxu0 0
  %1181 = vmatpush1.bf16.xpose.msra.mxu0 0
  %1182 = vmatprep.subr.bf16.mxu0 0
  %1183 = vmatpush1.bf16.xpose.msra.mxu0 0
  %1184 = vmatprep.subr.bf16.mxu0 0
  %1185 = vmatpush1.bf16.xpose.msra.mxu0 0
  %1186 = vmatprep.subr.bf16.mxu0 0
  %1187 = vmatpush1.bf16.xpose.msra.mxu0 0
  %1188 = vmatprep.subr.bf16.mxu0 0
  %1189 = vmatpush1.bf16.xpose.msra.mxu0 0
  %1190 = vmatprep.subr.bf16.mxu0 0
  %1191 = vmatpush1.bf16.xpose.msra.mxu0 0
  %1192 = vmatprep.subr.bf16.mxu0 0
  %1193 = vmatpush1.bf16.xpose.msra.mxu0 0
  %1194 = vmatprep.subr.bf16.mxu0 0
  %1195 = vmatpush1.bf16.xpose.msra.mxu0 0
  %1196 = vmatprep.subr.bf16.mxu0 0
  %1197 = vmatpush1.bf16.xpose.msra.mxu0 0
  %1198 = vmatprep.subr.bf16.mxu0 0
  %1199 = vmatpush1.bf16.xpose.msra.mxu0 0
  %1200 = vmatprep.subr.bf16.mxu0 0
  %1201 = vmatpush1.bf16.xpose.msra.mxu0 0
  %1202 = vmatprep.mubr.bf16.mxu0 0
  %1203 = vmatmul.mubr.bf16.gmra.mrb[0].mxu0 %v1165
  %v1204 = vpop.f32.mrb[0].mxu0
  %v1205 = vadd.f32 0.0, %v1204
  %v1206 = vpop.f32.mrb[0].mxu0
  %v1207 = vpop.f32.mrb[0].mxu0
  %v1208 = vadd.f32 0.0, %v1207
  %v1209 = vpop.f32.mrb[0].mxu0
  %1210 = vdwg.mxu0
  %1211 = vrot.lane.b32.xlu0 %v1109, 112
  %v1212 = vpop.permute.xlu0 %1211
  %1213 = vrot.lane.b32.xlu0 %v1109, 80
  %v1214 = vpop.permute.xlu0 %1213
  %v1216 = vsel %vm159, %v1212, 0
  %v1219 = vsel %vm159, %v1214, 0
  %1221 = vmatprep.subr.bf16.mxu0 0
  %1222 = vmatpush1.bf16.xpose.msra.mxu0 %v1219
  %1223 = vmatprep.subr.bf16.mxu0 0
  %1224 = vmatpush1.bf16.xpose.msra.mxu0 0
  %1225 = vmatprep.subr.bf16.mxu0 0
  %1226 = vmatpush1.bf16.xpose.msra.mxu0 0
  %1227 = vmatprep.subr.bf16.mxu0 0
  %1228 = vmatpush1.bf16.xpose.msra.mxu0 0
  %1229 = vmatprep.subr.bf16.mxu0 0
  %1230 = vmatpush1.bf16.xpose.msra.mxu0 0
  %1231 = vmatprep.subr.bf16.mxu0 0
  %1232 = vmatpush1.bf16.xpose.msra.mxu0 0
  %1233 = vmatprep.subr.bf16.mxu0 0
  %1234 = vmatpush1.bf16.xpose.msra.mxu0 0
  %1235 = vmatprep.subr.bf16.mxu0 0
  %1236 = vmatpush1.bf16.xpose.msra.mxu0 0
  %1237 = vmatprep.subr.bf16.mxu0 0
  %1238 = vmatpush1.bf16.xpose.msra.mxu0 0
  %1239 = vmatprep.subr.bf16.mxu0 0
  %1240 = vmatpush1.bf16.xpose.msra.mxu0 0
  %1241 = vmatprep.subr.bf16.mxu0 0
  %1242 = vmatpush1.bf16.xpose.msra.mxu0 0
  %1243 = vmatprep.subr.bf16.mxu0 0
  %1244 = vmatpush1.bf16.xpose.msra.mxu0 0
  %1245 = vmatprep.subr.bf16.mxu0 0
  %1246 = vmatpush1.bf16.xpose.msra.mxu0 0
  %1247 = vmatprep.subr.bf16.mxu0 0
  %1248 = vmatpush1.bf16.xpose.msra.mxu0 0
  %1249 = vmatprep.subr.bf16.mxu0 0
  %1250 = vmatpush1.bf16.xpose.msra.mxu0 0
  %1251 = vmatprep.subr.bf16.mxu0 0
  %1252 = vmatpush1.bf16.xpose.msra.mxu0 0
  %1253 = vmatprep.mubr.bf16.mxu0 0
  %1254 = vmatmul.mubr.bf16.gmra.mrb[0].mxu0 %v1216
  %v1255 = vpop.f32.mrb[0].mxu0
  %v1256 = vadd.f32 0.0, %v1255
  %v1257 = vpop.f32.mrb[0].mxu0
  %v1258 = vpop.f32.mrb[0].mxu0
  %v1259 = vadd.f32 0.0, %v1258
  %v1260 = vpop.f32.mrb[0].mxu0
  %1261 = vdwg.mxu0
  %1262 = vrot.lane.b32.xlu0 %v1109, 104
  %v1263 = vpop.permute.xlu0 %1262
  %1264 = vrot.lane.b32.xlu0 %v1109, 72
  %v1265 = vpop.permute.xlu0 %1264
  %v1267 = vsel %vm159, %v1263, 0
  %v1270 = vsel %vm159, %v1265, 0
  %1272 = vmatprep.subr.bf16.mxu0 0
  %1273 = vmatpush1.bf16.xpose.msra.mxu0 %v1270
  %1274 = vmatprep.subr.bf16.mxu0 0
  %1275 = vmatpush1.bf16.xpose.msra.mxu0 0
  %1276 = vmatprep.subr.bf16.mxu0 0
  %1277 = vmatpush1.bf16.xpose.msra.mxu0 0
  %1278 = vmatprep.subr.bf16.mxu0 0
  %1279 = vmatpush1.bf16.xpose.msra.mxu0 0
  %1280 = vmatprep.subr.bf16.mxu0 0
  %1281 = vmatpush1.bf16.xpose.msra.mxu0 0
  %1282 = vmatprep.subr.bf16.mxu0 0
  %1283 = vmatpush1.bf16.xpose.msra.mxu0 0
  %1284 = vmatprep.subr.bf16.mxu0 0
  %1285 = vmatpush1.bf16.xpose.msra.mxu0 0
  %1286 = vmatprep.subr.bf16.mxu0 0
  %1287 = vmatpush1.bf16.xpose.msra.mxu0 0
  %1288 = vmatprep.subr.bf16.mxu0 0
  %1289 = vmatpush1.bf16.xpose.msra.mxu0 0
  %1290 = vmatprep.subr.bf16.mxu0 0
  %1291 = vmatpush1.bf16.xpose.msra.mxu0 0
  %1292 = vmatprep.subr.bf16.mxu0 0
  %1293 = vmatpush1.bf16.xpose.msra.mxu0 0
  %1294 = vmatprep.subr.bf16.mxu0 0
  %1295 = vmatpush1.bf16.xpose.msra.mxu0 0
  %1296 = vmatprep.subr.bf16.mxu0 0
  %1297 = vmatpush1.bf16.xpose.msra.mxu0 0
  %1298 = vmatprep.subr.bf16.mxu0 0
  %1299 = vmatpush1.bf16.xpose.msra.mxu0 0
  %1300 = vmatprep.subr.bf16.mxu0 0
  %1301 = vmatpush1.bf16.xpose.msra.mxu0 0
  %1302 = vmatprep.subr.bf16.mxu0 0
  %1303 = vmatpush1.bf16.xpose.msra.mxu0 0
  %1304 = vmatprep.mubr.bf16.mxu0 0
  %1305 = vmatmul.mubr.bf16.gmra.mrb[0].mxu0 %v1267
  %v1306 = vpop.f32.mrb[0].mxu0
  %v1307 = vadd.f32 0.0, %v1306
  %v1308 = vpop.f32.mrb[0].mxu0
  %v1309 = vpop.f32.mrb[0].mxu0
  %v1310 = vadd.f32 0.0, %v1309
  %v1311 = vpop.f32.mrb[0].mxu0
  %1312 = vdwg.mxu0
  %v1313 = vmul.f32 %v1154, 0.35355338
  %v1314 = vmul.f32 %v1157, 0.35355338
  %v1315 = vmul.f32 %v1205, 0.35355338
  %v1316 = vmul.f32 %v1208, 0.35355338
  %v1317 = vmul.f32 %v1256, 0.35355338
  %v1318 = vmul.f32 %v1259, 0.35355338
  %v1319 = vmul.f32 %v1307, 0.35355338
  %v1320 = vmul.f32 %v1310, 0.35355338
  %v1321 = vadd.f32 %v1313, %v38
  %v1322 = vadd.f32 %v1314, %v39
  %v1323 = vadd.f32 %v1315, %v38
  %v1324 = vadd.f32 %v1316, %v39
  %v1325 = vadd.f32 %v1317, %v38
  %v1326 = vadd.f32 %v1318, %v39
  %v1327 = vadd.f32 %v1319, %v38
  %v1328 = vadd.f32 %v1320, %v39
  %vm1329 = vcmask 80896
  %v1330 = vsel %vm1329, %v1321, -inf
  %1331 = vmax.xlane.f32.xlu0 %v1330
  %v1332 = vpop.xlane.xlu0 %1331
  %vm1333 = vcmask 74752
  %v1334 = vsel %vm1333, %v1322, -inf
  %1335 = vmax.xlane.f32.xlu0 %v1334
  %v1336 = vpop.xlane.xlu0 %1335
  %v1337 = vsel %vm1329, %v1323, -inf
  %1338 = vmax.xlane.f32.xlu0 %v1337
  %v1339 = vpop.xlane.xlu0 %1338
  %v1340 = vsel %vm1333, %v1324, -inf
  %1341 = vmax.xlane.f32.xlu0 %v1340
  %v1342 = vpop.xlane.xlu0 %1341
  %v1343 = vsel %vm1329, %v1325, -inf
  %1344 = vmax.xlane.f32.xlu0 %v1343
  %v1345 = vpop.xlane.xlu0 %1344
  %v1346 = vsel %vm1333, %v1326, -inf
  %1347 = vmax.xlane.f32.xlu0 %v1346
  %v1348 = vpop.xlane.xlu0 %1347
  %v1349 = vsel %vm1329, %v1327, -inf
  %1350 = vmax.xlane.f32.xlu0 %v1349
  %v1351 = vpop.xlane.xlu0 %1350
  %v1352 = vsel %vm1333, %v1328, -inf
  %1353 = vmax.xlane.f32.xlu0 %v1352
  %v1354 = vpop.xlane.xlu0 %1353
  %v1355 = vsub.f32 %v1321, %v1332
  %v1356 = vsub.f32 %v1322, %v1336
  %v1357 = vsub.f32 %v1323, %v1339
  %v1358 = vsub.f32 %v1324, %v1342
  %v1359 = vsub.f32 %v1325, %v1345
  %v1360 = vsub.f32 %v1326, %v1348
  %v1361 = vsub.f32 %v1327, %v1351
  %v1362 = vsub.f32 %v1328, %v1354
  %v1363 = vmul.f32 %v1355, 1.442695
  %v1364 = vpow.pop %v1363
  %v1365 = vmul.f32 %v1356, 1.442695
  %v1366 = vpow.pop %v1365
  %v1367 = vmul.f32 %v1357, 1.442695
  %v1368 = vpow.pop %v1367
  %v1369 = vmul.f32 %v1358, 1.442695
  %v1370 = vpow.pop %v1369
  %v1371 = vmul.f32 %v1359, 1.442695
  %v1372 = vpow.pop %v1371
  %v1373 = vmul.f32 %v1360, 1.442695
  %v1374 = vpow.pop %v1373
  %v1375 = vmul.f32 %v1361, 1.442695
  %v1376 = vpow.pop %v1375
  %v1377 = vmul.f32 %v1362, 1.442695
  %v1378 = vpow.pop %v1377
  %v1379 = vsel %vm1329, %v1364, 0.0
  %1380 = vadd.xlane.f32.xlu0 %v1379
  %v1381 = vpop.xlane.xlu0 %1380
  %v1382 = vsel %vm1333, %v1366, 0.0
  %1383 = vadd.xlane.f32.xlu0 %v1382
  %v1384 = vpop.xlane.xlu0 %1383
  %v1385 = vsel %vm1329, %v1368, 0.0
  %1386 = vadd.xlane.f32.xlu0 %v1385
  %v1387 = vpop.xlane.xlu0 %1386
  %v1388 = vsel %vm1333, %v1370, 0.0
  %1389 = vadd.xlane.f32.xlu0 %v1388
  %v1390 = vpop.xlane.xlu0 %1389
  %v1391 = vsel %vm1329, %v1372, 0.0
  %1392 = vadd.xlane.f32.xlu0 %v1391
  %v1393 = vpop.xlane.xlu0 %1392
  %v1394 = vsel %vm1333, %v1374, 0.0
  %1395 = vadd.xlane.f32.xlu0 %v1394
  %v1396 = vpop.xlane.xlu0 %1395
  %v1397 = vsel %vm1329, %v1376, 0.0
  %1398 = vadd.xlane.f32.xlu0 %v1397
  %v1399 = vpop.xlane.xlu0 %1398
  %v1400 = vsel %vm1333, %v1378, 0.0
  %1401 = vadd.xlane.f32.xlu0 %v1400
  %v1402 = vpop.xlane.xlu0 %1401
  %v1403 = vrcp.pop %v1381
  %v1404 = vrcp.pop %v1384
  %v1405 = vrcp.pop %v1387
  %v1406 = vrcp.pop %v1390
  %v1407 = vrcp.pop %v1393
  %v1408 = vrcp.pop %v1396
  %v1409 = vrcp.pop %v1399
  %v1410 = vrcp.pop %v1402
  %v1411 = vmul.f32 %v1364, %v1403
  %v1412 = vmul.f32 %v1366, %v1404
  %v1413 = vmul.f32 %v1368, %v1405
  %v1414 = vmul.f32 %v1370, %v1406
  %v1415 = vmul.f32 %v1372, %v1407
  %v1416 = vmul.f32 %v1374, %v1408
  %v1417 = vmul.f32 %v1376, %v1409
  %v1418 = vmul.f32 %v1378, %v1410
  %v1419 = vpack.c.bf16 %v1412, %v1411
  %1420 = vrot.lane.b32.xlu0 %v1109, 64
  %v1421 = vpop.permute.xlu0 %1420
  %v1423 = vsel %vm1329, %v1419, 0
  %v1426 = vsel %vm997, %v1421, 0
  %1428 = vmatprep.subr.bf16.mxu0 0
  %1429 = vmatpush1.bf16.msra.mxu0 %v1426
  %1430 = vmatprep.subr.bf16.mxu0 0
  %1431 = vmatpush1.bf16.msra.mxu0 0
  %1432 = vmatprep.subr.bf16.mxu0 0
  %1433 = vmatpush1.bf16.msra.mxu0 0
  %1434 = vmatprep.subr.bf16.mxu0 0
  %1435 = vmatpush1.bf16.msra.mxu0 0
  %1436 = vmatprep.subr.bf16.mxu0 0
  %1437 = vmatpush1.bf16.msra.mxu0 0
  %1438 = vmatprep.subr.bf16.mxu0 0
  %1439 = vmatpush1.bf16.msra.mxu0 0
  %1440 = vmatprep.subr.bf16.mxu0 0
  %1441 = vmatpush1.bf16.msra.mxu0 0
  %1442 = vmatprep.subr.bf16.mxu0 0
  %1443 = vmatpush1.bf16.msra.mxu0 0
  %1444 = vmatprep.subr.bf16.mxu0 0
  %1445 = vmatpush1.bf16.msra.mxu0 0
  %1446 = vmatprep.subr.bf16.mxu0 0
  %1447 = vmatpush1.bf16.msra.mxu0 0
  %1448 = vmatprep.subr.bf16.mxu0 0
  %1449 = vmatpush1.bf16.msra.mxu0 0
  %1450 = vmatprep.subr.bf16.mxu0 0
  %1451 = vmatpush1.bf16.msra.mxu0 0
  %1452 = vmatprep.subr.bf16.mxu0 0
  %1453 = vmatpush1.bf16.msra.mxu0 0
  %1454 = vmatprep.subr.bf16.mxu0 0
  %1455 = vmatpush1.bf16.msra.mxu0 0
  %1456 = vmatprep.subr.bf16.mxu0 0
  %1457 = vmatpush1.bf16.msra.mxu0 0
  %1458 = vmatprep.subr.bf16.mxu0 0
  %1459 = vmatpush1.bf16.msra.mxu0 0
  %1460 = vmatprep.mubr.bf16.mxu0 0
  %1461 = vmatmul.mubr.bf16.gmra.mrb[0].mxu0 %v1423
  %v1462 = vpop.f32.mrb[0].mxu0
  %v1463 = vadd.f32 0.0, %v1462
  %v1464 = vpop.f32.mrb[0].mxu0
  %v1465 = vpop.f32.mrb[0].mxu0
  %v1466 = vadd.f32 0.0, %v1465
  %v1467 = vpop.f32.mrb[0].mxu0
  %1468 = vdwg.mxu0
  %v1469 = vpack.c.bf16 %v1414, %v1413
  %1470 = vrot.lane.b32.xlu0 %v1109, 56
  %v1471 = vpop.permute.xlu0 %1470
  %v1473 = vsel %vm1329, %v1469, 0
  %v1476 = vsel %vm997, %v1471, 0
  %1478 = vmatprep.subr.bf16.mxu0 0
  %1479 = vmatpush1.bf16.msra.mxu0 %v1476
  %1480 = vmatprep.subr.bf16.mxu0 0
  %1481 = vmatpush1.bf16.msra.mxu0 0
  %1482 = vmatprep.subr.bf16.mxu0 0
  %1483 = vmatpush1.bf16.msra.mxu0 0
  %1484 = vmatprep.subr.bf16.mxu0 0
  %1485 = vmatpush1.bf16.msra.mxu0 0
  %1486 = vmatprep.subr.bf16.mxu0 0
  %1487 = vmatpush1.bf16.msra.mxu0 0
  %1488 = vmatprep.subr.bf16.mxu0 0
  %1489 = vmatpush1.bf16.msra.mxu0 0
  %1490 = vmatprep.subr.bf16.mxu0 0
  %1491 = vmatpush1.bf16.msra.mxu0 0
  %1492 = vmatprep.subr.bf16.mxu0 0
  %1493 = vmatpush1.bf16.msra.mxu0 0
  %1494 = vmatprep.subr.bf16.mxu0 0
  %1495 = vmatpush1.bf16.msra.mxu0 0
  %1496 = vmatprep.subr.bf16.mxu0 0
  %1497 = vmatpush1.bf16.msra.mxu0 0
  %1498 = vmatprep.subr.bf16.mxu0 0
  %1499 = vmatpush1.bf16.msra.mxu0 0
  %1500 = vmatprep.subr.bf16.mxu0 0
  %1501 = vmatpush1.bf16.msra.mxu0 0
  %1502 = vmatprep.subr.bf16.mxu0 0
  %1503 = vmatpush1.bf16.msra.mxu0 0
  %1504 = vmatprep.subr.bf16.mxu0 0
  %1505 = vmatpush1.bf16.msra.mxu0 0
  %1506 = vmatprep.subr.bf16.mxu0 0
  %1507 = vmatpush1.bf16.msra.mxu0 0
  %1508 = vmatprep.subr.bf16.mxu0 0
  %1509 = vmatpush1.bf16.msra.mxu0 0
  %1510 = vmatprep.mubr.bf16.mxu0 0
  %1511 = vmatmul.mubr.bf16.gmra.mrb[0].mxu0 %v1473
  %v1512 = vpop.f32.mrb[0].mxu0
  %v1513 = vadd.f32 0.0, %v1512
  %v1514 = vpop.f32.mrb[0].mxu0
  %v1515 = vpop.f32.mrb[0].mxu0
  %v1516 = vadd.f32 0.0, %v1515
  %v1517 = vpop.f32.mrb[0].mxu0
  %1518 = vdwg.mxu0
  %v1519 = vpack.c.bf16 %v1416, %v1415
  %1520 = vrot.lane.b32.xlu0 %v1109, 48
  %v1521 = vpop.permute.xlu0 %1520
  %v1523 = vsel %vm1329, %v1519, 0
  %v1526 = vsel %vm997, %v1521, 0
  %1528 = vmatprep.subr.bf16.mxu0 0
  %1529 = vmatpush1.bf16.msra.mxu0 %v1526
  %1530 = vmatprep.subr.bf16.mxu0 0
  %1531 = vmatpush1.bf16.msra.mxu0 0
  %1532 = vmatprep.subr.bf16.mxu0 0
  %1533 = vmatpush1.bf16.msra.mxu0 0
  %1534 = vmatprep.subr.bf16.mxu0 0
  %1535 = vmatpush1.bf16.msra.mxu0 0
  %1536 = vmatprep.subr.bf16.mxu0 0
  %1537 = vmatpush1.bf16.msra.mxu0 0
  %1538 = vmatprep.subr.bf16.mxu0 0
  %1539 = vmatpush1.bf16.msra.mxu0 0
  %1540 = vmatprep.subr.bf16.mxu0 0
  %1541 = vmatpush1.bf16.msra.mxu0 0
  %1542 = vmatprep.subr.bf16.mxu0 0
  %1543 = vmatpush1.bf16.msra.mxu0 0
  %1544 = vmatprep.subr.bf16.mxu0 0
  %1545 = vmatpush1.bf16.msra.mxu0 0
  %1546 = vmatprep.subr.bf16.mxu0 0
  %1547 = vmatpush1.bf16.msra.mxu0 0
  %1548 = vmatprep.subr.bf16.mxu0 0
  %1549 = vmatpush1.bf16.msra.mxu0 0
  %1550 = vmatprep.subr.bf16.mxu0 0
  %1551 = vmatpush1.bf16.msra.mxu0 0
  %1552 = vmatprep.subr.bf16.mxu0 0
  %1553 = vmatpush1.bf16.msra.mxu0 0
  %1554 = vmatprep.subr.bf16.mxu0 0
  %1555 = vmatpush1.bf16.msra.mxu0 0
  %1556 = vmatprep.subr.bf16.mxu0 0
  %1557 = vmatpush1.bf16.msra.mxu0 0
  %1558 = vmatprep.subr.bf16.mxu0 0
  %1559 = vmatpush1.bf16.msra.mxu0 0
  %1560 = vmatprep.mubr.bf16.mxu0 0
  %1561 = vmatmul.mubr.bf16.gmra.mrb[0].mxu0 %v1523
  %v1562 = vpop.f32.mrb[0].mxu0
  %v1563 = vadd.f32 0.0, %v1562
  %v1564 = vpop.f32.mrb[0].mxu0
  %v1565 = vpop.f32.mrb[0].mxu0
  %v1566 = vadd.f32 0.0, %v1565
  %v1567 = vpop.f32.mrb[0].mxu0
  %1568 = vdwg.mxu0
  %v1569 = vpack.c.bf16 %v1418, %v1417
  %1570 = vrot.lane.b32.xlu0 %v1109, 40
  %v1571 = vpop.permute.xlu0 %1570
  %v1573 = vsel %vm1329, %v1569, 0
  %v1576 = vsel %vm997, %v1571, 0
  %1578 = vmatprep.subr.bf16.mxu0 0
  %1579 = vmatpush1.bf16.msra.mxu0 %v1576
  %1580 = vmatprep.subr.bf16.mxu0 0
  %1581 = vmatpush1.bf16.msra.mxu0 0
  %1582 = vmatprep.subr.bf16.mxu0 0
  %1583 = vmatpush1.bf16.msra.mxu0 0
  %1584 = vmatprep.subr.bf16.mxu0 0
  %1585 = vmatpush1.bf16.msra.mxu0 0
  %1586 = vmatprep.subr.bf16.mxu0 0
  %1587 = vmatpush1.bf16.msra.mxu0 0
  %1588 = vmatprep.subr.bf16.mxu0 0
  %1589 = vmatpush1.bf16.msra.mxu0 0
  %1590 = vmatprep.subr.bf16.mxu0 0
  %1591 = vmatpush1.bf16.msra.mxu0 0
  %1592 = vmatprep.subr.bf16.mxu0 0
  %1593 = vmatpush1.bf16.msra.mxu0 0
  %1594 = vmatprep.subr.bf16.mxu0 0
  %1595 = vmatpush1.bf16.msra.mxu0 0
  %1596 = vmatprep.subr.bf16.mxu0 0
  %1597 = vmatpush1.bf16.msra.mxu0 0
  %1598 = vmatprep.subr.bf16.mxu0 0
  %1599 = vmatpush1.bf16.msra.mxu0 0
  %1600 = vmatprep.subr.bf16.mxu0 0
  %1601 = vmatpush1.bf16.msra.mxu0 0
  %1602 = vmatprep.subr.bf16.mxu0 0
  %1603 = vmatpush1.bf16.msra.mxu0 0
  %1604 = vmatprep.subr.bf16.mxu0 0
  %1605 = vmatpush1.bf16.msra.mxu0 0
  %1606 = vmatprep.subr.bf16.mxu0 0
  %1607 = vmatpush1.bf16.msra.mxu0 0
  %1608 = vmatprep.subr.bf16.mxu0 0
  %1609 = vmatpush1.bf16.msra.mxu0 0
  %1610 = vmatprep.mubr.bf16.mxu0 0
  %1611 = vmatmul.mubr.bf16.gmra.mrb[0].mxu0 %v1573
  %v1612 = vpop.f32.mrb[0].mxu0
  %v1613 = vadd.f32 0.0, %v1612
  %v1614 = vpop.f32.mrb[0].mxu0
  %v1615 = vpop.f32.mrb[0].mxu0
  %v1616 = vadd.f32 0.0, %v1615
  %v1617 = vpop.f32.mrb[0].mxu0
  %1618 = vdwg.mxu0
  %1621 = vrot.lane.b32.xlu0 %v1513, 8
  %v1622 = vpop.permute.xlu0 %1621
  %1623 = vrot.lane.b32.xlu0 %v1516, 8
  %v1624 = vpop.permute.xlu0 %1623
  %1629 = vrot.lane.b32.xlu0 %v1563, 16
  %v1630 = vpop.permute.xlu0 %1629
  %1631 = vrot.lane.b32.xlu0 %v1566, 16
  %v1632 = vpop.permute.xlu0 %1631
  %1637 = vrot.lane.b32.xlu0 %v1613, 24
  %v1638 = vpop.permute.xlu0 %1637
  %1639 = vrot.lane.b32.xlu0 %v1616, 24
  %v1640 = vpop.permute.xlu0 %1639
  %v1643 = vsel %vm159, %v1463, %v1622
  %v1644 = vsel %vm159, %v1466, %v1624
  %v1645 = vsel %vm376, %v1643, %v1630
  %v1646 = vsel %vm376, %v1644, %v1632
  %v1647 = vsel %vm685, %v1645, %v1638
  %v1648 = vsel %vm685, %v1646, %v1640
  %v1649 = vpack.c.bf16 %v1648, %v1647
  %v1650 = vlaneseq
  %v1651 = vshrl.u32 %v1650, 7
  %v1652 = vsub.s32 2, %v1651
  %v1653 = vrot.slane %v32, %v1652
  %v1658 = vunpack.c.l.b16 %v1044
  %v1659 = vunpack.c.l.b16 %v1045
  %v1660 = vunpack.c.l.b16 %v1046
  %v1661 = vunpack.c.l.b16 %v1047
  %v1662 = vpack.c.b16 %v1659, %v1658
  %v1663 = vpack.c.b16 %v1661, %v1660
  %v1667 = vsel %vm46, %v1649, 0
  %1669 = vmatprep.subr.bf16.mxu0 0
  %1670 = vmatpush1.bf16.msra.mxu0 %v1662
  %1671 = vmatprep.subr.bf16.mxu0 0
  %1672 = vmatpush1.bf16.msra.mxu0 %v1663
  %1673 = vmatprep.subr.bf16.mxu0 0
  %1674 = vmatpush1.bf16.msra.mxu0 0
  %1675 = vmatprep.subr.bf16.mxu0 0
  %1676 = vmatpush1.bf16.msra.mxu0 0
  %1677 = vmatprep.subr.bf16.mxu0 0
  %1678 = vmatpush1.bf16.msra.mxu0 0
  %1679 = vmatprep.subr.bf16.mxu0 0
  %1680 = vmatpush1.bf16.msra.mxu0 0
  %1681 = vmatprep.subr.bf16.mxu0 0
  %1682 = vmatpush1.bf16.msra.mxu0 0
  %1683 = vmatprep.subr.bf16.mxu0 0
  %1684 = vmatpush1.bf16.msra.mxu0 0
  %1685 = vmatprep.subr.bf16.mxu0 0
  %1686 = vmatpush1.bf16.msra.mxu0 0
  %1687 = vmatprep.subr.bf16.mxu0 0
  %1688 = vmatpush1.bf16.msra.mxu0 0
  %1689 = vmatprep.subr.bf16.mxu0 0
  %1690 = vmatpush1.bf16.msra.mxu0 0
  %1691 = vmatprep.subr.bf16.mxu0 0
  %1692 = vmatpush1.bf16.msra.mxu0 0
  %1693 = vmatprep.subr.bf16.mxu0 0
  %1694 = vmatpush1.bf16.msra.mxu0 0
  %1695 = vmatprep.subr.bf16.mxu0 0
  %1696 = vmatpush1.bf16.msra.mxu0 0
  %1697 = vmatprep.subr.bf16.mxu0 0
  %1698 = vmatpush1.bf16.msra.mxu0 0
  %1699 = vmatprep.subr.bf16.mxu0 0
  %1700 = vmatpush1.bf16.msra.mxu0 0
  %1701 = vmatprep.mubr.bf16.mxu0 0
  %1702 = vmatmul.mubr.bf16.gmra.mrb[0].mxu0 %v1667
  %v1703 = vpop.f32.mrb[0].mxu0
  %v1704 = vadd.f32 %v1653, %v1703
  %v1705 = vpop.f32.mrb[0].mxu0
  %v1706 = vpop.f32.mrb[0].mxu0
  %v1707 = vadd.f32 %v1653, %v1706
  %v1708 = vpop.f32.mrb[0].mxu0
  %1709 = vdwg.mxu0
  %v1710 = vadd.f32 %v1704, %v1036
  %v1711 = vadd.f32 %v1707, %v1037
  %v1712 = vsel %vm46, %v1710, 0.0
  %1713 = vadd.xlane.f32.xlu0 %v1712
  %v1714 = vpop.xlane.xlu0 %1713
  %v1715 = vsel %vm1002, %v1711, 0.0
  %1716 = vadd.xlane.f32.xlu0 %v1715
  %v1717 = vpop.xlane.xlu0 %1716
  %v1718 = vmul.f32 %v1714, %v53
  %v1719 = vmul.f32 %v1717, %v53
  %v1720 = vsub.f32 %v1710, %v1718
  %v1721 = vsub.f32 %v1711, %v1719
  %v1722 = vmul.f32 %v1720, %v1720
  %v1723 = vmul.f32 %v1721, %v1721
  %v1724 = vsel %vm46, %v1722, 0.0
  %1725 = vadd.xlane.f32.xlu0 %v1724
  %v1726 = vpop.xlane.xlu0 %1725
  %v1727 = vsel %vm1002, %v1723, 0.0
  %1728 = vadd.xlane.f32.xlu0 %v1727
  %v1729 = vpop.xlane.xlu0 %1728
  %v1730 = vmul.f32 %v1726, %v53
  %v1731 = vmul.f32 %v1729, %v53
  %v1732 = vadd.f32 %v1730, 1e-12
  %v1733 = vadd.f32 %v1731, 1e-12
  %v1734 = vrsqrt.pop %v1732
  %v1735 = vrsqrt.pop %v1733
  %v1736 = vmul.f32 %v1720, %v1734
  %v1737 = vmul.f32 %v1721, %v1735
  %v1738 = vlaneseq
  %v1739 = vshrl.u32 %v1738, 7
  %v1740 = vsub.s32 3, %v1739
  %v1741 = vrot.slane %v32, %v1740
  %v1742 = vmul.f32 %v1736, %v1741
  %v1743 = vmul.f32 %v1737, %v1741
  %v1744 = vlaneseq
  %v1745 = vshrl.u32 %v1744, 7
  %v1746 = vsub.s32 4, %v1745
  %v1747 = vrot.slane %v32, %v1746
  %v1748 = vadd.f32 %v1742, %v1747
  %v1749 = vadd.f32 %v1743, %v1747
  %s1750 = scalar_lea.vmem %s4, 32
  %v1751 = vld [vmem:[%s1750] sm:$0xf]
  %v1752 = vld [vmem:[%s1750 + $0x4] sm:$0xf]
  %v1753 = vld [vmem:[%s1750 + $0x8] sm:$0xf]
  %v1754 = vld [vmem:[%s1750 + $0xc] sm:$0xf]
  %s1755 = scalar_lea.vmem %s5, 32
  %v1756 = vld [vmem:[%s1755] sm:$0xf]
  %v1757 = vld [vmem:[%s1755 + $0x4] sm:$0xf]
  %v1758 = vld [vmem:[%s1755 + $0x8] sm:$0xf]
  %v1759 = vld [vmem:[%s1755 + $0xc] sm:$0xf]
  %s1760 = scalar_lea.vmem %s4, 48
  %v1761 = vld [vmem:[%s1760] sm:$0xf]
  %v1762 = vld [vmem:[%s1760 + $0x4] sm:$0xf]
  %v1763 = vld [vmem:[%s1760 + $0x8] sm:$0xf]
  %v1764 = vld [vmem:[%s1760 + $0xc] sm:$0xf]
  %v1765 = vpack.c.bf16 %v1749, %v1748
  %v1766 = vlaneseq
  %v1767 = vshrl.u32 %v1766, 7
  %v1768 = vsub.s32 5, %v1767
  %v1769 = vrot.slane %v32, %v1768
  %v1774 = vunpack.c.l.b16 %v1751
  %v1775 = vunpack.c.l.b16 %v1752
  %v1776 = vunpack.c.l.b16 %v1753
  %v1777 = vunpack.c.l.b16 %v1754
  %v1778 = vpack.c.b16 %v1775, %v1774
  %v1779 = vpack.c.b16 %v1777, %v1776
  %v1783 = vsel %vm46, %v1765, 0
  %1785 = vmatprep.subr.bf16.mxu0 0
  %1786 = vmatpush1.bf16.msra.mxu0 %v1778
  %1787 = vmatprep.subr.bf16.mxu0 0
  %1788 = vmatpush1.bf16.msra.mxu0 %v1779
  %1789 = vmatprep.subr.bf16.mxu0 0
  %1790 = vmatpush1.bf16.msra.mxu0 0
  %1791 = vmatprep.subr.bf16.mxu0 0
  %1792 = vmatpush1.bf16.msra.mxu0 0
  %1793 = vmatprep.subr.bf16.mxu0 0
  %1794 = vmatpush1.bf16.msra.mxu0 0
  %1795 = vmatprep.subr.bf16.mxu0 0
  %1796 = vmatpush1.bf16.msra.mxu0 0
  %1797 = vmatprep.subr.bf16.mxu0 0
  %1798 = vmatpush1.bf16.msra.mxu0 0
  %1799 = vmatprep.subr.bf16.mxu0 0
  %1800 = vmatpush1.bf16.msra.mxu0 0
  %1801 = vmatprep.subr.bf16.mxu0 0
  %1802 = vmatpush1.bf16.msra.mxu0 0
  %1803 = vmatprep.subr.bf16.mxu0 0
  %1804 = vmatpush1.bf16.msra.mxu0 0
  %1805 = vmatprep.subr.bf16.mxu0 0
  %1806 = vmatpush1.bf16.msra.mxu0 0
  %1807 = vmatprep.subr.bf16.mxu0 0
  %1808 = vmatpush1.bf16.msra.mxu0 0
  %1809 = vmatprep.subr.bf16.mxu0 0
  %1810 = vmatpush1.bf16.msra.mxu0 0
  %1811 = vmatprep.subr.bf16.mxu0 0
  %1812 = vmatpush1.bf16.msra.mxu0 0
  %1813 = vmatprep.subr.bf16.mxu0 0
  %1814 = vmatpush1.bf16.msra.mxu0 0
  %1815 = vmatprep.subr.bf16.mxu0 0
  %1816 = vmatpush1.bf16.msra.mxu0 0
  %1817 = vmatprep.mubr.bf16.mxu0 0
  %1818 = vmatmul.mubr.bf16.gmra.mrb[0].mxu0 %v1783
  %v1819 = vpop.f32.mrb[0].mxu0
  %v1820 = vadd.f32 %v1769, %v1819
  %v1821 = vpop.f32.mrb[0].mxu0
  %v1822 = vpop.f32.mrb[0].mxu0
  %v1823 = vadd.f32 %v1769, %v1822
  %v1824 = vpop.f32.mrb[0].mxu0
  %1825 = vdwg.mxu0
  %v1826 = vpack.c.bf16 %v993, %v992
  %v1827 = vlaneseq
  %v1828 = vshrl.u32 %v1827, 7
  %v1829 = vsub.s32 6, %v1828
  %v1830 = vrot.slane %v32, %v1829
  %v1835 = vunpack.c.l.b16 %v1756
  %v1836 = vunpack.c.l.b16 %v1757
  %v1837 = vunpack.c.l.b16 %v1758
  %v1838 = vunpack.c.l.b16 %v1759
  %v1839 = vpack.c.b16 %v1836, %v1835
  %v1840 = vpack.c.b16 %v1838, %v1837
  %v1844 = vsel %vm46, %v1826, 0
  %1846 = vmatprep.subr.bf16.mxu0 0
  %1847 = vmatpush1.bf16.msra.mxu0 %v1839
  %1848 = vmatprep.subr.bf16.mxu0 0
  %1849 = vmatpush1.bf16.msra.mxu0 %v1840
  %1850 = vmatprep.subr.bf16.mxu0 0
  %1851 = vmatpush1.bf16.msra.mxu0 0
  %1852 = vmatprep.subr.bf16.mxu0 0
  %1853 = vmatpush1.bf16.msra.mxu0 0
  %1854 = vmatprep.subr.bf16.mxu0 0
  %1855 = vmatpush1.bf16.msra.mxu0 0
  %1856 = vmatprep.subr.bf16.mxu0 0
  %1857 = vmatpush1.bf16.msra.mxu0 0
  %1858 = vmatprep.subr.bf16.mxu0 0
  %1859 = vmatpush1.bf16.msra.mxu0 0
  %1860 = vmatprep.subr.bf16.mxu0 0
  %1861 = vmatpush1.bf16.msra.mxu0 0
  %1862 = vmatprep.subr.bf16.mxu0 0
  %1863 = vmatpush1.bf16.msra.mxu0 0
  %1864 = vmatprep.subr.bf16.mxu0 0
  %1865 = vmatpush1.bf16.msra.mxu0 0
  %1866 = vmatprep.subr.bf16.mxu0 0
  %1867 = vmatpush1.bf16.msra.mxu0 0
  %1868 = vmatprep.subr.bf16.mxu0 0
  %1869 = vmatpush1.bf16.msra.mxu0 0
  %1870 = vmatprep.subr.bf16.mxu0 0
  %1871 = vmatpush1.bf16.msra.mxu0 0
  %1872 = vmatprep.subr.bf16.mxu0 0
  %1873 = vmatpush1.bf16.msra.mxu0 0
  %1874 = vmatprep.subr.bf16.mxu0 0
  %1875 = vmatpush1.bf16.msra.mxu0 0
  %1876 = vmatprep.subr.bf16.mxu0 0
  %1877 = vmatpush1.bf16.msra.mxu0 0
  %1878 = vmatprep.mubr.bf16.mxu0 0
  %1879 = vmatmul.mubr.bf16.gmra.mrb[0].mxu0 %v1844
  %v1880 = vpop.f32.mrb[0].mxu0
  %v1881 = vadd.f32 %v1830, %v1880
  %v1882 = vpop.f32.mrb[0].mxu0
  %v1883 = vpop.f32.mrb[0].mxu0
  %v1884 = vadd.f32 %v1830, %v1883
  %v1885 = vpop.f32.mrb[0].mxu0
  %1886 = vdwg.mxu0
  %v1887 = vpack.c.bf16 %v1823, %v1820
  %v1888 = vpack.c.bf16 %v1884, %v1881
  %v1890 = vsel %vm159, %v1887, 0
  %v1893 = vsel %vm159, %v1888, 0
  %1895 = vmatprep.subr.bf16.mxu0 0
  %1896 = vmatpush1.bf16.xpose.msra.mxu0 %v1893
  %1897 = vmatprep.subr.bf16.mxu0 0
  %1898 = vmatpush1.bf16.xpose.msra.mxu0 0
  %1899 = vmatprep.subr.bf16.mxu0 0
  %1900 = vmatpush1.bf16.xpose.msra.mxu0 0
  %1901 = vmatprep.subr.bf16.mxu0 0
  %1902 = vmatpush1.bf16.xpose.msra.mxu0 0
  %1903 = vmatprep.subr.bf16.mxu0 0
  %1904 = vmatpush1.bf16.xpose.msra.mxu0 0
  %1905 = vmatprep.subr.bf16.mxu0 0
  %1906 = vmatpush1.bf16.xpose.msra.mxu0 0
  %1907 = vmatprep.subr.bf16.mxu0 0
  %1908 = vmatpush1.bf16.xpose.msra.mxu0 0
  %1909 = vmatprep.subr.bf16.mxu0 0
  %1910 = vmatpush1.bf16.xpose.msra.mxu0 0
  %1911 = vmatprep.subr.bf16.mxu0 0
  %1912 = vmatpush1.bf16.xpose.msra.mxu0 0
  %1913 = vmatprep.subr.bf16.mxu0 0
  %1914 = vmatpush1.bf16.xpose.msra.mxu0 0
  %1915 = vmatprep.subr.bf16.mxu0 0
  %1916 = vmatpush1.bf16.xpose.msra.mxu0 0
  %1917 = vmatprep.subr.bf16.mxu0 0
  %1918 = vmatpush1.bf16.xpose.msra.mxu0 0
  %1919 = vmatprep.subr.bf16.mxu0 0
  %1920 = vmatpush1.bf16.xpose.msra.mxu0 0
  %1921 = vmatprep.subr.bf16.mxu0 0
  %1922 = vmatpush1.bf16.xpose.msra.mxu0 0
  %1923 = vmatprep.subr.bf16.mxu0 0
  %1924 = vmatpush1.bf16.xpose.msra.mxu0 0
  %1925 = vmatprep.subr.bf16.mxu0 0
  %1926 = vmatpush1.bf16.xpose.msra.mxu0 0
  %1927 = vmatprep.mubr.bf16.mxu0 0
  %1928 = vmatmul.mubr.bf16.gmra.mrb[0].mxu0 %v1890
  %v1929 = vpop.f32.mrb[0].mxu0
  %v1930 = vadd.f32 0.0, %v1929
  %v1931 = vpop.f32.mrb[0].mxu0
  %v1932 = vpop.f32.mrb[0].mxu0
  %v1933 = vadd.f32 0.0, %v1932
  %v1934 = vpop.f32.mrb[0].mxu0
  %1935 = vdwg.mxu0
  %1937 = vrot.lane.b32.xlu0 %v1887, 120
  %v1938 = vpop.permute.xlu0 %1937
  %1940 = vrot.lane.b32.xlu0 %v1888, 120
  %v1941 = vpop.permute.xlu0 %1940
  %v1943 = vsel %vm159, %v1938, 0
  %v1946 = vsel %vm159, %v1941, 0
  %1948 = vmatprep.subr.bf16.mxu0 0
  %1949 = vmatpush1.bf16.xpose.msra.mxu0 %v1946
  %1950 = vmatprep.subr.bf16.mxu0 0
  %1951 = vmatpush1.bf16.xpose.msra.mxu0 0
  %1952 = vmatprep.subr.bf16.mxu0 0
  %1953 = vmatpush1.bf16.xpose.msra.mxu0 0
  %1954 = vmatprep.subr.bf16.mxu0 0
  %1955 = vmatpush1.bf16.xpose.msra.mxu0 0
  %1956 = vmatprep.subr.bf16.mxu0 0
  %1957 = vmatpush1.bf16.xpose.msra.mxu0 0
  %1958 = vmatprep.subr.bf16.mxu0 0
  %1959 = vmatpush1.bf16.xpose.msra.mxu0 0
  %1960 = vmatprep.subr.bf16.mxu0 0
  %1961 = vmatpush1.bf16.xpose.msra.mxu0 0
  %1962 = vmatprep.subr.bf16.mxu0 0
  %1963 = vmatpush1.bf16.xpose.msra.mxu0 0
  %1964 = vmatprep.subr.bf16.mxu0 0
  %1965 = vmatpush1.bf16.xpose.msra.mxu0 0
  %1966 = vmatprep.subr.bf16.mxu0 0
  %1967 = vmatpush1.bf16.xpose.msra.mxu0 0
  %1968 = vmatprep.subr.bf16.mxu0 0
  %1969 = vmatpush1.bf16.xpose.msra.mxu0 0
  %1970 = vmatprep.subr.bf16.mxu0 0
  %1971 = vmatpush1.bf16.xpose.msra.mxu0 0
  %1972 = vmatprep.subr.bf16.mxu0 0
  %1973 = vmatpush1.bf16.xpose.msra.mxu0 0
  %1974 = vmatprep.subr.bf16.mxu0 0
  %1975 = vmatpush1.bf16.xpose.msra.mxu0 0
  %1976 = vmatprep.subr.bf16.mxu0 0
  %1977 = vmatpush1.bf16.xpose.msra.mxu0 0
  %1978 = vmatprep.subr.bf16.mxu0 0
  %1979 = vmatpush1.bf16.xpose.msra.mxu0 0
  %1980 = vmatprep.mubr.bf16.mxu0 0
  %1981 = vmatmul.mubr.bf16.gmra.mrb[0].mxu0 %v1943
  %v1982 = vpop.f32.mrb[0].mxu0
  %v1983 = vadd.f32 0.0, %v1982
  %v1984 = vpop.f32.mrb[0].mxu0
  %v1985 = vpop.f32.mrb[0].mxu0
  %v1986 = vadd.f32 0.0, %v1985
  %v1987 = vpop.f32.mrb[0].mxu0
  %1988 = vdwg.mxu0
  %1989 = vrot.lane.b32.xlu0 %v1887, 112
  %v1990 = vpop.permute.xlu0 %1989
  %1991 = vrot.lane.b32.xlu0 %v1888, 112
  %v1992 = vpop.permute.xlu0 %1991
  %v1994 = vsel %vm159, %v1990, 0
  %v1997 = vsel %vm159, %v1992, 0
  %1999 = vmatprep.subr.bf16.mxu0 0
  %2000 = vmatpush1.bf16.xpose.msra.mxu0 %v1997
  %2001 = vmatprep.subr.bf16.mxu0 0
  %2002 = vmatpush1.bf16.xpose.msra.mxu0 0
  %2003 = vmatprep.subr.bf16.mxu0 0
  %2004 = vmatpush1.bf16.xpose.msra.mxu0 0
  %2005 = vmatprep.subr.bf16.mxu0 0
  %2006 = vmatpush1.bf16.xpose.msra.mxu0 0
  %2007 = vmatprep.subr.bf16.mxu0 0
  %2008 = vmatpush1.bf16.xpose.msra.mxu0 0
  %2009 = vmatprep.subr.bf16.mxu0 0
  %2010 = vmatpush1.bf16.xpose.msra.mxu0 0
  %2011 = vmatprep.subr.bf16.mxu0 0
  %2012 = vmatpush1.bf16.xpose.msra.mxu0 0
  %2013 = vmatprep.subr.bf16.mxu0 0
  %2014 = vmatpush1.bf16.xpose.msra.mxu0 0
  %2015 = vmatprep.subr.bf16.mxu0 0
  %2016 = vmatpush1.bf16.xpose.msra.mxu0 0
  %2017 = vmatprep.subr.bf16.mxu0 0
  %2018 = vmatpush1.bf16.xpose.msra.mxu0 0
  %2019 = vmatprep.subr.bf16.mxu0 0
  %2020 = vmatpush1.bf16.xpose.msra.mxu0 0
  %2021 = vmatprep.subr.bf16.mxu0 0
  %2022 = vmatpush1.bf16.xpose.msra.mxu0 0
  %2023 = vmatprep.subr.bf16.mxu0 0
  %2024 = vmatpush1.bf16.xpose.msra.mxu0 0
  %2025 = vmatprep.subr.bf16.mxu0 0
  %2026 = vmatpush1.bf16.xpose.msra.mxu0 0
  %2027 = vmatprep.subr.bf16.mxu0 0
  %2028 = vmatpush1.bf16.xpose.msra.mxu0 0
  %2029 = vmatprep.subr.bf16.mxu0 0
  %2030 = vmatpush1.bf16.xpose.msra.mxu0 0
  %2031 = vmatprep.mubr.bf16.mxu0 0
  %2032 = vmatmul.mubr.bf16.gmra.mrb[0].mxu0 %v1994
  %v2033 = vpop.f32.mrb[0].mxu0
  %v2034 = vadd.f32 0.0, %v2033
  %v2035 = vpop.f32.mrb[0].mxu0
  %v2036 = vpop.f32.mrb[0].mxu0
  %v2037 = vadd.f32 0.0, %v2036
  %v2038 = vpop.f32.mrb[0].mxu0
  %2039 = vdwg.mxu0
  %2040 = vrot.lane.b32.xlu0 %v1887, 104
  %v2041 = vpop.permute.xlu0 %2040
  %2042 = vrot.lane.b32.xlu0 %v1888, 104
  %v2043 = vpop.permute.xlu0 %2042
  %v2045 = vsel %vm159, %v2041, 0
  %v2048 = vsel %vm159, %v2043, 0
  %2050 = vmatprep.subr.bf16.mxu0 0
  %2051 = vmatpush1.bf16.xpose.msra.mxu0 %v2048
  %2052 = vmatprep.subr.bf16.mxu0 0
  %2053 = vmatpush1.bf16.xpose.msra.mxu0 0
  %2054 = vmatprep.subr.bf16.mxu0 0
  %2055 = vmatpush1.bf16.xpose.msra.mxu0 0
  %2056 = vmatprep.subr.bf16.mxu0 0
  %2057 = vmatpush1.bf16.xpose.msra.mxu0 0
  %2058 = vmatprep.subr.bf16.mxu0 0
  %2059 = vmatpush1.bf16.xpose.msra.mxu0 0
  %2060 = vmatprep.subr.bf16.mxu0 0
  %2061 = vmatpush1.bf16.xpose.msra.mxu0 0
  %2062 = vmatprep.subr.bf16.mxu0 0
  %2063 = vmatpush1.bf16.xpose.msra.mxu0 0
  %2064 = vmatprep.subr.bf16.mxu0 0
  %2065 = vmatpush1.bf16.xpose.msra.mxu0 0
  %2066 = vmatprep.subr.bf16.mxu0 0
  %2067 = vmatpush1.bf16.xpose.msra.mxu0 0
  %2068 = vmatprep.subr.bf16.mxu0 0
  %2069 = vmatpush1.bf16.xpose.msra.mxu0 0
  %2070 = vmatprep.subr.bf16.mxu0 0
  %2071 = vmatpush1.bf16.xpose.msra.mxu0 0
  %2072 = vmatprep.subr.bf16.mxu0 0
  %2073 = vmatpush1.bf16.xpose.msra.mxu0 0
  %2074 = vmatprep.subr.bf16.mxu0 0
  %2075 = vmatpush1.bf16.xpose.msra.mxu0 0
  %2076 = vmatprep.subr.bf16.mxu0 0
  %2077 = vmatpush1.bf16.xpose.msra.mxu0 0
  %2078 = vmatprep.subr.bf16.mxu0 0
  %2079 = vmatpush1.bf16.xpose.msra.mxu0 0
  %2080 = vmatprep.subr.bf16.mxu0 0
  %2081 = vmatpush1.bf16.xpose.msra.mxu0 0
  %2082 = vmatprep.mubr.bf16.mxu0 0
  %2083 = vmatmul.mubr.bf16.gmra.mrb[0].mxu0 %v2045
  %v2084 = vpop.f32.mrb[0].mxu0
  %v2085 = vadd.f32 0.0, %v2084
  %v2086 = vpop.f32.mrb[0].mxu0
  %v2087 = vpop.f32.mrb[0].mxu0
  %v2088 = vadd.f32 0.0, %v2087
  %v2089 = vpop.f32.mrb[0].mxu0
  %2090 = vdwg.mxu0
  %v2091 = vmul.f32 %v1930, 0.35355338
  %v2092 = vmul.f32 %v1933, 0.35355338
  %v2093 = vmul.f32 %v1983, 0.35355338
  %v2094 = vmul.f32 %v1986, 0.35355338
  %v2095 = vmul.f32 %v2034, 0.35355338
  %v2096 = vmul.f32 %v2037, 0.35355338
  %v2097 = vmul.f32 %v2085, 0.35355338
  %v2098 = vmul.f32 %v2088, 0.35355338
  %v2099 = vadd.f32 %v2091, %v40
  %v2100 = vadd.f32 %v2092, %v41
  %v2101 = vadd.f32 %v2093, %v40
  %v2102 = vadd.f32 %v2094, %v41
  %v2103 = vadd.f32 %v2095, %v40
  %v2104 = vadd.f32 %v2096, %v41
  %v2105 = vadd.f32 %v2097, %v40
  %v2106 = vadd.f32 %v2098, %v41
  %v2107 = vsel %vm376, %v2099, -inf
  %2108 = vmax.xlane.f32.xlu0 %v2107
  %v2109 = vpop.xlane.xlu0 %2108
  %vm2110 = vcmask 123904
  %v2111 = vsel %vm2110, %v2100, -inf
  %2112 = vmax.xlane.f32.xlu0 %v2111
  %v2113 = vpop.xlane.xlu0 %2112
  %v2114 = vsel %vm376, %v2101, -inf
  %2115 = vmax.xlane.f32.xlu0 %v2114
  %v2116 = vpop.xlane.xlu0 %2115
  %v2117 = vsel %vm2110, %v2102, -inf
  %2118 = vmax.xlane.f32.xlu0 %v2117
  %v2119 = vpop.xlane.xlu0 %2118
  %v2120 = vsel %vm376, %v2103, -inf
  %2121 = vmax.xlane.f32.xlu0 %v2120
  %v2122 = vpop.xlane.xlu0 %2121
  %v2123 = vsel %vm2110, %v2104, -inf
  %2124 = vmax.xlane.f32.xlu0 %v2123
  %v2125 = vpop.xlane.xlu0 %2124
  %v2126 = vsel %vm376, %v2105, -inf
  %2127 = vmax.xlane.f32.xlu0 %v2126
  %v2128 = vpop.xlane.xlu0 %2127
  %v2129 = vsel %vm2110, %v2106, -inf
  %2130 = vmax.xlane.f32.xlu0 %v2129
  %v2131 = vpop.xlane.xlu0 %2130
  %v2132 = vsub.f32 %v2099, %v2109
  %v2133 = vsub.f32 %v2100, %v2113
  %v2134 = vsub.f32 %v2101, %v2116
  %v2135 = vsub.f32 %v2102, %v2119
  %v2136 = vsub.f32 %v2103, %v2122
  %v2137 = vsub.f32 %v2104, %v2125
  %v2138 = vsub.f32 %v2105, %v2128
  %v2139 = vsub.f32 %v2106, %v2131
  %v2140 = vmul.f32 %v2132, 1.442695
  %v2141 = vpow.pop %v2140
  %v2142 = vmul.f32 %v2133, 1.442695
  %v2143 = vpow.pop %v2142
  %v2144 = vmul.f32 %v2134, 1.442695
  %v2145 = vpow.pop %v2144
  %v2146 = vmul.f32 %v2135, 1.442695
  %v2147 = vpow.pop %v2146
  %v2148 = vmul.f32 %v2136, 1.442695
  %v2149 = vpow.pop %v2148
  %v2150 = vmul.f32 %v2137, 1.442695
  %v2151 = vpow.pop %v2150
  %v2152 = vmul.f32 %v2138, 1.442695
  %v2153 = vpow.pop %v2152
  %v2154 = vmul.f32 %v2139, 1.442695
  %v2155 = vpow.pop %v2154
  %v2156 = vsel %vm376, %v2141, 0.0
  %2157 = vadd.xlane.f32.xlu0 %v2156
  %v2158 = vpop.xlane.xlu0 %2157
  %v2159 = vsel %vm2110, %v2143, 0.0
  %2160 = vadd.xlane.f32.xlu0 %v2159
  %v2161 = vpop.xlane.xlu0 %2160
  %v2162 = vsel %vm376, %v2145, 0.0
  %2163 = vadd.xlane.f32.xlu0 %v2162
  %v2164 = vpop.xlane.xlu0 %2163
  %v2165 = vsel %vm2110, %v2147, 0.0
  %2166 = vadd.xlane.f32.xlu0 %v2165
  %v2167 = vpop.xlane.xlu0 %2166
  %v2168 = vsel %vm376, %v2149, 0.0
  %2169 = vadd.xlane.f32.xlu0 %v2168
  %v2170 = vpop.xlane.xlu0 %2169
  %v2171 = vsel %vm2110, %v2151, 0.0
  %2172 = vadd.xlane.f32.xlu0 %v2171
  %v2173 = vpop.xlane.xlu0 %2172
  %v2174 = vsel %vm376, %v2153, 0.0
  %2175 = vadd.xlane.f32.xlu0 %v2174
  %v2176 = vpop.xlane.xlu0 %2175
  %v2177 = vsel %vm2110, %v2155, 0.0
  %2178 = vadd.xlane.f32.xlu0 %v2177
  %v2179 = vpop.xlane.xlu0 %2178
  %v2180 = vrcp.pop %v2158
  %v2181 = vrcp.pop %v2161
  %v2182 = vrcp.pop %v2164
  %v2183 = vrcp.pop %v2167
  %v2184 = vrcp.pop %v2170
  %v2185 = vrcp.pop %v2173
  %v2186 = vrcp.pop %v2176
  %v2187 = vrcp.pop %v2179
  %v2188 = vmul.f32 %v2141, %v2180
  %v2189 = vmul.f32 %v2143, %v2181
  %v2190 = vmul.f32 %v2145, %v2182
  %v2191 = vmul.f32 %v2147, %v2183
  %v2192 = vmul.f32 %v2149, %v2184
  %v2193 = vmul.f32 %v2151, %v2185
  %v2194 = vmul.f32 %v2153, %v2186
  %v2195 = vmul.f32 %v2155, %v2187
  %v2196 = vpack.c.bf16 %v2189, %v2188
  %2197 = vrot.lane.b32.xlu0 %v1888, 96
  %v2198 = vpop.permute.xlu0 %2197
  %v2201 = vsel %vm376, %v2196, 0
  %2203 = vmatprep.subr.bf16.mxu0 0
  %2204 = vmatpush1.bf16.msra.mxu0 %v2198
  %2205 = vmatprep.subr.bf16.mxu0 0
  %2206 = vmatpush1.bf16.msra.mxu0 0
  %2207 = vmatprep.subr.bf16.mxu0 0
  %2208 = vmatpush1.bf16.msra.mxu0 0
  %2209 = vmatprep.subr.bf16.mxu0 0
  %2210 = vmatpush1.bf16.msra.mxu0 0
  %2211 = vmatprep.subr.bf16.mxu0 0
  %2212 = vmatpush1.bf16.msra.mxu0 0
  %2213 = vmatprep.subr.bf16.mxu0 0
  %2214 = vmatpush1.bf16.msra.mxu0 0
  %2215 = vmatprep.subr.bf16.mxu0 0
  %2216 = vmatpush1.bf16.msra.mxu0 0
  %2217 = vmatprep.subr.bf16.mxu0 0
  %2218 = vmatpush1.bf16.msra.mxu0 0
  %2219 = vmatprep.subr.bf16.mxu0 0
  %2220 = vmatpush1.bf16.msra.mxu0 0
  %2221 = vmatprep.subr.bf16.mxu0 0
  %2222 = vmatpush1.bf16.msra.mxu0 0
  %2223 = vmatprep.subr.bf16.mxu0 0
  %2224 = vmatpush1.bf16.msra.mxu0 0
  %2225 = vmatprep.subr.bf16.mxu0 0
  %2226 = vmatpush1.bf16.msra.mxu0 0
  %2227 = vmatprep.subr.bf16.mxu0 0
  %2228 = vmatpush1.bf16.msra.mxu0 0
  %2229 = vmatprep.subr.bf16.mxu0 0
  %2230 = vmatpush1.bf16.msra.mxu0 0
  %2231 = vmatprep.subr.bf16.mxu0 0
  %2232 = vmatpush1.bf16.msra.mxu0 0
  %2233 = vmatprep.subr.bf16.mxu0 0
  %2234 = vmatpush1.bf16.msra.mxu0 0
  %2235 = vmatprep.mubr.bf16.mxu0 0
  %2236 = vmatmul.mubr.bf16.gmra.mrb[0].mxu0 %v2201
  %v2237 = vpop.f32.mrb[0].mxu0
  %v2238 = vadd.f32 0.0, %v2237
  %v2239 = vpop.f32.mrb[0].mxu0
  %v2240 = vpop.f32.mrb[0].mxu0
  %v2241 = vadd.f32 0.0, %v2240
  %v2242 = vpop.f32.mrb[0].mxu0
  %2243 = vdwg.mxu0
  %v2244 = vpack.c.bf16 %v2191, %v2190
  %2245 = vrot.lane.b32.xlu0 %v1888, 88
  %v2246 = vpop.permute.xlu0 %2245
  %v2249 = vsel %vm376, %v2244, 0
  %2251 = vmatprep.subr.bf16.mxu0 0
  %2252 = vmatpush1.bf16.msra.mxu0 %v2246
  %2253 = vmatprep.subr.bf16.mxu0 0
  %2254 = vmatpush1.bf16.msra.mxu0 0
  %2255 = vmatprep.subr.bf16.mxu0 0
  %2256 = vmatpush1.bf16.msra.mxu0 0
  %2257 = vmatprep.subr.bf16.mxu0 0
  %2258 = vmatpush1.bf16.msra.mxu0 0
  %2259 = vmatprep.subr.bf16.mxu0 0
  %2260 = vmatpush1.bf16.msra.mxu0 0
  %2261 = vmatprep.subr.bf16.mxu0 0
  %2262 = vmatpush1.bf16.msra.mxu0 0
  %2263 = vmatprep.subr.bf16.mxu0 0
  %2264 = vmatpush1.bf16.msra.mxu0 0
  %2265 = vmatprep.subr.bf16.mxu0 0
  %2266 = vmatpush1.bf16.msra.mxu0 0
  %2267 = vmatprep.subr.bf16.mxu0 0
  %2268 = vmatpush1.bf16.msra.mxu0 0
  %2269 = vmatprep.subr.bf16.mxu0 0
  %2270 = vmatpush1.bf16.msra.mxu0 0
  %2271 = vmatprep.subr.bf16.mxu0 0
  %2272 = vmatpush1.bf16.msra.mxu0 0
  %2273 = vmatprep.subr.bf16.mxu0 0
  %2274 = vmatpush1.bf16.msra.mxu0 0
  %2275 = vmatprep.subr.bf16.mxu0 0
  %2276 = vmatpush1.bf16.msra.mxu0 0
  %2277 = vmatprep.subr.bf16.mxu0 0
  %2278 = vmatpush1.bf16.msra.mxu0 0
  %2279 = vmatprep.subr.bf16.mxu0 0
  %2280 = vmatpush1.bf16.msra.mxu0 0
  %2281 = vmatprep.subr.bf16.mxu0 0
  %2282 = vmatpush1.bf16.msra.mxu0 0
  %2283 = vmatprep.mubr.bf16.mxu0 0
  %2284 = vmatmul.mubr.bf16.gmra.mrb[0].mxu0 %v2249
  %v2285 = vpop.f32.mrb[0].mxu0
  %v2286 = vadd.f32 0.0, %v2285
  %v2287 = vpop.f32.mrb[0].mxu0
  %v2288 = vpop.f32.mrb[0].mxu0
  %v2289 = vadd.f32 0.0, %v2288
  %v2290 = vpop.f32.mrb[0].mxu0
  %2291 = vdwg.mxu0
  %v2292 = vpack.c.bf16 %v2193, %v2192
  %2293 = vrot.lane.b32.xlu0 %v1888, 80
  %v2294 = vpop.permute.xlu0 %2293
  %v2297 = vsel %vm376, %v2292, 0
  %2299 = vmatprep.subr.bf16.mxu0 0
  %2300 = vmatpush1.bf16.msra.mxu0 %v2294
  %2301 = vmatprep.subr.bf16.mxu0 0
  %2302 = vmatpush1.bf16.msra.mxu0 0
  %2303 = vmatprep.subr.bf16.mxu0 0
  %2304 = vmatpush1.bf16.msra.mxu0 0
  %2305 = vmatprep.subr.bf16.mxu0 0
  %2306 = vmatpush1.bf16.msra.mxu0 0
  %2307 = vmatprep.subr.bf16.mxu0 0
  %2308 = vmatpush1.bf16.msra.mxu0 0
  %2309 = vmatprep.subr.bf16.mxu0 0
  %2310 = vmatpush1.bf16.msra.mxu0 0
  %2311 = vmatprep.subr.bf16.mxu0 0
  %2312 = vmatpush1.bf16.msra.mxu0 0
  %2313 = vmatprep.subr.bf16.mxu0 0
  %2314 = vmatpush1.bf16.msra.mxu0 0
  %2315 = vmatprep.subr.bf16.mxu0 0
  %2316 = vmatpush1.bf16.msra.mxu0 0
  %2317 = vmatprep.subr.bf16.mxu0 0
  %2318 = vmatpush1.bf16.msra.mxu0 0
  %2319 = vmatprep.subr.bf16.mxu0 0
  %2320 = vmatpush1.bf16.msra.mxu0 0
  %2321 = vmatprep.subr.bf16.mxu0 0
  %2322 = vmatpush1.bf16.msra.mxu0 0
  %2323 = vmatprep.subr.bf16.mxu0 0
  %2324 = vmatpush1.bf16.msra.mxu0 0
  %2325 = vmatprep.subr.bf16.mxu0 0
  %2326 = vmatpush1.bf16.msra.mxu0 0
  %2327 = vmatprep.subr.bf16.mxu0 0
  %2328 = vmatpush1.bf16.msra.mxu0 0
  %2329 = vmatprep.subr.bf16.mxu0 0
  %2330 = vmatpush1.bf16.msra.mxu0 0
  %2331 = vmatprep.mubr.bf16.mxu0 0
  %2332 = vmatmul.mubr.bf16.gmra.mrb[0].mxu0 %v2297
  %v2333 = vpop.f32.mrb[0].mxu0
  %v2334 = vadd.f32 0.0, %v2333
  %v2335 = vpop.f32.mrb[0].mxu0
  %v2336 = vpop.f32.mrb[0].mxu0
  %v2337 = vadd.f32 0.0, %v2336
  %v2338 = vpop.f32.mrb[0].mxu0
  %2339 = vdwg.mxu0
  %v2340 = vpack.c.bf16 %v2195, %v2194
  %2341 = vrot.lane.b32.xlu0 %v1888, 72
  %v2342 = vpop.permute.xlu0 %2341
  %v2345 = vsel %vm376, %v2340, 0
  %2347 = vmatprep.subr.bf16.mxu0 0
  %2348 = vmatpush1.bf16.msra.mxu0 %v2342
  %2349 = vmatprep.subr.bf16.mxu0 0
  %2350 = vmatpush1.bf16.msra.mxu0 0
  %2351 = vmatprep.subr.bf16.mxu0 0
  %2352 = vmatpush1.bf16.msra.mxu0 0
  %2353 = vmatprep.subr.bf16.mxu0 0
  %2354 = vmatpush1.bf16.msra.mxu0 0
  %2355 = vmatprep.subr.bf16.mxu0 0
  %2356 = vmatpush1.bf16.msra.mxu0 0
  %2357 = vmatprep.subr.bf16.mxu0 0
  %2358 = vmatpush1.bf16.msra.mxu0 0
  %2359 = vmatprep.subr.bf16.mxu0 0
  %2360 = vmatpush1.bf16.msra.mxu0 0
  %2361 = vmatprep.subr.bf16.mxu0 0
  %2362 = vmatpush1.bf16.msra.mxu0 0
  %2363 = vmatprep.subr.bf16.mxu0 0
  %2364 = vmatpush1.bf16.msra.mxu0 0
  %2365 = vmatprep.subr.bf16.mxu0 0
  %2366 = vmatpush1.bf16.msra.mxu0 0
  %2367 = vmatprep.subr.bf16.mxu0 0
  %2368 = vmatpush1.bf16.msra.mxu0 0
  %2369 = vmatprep.subr.bf16.mxu0 0
  %2370 = vmatpush1.bf16.msra.mxu0 0
  %2371 = vmatprep.subr.bf16.mxu0 0
  %2372 = vmatpush1.bf16.msra.mxu0 0
  %2373 = vmatprep.subr.bf16.mxu0 0
  %2374 = vmatpush1.bf16.msra.mxu0 0
  %2375 = vmatprep.subr.bf16.mxu0 0
  %2376 = vmatpush1.bf16.msra.mxu0 0
  %2377 = vmatprep.subr.bf16.mxu0 0
  %2378 = vmatpush1.bf16.msra.mxu0 0
  %2379 = vmatprep.mubr.bf16.mxu0 0
  %2380 = vmatmul.mubr.bf16.gmra.mrb[0].mxu0 %v2345
  %v2381 = vpop.f32.mrb[0].mxu0
  %v2382 = vadd.f32 0.0, %v2381
  %v2383 = vpop.f32.mrb[0].mxu0
  %v2384 = vpop.f32.mrb[0].mxu0
  %v2385 = vadd.f32 0.0, %v2384
  %v2386 = vpop.f32.mrb[0].mxu0
  %2387 = vdwg.mxu0
  %2390 = vrot.lane.b32.xlu0 %v2286, 8
  %v2391 = vpop.permute.xlu0 %2390
  %2392 = vrot.lane.b32.xlu0 %v2289, 8
  %v2393 = vpop.permute.xlu0 %2392
  %2398 = vrot.lane.b32.xlu0 %v2334, 16
  %v2399 = vpop.permute.xlu0 %2398
  %2400 = vrot.lane.b32.xlu0 %v2337, 16
  %v2401 = vpop.permute.xlu0 %2400
  %2406 = vrot.lane.b32.xlu0 %v2382, 24
  %v2407 = vpop.permute.xlu0 %2406
  %2408 = vrot.lane.b32.xlu0 %v2385, 24
  %v2409 = vpop.permute.xlu0 %2408
  %v2412 = vsel %vm159, %v2238, %v2391
  %v2413 = vsel %vm159, %v2241, %v2393
  %v2414 = vsel %vm376, %v2412, %v2399
  %v2415 = vsel %vm376, %v2413, %v2401
  %v2416 = vsel %vm685, %v2414, %v2407
  %v2417 = vsel %vm685, %v2415, %v2409
  %v2418 = vpack.c.bf16 %v2417, %v2416
  %v2419 = vlaneseq
  %v2420 = vshrl.u32 %v2419, 7
  %v2421 = vsub.s32 7, %v2420
  %v2422 = vrot.slane %v32, %v2421
  %v2427 = vunpack.c.l.b16 %v1761
  %v2428 = vunpack.c.l.b16 %v1762
  %v2429 = vunpack.c.l.b16 %v1763
  %v2430 = vunpack.c.l.b16 %v1764
  %v2431 = vpack.c.b16 %v2428, %v2427
  %v2432 = vpack.c.b16 %v2430, %v2429
  %v2436 = vsel %vm46, %v2418, 0
  %2438 = vmatprep.subr.bf16.mxu0 0
  %2439 = vmatpush1.bf16.msra.mxu0 %v2431
  %2440 = vmatprep.subr.bf16.mxu0 0
  %2441 = vmatpush1.bf16.msra.mxu0 %v2432
  %2442 = vmatprep.subr.bf16.mxu0 0
  %2443 = vmatpush1.bf16.msra.mxu0 0
  %2444 = vmatprep.subr.bf16.mxu0 0
  %2445 = vmatpush1.bf16.msra.mxu0 0
  %2446 = vmatprep.subr.bf16.mxu0 0
  %2447 = vmatpush1.bf16.msra.mxu0 0
  %2448 = vmatprep.subr.bf16.mxu0 0
  %2449 = vmatpush1.bf16.msra.mxu0 0
  %2450 = vmatprep.subr.bf16.mxu0 0
  %2451 = vmatpush1.bf16.msra.mxu0 0
  %2452 = vmatprep.subr.bf16.mxu0 0
  %2453 = vmatpush1.bf16.msra.mxu0 0
  %2454 = vmatprep.subr.bf16.mxu0 0
  %2455 = vmatpush1.bf16.msra.mxu0 0
  %2456 = vmatprep.subr.bf16.mxu0 0
  %2457 = vmatpush1.bf16.msra.mxu0 0
  %2458 = vmatprep.subr.bf16.mxu0 0
  %2459 = vmatpush1.bf16.msra.mxu0 0
  %2460 = vmatprep.subr.bf16.mxu0 0
  %2461 = vmatpush1.bf16.msra.mxu0 0
  %2462 = vmatprep.subr.bf16.mxu0 0
  %2463 = vmatpush1.bf16.msra.mxu0 0
  %2464 = vmatprep.subr.bf16.mxu0 0
  %2465 = vmatpush1.bf16.msra.mxu0 0
  %2466 = vmatprep.subr.bf16.mxu0 0
  %2467 = vmatpush1.bf16.msra.mxu0 0
  %2468 = vmatprep.subr.bf16.mxu0 0
  %2469 = vmatpush1.bf16.msra.mxu0 0
  %2470 = vmatprep.mubr.bf16.mxu0 0
  %2471 = vmatmul.mubr.bf16.gmra.mrb[0].mxu0 %v2436
  %v2472 = vpop.f32.mrb[0].mxu0
  %v2473 = vadd.f32 %v2422, %v2472
  %v2474 = vpop.f32.mrb[0].mxu0
  %v2475 = vpop.f32.mrb[0].mxu0
  %v2476 = vadd.f32 %v2422, %v2475
  %v2477 = vpop.f32.mrb[0].mxu0
  %2478 = vdwg.mxu0
  %v2479 = vadd.f32 %v2473, %v1748
  %v2480 = vadd.f32 %v2476, %v1749
  %v2481 = vsel %vm46, %v2479, 0.0
  %2482 = vadd.xlane.f32.xlu0 %v2481
  %v2483 = vpop.xlane.xlu0 %2482
  %v2484 = vsel %vm1002, %v2480, 0.0
  %2485 = vadd.xlane.f32.xlu0 %v2484
  %v2486 = vpop.xlane.xlu0 %2485
  %v2487 = vmul.f32 %v2483, %v53
  %v2488 = vmul.f32 %v2486, %v53
  %v2489 = vsub.f32 %v2479, %v2487
  %v2490 = vsub.f32 %v2480, %v2488
  %v2491 = vmul.f32 %v2489, %v2489
  %v2492 = vmul.f32 %v2490, %v2490
  %v2493 = vsel %vm46, %v2491, 0.0
  %2494 = vadd.xlane.f32.xlu0 %v2493
  %v2495 = vpop.xlane.xlu0 %2494
  %v2496 = vsel %vm1002, %v2492, 0.0
  %2497 = vadd.xlane.f32.xlu0 %v2496
  %v2498 = vpop.xlane.xlu0 %2497
  %v2499 = vmul.f32 %v2495, %v53
  %v2500 = vmul.f32 %v2498, %v53
  %v2501 = vadd.f32 %v2499, 1e-12
  %v2502 = vadd.f32 %v2500, 1e-12
  %v2503 = vrsqrt.pop %v2501
  %v2504 = vrsqrt.pop %v2502
  %v2505 = vmul.f32 %v2489, %v2503
  %v2506 = vmul.f32 %v2490, %v2504
  %v2507 = vlaneseq
  %v2508 = vshrl.u32 %v2507, 7
  %v2509 = vsub.s32 0, %v2508
  %v2510 = vrot.slane %v33, %v2509
  %v2511 = vmul.f32 %v2505, %v2510
  %v2512 = vmul.f32 %v2506, %v2510
  %v2513 = vlaneseq
  %v2514 = vshrl.u32 %v2513, 7
  %v2515 = vsub.s32 1, %v2514
  %v2516 = vrot.slane %v33, %v2515
  %v2517 = vadd.f32 %v2511, %v2516
  %v2518 = vadd.f32 %v2512, %v2516
  %s2519 = scalar_lea.vmem %s5, 16
  %v2520 = vld [vmem:[%s2519] sm:$0xf]
  %v2521 = vld [vmem:[%s2519 + $0x4] sm:$0xf]
  %v2522 = vld [vmem:[%s2519 + $0x8] sm:$0xf]
  %v2523 = vld [vmem:[%s2519 + $0xc] sm:$0xf]
  %s2524 = scalar_lea.vmem %s6, 32
  %v2525 = vld [vmem:[%s2524] sm:$0xf]
  %v2526 = vld [vmem:[%s2524 + $0x4] sm:$0xf]
  %v2527 = vld [vmem:[%s2524 + $0x8] sm:$0xf]
  %v2528 = vld [vmem:[%s2524 + $0xc] sm:$0xf]
  %v2529 = vld [vmem:[%s2524 + $0x10] sm:$0xf]
  %v2530 = vld [vmem:[%s2524 + $0x14] sm:$0xf]
  %v2531 = vld [vmem:[%s2524 + $0x18] sm:$0xf]
  %v2532 = vld [vmem:[%s2524 + $0x1c] sm:$0xf]
  %v2533 = vpack.c.bf16 %v2518, %v2517
  %v2534 = vlaneseq
  %v2535 = vshrl.u32 %v2534, 7
  %v2536 = vsub.s32 2, %v2535
  %v2537 = vrot.slane %v33, %v2536
  %v2542 = vunpack.c.l.b16 %v2520
  %v2543 = vunpack.c.l.b16 %v2521
  %v2544 = vunpack.c.l.b16 %v2522
  %v2545 = vunpack.c.l.b16 %v2523
  %v2546 = vpack.c.b16 %v2543, %v2542
  %v2547 = vpack.c.b16 %v2545, %v2544
  %v2551 = vsel %vm46, %v2533, 0
  %2553 = vmatprep.subr.bf16.mxu0 0
  %2554 = vmatpush1.bf16.msra.mxu0 %v2546
  %2555 = vmatprep.subr.bf16.mxu0 0
  %2556 = vmatpush1.bf16.msra.mxu0 %v2547
  %2557 = vmatprep.subr.bf16.mxu0 0
  %2558 = vmatpush1.bf16.msra.mxu0 0
  %2559 = vmatprep.subr.bf16.mxu0 0
  %2560 = vmatpush1.bf16.msra.mxu0 0
  %2561 = vmatprep.subr.bf16.mxu0 0
  %2562 = vmatpush1.bf16.msra.mxu0 0
  %2563 = vmatprep.subr.bf16.mxu0 0
  %2564 = vmatpush1.bf16.msra.mxu0 0
  %2565 = vmatprep.subr.bf16.mxu0 0
  %2566 = vmatpush1.bf16.msra.mxu0 0
  %2567 = vmatprep.subr.bf16.mxu0 0
  %2568 = vmatpush1.bf16.msra.mxu0 0
  %2569 = vmatprep.subr.bf16.mxu0 0
  %2570 = vmatpush1.bf16.msra.mxu0 0
  %2571 = vmatprep.subr.bf16.mxu0 0
  %2572 = vmatpush1.bf16.msra.mxu0 0
  %2573 = vmatprep.subr.bf16.mxu0 0
  %2574 = vmatpush1.bf16.msra.mxu0 0
  %2575 = vmatprep.subr.bf16.mxu0 0
  %2576 = vmatpush1.bf16.msra.mxu0 0
  %2577 = vmatprep.subr.bf16.mxu0 0
  %2578 = vmatpush1.bf16.msra.mxu0 0
  %2579 = vmatprep.subr.bf16.mxu0 0
  %2580 = vmatpush1.bf16.msra.mxu0 0
  %2581 = vmatprep.subr.bf16.mxu0 0
  %2582 = vmatpush1.bf16.msra.mxu0 0
  %2583 = vmatprep.subr.bf16.mxu0 0
  %2584 = vmatpush1.bf16.msra.mxu0 0
  %2585 = vmatprep.mubr.bf16.mxu0 0
  %2586 = vmatmul.mubr.bf16.gmra.mrb[0].mxu0 %v2551
  %v2587 = vpop.f32.mrb[0].mxu0
  %v2588 = vadd.f32 %v2537, %v2587
  %v2589 = vpop.f32.mrb[0].mxu0
  %v2590 = vpop.f32.mrb[0].mxu0
  %v2591 = vadd.f32 %v2537, %v2590
  %v2592 = vpop.f32.mrb[0].mxu0
  %2593 = vdwg.mxu0
  %v2594 = vmul.f32 %v2588, %v2588
  %v2595 = vmul.f32 %v2591, %v2591
  %v2596 = vmul.f32 %v2588, %v2594
  %v2597 = vmul.f32 %v2591, %v2595
  %v2598 = vmul.f32 %v2596, 0.044715
  %v2599 = vmul.f32 %v2597, 0.044715
  %v2600 = vadd.f32 %v2588, %v2598
  %v2601 = vadd.f32 %v2591, %v2599
  %v2602 = vmul.f32 %v2600, 0.7978846
  %v2603 = vmul.f32 %v2601, 0.7978846
  %v2604 = vtanh.pop %v2602
  %v2605 = vtanh.pop %v2603
  %v2606 = vadd.f32 %v2604, 1.0
  %v2607 = vadd.f32 %v2605, 1.0
  %v2608 = vmul.f32 %v2606, 0.5
  %v2609 = vmul.f32 %v2607, 0.5
  %v2610 = vmul.f32 %v2588, %v2608
  %v2611 = vmul.f32 %v2591, %v2609
  %v2612 = vpack.c.bf16 %v2611, %v2610
  %v2613 = vlaneseq
  %v2614 = vshrl.u32 %v2613, 7
  %v2615 = vsub.s32 3, %v2614
  %v2616 = vrot.slane %v33, %v2615
  %v2625 = vunpack.c.l.b16 %v2525
  %v2626 = vunpack.c.l.b16 %v2526
  %v2627 = vunpack.c.l.b16 %v2527
  %v2628 = vunpack.c.l.b16 %v2528
  %v2629 = vunpack.c.l.b16 %v2529
  %v2630 = vunpack.c.l.b16 %v2530
  %v2631 = vunpack.c.l.b16 %v2531
  %v2632 = vunpack.c.l.b16 %v2532
  %v2633 = vpack.c.b16 %v2626, %v2625
  %v2634 = vpack.c.b16 %v2628, %v2627
  %v2635 = vpack.c.b16 %v2630, %v2629
  %v2636 = vpack.c.b16 %v2632, %v2631
  %v2642 = vsel %vm909, %v2612, 0
  %2644 = vmatprep.subr.bf16.mxu0 0
  %2645 = vmatpush1.bf16.msra.mxu0 %v2633
  %2646 = vmatprep.subr.bf16.mxu0 0
  %2647 = vmatpush1.bf16.msra.mxu0 %v2634
  %2648 = vmatprep.subr.bf16.mxu0 0
  %2649 = vmatpush1.bf16.msra.mxu0 %v2635
  %2650 = vmatprep.subr.bf16.mxu0 0
  %2651 = vmatpush1.bf16.msra.mxu0 %v2636
  %2652 = vmatprep.subr.bf16.mxu0 0
  %2653 = vmatpush1.bf16.msra.mxu0 0
  %2654 = vmatprep.subr.bf16.mxu0 0
  %2655 = vmatpush1.bf16.msra.mxu0 0
  %2656 = vmatprep.subr.bf16.mxu0 0
  %2657 = vmatpush1.bf16.msra.mxu0 0
  %2658 = vmatprep.subr.bf16.mxu0 0
  %2659 = vmatpush1.bf16.msra.mxu0 0
  %2660 = vmatprep.subr.bf16.mxu0 0
  %2661 = vmatpush1.bf16.msra.mxu0 0
  %2662 = vmatprep.subr.bf16.mxu0 0
  %2663 = vmatpush1.bf16.msra.mxu0 0
  %2664 = vmatprep.subr.bf16.mxu0 0
  %2665 = vmatpush1.bf16.msra.mxu0 0
  %2666 = vmatprep.subr.bf16.mxu0 0
  %2667 = vmatpush1.bf16.msra.mxu0 0
  %2668 = vmatprep.subr.bf16.mxu0 0
  %2669 = vmatpush1.bf16.msra.mxu0 0
  %2670 = vmatprep.subr.bf16.mxu0 0
  %2671 = vmatpush1.bf16.msra.mxu0 0
  %2672 = vmatprep.subr.bf16.mxu0 0
  %2673 = vmatpush1.bf16.msra.mxu0 0
  %2674 = vmatprep.subr.bf16.mxu0 0
  %2675 = vmatpush1.bf16.msra.mxu0 0
  %2676 = vmatprep.mubr.bf16.mxu0 0
  %2677 = vmatmul.mubr.bf16.gmra.mrb[0].mxu0 %v2642
  %v2678 = vpop.f32.mrb[0].mxu0
  %v2679 = vadd.f32 %v2616, %v2678
  %v2680 = vpop.f32.mrb[0].mxu0
  %v2681 = vpop.f32.mrb[0].mxu0
  %v2682 = vadd.f32 %v2616, %v2681
  %v2683 = vpop.f32.mrb[0].mxu0
  %2684 = vdwg.mxu0
  %v2685 = vadd.f32 %v2679, %v2517
  %v2686 = vadd.f32 %v2682, %v2518
  %v2687 = vsel %vm46, %v2685, 0.0
  %2688 = vadd.xlane.f32.xlu0 %v2687
  %v2689 = vpop.xlane.xlu0 %2688
  %v2690 = vsel %vm1002, %v2686, 0.0
  %2691 = vadd.xlane.f32.xlu0 %v2690
  %v2692 = vpop.xlane.xlu0 %2691
  %v2693 = vmul.f32 %v2689, %v53
  %v2694 = vmul.f32 %v2692, %v53
  %v2695 = vsub.f32 %v2685, %v2693
  %v2696 = vsub.f32 %v2686, %v2694
  %v2697 = vmul.f32 %v2695, %v2695
  %v2698 = vmul.f32 %v2696, %v2696
  %v2699 = vsel %vm46, %v2697, 0.0
  %2700 = vadd.xlane.f32.xlu0 %v2699
  %v2701 = vpop.xlane.xlu0 %2700
  %v2702 = vsel %vm1002, %v2698, 0.0
  %2703 = vadd.xlane.f32.xlu0 %v2702
  %v2704 = vpop.xlane.xlu0 %2703
  %v2705 = vmul.f32 %v2701, %v53
  %v2706 = vmul.f32 %v2704, %v53
  %v2707 = vadd.f32 %v2705, 1e-12
  %v2708 = vadd.f32 %v2706, 1e-12
  %v2709 = vrsqrt.pop %v2707
  %v2710 = vrsqrt.pop %v2708
  %v2711 = vmul.f32 %v2695, %v2709
  %v2712 = vmul.f32 %v2696, %v2710
  %v2713 = vlaneseq
  %v2714 = vshrl.u32 %v2713, 7
  %v2715 = vsub.s32 4, %v2714
  %v2716 = vrot.slane %v33, %v2715
  %v2717 = vmul.f32 %v2711, %v2716
  %v2718 = vmul.f32 %v2712, %v2716
  %v2719 = vlaneseq
  %v2720 = vshrl.u32 %v2719, 7
  %v2721 = vsub.s32 5, %v2720
  %v2722 = vrot.slane %v33, %v2721
  %v2723 = vadd.f32 %v2717, %v2722
  %v2724 = vadd.f32 %v2718, %v2722
  %s2725 = scalar_lea.vmem %s3, 32
  %v2726 = vld [vmem:[%s2725] sm:$0xf]
  %v2727 = vld [vmem:[%s2725 + $0x4] sm:$0xf]
  %v2728 = vld [vmem:[%s2725 + $0x8] sm:$0xf]
  %v2729 = vld [vmem:[%s2725 + $0xc] sm:$0xf]
  %s2730 = scalar_lea.vmem %s4, 64
  %v2731 = vld [vmem:[%s2730] sm:$0xf]
  %v2732 = vld [vmem:[%s2730 + $0x4] sm:$0xf]
  %v2733 = vld [vmem:[%s2730 + $0x8] sm:$0xf]
  %v2734 = vld [vmem:[%s2730 + $0xc] sm:$0xf]
  %v2735 = vpack.c.bf16 %v2724, %v2723
  %v2736 = vlaneseq
  %v2737 = vshrl.u32 %v2736, 7
  %v2738 = vsub.s32 6, %v2737
  %v2739 = vrot.slane %v33, %v2738
  %v2744 = vunpack.c.l.b16 %v2726
  %v2745 = vunpack.c.l.b16 %v2727
  %v2746 = vunpack.c.l.b16 %v2728
  %v2747 = vunpack.c.l.b16 %v2729
  %v2748 = vpack.c.b16 %v2745, %v2744
  %v2749 = vpack.c.b16 %v2747, %v2746
  %v2753 = vsel %vm46, %v2735, 0
  %2755 = vmatprep.subr.bf16.mxu0 0
  %2756 = vmatpush1.bf16.msra.mxu0 %v2748
  %2757 = vmatprep.subr.bf16.mxu0 0
  %2758 = vmatpush1.bf16.msra.mxu0 %v2749
  %2759 = vmatprep.subr.bf16.mxu0 0
  %2760 = vmatpush1.bf16.msra.mxu0 0
  %2761 = vmatprep.subr.bf16.mxu0 0
  %2762 = vmatpush1.bf16.msra.mxu0 0
  %2763 = vmatprep.subr.bf16.mxu0 0
  %2764 = vmatpush1.bf16.msra.mxu0 0
  %2765 = vmatprep.subr.bf16.mxu0 0
  %2766 = vmatpush1.bf16.msra.mxu0 0
  %2767 = vmatprep.subr.bf16.mxu0 0
  %2768 = vmatpush1.bf16.msra.mxu0 0
  %2769 = vmatprep.subr.bf16.mxu0 0
  %2770 = vmatpush1.bf16.msra.mxu0 0
  %2771 = vmatprep.subr.bf16.mxu0 0
  %2772 = vmatpush1.bf16.msra.mxu0 0
  %2773 = vmatprep.subr.bf16.mxu0 0
  %2774 = vmatpush1.bf16.msra.mxu0 0
  %2775 = vmatprep.subr.bf16.mxu0 0
  %2776 = vmatpush1.bf16.msra.mxu0 0
  %2777 = vmatprep.subr.bf16.mxu0 0
  %2778 = vmatpush1.bf16.msra.mxu0 0
  %2779 = vmatprep.subr.bf16.mxu0 0
  %2780 = vmatpush1.bf16.msra.mxu0 0
  %2781 = vmatprep.subr.bf16.mxu0 0
  %2782 = vmatpush1.bf16.msra.mxu0 0
  %2783 = vmatprep.subr.bf16.mxu0 0
  %2784 = vmatpush1.bf16.msra.mxu0 0
  %2785 = vmatprep.subr.bf16.mxu0 0
  %2786 = vmatpush1.bf16.msra.mxu0 0
  %2787 = vmatprep.mubr.bf16.mxu0 0
  %2788 = vmatmul.mubr.bf16.gmra.mrb[0].mxu0 %v2753
  %v2789 = vpop.f32.mrb[0].mxu0
  %v2790 = vadd.f32 %v2739, %v2789
  %v2791 = vpop.f32.mrb[0].mxu0
  %v2792 = vpop.f32.mrb[0].mxu0
  %v2793 = vadd.f32 %v2739, %v2792
  %v2794 = vpop.f32.mrb[0].mxu0
  %2795 = vdwg.mxu0
  %v2796 = vpack.c.bf16 %v2793, %v2790
  %2798 = vrot.lane.b32.xlu0 %v2796, 96
  %v2799 = vpop.permute.xlu0 %2798
  %v2801 = vsel %vm159, %v2796, 0
  %v2804 = vsel %vm159, %v2799, 0
  %2806 = vmatprep.subr.bf16.mxu0 0
  %2807 = vmatpush1.bf16.xpose.msra.mxu0 %v2804
  %2808 = vmatprep.subr.bf16.mxu0 0
  %2809 = vmatpush1.bf16.xpose.msra.mxu0 0
  %2810 = vmatprep.subr.bf16.mxu0 0
  %2811 = vmatpush1.bf16.xpose.msra.mxu0 0
  %2812 = vmatprep.subr.bf16.mxu0 0
  %2813 = vmatpush1.bf16.xpose.msra.mxu0 0
  %2814 = vmatprep.subr.bf16.mxu0 0
  %2815 = vmatpush1.bf16.xpose.msra.mxu0 0
  %2816 = vmatprep.subr.bf16.mxu0 0
  %2817 = vmatpush1.bf16.xpose.msra.mxu0 0
  %2818 = vmatprep.subr.bf16.mxu0 0
  %2819 = vmatpush1.bf16.xpose.msra.mxu0 0
  %2820 = vmatprep.subr.bf16.mxu0 0
  %2821 = vmatpush1.bf16.xpose.msra.mxu0 0
  %2822 = vmatprep.subr.bf16.mxu0 0
  %2823 = vmatpush1.bf16.xpose.msra.mxu0 0
  %2824 = vmatprep.subr.bf16.mxu0 0
  %2825 = vmatpush1.bf16.xpose.msra.mxu0 0
  %2826 = vmatprep.subr.bf16.mxu0 0
  %2827 = vmatpush1.bf16.xpose.msra.mxu0 0
  %2828 = vmatprep.subr.bf16.mxu0 0
  %2829 = vmatpush1.bf16.xpose.msra.mxu0 0
  %2830 = vmatprep.subr.bf16.mxu0 0
  %2831 = vmatpush1.bf16.xpose.msra.mxu0 0
  %2832 = vmatprep.subr.bf16.mxu0 0
  %2833 = vmatpush1.bf16.xpose.msra.mxu0 0
  %2834 = vmatprep.subr.bf16.mxu0 0
  %2835 = vmatpush1.bf16.xpose.msra.mxu0 0
  %2836 = vmatprep.subr.bf16.mxu0 0
  %2837 = vmatpush1.bf16.xpose.msra.mxu0 0
  %2838 = vmatprep.mubr.bf16.mxu0 0
  %2839 = vmatmul.mubr.bf16.gmra.mrb[0].mxu0 %v2801
  %v2840 = vpop.f32.mrb[0].mxu0
  %v2841 = vadd.f32 0.0, %v2840
  %v2842 = vpop.f32.mrb[0].mxu0
  %v2843 = vpop.f32.mrb[0].mxu0
  %v2844 = vadd.f32 0.0, %v2843
  %v2845 = vpop.f32.mrb[0].mxu0
  %2846 = vdwg.mxu0
  %2847 = vrot.lane.b32.xlu0 %v2796, 120
  %v2848 = vpop.permute.xlu0 %2847
  %2849 = vrot.lane.b32.xlu0 %v2796, 88
  %v2850 = vpop.permute.xlu0 %2849
  %v2852 = vsel %vm159, %v2848, 0
  %v2855 = vsel %vm159, %v2850, 0
  %2857 = vmatprep.subr.bf16.mxu0 0
  %2858 = vmatpush1.bf16.xpose.msra.mxu0 %v2855
  %2859 = vmatprep.subr.bf16.mxu0 0
  %2860 = vmatpush1.bf16.xpose.msra.mxu0 0
  %2861 = vmatprep.subr.bf16.mxu0 0
  %2862 = vmatpush1.bf16.xpose.msra.mxu0 0
  %2863 = vmatprep.subr.bf16.mxu0 0
  %2864 = vmatpush1.bf16.xpose.msra.mxu0 0
  %2865 = vmatprep.subr.bf16.mxu0 0
  %2866 = vmatpush1.bf16.xpose.msra.mxu0 0
  %2867 = vmatprep.subr.bf16.mxu0 0
  %2868 = vmatpush1.bf16.xpose.msra.mxu0 0
  %2869 = vmatprep.subr.bf16.mxu0 0
  %2870 = vmatpush1.bf16.xpose.msra.mxu0 0
  %2871 = vmatprep.subr.bf16.mxu0 0
  %2872 = vmatpush1.bf16.xpose.msra.mxu0 0
  %2873 = vmatprep.subr.bf16.mxu0 0
  %2874 = vmatpush1.bf16.xpose.msra.mxu0 0
  %2875 = vmatprep.subr.bf16.mxu0 0
  %2876 = vmatpush1.bf16.xpose.msra.mxu0 0
  %2877 = vmatprep.subr.bf16.mxu0 0
  %2878 = vmatpush1.bf16.xpose.msra.mxu0 0
  %2879 = vmatprep.subr.bf16.mxu0 0
  %2880 = vmatpush1.bf16.xpose.msra.mxu0 0
  %2881 = vmatprep.subr.bf16.mxu0 0
  %2882 = vmatpush1.bf16.xpose.msra.mxu0 0
  %2883 = vmatprep.subr.bf16.mxu0 0
  %2884 = vmatpush1.bf16.xpose.msra.mxu0 0
  %2885 = vmatprep.subr.bf16.mxu0 0
  %2886 = vmatpush1.bf16.xpose.msra.mxu0 0
  %2887 = vmatprep.subr.bf16.mxu0 0
  %2888 = vmatpush1.bf16.xpose.msra.mxu0 0
  %2889 = vmatprep.mubr.bf16.mxu0 0
  %2890 = vmatmul.mubr.bf16.gmra.mrb[0].mxu0 %v2852
  %v2891 = vpop.f32.mrb[0].mxu0
  %v2892 = vadd.f32 0.0, %v2891
  %v2893 = vpop.f32.mrb[0].mxu0
  %v2894 = vpop.f32.mrb[0].mxu0
  %v2895 = vadd.f32 0.0, %v2894
  %v2896 = vpop.f32.mrb[0].mxu0
  %2897 = vdwg.mxu0
  %2898 = vrot.lane.b32.xlu0 %v2796, 112
  %v2899 = vpop.permute.xlu0 %2898
  %2900 = vrot.lane.b32.xlu0 %v2796, 80
  %v2901 = vpop.permute.xlu0 %2900
  %v2903 = vsel %vm159, %v2899, 0
  %v2906 = vsel %vm159, %v2901, 0
  %2908 = vmatprep.subr.bf16.mxu0 0
  %2909 = vmatpush1.bf16.xpose.msra.mxu0 %v2906
  %2910 = vmatprep.subr.bf16.mxu0 0
  %2911 = vmatpush1.bf16.xpose.msra.mxu0 0
  %2912 = vmatprep.subr.bf16.mxu0 0
  %2913 = vmatpush1.bf16.xpose.msra.mxu0 0
  %2914 = vmatprep.subr.bf16.mxu0 0
  %2915 = vmatpush1.bf16.xpose.msra.mxu0 0
  %2916 = vmatprep.subr.bf16.mxu0 0
  %2917 = vmatpush1.bf16.xpose.msra.mxu0 0
  %2918 = vmatprep.subr.bf16.mxu0 0
  %2919 = vmatpush1.bf16.xpose.msra.mxu0 0
  %2920 = vmatprep.subr.bf16.mxu0 0
  %2921 = vmatpush1.bf16.xpose.msra.mxu0 0
  %2922 = vmatprep.subr.bf16.mxu0 0
  %2923 = vmatpush1.bf16.xpose.msra.mxu0 0
  %2924 = vmatprep.subr.bf16.mxu0 0
  %2925 = vmatpush1.bf16.xpose.msra.mxu0 0
  %2926 = vmatprep.subr.bf16.mxu0 0
  %2927 = vmatpush1.bf16.xpose.msra.mxu0 0
  %2928 = vmatprep.subr.bf16.mxu0 0
  %2929 = vmatpush1.bf16.xpose.msra.mxu0 0
  %2930 = vmatprep.subr.bf16.mxu0 0
  %2931 = vmatpush1.bf16.xpose.msra.mxu0 0
  %2932 = vmatprep.subr.bf16.mxu0 0
  %2933 = vmatpush1.bf16.xpose.msra.mxu0 0
  %2934 = vmatprep.subr.bf16.mxu0 0
  %2935 = vmatpush1.bf16.xpose.msra.mxu0 0
  %2936 = vmatprep.subr.bf16.mxu0 0
  %2937 = vmatpush1.bf16.xpose.msra.mxu0 0
  %2938 = vmatprep.subr.bf16.mxu0 0
  %2939 = vmatpush1.bf16.xpose.msra.mxu0 0
  %2940 = vmatprep.mubr.bf16.mxu0 0
  %2941 = vmatmul.mubr.bf16.gmra.mrb[0].mxu0 %v2903
  %v2942 = vpop.f32.mrb[0].mxu0
  %v2943 = vadd.f32 0.0, %v2942
  %v2944 = vpop.f32.mrb[0].mxu0
  %v2945 = vpop.f32.mrb[0].mxu0
  %v2946 = vadd.f32 0.0, %v2945
  %v2947 = vpop.f32.mrb[0].mxu0
  %2948 = vdwg.mxu0
  %2949 = vrot.lane.b32.xlu0 %v2796, 104
  %v2950 = vpop.permute.xlu0 %2949
  %2951 = vrot.lane.b32.xlu0 %v2796, 72
  %v2952 = vpop.permute.xlu0 %2951
  %v2954 = vsel %vm159, %v2950, 0
  %v2957 = vsel %vm159, %v2952, 0
  %2959 = vmatprep.subr.bf16.mxu0 0
  %2960 = vmatpush1.bf16.xpose.msra.mxu0 %v2957
  %2961 = vmatprep.subr.bf16.mxu0 0
  %2962 = vmatpush1.bf16.xpose.msra.mxu0 0
  %2963 = vmatprep.subr.bf16.mxu0 0
  %2964 = vmatpush1.bf16.xpose.msra.mxu0 0
  %2965 = vmatprep.subr.bf16.mxu0 0
  %2966 = vmatpush1.bf16.xpose.msra.mxu0 0
  %2967 = vmatprep.subr.bf16.mxu0 0
  %2968 = vmatpush1.bf16.xpose.msra.mxu0 0
  %2969 = vmatprep.subr.bf16.mxu0 0
  %2970 = vmatpush1.bf16.xpose.msra.mxu0 0
  %2971 = vmatprep.subr.bf16.mxu0 0
  %2972 = vmatpush1.bf16.xpose.msra.mxu0 0
  %2973 = vmatprep.subr.bf16.mxu0 0
  %2974 = vmatpush1.bf16.xpose.msra.mxu0 0
  %2975 = vmatprep.subr.bf16.mxu0 0
  %2976 = vmatpush1.bf16.xpose.msra.mxu0 0
  %2977 = vmatprep.subr.bf16.mxu0 0
  %2978 = vmatpush1.bf16.xpose.msra.mxu0 0
  %2979 = vmatprep.subr.bf16.mxu0 0
  %2980 = vmatpush1.bf16.xpose.msra.mxu0 0
  %2981 = vmatprep.subr.bf16.mxu0 0
  %2982 = vmatpush1.bf16.xpose.msra.mxu0 0
  %2983 = vmatprep.subr.bf16.mxu0 0
  %2984 = vmatpush1.bf16.xpose.msra.mxu0 0
  %2985 = vmatprep.subr.bf16.mxu0 0
  %2986 = vmatpush1.bf16.xpose.msra.mxu0 0
  %2987 = vmatprep.subr.bf16.mxu0 0
  %2988 = vmatpush1.bf16.xpose.msra.mxu0 0
  %2989 = vmatprep.subr.bf16.mxu0 0
  %2990 = vmatpush1.bf16.xpose.msra.mxu0 0
  %2991 = vmatprep.mubr.bf16.mxu0 0
  %2992 = vmatmul.mubr.bf16.gmra.mrb[0].mxu0 %v2954
  %v2993 = vpop.f32.mrb[0].mxu0
  %v2994 = vadd.f32 0.0, %v2993
  %v2995 = vpop.f32.mrb[0].mxu0
  %v2996 = vpop.f32.mrb[0].mxu0
  %v2997 = vadd.f32 0.0, %v2996
  %v2998 = vpop.f32.mrb[0].mxu0
  %2999 = vdwg.mxu0
  %v3000 = vmul.f32 %v2841, 0.35355338
  %v3001 = vmul.f32 %v2844, 0.35355338
  %v3002 = vmul.f32 %v2892, 0.35355338
  %v3003 = vmul.f32 %v2895, 0.35355338
  %v3004 = vmul.f32 %v2943, 0.35355338
  %v3005 = vmul.f32 %v2946, 0.35355338
  %v3006 = vmul.f32 %v2994, 0.35355338
  %v3007 = vmul.f32 %v2997, 0.35355338
  %v3008 = vadd.f32 %v3000, %v38
  %v3009 = vadd.f32 %v3001, %v39
  %v3010 = vadd.f32 %v3002, %v38
  %v3011 = vadd.f32 %v3003, %v39
  %v3012 = vadd.f32 %v3004, %v38
  %v3013 = vadd.f32 %v3005, %v39
  %v3014 = vadd.f32 %v3006, %v38
  %v3015 = vadd.f32 %v3007, %v39
  %v3016 = vsel %vm1329, %v3008, -inf
  %3017 = vmax.xlane.f32.xlu0 %v3016
  %v3018 = vpop.xlane.xlu0 %3017
  %v3019 = vsel %vm1333, %v3009, -inf
  %3020 = vmax.xlane.f32.xlu0 %v3019
  %v3021 = vpop.xlane.xlu0 %3020
  %v3022 = vsel %vm1329, %v3010, -inf
  %3023 = vmax.xlane.f32.xlu0 %v3022
  %v3024 = vpop.xlane.xlu0 %3023
  %v3025 = vsel %vm1333, %v3011, -inf
  %3026 = vmax.xlane.f32.xlu0 %v3025
  %v3027 = vpop.xlane.xlu0 %3026
  %v3028 = vsel %vm1329, %v3012, -inf
  %3029 = vmax.xlane.f32.xlu0 %v3028
  %v3030 = vpop.xlane.xlu0 %3029
  %v3031 = vsel %vm1333, %v3013, -inf
  %3032 = vmax.xlane.f32.xlu0 %v3031
  %v3033 = vpop.xlane.xlu0 %3032
  %v3034 = vsel %vm1329, %v3014, -inf
  %3035 = vmax.xlane.f32.xlu0 %v3034
  %v3036 = vpop.xlane.xlu0 %3035
  %v3037 = vsel %vm1333, %v3015, -inf
  %3038 = vmax.xlane.f32.xlu0 %v3037
  %v3039 = vpop.xlane.xlu0 %3038
  %v3040 = vsub.f32 %v3008, %v3018
  %v3041 = vsub.f32 %v3009, %v3021
  %v3042 = vsub.f32 %v3010, %v3024
  %v3043 = vsub.f32 %v3011, %v3027
  %v3044 = vsub.f32 %v3012, %v3030
  %v3045 = vsub.f32 %v3013, %v3033
  %v3046 = vsub.f32 %v3014, %v3036
  %v3047 = vsub.f32 %v3015, %v3039
  %v3048 = vmul.f32 %v3040, 1.442695
  %v3049 = vpow.pop %v3048
  %v3050 = vmul.f32 %v3041, 1.442695
  %v3051 = vpow.pop %v3050
  %v3052 = vmul.f32 %v3042, 1.442695
  %v3053 = vpow.pop %v3052
  %v3054 = vmul.f32 %v3043, 1.442695
  %v3055 = vpow.pop %v3054
  %v3056 = vmul.f32 %v3044, 1.442695
  %v3057 = vpow.pop %v3056
  %v3058 = vmul.f32 %v3045, 1.442695
  %v3059 = vpow.pop %v3058
  %v3060 = vmul.f32 %v3046, 1.442695
  %v3061 = vpow.pop %v3060
  %v3062 = vmul.f32 %v3047, 1.442695
  %v3063 = vpow.pop %v3062
  %v3064 = vsel %vm1329, %v3049, 0.0
  %3065 = vadd.xlane.f32.xlu0 %v3064
  %v3066 = vpop.xlane.xlu0 %3065
  %v3067 = vsel %vm1333, %v3051, 0.0
  %3068 = vadd.xlane.f32.xlu0 %v3067
  %v3069 = vpop.xlane.xlu0 %3068
  %v3070 = vsel %vm1329, %v3053, 0.0
  %3071 = vadd.xlane.f32.xlu0 %v3070
  %v3072 = vpop.xlane.xlu0 %3071
  %v3073 = vsel %vm1333, %v3055, 0.0
  %3074 = vadd.xlane.f32.xlu0 %v3073
  %v3075 = vpop.xlane.xlu0 %3074
  %v3076 = vsel %vm1329, %v3057, 0.0
  %3077 = vadd.xlane.f32.xlu0 %v3076
  %v3078 = vpop.xlane.xlu0 %3077
  %v3079 = vsel %vm1333, %v3059, 0.0
  %3080 = vadd.xlane.f32.xlu0 %v3079
  %v3081 = vpop.xlane.xlu0 %3080
  %v3082 = vsel %vm1329, %v3061, 0.0
  %3083 = vadd.xlane.f32.xlu0 %v3082
  %v3084 = vpop.xlane.xlu0 %3083
  %v3085 = vsel %vm1333, %v3063, 0.0
  %3086 = vadd.xlane.f32.xlu0 %v3085
  %v3087 = vpop.xlane.xlu0 %3086
  %v3088 = vrcp.pop %v3066
  %v3089 = vrcp.pop %v3069
  %v3090 = vrcp.pop %v3072
  %v3091 = vrcp.pop %v3075
  %v3092 = vrcp.pop %v3078
  %v3093 = vrcp.pop %v3081
  %v3094 = vrcp.pop %v3084
  %v3095 = vrcp.pop %v3087
  %v3096 = vmul.f32 %v3049, %v3088
  %v3097 = vmul.f32 %v3051, %v3089
  %v3098 = vmul.f32 %v3053, %v3090
  %v3099 = vmul.f32 %v3055, %v3091
  %v3100 = vmul.f32 %v3057, %v3092
  %v3101 = vmul.f32 %v3059, %v3093
  %v3102 = vmul.f32 %v3061, %v3094
  %v3103 = vmul.f32 %v3063, %v3095
  %v3104 = vpack.c.bf16 %v3097, %v3096
  %3105 = vrot.lane.b32.xlu0 %v2796, 64
  %v3106 = vpop.permute.xlu0 %3105
  %v3108 = vsel %vm1329, %v3104, 0
  %v3111 = vsel %vm997, %v3106, 0
  %3113 = vmatprep.subr.bf16.mxu0 0
  %3114 = vmatpush1.bf16.msra.mxu0 %v3111
  %3115 = vmatprep.subr.bf16.mxu0 0
  %3116 = vmatpush1.bf16.msra.mxu0 0
  %3117 = vmatprep.subr.bf16.mxu0 0
  %3118 = vmatpush1.bf16.msra.mxu0 0
  %3119 = vmatprep.subr.bf16.mxu0 0
  %3120 = vmatpush1.bf16.msra.mxu0 0
  %3121 = vmatprep.subr.bf16.mxu0 0
  %3122 = vmatpush1.bf16.msra.mxu0 0
  %3123 = vmatprep.subr.bf16.mxu0 0
  %3124 = vmatpush1.bf16.msra.mxu0 0
  %3125 = vmatprep.subr.bf16.mxu0 0
  %3126 = vmatpush1.bf16.msra.mxu0 0
  %3127 = vmatprep.subr.bf16.mxu0 0
  %3128 = vmatpush1.bf16.msra.mxu0 0
  %3129 = vmatprep.subr.bf16.mxu0 0
  %3130 = vmatpush1.bf16.msra.mxu0 0
  %3131 = vmatprep.subr.bf16.mxu0 0
  %3132 = vmatpush1.bf16.msra.mxu0 0
  %3133 = vmatprep.subr.bf16.mxu0 0
  %3134 = vmatpush1.bf16.msra.mxu0 0
  %3135 = vmatprep.subr.bf16.mxu0 0
  %3136 = vmatpush1.bf16.msra.mxu0 0
  %3137 = vmatprep.subr.bf16.mxu0 0
  %3138 = vmatpush1.bf16.msra.mxu0 0
  %3139 = vmatprep.subr.bf16.mxu0 0
  %3140 = vmatpush1.bf16.msra.mxu0 0
  %3141 = vmatprep.subr.bf16.mxu0 0
  %3142 = vmatpush1.bf16.msra.mxu0 0
  %3143 = vmatprep.subr.bf16.mxu0 0
  %3144 = vmatpush1.bf16.msra.mxu0 0
  %3145 = vmatprep.mubr.bf16.mxu0 0
  %3146 = vmatmul.mubr.bf16.gmra.mrb[0].mxu0 %v3108
  %v3147 = vpop.f32.mrb[0].mxu0
  %v3148 = vadd.f32 0.0, %v3147
  %v3149 = vpop.f32.mrb[0].mxu0
  %v3150 = vpop.f32.mrb[0].mxu0
  %v3151 = vadd.f32 0.0, %v3150
  %v3152 = vpop.f32.mrb[0].mxu0
  %3153 = vdwg.mxu0
  %v3154 = vpack.c.bf16 %v3099, %v3098
  %3155 = vrot.lane.b32.xlu0 %v2796, 56
  %v3156 = vpop.permute.xlu0 %3155
  %v3158 = vsel %vm1329, %v3154, 0
  %v3161 = vsel %vm997, %v3156, 0
  %3163 = vmatprep.subr.bf16.mxu0 0
  %3164 = vmatpush1.bf16.msra.mxu0 %v3161
  %3165 = vmatprep.subr.bf16.mxu0 0
  %3166 = vmatpush1.bf16.msra.mxu0 0
  %3167 = vmatprep.subr.bf16.mxu0 0
  %3168 = vmatpush1.bf16.msra.mxu0 0
  %3169 = vmatprep.subr.bf16.mxu0 0
  %3170 = vmatpush1.bf16.msra.mxu0 0
  %3171 = vmatprep.subr.bf16.mxu0 0
  %3172 = vmatpush1.bf16.msra.mxu0 0
  %3173 = vmatprep.subr.bf16.mxu0 0
  %3174 = vmatpush1.bf16.msra.mxu0 0
  %3175 = vmatprep.subr.bf16.mxu0 0
  %3176 = vmatpush1.bf16.msra.mxu0 0
  %3177 = vmatprep.subr.bf16.mxu0 0
  %3178 = vmatpush1.bf16.msra.mxu0 0
  %3179 = vmatprep.subr.bf16.mxu0 0
  %3180 = vmatpush1.bf16.msra.mxu0 0
  %3181 = vmatprep.subr.bf16.mxu0 0
  %3182 = vmatpush1.bf16.msra.mxu0 0
  %3183 = vmatprep.subr.bf16.mxu0 0
  %3184 = vmatpush1.bf16.msra.mxu0 0
  %3185 = vmatprep.subr.bf16.mxu0 0
  %3186 = vmatpush1.bf16.msra.mxu0 0
  %3187 = vmatprep.subr.bf16.mxu0 0
  %3188 = vmatpush1.bf16.msra.mxu0 0
  %3189 = vmatprep.subr.bf16.mxu0 0
  %3190 = vmatpush1.bf16.msra.mxu0 0
  %3191 = vmatprep.subr.bf16.mxu0 0
  %3192 = vmatpush1.bf16.msra.mxu0 0
  %3193 = vmatprep.subr.bf16.mxu0 0
  %3194 = vmatpush1.bf16.msra.mxu0 0
  %3195 = vmatprep.mubr.bf16.mxu0 0
  %3196 = vmatmul.mubr.bf16.gmra.mrb[0].mxu0 %v3158
  %v3197 = vpop.f32.mrb[0].mxu0
  %v3198 = vadd.f32 0.0, %v3197
  %v3199 = vpop.f32.mrb[0].mxu0
  %v3200 = vpop.f32.mrb[0].mxu0
  %v3201 = vadd.f32 0.0, %v3200
  %v3202 = vpop.f32.mrb[0].mxu0
  %3203 = vdwg.mxu0
  %v3204 = vpack.c.bf16 %v3101, %v3100
  %3205 = vrot.lane.b32.xlu0 %v2796, 48
  %v3206 = vpop.permute.xlu0 %3205
  %v3208 = vsel %vm1329, %v3204, 0
  %v3211 = vsel %vm997, %v3206, 0
  %3213 = vmatprep.subr.bf16.mxu0 0
  %3214 = vmatpush1.bf16.msra.mxu0 %v3211
  %3215 = vmatprep.subr.bf16.mxu0 0
  %3216 = vmatpush1.bf16.msra.mxu0 0
  %3217 = vmatprep.subr.bf16.mxu0 0
  %3218 = vmatpush1.bf16.msra.mxu0 0
  %3219 = vmatprep.subr.bf16.mxu0 0
  %3220 = vmatpush1.bf16.msra.mxu0 0
  %3221 = vmatprep.subr.bf16.mxu0 0
  %3222 = vmatpush1.bf16.msra.mxu0 0
  %3223 = vmatprep.subr.bf16.mxu0 0
  %3224 = vmatpush1.bf16.msra.mxu0 0
  %3225 = vmatprep.subr.bf16.mxu0 0
  %3226 = vmatpush1.bf16.msra.mxu0 0
  %3227 = vmatprep.subr.bf16.mxu0 0
  %3228 = vmatpush1.bf16.msra.mxu0 0
  %3229 = vmatprep.subr.bf16.mxu0 0
  %3230 = vmatpush1.bf16.msra.mxu0 0
  %3231 = vmatprep.subr.bf16.mxu0 0
  %3232 = vmatpush1.bf16.msra.mxu0 0
  %3233 = vmatprep.subr.bf16.mxu0 0
  %3234 = vmatpush1.bf16.msra.mxu0 0
  %3235 = vmatprep.subr.bf16.mxu0 0
  %3236 = vmatpush1.bf16.msra.mxu0 0
  %3237 = vmatprep.subr.bf16.mxu0 0
  %3238 = vmatpush1.bf16.msra.mxu0 0
  %3239 = vmatprep.subr.bf16.mxu0 0
  %3240 = vmatpush1.bf16.msra.mxu0 0
  %3241 = vmatprep.subr.bf16.mxu0 0
  %3242 = vmatpush1.bf16.msra.mxu0 0
  %3243 = vmatprep.subr.bf16.mxu0 0
  %3244 = vmatpush1.bf16.msra.mxu0 0
  %3245 = vmatprep.mubr.bf16.mxu0 0
  %3246 = vmatmul.mubr.bf16.gmra.mrb[0].mxu0 %v3208
  %v3247 = vpop.f32.mrb[0].mxu0
  %v3248 = vadd.f32 0.0, %v3247
  %v3249 = vpop.f32.mrb[0].mxu0
  %v3250 = vpop.f32.mrb[0].mxu0
  %v3251 = vadd.f32 0.0, %v3250
  %v3252 = vpop.f32.mrb[0].mxu0
  %3253 = vdwg.mxu0
  %v3254 = vpack.c.bf16 %v3103, %v3102
  %3255 = vrot.lane.b32.xlu0 %v2796, 40
  %v3256 = vpop.permute.xlu0 %3255
  %v3258 = vsel %vm1329, %v3254, 0
  %v3261 = vsel %vm997, %v3256, 0
  %3263 = vmatprep.subr.bf16.mxu0 0
  %3264 = vmatpush1.bf16.msra.mxu0 %v3261
  %3265 = vmatprep.subr.bf16.mxu0 0
  %3266 = vmatpush1.bf16.msra.mxu0 0
  %3267 = vmatprep.subr.bf16.mxu0 0
  %3268 = vmatpush1.bf16.msra.mxu0 0
  %3269 = vmatprep.subr.bf16.mxu0 0
  %3270 = vmatpush1.bf16.msra.mxu0 0
  %3271 = vmatprep.subr.bf16.mxu0 0
  %3272 = vmatpush1.bf16.msra.mxu0 0
  %3273 = vmatprep.subr.bf16.mxu0 0
  %3274 = vmatpush1.bf16.msra.mxu0 0
  %3275 = vmatprep.subr.bf16.mxu0 0
  %3276 = vmatpush1.bf16.msra.mxu0 0
  %3277 = vmatprep.subr.bf16.mxu0 0
  %3278 = vmatpush1.bf16.msra.mxu0 0
  %3279 = vmatprep.subr.bf16.mxu0 0
  %3280 = vmatpush1.bf16.msra.mxu0 0
  %3281 = vmatprep.subr.bf16.mxu0 0
  %3282 = vmatpush1.bf16.msra.mxu0 0
  %3283 = vmatprep.subr.bf16.mxu0 0
  %3284 = vmatpush1.bf16.msra.mxu0 0
  %3285 = vmatprep.subr.bf16.mxu0 0
  %3286 = vmatpush1.bf16.msra.mxu0 0
  %3287 = vmatprep.subr.bf16.mxu0 0
  %3288 = vmatpush1.bf16.msra.mxu0 0
  %3289 = vmatprep.subr.bf16.mxu0 0
  %3290 = vmatpush1.bf16.msra.mxu0 0
  %3291 = vmatprep.subr.bf16.mxu0 0
  %3292 = vmatpush1.bf16.msra.mxu0 0
  %3293 = vmatprep.subr.bf16.mxu0 0
  %3294 = vmatpush1.bf16.msra.mxu0 0
  %3295 = vmatprep.mubr.bf16.mxu0 0
  %3296 = vmatmul.mubr.bf16.gmra.mrb[0].mxu0 %v3258
  %v3297 = vpop.f32.mrb[0].mxu0
  %v3298 = vadd.f32 0.0, %v3297
  %v3299 = vpop.f32.mrb[0].mxu0
  %v3300 = vpop.f32.mrb[0].mxu0
  %v3301 = vadd.f32 0.0, %v3300
  %v3302 = vpop.f32.mrb[0].mxu0
  %3303 = vdwg.mxu0
  %3306 = vrot.lane.b32.xlu0 %v3198, 8
  %v3307 = vpop.permute.xlu0 %3306
  %3308 = vrot.lane.b32.xlu0 %v3201, 8
  %v3309 = vpop.permute.xlu0 %3308
  %3314 = vrot.lane.b32.xlu0 %v3248, 16
  %v3315 = vpop.permute.xlu0 %3314
  %3316 = vrot.lane.b32.xlu0 %v3251, 16
  %v3317 = vpop.permute.xlu0 %3316
  %3322 = vrot.lane.b32.xlu0 %v3298, 24
  %v3323 = vpop.permute.xlu0 %3322
  %3324 = vrot.lane.b32.xlu0 %v3301, 24
  %v3325 = vpop.permute.xlu0 %3324
  %v3328 = vsel %vm159, %v3148, %v3307
  %v3329 = vsel %vm159, %v3151, %v3309
  %v3330 = vsel %vm376, %v3328, %v3315
  %v3331 = vsel %vm376, %v3329, %v3317
  %v3332 = vsel %vm685, %v3330, %v3323
  %v3333 = vsel %vm685, %v3331, %v3325
  %v3334 = vpack.c.bf16 %v3333, %v3332
  %v3335 = vlaneseq
  %v3336 = vshrl.u32 %v3335, 7
  %v3337 = vsub.s32 7, %v3336
  %v3338 = vrot.slane %v33, %v3337
  %v3343 = vunpack.c.l.b16 %v2731
  %v3344 = vunpack.c.l.b16 %v2732
  %v3345 = vunpack.c.l.b16 %v2733
  %v3346 = vunpack.c.l.b16 %v2734
  %v3347 = vpack.c.b16 %v3344, %v3343
  %v3348 = vpack.c.b16 %v3346, %v3345
  %v3352 = vsel %vm46, %v3334, 0
  %3354 = vmatprep.subr.bf16.mxu0 0
  %3355 = vmatpush1.bf16.msra.mxu0 %v3347
  %3356 = vmatprep.subr.bf16.mxu0 0
  %3357 = vmatpush1.bf16.msra.mxu0 %v3348
  %3358 = vmatprep.subr.bf16.mxu0 0
  %3359 = vmatpush1.bf16.msra.mxu0 0
  %3360 = vmatprep.subr.bf16.mxu0 0
  %3361 = vmatpush1.bf16.msra.mxu0 0
  %3362 = vmatprep.subr.bf16.mxu0 0
  %3363 = vmatpush1.bf16.msra.mxu0 0
  %3364 = vmatprep.subr.bf16.mxu0 0
  %3365 = vmatpush1.bf16.msra.mxu0 0
  %3366 = vmatprep.subr.bf16.mxu0 0
  %3367 = vmatpush1.bf16.msra.mxu0 0
  %3368 = vmatprep.subr.bf16.mxu0 0
  %3369 = vmatpush1.bf16.msra.mxu0 0
  %3370 = vmatprep.subr.bf16.mxu0 0
  %3371 = vmatpush1.bf16.msra.mxu0 0
  %3372 = vmatprep.subr.bf16.mxu0 0
  %3373 = vmatpush1.bf16.msra.mxu0 0
  %3374 = vmatprep.subr.bf16.mxu0 0
  %3375 = vmatpush1.bf16.msra.mxu0 0
  %3376 = vmatprep.subr.bf16.mxu0 0
  %3377 = vmatpush1.bf16.msra.mxu0 0
  %3378 = vmatprep.subr.bf16.mxu0 0
  %3379 = vmatpush1.bf16.msra.mxu0 0
  %3380 = vmatprep.subr.bf16.mxu0 0
  %3381 = vmatpush1.bf16.msra.mxu0 0
  %3382 = vmatprep.subr.bf16.mxu0 0
  %3383 = vmatpush1.bf16.msra.mxu0 0
  %3384 = vmatprep.subr.bf16.mxu0 0
  %3385 = vmatpush1.bf16.msra.mxu0 0
  %3386 = vmatprep.mubr.bf16.mxu0 0
  %3387 = vmatmul.mubr.bf16.gmra.mrb[0].mxu0 %v3352
  %v3388 = vpop.f32.mrb[0].mxu0
  %v3389 = vadd.f32 %v3338, %v3388
  %v3390 = vpop.f32.mrb[0].mxu0
  %v3391 = vpop.f32.mrb[0].mxu0
  %v3392 = vadd.f32 %v3338, %v3391
  %v3393 = vpop.f32.mrb[0].mxu0
  %3394 = vdwg.mxu0
  %v3395 = vadd.f32 %v3389, %v2723
  %v3396 = vadd.f32 %v3392, %v2724
  %v3397 = vsel %vm46, %v3395, 0.0
  %3398 = vadd.xlane.f32.xlu0 %v3397
  %v3399 = vpop.xlane.xlu0 %3398
  %v3400 = vsel %vm1002, %v3396, 0.0
  %3401 = vadd.xlane.f32.xlu0 %v3400
  %v3402 = vpop.xlane.xlu0 %3401
  %v3403 = vmul.f32 %v3399, %v53
  %v3404 = vmul.f32 %v3402, %v53
  %v3405 = vsub.f32 %v3395, %v3403
  %v3406 = vsub.f32 %v3396, %v3404
  %v3407 = vmul.f32 %v3405, %v3405
  %v3408 = vmul.f32 %v3406, %v3406
  %v3409 = vsel %vm46, %v3407, 0.0
  %3410 = vadd.xlane.f32.xlu0 %v3409
  %v3411 = vpop.xlane.xlu0 %3410
  %v3412 = vsel %vm1002, %v3408, 0.0
  %3413 = vadd.xlane.f32.xlu0 %v3412
  %v3414 = vpop.xlane.xlu0 %3413
  %v3415 = vmul.f32 %v3411, %v53
  %v3416 = vmul.f32 %v3414, %v53
  %v3417 = vadd.f32 %v3415, 1e-12
  %v3418 = vadd.f32 %v3416, 1e-12
  %v3419 = vrsqrt.pop %v3417
  %v3420 = vrsqrt.pop %v3418
  %v3421 = vmul.f32 %v3405, %v3419
  %v3422 = vmul.f32 %v3406, %v3420
  %v3423 = vlaneseq
  %v3424 = vshrl.u32 %v3423, 7
  %v3425 = vsub.s32 0, %v3424
  %v3426 = vrot.slane %v34, %v3425
  %v3427 = vmul.f32 %v3421, %v3426
  %v3428 = vmul.f32 %v3422, %v3426
  %v3429 = vlaneseq
  %v3430 = vshrl.u32 %v3429, 7
  %v3431 = vsub.s32 1, %v3430
  %v3432 = vrot.slane %v34, %v3431
  %v3433 = vadd.f32 %v3427, %v3432
  %v3434 = vadd.f32 %v3428, %v3432
  %s3435 = scalar_lea.vmem %s4, 80
  %v3436 = vld [vmem:[%s3435] sm:$0xf]
  %v3437 = vld [vmem:[%s3435 + $0x4] sm:$0xf]
  %v3438 = vld [vmem:[%s3435 + $0x8] sm:$0xf]
  %v3439 = vld [vmem:[%s3435 + $0xc] sm:$0xf]
  %s3440 = scalar_lea.vmem %s5, 64
  %v3441 = vld [vmem:[%s3440] sm:$0xf]
  %v3442 = vld [vmem:[%s3440 + $0x4] sm:$0xf]
  %v3443 = vld [vmem:[%s3440 + $0x8] sm:$0xf]
  %v3444 = vld [vmem:[%s3440 + $0xc] sm:$0xf]
  %s3445 = scalar_lea.vmem %s4, 96
  %v3446 = vld [vmem:[%s3445] sm:$0xf]
  %v3447 = vld [vmem:[%s3445 + $0x4] sm:$0xf]
  %v3448 = vld [vmem:[%s3445 + $0x8] sm:$0xf]
  %v3449 = vld [vmem:[%s3445 + $0xc] sm:$0xf]
  %v3450 = vpack.c.bf16 %v3434, %v3433
  %v3451 = vlaneseq
  %v3452 = vshrl.u32 %v3451, 7
  %v3453 = vsub.s32 2, %v3452
  %v3454 = vrot.slane %v34, %v3453
  %v3459 = vunpack.c.l.b16 %v3436
  %v3460 = vunpack.c.l.b16 %v3437
  %v3461 = vunpack.c.l.b16 %v3438
  %v3462 = vunpack.c.l.b16 %v3439
  %v3463 = vpack.c.b16 %v3460, %v3459
  %v3464 = vpack.c.b16 %v3462, %v3461
  %v3468 = vsel %vm46, %v3450, 0
  %3470 = vmatprep.subr.bf16.mxu0 0
  %3471 = vmatpush1.bf16.msra.mxu0 %v3463
  %3472 = vmatprep.subr.bf16.mxu0 0
  %3473 = vmatpush1.bf16.msra.mxu0 %v3464
  %3474 = vmatprep.subr.bf16.mxu0 0
  %3475 = vmatpush1.bf16.msra.mxu0 0
  %3476 = vmatprep.subr.bf16.mxu0 0
  %3477 = vmatpush1.bf16.msra.mxu0 0
  %3478 = vmatprep.subr.bf16.mxu0 0
  %3479 = vmatpush1.bf16.msra.mxu0 0
  %3480 = vmatprep.subr.bf16.mxu0 0
  %3481 = vmatpush1.bf16.msra.mxu0 0
  %3482 = vmatprep.subr.bf16.mxu0 0
  %3483 = vmatpush1.bf16.msra.mxu0 0
  %3484 = vmatprep.subr.bf16.mxu0 0
  %3485 = vmatpush1.bf16.msra.mxu0 0
  %3486 = vmatprep.subr.bf16.mxu0 0
  %3487 = vmatpush1.bf16.msra.mxu0 0
  %3488 = vmatprep.subr.bf16.mxu0 0
  %3489 = vmatpush1.bf16.msra.mxu0 0
  %3490 = vmatprep.subr.bf16.mxu0 0
  %3491 = vmatpush1.bf16.msra.mxu0 0
  %3492 = vmatprep.subr.bf16.mxu0 0
  %3493 = vmatpush1.bf16.msra.mxu0 0
  %3494 = vmatprep.subr.bf16.mxu0 0
  %3495 = vmatpush1.bf16.msra.mxu0 0
  %3496 = vmatprep.subr.bf16.mxu0 0
  %3497 = vmatpush1.bf16.msra.mxu0 0
  %3498 = vmatprep.subr.bf16.mxu0 0
  %3499 = vmatpush1.bf16.msra.mxu0 0
  %3500 = vmatprep.subr.bf16.mxu0 0
  %3501 = vmatpush1.bf16.msra.mxu0 0
  %3502 = vmatprep.mubr.bf16.mxu0 0
  %3503 = vmatmul.mubr.bf16.gmra.mrb[0].mxu0 %v3468
  %v3504 = vpop.f32.mrb[0].mxu0
  %v3505 = vadd.f32 %v3454, %v3504
  %v3506 = vpop.f32.mrb[0].mxu0
  %v3507 = vpop.f32.mrb[0].mxu0
  %v3508 = vadd.f32 %v3454, %v3507
  %v3509 = vpop.f32.mrb[0].mxu0
  %3510 = vdwg.mxu0
  %v3511 = vlaneseq
  %v3512 = vshrl.u32 %v3511, 7
  %v3513 = vsub.s32 3, %v3512
  %v3514 = vrot.slane %v34, %v3513
  %v3519 = vunpack.c.l.b16 %v3441
  %v3520 = vunpack.c.l.b16 %v3442
  %v3521 = vunpack.c.l.b16 %v3443
  %v3522 = vunpack.c.l.b16 %v3444
  %v3523 = vpack.c.b16 %v3520, %v3519
  %v3524 = vpack.c.b16 %v3522, %v3521
  %3527 = vmatprep.subr.bf16.mxu0 0
  %3528 = vmatpush1.bf16.msra.mxu0 %v3523
  %3529 = vmatprep.subr.bf16.mxu0 0
  %3530 = vmatpush1.bf16.msra.mxu0 %v3524
  %3531 = vmatprep.subr.bf16.mxu0 0
  %3532 = vmatpush1.bf16.msra.mxu0 0
  %3533 = vmatprep.subr.bf16.mxu0 0
  %3534 = vmatpush1.bf16.msra.mxu0 0
  %3535 = vmatprep.subr.bf16.mxu0 0
  %3536 = vmatpush1.bf16.msra.mxu0 0
  %3537 = vmatprep.subr.bf16.mxu0 0
  %3538 = vmatpush1.bf16.msra.mxu0 0
  %3539 = vmatprep.subr.bf16.mxu0 0
  %3540 = vmatpush1.bf16.msra.mxu0 0
  %3541 = vmatprep.subr.bf16.mxu0 0
  %3542 = vmatpush1.bf16.msra.mxu0 0
  %3543 = vmatprep.subr.bf16.mxu0 0
  %3544 = vmatpush1.bf16.msra.mxu0 0
  %3545 = vmatprep.subr.bf16.mxu0 0
  %3546 = vmatpush1.bf16.msra.mxu0 0
  %3547 = vmatprep.subr.bf16.mxu0 0
  %3548 = vmatpush1.bf16.msra.mxu0 0
  %3549 = vmatprep.subr.bf16.mxu0 0
  %3550 = vmatpush1.bf16.msra.mxu0 0
  %3551 = vmatprep.subr.bf16.mxu0 0
  %3552 = vmatpush1.bf16.msra.mxu0 0
  %3553 = vmatprep.subr.bf16.mxu0 0
  %3554 = vmatpush1.bf16.msra.mxu0 0
  %3555 = vmatprep.subr.bf16.mxu0 0
  %3556 = vmatpush1.bf16.msra.mxu0 0
  %3557 = vmatprep.subr.bf16.mxu0 0
  %3558 = vmatpush1.bf16.msra.mxu0 0
  %3559 = vmatprep.mubr.bf16.mxu0 0
  %3560 = vmatmul.mubr.bf16.gmra.mrb[0].mxu0 %v1844
  %v3561 = vpop.f32.mrb[0].mxu0
  %v3562 = vadd.f32 %v3514, %v3561
  %v3563 = vpop.f32.mrb[0].mxu0
  %v3564 = vpop.f32.mrb[0].mxu0
  %v3565 = vadd.f32 %v3514, %v3564
  %v3566 = vpop.f32.mrb[0].mxu0
  %3567 = vdwg.mxu0
  %v3568 = vpack.c.bf16 %v3508, %v3505
  %v3569 = vpack.c.bf16 %v3565, %v3562
  %v3571 = vsel %vm159, %v3568, 0
  %v3574 = vsel %vm159, %v3569, 0
  %3576 = vmatprep.subr.bf16.mxu0 0
  %3577 = vmatpush1.bf16.xpose.msra.mxu0 %v3574
  %3578 = vmatprep.subr.bf16.mxu0 0
  %3579 = vmatpush1.bf16.xpose.msra.mxu0 0
  %3580 = vmatprep.subr.bf16.mxu0 0
  %3581 = vmatpush1.bf16.xpose.msra.mxu0 0
  %3582 = vmatprep.subr.bf16.mxu0 0
  %3583 = vmatpush1.bf16.xpose.msra.mxu0 0
  %3584 = vmatprep.subr.bf16.mxu0 0
  %3585 = vmatpush1.bf16.xpose.msra.mxu0 0
  %3586 = vmatprep.subr.bf16.mxu0 0
  %3587 = vmatpush1.bf16.xpose.msra.mxu0 0
  %3588 = vmatprep.subr.bf16.mxu0 0
  %3589 = vmatpush1.bf16.xpose.msra.mxu0 0
  %3590 = vmatprep.subr.bf16.mxu0 0
  %3591 = vmatpush1.bf16.xpose.msra.mxu0 0
  %3592 = vmatprep.subr.bf16.mxu0 0
  %3593 = vmatpush1.bf16.xpose.msra.mxu0 0
  %3594 = vmatprep.subr.bf16.mxu0 0
  %3595 = vmatpush1.bf16.xpose.msra.mxu0 0
  %3596 = vmatprep.subr.bf16.mxu0 0
  %3597 = vmatpush1.bf16.xpose.msra.mxu0 0
  %3598 = vmatprep.subr.bf16.mxu0 0
  %3599 = vmatpush1.bf16.xpose.msra.mxu0 0
  %3600 = vmatprep.subr.bf16.mxu0 0
  %3601 = vmatpush1.bf16.xpose.msra.mxu0 0
  %3602 = vmatprep.subr.bf16.mxu0 0
  %3603 = vmatpush1.bf16.xpose.msra.mxu0 0
  %3604 = vmatprep.subr.bf16.mxu0 0
  %3605 = vmatpush1.bf16.xpose.msra.mxu0 0
  %3606 = vmatprep.subr.bf16.mxu0 0
  %3607 = vmatpush1.bf16.xpose.msra.mxu0 0
  %3608 = vmatprep.mubr.bf16.mxu0 0
  %3609 = vmatmul.mubr.bf16.gmra.mrb[0].mxu0 %v3571
  %v3610 = vpop.f32.mrb[0].mxu0
  %v3611 = vadd.f32 0.0, %v3610
  %v3612 = vpop.f32.mrb[0].mxu0
  %v3613 = vpop.f32.mrb[0].mxu0
  %v3614 = vadd.f32 0.0, %v3613
  %v3615 = vpop.f32.mrb[0].mxu0
  %3616 = vdwg.mxu0
  %3618 = vrot.lane.b32.xlu0 %v3568, 120
  %v3619 = vpop.permute.xlu0 %3618
  %3621 = vrot.lane.b32.xlu0 %v3569, 120
  %v3622 = vpop.permute.xlu0 %3621
  %v3624 = vsel %vm159, %v3619, 0
  %v3627 = vsel %vm159, %v3622, 0
  %3629 = vmatprep.subr.bf16.mxu0 0
  %3630 = vmatpush1.bf16.xpose.msra.mxu0 %v3627
  %3631 = vmatprep.subr.bf16.mxu0 0
  %3632 = vmatpush1.bf16.xpose.msra.mxu0 0
  %3633 = vmatprep.subr.bf16.mxu0 0
  %3634 = vmatpush1.bf16.xpose.msra.mxu0 0
  %3635 = vmatprep.subr.bf16.mxu0 0
  %3636 = vmatpush1.bf16.xpose.msra.mxu0 0
  %3637 = vmatprep.subr.bf16.mxu0 0
  %3638 = vmatpush1.bf16.xpose.msra.mxu0 0
  %3639 = vmatprep.subr.bf16.mxu0 0
  %3640 = vmatpush1.bf16.xpose.msra.mxu0 0
  %3641 = vmatprep.subr.bf16.mxu0 0
  %3642 = vmatpush1.bf16.xpose.msra.mxu0 0
  %3643 = vmatprep.subr.bf16.mxu0 0
  %3644 = vmatpush1.bf16.xpose.msra.mxu0 0
  %3645 = vmatprep.subr.bf16.mxu0 0
  %3646 = vmatpush1.bf16.xpose.msra.mxu0 0
  %3647 = vmatprep.subr.bf16.mxu0 0
  %3648 = vmatpush1.bf16.xpose.msra.mxu0 0
  %3649 = vmatprep.subr.bf16.mxu0 0
  %3650 = vmatpush1.bf16.xpose.msra.mxu0 0
  %3651 = vmatprep.subr.bf16.mxu0 0
  %3652 = vmatpush1.bf16.xpose.msra.mxu0 0
  %3653 = vmatprep.subr.bf16.mxu0 0
  %3654 = vmatpush1.bf16.xpose.msra.mxu0 0
  %3655 = vmatprep.subr.bf16.mxu0 0
  %3656 = vmatpush1.bf16.xpose.msra.mxu0 0
  %3657 = vmatprep.subr.bf16.mxu0 0
  %3658 = vmatpush1.bf16.xpose.msra.mxu0 0
  %3659 = vmatprep.subr.bf16.mxu0 0
  %3660 = vmatpush1.bf16.xpose.msra.mxu0 0
  %3661 = vmatprep.mubr.bf16.mxu0 0
  %3662 = vmatmul.mubr.bf16.gmra.mrb[0].mxu0 %v3624
  %v3663 = vpop.f32.mrb[0].mxu0
  %v3664 = vadd.f32 0.0, %v3663
  %v3665 = vpop.f32.mrb[0].mxu0
  %v3666 = vpop.f32.mrb[0].mxu0
  %v3667 = vadd.f32 0.0, %v3666
  %v3668 = vpop.f32.mrb[0].mxu0
  %3669 = vdwg.mxu0
  %3670 = vrot.lane.b32.xlu0 %v3568, 112
  %v3671 = vpop.permute.xlu0 %3670
  %3672 = vrot.lane.b32.xlu0 %v3569, 112
  %v3673 = vpop.permute.xlu0 %3672
  %v3675 = vsel %vm159, %v3671, 0
  %v3678 = vsel %vm159, %v3673, 0
  %3680 = vmatprep.subr.bf16.mxu0 0
  %3681 = vmatpush1.bf16.xpose.msra.mxu0 %v3678
  %3682 = vmatprep.subr.bf16.mxu0 0
  %3683 = vmatpush1.bf16.xpose.msra.mxu0 0
  %3684 = vmatprep.subr.bf16.mxu0 0
  %3685 = vmatpush1.bf16.xpose.msra.mxu0 0
  %3686 = vmatprep.subr.bf16.mxu0 0
  %3687 = vmatpush1.bf16.xpose.msra.mxu0 0
  %3688 = vmatprep.subr.bf16.mxu0 0
  %3689 = vmatpush1.bf16.xpose.msra.mxu0 0
  %3690 = vmatprep.subr.bf16.mxu0 0
  %3691 = vmatpush1.bf16.xpose.msra.mxu0 0
  %3692 = vmatprep.subr.bf16.mxu0 0
  %3693 = vmatpush1.bf16.xpose.msra.mxu0 0
  %3694 = vmatprep.subr.bf16.mxu0 0
  %3695 = vmatpush1.bf16.xpose.msra.mxu0 0
  %3696 = vmatprep.subr.bf16.mxu0 0
  %3697 = vmatpush1.bf16.xpose.msra.mxu0 0
  %3698 = vmatprep.subr.bf16.mxu0 0
  %3699 = vmatpush1.bf16.xpose.msra.mxu0 0
  %3700 = vmatprep.subr.bf16.mxu0 0
  %3701 = vmatpush1.bf16.xpose.msra.mxu0 0
  %3702 = vmatprep.subr.bf16.mxu0 0
  %3703 = vmatpush1.bf16.xpose.msra.mxu0 0
  %3704 = vmatprep.subr.bf16.mxu0 0
  %3705 = vmatpush1.bf16.xpose.msra.mxu0 0
  %3706 = vmatprep.subr.bf16.mxu0 0
  %3707 = vmatpush1.bf16.xpose.msra.mxu0 0
  %3708 = vmatprep.subr.bf16.mxu0 0
  %3709 = vmatpush1.bf16.xpose.msra.mxu0 0
  %3710 = vmatprep.subr.bf16.mxu0 0
  %3711 = vmatpush1.bf16.xpose.msra.mxu0 0
  %3712 = vmatprep.mubr.bf16.mxu0 0
  %3713 = vmatmul.mubr.bf16.gmra.mrb[0].mxu0 %v3675
  %v3714 = vpop.f32.mrb[0].mxu0
  %v3715 = vadd.f32 0.0, %v3714
  %v3716 = vpop.f32.mrb[0].mxu0
  %v3717 = vpop.f32.mrb[0].mxu0
  %v3718 = vadd.f32 0.0, %v3717
  %v3719 = vpop.f32.mrb[0].mxu0
  %3720 = vdwg.mxu0
  %3721 = vrot.lane.b32.xlu0 %v3568, 104
  %v3722 = vpop.permute.xlu0 %3721
  %3723 = vrot.lane.b32.xlu0 %v3569, 104
  %v3724 = vpop.permute.xlu0 %3723
  %v3726 = vsel %vm159, %v3722, 0
  %v3729 = vsel %vm159, %v3724, 0
  %3731 = vmatprep.subr.bf16.mxu0 0
  %3732 = vmatpush1.bf16.xpose.msra.mxu0 %v3729
  %3733 = vmatprep.subr.bf16.mxu0 0
  %3734 = vmatpush1.bf16.xpose.msra.mxu0 0
  %3735 = vmatprep.subr.bf16.mxu0 0
  %3736 = vmatpush1.bf16.xpose.msra.mxu0 0
  %3737 = vmatprep.subr.bf16.mxu0 0
  %3738 = vmatpush1.bf16.xpose.msra.mxu0 0
  %3739 = vmatprep.subr.bf16.mxu0 0
  %3740 = vmatpush1.bf16.xpose.msra.mxu0 0
  %3741 = vmatprep.subr.bf16.mxu0 0
  %3742 = vmatpush1.bf16.xpose.msra.mxu0 0
  %3743 = vmatprep.subr.bf16.mxu0 0
  %3744 = vmatpush1.bf16.xpose.msra.mxu0 0
  %3745 = vmatprep.subr.bf16.mxu0 0
  %3746 = vmatpush1.bf16.xpose.msra.mxu0 0
  %3747 = vmatprep.subr.bf16.mxu0 0
  %3748 = vmatpush1.bf16.xpose.msra.mxu0 0
  %3749 = vmatprep.subr.bf16.mxu0 0
  %3750 = vmatpush1.bf16.xpose.msra.mxu0 0
  %3751 = vmatprep.subr.bf16.mxu0 0
  %3752 = vmatpush1.bf16.xpose.msra.mxu0 0
  %3753 = vmatprep.subr.bf16.mxu0 0
  %3754 = vmatpush1.bf16.xpose.msra.mxu0 0
  %3755 = vmatprep.subr.bf16.mxu0 0
  %3756 = vmatpush1.bf16.xpose.msra.mxu0 0
  %3757 = vmatprep.subr.bf16.mxu0 0
  %3758 = vmatpush1.bf16.xpose.msra.mxu0 0
  %3759 = vmatprep.subr.bf16.mxu0 0
  %3760 = vmatpush1.bf16.xpose.msra.mxu0 0
  %3761 = vmatprep.subr.bf16.mxu0 0
  %3762 = vmatpush1.bf16.xpose.msra.mxu0 0
  %3763 = vmatprep.mubr.bf16.mxu0 0
  %3764 = vmatmul.mubr.bf16.gmra.mrb[0].mxu0 %v3726
  %v3765 = vpop.f32.mrb[0].mxu0
  %v3766 = vadd.f32 0.0, %v3765
  %v3767 = vpop.f32.mrb[0].mxu0
  %v3768 = vpop.f32.mrb[0].mxu0
  %v3769 = vadd.f32 0.0, %v3768
  %v3770 = vpop.f32.mrb[0].mxu0
  %3771 = vdwg.mxu0
  %v3772 = vmul.f32 %v3611, 0.35355338
  %v3773 = vmul.f32 %v3614, 0.35355338
  %v3774 = vmul.f32 %v3664, 0.35355338
  %v3775 = vmul.f32 %v3667, 0.35355338
  %v3776 = vmul.f32 %v3715, 0.35355338
  %v3777 = vmul.f32 %v3718, 0.35355338
  %v3778 = vmul.f32 %v3766, 0.35355338
  %v3779 = vmul.f32 %v3769, 0.35355338
  %v3780 = vadd.f32 %v3772, %v40
  %v3781 = vadd.f32 %v3773, %v41
  %v3782 = vadd.f32 %v3774, %v40
  %v3783 = vadd.f32 %v3775, %v41
  %v3784 = vadd.f32 %v3776, %v40
  %v3785 = vadd.f32 %v3777, %v41
  %v3786 = vadd.f32 %v3778, %v40
  %v3787 = vadd.f32 %v3779, %v41
  %v3788 = vsel %vm376, %v3780, -inf
  %3789 = vmax.xlane.f32.xlu0 %v3788
  %v3790 = vpop.xlane.xlu0 %3789
  %v3791 = vsel %vm2110, %v3781, -inf
  %3792 = vmax.xlane.f32.xlu0 %v3791
  %v3793 = vpop.xlane.xlu0 %3792
  %v3794 = vsel %vm376, %v3782, -inf
  %3795 = vmax.xlane.f32.xlu0 %v3794
  %v3796 = vpop.xlane.xlu0 %3795
  %v3797 = vsel %vm2110, %v3783, -inf
  %3798 = vmax.xlane.f32.xlu0 %v3797
  %v3799 = vpop.xlane.xlu0 %3798
  %v3800 = vsel %vm376, %v3784, -inf
  %3801 = vmax.xlane.f32.xlu0 %v3800
  %v3802 = vpop.xlane.xlu0 %3801
  %v3803 = vsel %vm2110, %v3785, -inf
  %3804 = vmax.xlane.f32.xlu0 %v3803
  %v3805 = vpop.xlane.xlu0 %3804
  %v3806 = vsel %vm376, %v3786, -inf
  %3807 = vmax.xlane.f32.xlu0 %v3806
  %v3808 = vpop.xlane.xlu0 %3807
  %v3809 = vsel %vm2110, %v3787, -inf
  %3810 = vmax.xlane.f32.xlu0 %v3809
  %v3811 = vpop.xlane.xlu0 %3810
  %v3812 = vsub.f32 %v3780, %v3790
  %v3813 = vsub.f32 %v3781, %v3793
  %v3814 = vsub.f32 %v3782, %v3796
  %v3815 = vsub.f32 %v3783, %v3799
  %v3816 = vsub.f32 %v3784, %v3802
  %v3817 = vsub.f32 %v3785, %v3805
  %v3818 = vsub.f32 %v3786, %v3808
  %v3819 = vsub.f32 %v3787, %v3811
  %v3820 = vmul.f32 %v3812, 1.442695
  %v3821 = vpow.pop %v3820
  %v3822 = vmul.f32 %v3813, 1.442695
  %v3823 = vpow.pop %v3822
  %v3824 = vmul.f32 %v3814, 1.442695
  %v3825 = vpow.pop %v3824
  %v3826 = vmul.f32 %v3815, 1.442695
  %v3827 = vpow.pop %v3826
  %v3828 = vmul.f32 %v3816, 1.442695
  %v3829 = vpow.pop %v3828
  %v3830 = vmul.f32 %v3817, 1.442695
  %v3831 = vpow.pop %v3830
  %v3832 = vmul.f32 %v3818, 1.442695
  %v3833 = vpow.pop %v3832
  %v3834 = vmul.f32 %v3819, 1.442695
  %v3835 = vpow.pop %v3834
  %v3836 = vsel %vm376, %v3821, 0.0
  %3837 = vadd.xlane.f32.xlu0 %v3836
  %v3838 = vpop.xlane.xlu0 %3837
  %v3839 = vsel %vm2110, %v3823, 0.0
  %3840 = vadd.xlane.f32.xlu0 %v3839
  %v3841 = vpop.xlane.xlu0 %3840
  %v3842 = vsel %vm376, %v3825, 0.0
  %3843 = vadd.xlane.f32.xlu0 %v3842
  %v3844 = vpop.xlane.xlu0 %3843
  %v3845 = vsel %vm2110, %v3827, 0.0
  %3846 = vadd.xlane.f32.xlu0 %v3845
  %v3847 = vpop.xlane.xlu0 %3846
  %v3848 = vsel %vm376, %v3829, 0.0
  %3849 = vadd.xlane.f32.xlu0 %v3848
  %v3850 = vpop.xlane.xlu0 %3849
  %v3851 = vsel %vm2110, %v3831, 0.0
  %3852 = vadd.xlane.f32.xlu0 %v3851
  %v3853 = vpop.xlane.xlu0 %3852
  %v3854 = vsel %vm376, %v3833, 0.0
  %3855 = vadd.xlane.f32.xlu0 %v3854
  %v3856 = vpop.xlane.xlu0 %3855
  %v3857 = vsel %vm2110, %v3835, 0.0
  %3858 = vadd.xlane.f32.xlu0 %v3857
  %v3859 = vpop.xlane.xlu0 %3858
  %v3860 = vrcp.pop %v3838
  %v3861 = vrcp.pop %v3841
  %v3862 = vrcp.pop %v3844
  %v3863 = vrcp.pop %v3847
  %v3864 = vrcp.pop %v3850
  %v3865 = vrcp.pop %v3853
  %v3866 = vrcp.pop %v3856
  %v3867 = vrcp.pop %v3859
  %v3868 = vmul.f32 %v3821, %v3860
  %v3869 = vmul.f32 %v3823, %v3861
  %v3870 = vmul.f32 %v3825, %v3862
  %v3871 = vmul.f32 %v3827, %v3863
  %v3872 = vmul.f32 %v3829, %v3864
  %v3873 = vmul.f32 %v3831, %v3865
  %v3874 = vmul.f32 %v3833, %v3866
  %v3875 = vmul.f32 %v3835, %v3867
  %v3876 = vpack.c.bf16 %v3869, %v3868
  %3877 = vrot.lane.b32.xlu0 %v3569, 96
  %v3878 = vpop.permute.xlu0 %3877
  %v3881 = vsel %vm376, %v3876, 0
  %3883 = vmatprep.subr.bf16.mxu0 0
  %3884 = vmatpush1.bf16.msra.mxu0 %v3878
  %3885 = vmatprep.subr.bf16.mxu0 0
  %3886 = vmatpush1.bf16.msra.mxu0 0
  %3887 = vmatprep.subr.bf16.mxu0 0
  %3888 = vmatpush1.bf16.msra.mxu0 0
  %3889 = vmatprep.subr.bf16.mxu0 0
  %3890 = vmatpush1.bf16.msra.mxu0 0
  %3891 = vmatprep.subr.bf16.mxu0 0
  %3892 = vmatpush1.bf16.msra.mxu0 0
  %3893 = vmatprep.subr.bf16.mxu0 0
  %3894 = vmatpush1.bf16.msra.mxu0 0
  %3895 = vmatprep.subr.bf16.mxu0 0
  %3896 = vmatpush1.bf16.msra.mxu0 0
  %3897 = vmatprep.subr.bf16.mxu0 0
  %3898 = vmatpush1.bf16.msra.mxu0 0
  %3899 = vmatprep.subr.bf16.mxu0 0
  %3900 = vmatpush1.bf16.msra.mxu0 0
  %3901 = vmatprep.subr.bf16.mxu0 0
  %3902 = vmatpush1.bf16.msra.mxu0 0
  %3903 = vmatprep.subr.bf16.mxu0 0
  %3904 = vmatpush1.bf16.msra.mxu0 0
  %3905 = vmatprep.subr.bf16.mxu0 0
  %3906 = vmatpush1.bf16.msra.mxu0 0
  %3907 = vmatprep.subr.bf16.mxu0 0
  %3908 = vmatpush1.bf16.msra.mxu0 0
  %3909 = vmatprep.subr.bf16.mxu0 0
  %3910 = vmatpush1.bf16.msra.mxu0 0
  %3911 = vmatprep.subr.bf16.mxu0 0
  %3912 = vmatpush1.bf16.msra.mxu0 0
  %3913 = vmatprep.subr.bf16.mxu0 0
  %3914 = vmatpush1.bf16.msra.mxu0 0
  %3915 = vmatprep.mubr.bf16.mxu0 0
  %3916 = vmatmul.mubr.bf16.gmra.mrb[0].mxu0 %v3881
  %v3917 = vpop.f32.mrb[0].mxu0
  %v3918 = vadd.f32 0.0, %v3917
  %v3919 = vpop.f32.mrb[0].mxu0
  %v3920 = vpop.f32.mrb[0].mxu0
  %v3921 = vadd.f32 0.0, %v3920
  %v3922 = vpop.f32.mrb[0].mxu0
  %3923 = vdwg.mxu0
  %v3924 = vpack.c.bf16 %v3871, %v3870
  %3925 = vrot.lane.b32.xlu0 %v3569, 88
  %v3926 = vpop.permute.xlu0 %3925
  %v3929 = vsel %vm376, %v3924, 0
  %3931 = vmatprep.subr.bf16.mxu0 0
  %3932 = vmatpush1.bf16.msra.mxu0 %v3926
  %3933 = vmatprep.subr.bf16.mxu0 0
  %3934 = vmatpush1.bf16.msra.mxu0 0
  %3935 = vmatprep.subr.bf16.mxu0 0
  %3936 = vmatpush1.bf16.msra.mxu0 0
  %3937 = vmatprep.subr.bf16.mxu0 0
  %3938 = vmatpush1.bf16.msra.mxu0 0
  %3939 = vmatprep.subr.bf16.mxu0 0
  %3940 = vmatpush1.bf16.msra.mxu0 0
  %3941 = vmatprep.subr.bf16.mxu0 0
  %3942 = vmatpush1.bf16.msra.mxu0 0
  %3943 = vmatprep.subr.bf16.mxu0 0
  %3944 = vmatpush1.bf16.msra.mxu0 0
  %3945 = vmatprep.subr.bf16.mxu0 0
  %3946 = vmatpush1.bf16.msra.mxu0 0
  %3947 = vmatprep.subr.bf16.mxu0 0
  %3948 = vmatpush1.bf16.msra.mxu0 0
  %3949 = vmatprep.subr.bf16.mxu0 0
  %3950 = vmatpush1.bf16.msra.mxu0 0
  %3951 = vmatprep.subr.bf16.mxu0 0
  %3952 = vmatpush1.bf16.msra.mxu0 0
  %3953 = vmatprep.subr.bf16.mxu0 0
  %3954 = vmatpush1.bf16.msra.mxu0 0
  %3955 = vmatprep.subr.bf16.mxu0 0
  %3956 = vmatpush1.bf16.msra.mxu0 0
  %3957 = vmatprep.subr.bf16.mxu0 0
  %3958 = vmatpush1.bf16.msra.mxu0 0
  %3959 = vmatprep.subr.bf16.mxu0 0
  %3960 = vmatpush1.bf16.msra.mxu0 0
  %3961 = vmatprep.subr.bf16.mxu0 0
  %3962 = vmatpush1.bf16.msra.mxu0 0
  %3963 = vmatprep.mubr.bf16.mxu0 0
  %3964 = vmatmul.mubr.bf16.gmra.mrb[0].mxu0 %v3929
  %v3965 = vpop.f32.mrb[0].mxu0
  %v3966 = vadd.f32 0.0, %v3965
  %v3967 = vpop.f32.mrb[0].mxu0
  %v3968 = vpop.f32.mrb[0].mxu0
  %v3969 = vadd.f32 0.0, %v3968
  %v3970 = vpop.f32.mrb[0].mxu0
  %3971 = vdwg.mxu0
  %v3972 = vpack.c.bf16 %v3873, %v3872
  %3973 = vrot.lane.b32.xlu0 %v3569, 80
  %v3974 = vpop.permute.xlu0 %3973
  %v3977 = vsel %vm376, %v3972, 0
  %3979 = vmatprep.subr.bf16.mxu0 0
  %3980 = vmatpush1.bf16.msra.mxu0 %v3974
  %3981 = vmatprep.subr.bf16.mxu0 0
  %3982 = vmatpush1.bf16.msra.mxu0 0
  %3983 = vmatprep.subr.bf16.mxu0 0
  %3984 = vmatpush1.bf16.msra.mxu0 0
  %3985 = vmatprep.subr.bf16.mxu0 0
  %3986 = vmatpush1.bf16.msra.mxu0 0
  %3987 = vmatprep.subr.bf16.mxu0 0
  %3988 = vmatpush1.bf16.msra.mxu0 0
  %3989 = vmatprep.subr.bf16.mxu0 0
  %3990 = vmatpush1.bf16.msra.mxu0 0
  %3991 = vmatprep.subr.bf16.mxu0 0
  %3992 = vmatpush1.bf16.msra.mxu0 0
  %3993 = vmatprep.subr.bf16.mxu0 0
  %3994 = vmatpush1.bf16.msra.mxu0 0
  %3995 = vmatprep.subr.bf16.mxu0 0
  %3996 = vmatpush1.bf16.msra.mxu0 0
  %3997 = vmatprep.subr.bf16.mxu0 0
  %3998 = vmatpush1.bf16.msra.mxu0 0
  %3999 = vmatprep.subr.bf16.mxu0 0
  %4000 = vmatpush1.bf16.msra.mxu0 0
  %4001 = vmatprep.subr.bf16.mxu0 0
  %4002 = vmatpush1.bf16.msra.mxu0 0
  %4003 = vmatprep.subr.bf16.mxu0 0
  %4004 = vmatpush1.bf16.msra.mxu0 0
  %4005 = vmatprep.subr.bf16.mxu0 0
  %4006 = vmatpush1.bf16.msra.mxu0 0
  %4007 = vmatprep.subr.bf16.mxu0 0
  %4008 = vmatpush1.bf16.msra.mxu0 0
  %4009 = vmatprep.subr.bf16.mxu0 0
  %4010 = vmatpush1.bf16.msra.mxu0 0
  %4011 = vmatprep.mubr.bf16.mxu0 0
  %4012 = vmatmul.mubr.bf16.gmra.mrb[0].mxu0 %v3977
  %v4013 = vpop.f32.mrb[0].mxu0
  %v4014 = vadd.f32 0.0, %v4013
  %v4015 = vpop.f32.mrb[0].mxu0
  %v4016 = vpop.f32.mrb[0].mxu0
  %v4017 = vadd.f32 0.0, %v4016
  %v4018 = vpop.f32.mrb[0].mxu0
  %4019 = vdwg.mxu0
  %v4020 = vpack.c.bf16 %v3875, %v3874
  %4021 = vrot.lane.b32.xlu0 %v3569, 72
  %v4022 = vpop.permute.xlu0 %4021
  %v4025 = vsel %vm376, %v4020, 0
  %4027 = vmatprep.subr.bf16.mxu0 0
  %4028 = vmatpush1.bf16.msra.mxu0 %v4022
  %4029 = vmatprep.subr.bf16.mxu0 0
  %4030 = vmatpush1.bf16.msra.mxu0 0
  %4031 = vmatprep.subr.bf16.mxu0 0
  %4032 = vmatpush1.bf16.msra.mxu0 0
  %4033 = vmatprep.subr.bf16.mxu0 0
  %4034 = vmatpush1.bf16.msra.mxu0 0
  %4035 = vmatprep.subr.bf16.mxu0 0
  %4036 = vmatpush1.bf16.msra.mxu0 0
  %4037 = vmatprep.subr.bf16.mxu0 0
  %4038 = vmatpush1.bf16.msra.mxu0 0
  %4039 = vmatprep.subr.bf16.mxu0 0
  %4040 = vmatpush1.bf16.msra.mxu0 0
  %4041 = vmatprep.subr.bf16.mxu0 0
  %4042 = vmatpush1.bf16.msra.mxu0 0
  %4043 = vmatprep.subr.bf16.mxu0 0
  %4044 = vmatpush1.bf16.msra.mxu0 0
  %4045 = vmatprep.subr.bf16.mxu0 0
  %4046 = vmatpush1.bf16.msra.mxu0 0
  %4047 = vmatprep.subr.bf16.mxu0 0
  %4048 = vmatpush1.bf16.msra.mxu0 0
  %4049 = vmatprep.subr.bf16.mxu0 0
  %4050 = vmatpush1.bf16.msra.mxu0 0
  %4051 = vmatprep.subr.bf16.mxu0 0
  %4052 = vmatpush1.bf16.msra.mxu0 0
  %4053 = vmatprep.subr.bf16.mxu0 0
  %4054 = vmatpush1.bf16.msra.mxu0 0
  %4055 = vmatprep.subr.bf16.mxu0 0
  %4056 = vmatpush1.bf16.msra.mxu0 0
  %4057 = vmatprep.subr.bf16.mxu0 0
  %4058 = vmatpush1.bf16.msra.mxu0 0
  %4059 = vmatprep.mubr.bf16.mxu0 0
  %4060 = vmatmul.mubr.bf16.gmra.mrb[0].mxu0 %v4025
  %v4061 = vpop.f32.mrb[0].mxu0
  %v4062 = vadd.f32 0.0, %v4061
  %v4063 = vpop.f32.mrb[0].mxu0
  %v4064 = vpop.f32.mrb[0].mxu0
  %v4065 = vadd.f32 0.0, %v4064
  %v4066 = vpop.f32.mrb[0].mxu0
  %4067 = vdwg.mxu0
  %4070 = vrot.lane.b32.xlu0 %v3966, 8
  %v4071 = vpop.permute.xlu0 %4070
  %4072 = vrot.lane.b32.xlu0 %v3969, 8
  %v4073 = vpop.permute.xlu0 %4072
  %4078 = vrot.lane.b32.xlu0 %v4014, 16
  %v4079 = vpop.permute.xlu0 %4078
  %4080 = vrot.lane.b32.xlu0 %v4017, 16
  %v4081 = vpop.permute.xlu0 %4080
  %4086 = vrot.lane.b32.xlu0 %v4062, 24
  %v4087 = vpop.permute.xlu0 %4086
  %4088 = vrot.lane.b32.xlu0 %v4065, 24
  %v4089 = vpop.permute.xlu0 %4088
  %v4092 = vsel %vm159, %v3918, %v4071
  %v4093 = vsel %vm159, %v3921, %v4073
  %v4094 = vsel %vm376, %v4092, %v4079
  %v4095 = vsel %vm376, %v4093, %v4081
  %v4096 = vsel %vm685, %v4094, %v4087
  %v4097 = vsel %vm685, %v4095, %v4089
  %v4098 = vpack.c.bf16 %v4097, %v4096
  %v4099 = vlaneseq
  %v4100 = vshrl.u32 %v4099, 7
  %v4101 = vsub.s32 4, %v4100
  %v4102 = vrot.slane %v34, %v4101
  %v4107 = vunpack.c.l.b16 %v3446
  %v4108 = vunpack.c.l.b16 %v3447
  %v4109 = vunpack.c.l.b16 %v3448
  %v4110 = vunpack.c.l.b16 %v3449
  %v4111 = vpack.c.b16 %v4108, %v4107
  %v4112 = vpack.c.b16 %v4110, %v4109
  %v4116 = vsel %vm46, %v4098, 0
  %4118 = vmatprep.subr.bf16.mxu0 0
  %4119 = vmatpush1.bf16.msra.mxu0 %v4111
  %4120 = vmatprep.subr.bf16.mxu0 0
  %4121 = vmatpush1.bf16.msra.mxu0 %v4112
  %4122 = vmatprep.subr.bf16.mxu0 0
  %4123 = vmatpush1.bf16.msra.mxu0 0
  %4124 = vmatprep.subr.bf16.mxu0 0
  %4125 = vmatpush1.bf16.msra.mxu0 0
  %4126 = vmatprep.subr.bf16.mxu0 0
  %4127 = vmatpush1.bf16.msra.mxu0 0
  %4128 = vmatprep.subr.bf16.mxu0 0
  %4129 = vmatpush1.bf16.msra.mxu0 0
  %4130 = vmatprep.subr.bf16.mxu0 0
  %4131 = vmatpush1.bf16.msra.mxu0 0
  %4132 = vmatprep.subr.bf16.mxu0 0
  %4133 = vmatpush1.bf16.msra.mxu0 0
  %4134 = vmatprep.subr.bf16.mxu0 0
  %4135 = vmatpush1.bf16.msra.mxu0 0
  %4136 = vmatprep.subr.bf16.mxu0 0
  %4137 = vmatpush1.bf16.msra.mxu0 0
  %4138 = vmatprep.subr.bf16.mxu0 0
  %4139 = vmatpush1.bf16.msra.mxu0 0
  %4140 = vmatprep.subr.bf16.mxu0 0
  %4141 = vmatpush1.bf16.msra.mxu0 0
  %4142 = vmatprep.subr.bf16.mxu0 0
  %4143 = vmatpush1.bf16.msra.mxu0 0
  %4144 = vmatprep.subr.bf16.mxu0 0
  %4145 = vmatpush1.bf16.msra.mxu0 0
  %4146 = vmatprep.subr.bf16.mxu0 0
  %4147 = vmatpush1.bf16.msra.mxu0 0
  %4148 = vmatprep.subr.bf16.mxu0 0
  %4149 = vmatpush1.bf16.msra.mxu0 0
  %4150 = vmatprep.mubr.bf16.mxu0 0
  %4151 = vmatmul.mubr.bf16.gmra.mrb[0].mxu0 %v4116
  %v4152 = vpop.f32.mrb[0].mxu0
  %v4153 = vadd.f32 %v4102, %v4152
  %v4154 = vpop.f32.mrb[0].mxu0
  %v4155 = vpop.f32.mrb[0].mxu0
  %v4156 = vadd.f32 %v4102, %v4155
  %v4157 = vpop.f32.mrb[0].mxu0
  %4158 = vdwg.mxu0
  %v4159 = vadd.f32 %v4153, %v3433
  %v4160 = vadd.f32 %v4156, %v3434
  %v4161 = vsel %vm46, %v4159, 0.0
  %4162 = vadd.xlane.f32.xlu0 %v4161
  %v4163 = vpop.xlane.xlu0 %4162
  %v4164 = vsel %vm1002, %v4160, 0.0
  %4165 = vadd.xlane.f32.xlu0 %v4164
  %v4166 = vpop.xlane.xlu0 %4165
  %v4167 = vmul.f32 %v4163, %v53
  %v4168 = vmul.f32 %v4166, %v53
  %v4169 = vsub.f32 %v4159, %v4167
  %v4170 = vsub.f32 %v4160, %v4168
  %v4171 = vmul.f32 %v4169, %v4169
  %v4172 = vmul.f32 %v4170, %v4170
  %v4173 = vsel %vm46, %v4171, 0.0
  %4174 = vadd.xlane.f32.xlu0 %v4173
  %v4175 = vpop.xlane.xlu0 %4174
  %v4176 = vsel %vm1002, %v4172, 0.0
  %4177 = vadd.xlane.f32.xlu0 %v4176
  %v4178 = vpop.xlane.xlu0 %4177
  %v4179 = vmul.f32 %v4175, %v53
  %v4180 = vmul.f32 %v4178, %v53
  %v4181 = vadd.f32 %v4179, 1e-12
  %v4182 = vadd.f32 %v4180, 1e-12
  %v4183 = vrsqrt.pop %v4181
  %v4184 = vrsqrt.pop %v4182
  %v4185 = vmul.f32 %v4169, %v4183
  %v4186 = vmul.f32 %v4170, %v4184
  %v4187 = vlaneseq
  %v4188 = vshrl.u32 %v4187, 7
  %v4189 = vsub.s32 5, %v4188
  %v4190 = vrot.slane %v34, %v4189
  %v4191 = vmul.f32 %v4185, %v4190
  %v4192 = vmul.f32 %v4186, %v4190
  %v4193 = vlaneseq
  %v4194 = vshrl.u32 %v4193, 7
  %v4195 = vsub.s32 6, %v4194
  %v4196 = vrot.slane %v34, %v4195
  %v4197 = vadd.f32 %v4191, %v4196
  %v4198 = vadd.f32 %v4192, %v4196
  %s4199 = scalar_lea.vmem %s5, 48
  %v4200 = vld [vmem:[%s4199] sm:$0xf]
  %v4201 = vld [vmem:[%s4199 + $0x4] sm:$0xf]
  %v4202 = vld [vmem:[%s4199 + $0x8] sm:$0xf]
  %v4203 = vld [vmem:[%s4199 + $0xc] sm:$0xf]
  %s4204 = scalar_lea.vmem %s6, 64
  %v4205 = vld [vmem:[%s4204] sm:$0xf]
  %v4206 = vld [vmem:[%s4204 + $0x4] sm:$0xf]
  %v4207 = vld [vmem:[%s4204 + $0x8] sm:$0xf]
  %v4208 = vld [vmem:[%s4204 + $0xc] sm:$0xf]
  %v4209 = vld [vmem:[%s4204 + $0x10] sm:$0xf]
  %v4210 = vld [vmem:[%s4204 + $0x14] sm:$0xf]
  %v4211 = vld [vmem:[%s4204 + $0x18] sm:$0xf]
  %v4212 = vld [vmem:[%s4204 + $0x1c] sm:$0xf]
  %v4213 = vpack.c.bf16 %v4198, %v4197
  %v4214 = vlaneseq
  %v4215 = vshrl.u32 %v4214, 7
  %v4216 = vsub.s32 7, %v4215
  %v4217 = vrot.slane %v34, %v4216
  %v4222 = vunpack.c.l.b16 %v4200
  %v4223 = vunpack.c.l.b16 %v4201
  %v4224 = vunpack.c.l.b16 %v4202
  %v4225 = vunpack.c.l.b16 %v4203
  %v4226 = vpack.c.b16 %v4223, %v4222
  %v4227 = vpack.c.b16 %v4225, %v4224
  %v4231 = vsel %vm46, %v4213, 0
  %4233 = vmatprep.subr.bf16.mxu0 0
  %4234 = vmatpush1.bf16.msra.mxu0 %v4226
  %4235 = vmatprep.subr.bf16.mxu0 0
  %4236 = vmatpush1.bf16.msra.mxu0 %v4227
  %4237 = vmatprep.subr.bf16.mxu0 0
  %4238 = vmatpush1.bf16.msra.mxu0 0
  %4239 = vmatprep.subr.bf16.mxu0 0
  %4240 = vmatpush1.bf16.msra.mxu0 0
  %4241 = vmatprep.subr.bf16.mxu0 0
  %4242 = vmatpush1.bf16.msra.mxu0 0
  %4243 = vmatprep.subr.bf16.mxu0 0
  %4244 = vmatpush1.bf16.msra.mxu0 0
  %4245 = vmatprep.subr.bf16.mxu0 0
  %4246 = vmatpush1.bf16.msra.mxu0 0
  %4247 = vmatprep.subr.bf16.mxu0 0
  %4248 = vmatpush1.bf16.msra.mxu0 0
  %4249 = vmatprep.subr.bf16.mxu0 0
  %4250 = vmatpush1.bf16.msra.mxu0 0
  %4251 = vmatprep.subr.bf16.mxu0 0
  %4252 = vmatpush1.bf16.msra.mxu0 0
  %4253 = vmatprep.subr.bf16.mxu0 0
  %4254 = vmatpush1.bf16.msra.mxu0 0
  %4255 = vmatprep.subr.bf16.mxu0 0
  %4256 = vmatpush1.bf16.msra.mxu0 0
  %4257 = vmatprep.subr.bf16.mxu0 0
  %4258 = vmatpush1.bf16.msra.mxu0 0
  %4259 = vmatprep.subr.bf16.mxu0 0
  %4260 = vmatpush1.bf16.msra.mxu0 0
  %4261 = vmatprep.subr.bf16.mxu0 0
  %4262 = vmatpush1.bf16.msra.mxu0 0
  %4263 = vmatprep.subr.bf16.mxu0 0
  %4264 = vmatpush1.bf16.msra.mxu0 0
  %4265 = vmatprep.mubr.bf16.mxu0 0
  %4266 = vmatmul.mubr.bf16.gmra.mrb[0].mxu0 %v4231
  %v4267 = vpop.f32.mrb[0].mxu0
  %v4268 = vadd.f32 %v4217, %v4267
  %v4269 = vpop.f32.mrb[0].mxu0
  %v4270 = vpop.f32.mrb[0].mxu0
  %v4271 = vadd.f32 %v4217, %v4270
  %v4272 = vpop.f32.mrb[0].mxu0
  %4273 = vdwg.mxu0
  %v4274 = vmul.f32 %v4268, %v4268
  %v4275 = vmul.f32 %v4271, %v4271
  %v4276 = vmul.f32 %v4268, %v4274
  %v4277 = vmul.f32 %v4271, %v4275
  %v4278 = vmul.f32 %v4276, 0.044715
  %v4279 = vmul.f32 %v4277, 0.044715
  %v4280 = vadd.f32 %v4268, %v4278
  %v4281 = vadd.f32 %v4271, %v4279
  %v4282 = vmul.f32 %v4280, 0.7978846
  %v4283 = vmul.f32 %v4281, 0.7978846
  %v4284 = vtanh.pop %v4282
  %v4285 = vtanh.pop %v4283
  %v4286 = vadd.f32 %v4284, 1.0
  %v4287 = vadd.f32 %v4285, 1.0
  %v4288 = vmul.f32 %v4286, 0.5
  %v4289 = vmul.f32 %v4287, 0.5
  %v4290 = vmul.f32 %v4268, %v4288
  %v4291 = vmul.f32 %v4271, %v4289
  %v4292 = vpack.c.bf16 %v4291, %v4290
  %v4293 = vlaneseq
  %v4294 = vshrl.u32 %v4293, 7
  %v4295 = vsub.s32 0, %v4294
  %v4296 = vrot.slane %v35, %v4295
  %v4305 = vunpack.c.l.b16 %v4205
  %v4306 = vunpack.c.l.b16 %v4206
  %v4307 = vunpack.c.l.b16 %v4207
  %v4308 = vunpack.c.l.b16 %v4208
  %v4309 = vunpack.c.l.b16 %v4209
  %v4310 = vunpack.c.l.b16 %v4210
  %v4311 = vunpack.c.l.b16 %v4211
  %v4312 = vunpack.c.l.b16 %v4212
  %v4313 = vpack.c.b16 %v4306, %v4305
  %v4314 = vpack.c.b16 %v4308, %v4307
  %v4315 = vpack.c.b16 %v4310, %v4309
  %v4316 = vpack.c.b16 %v4312, %v4311
  %v4322 = vsel %vm909, %v4292, 0
  %4324 = vmatprep.subr.bf16.mxu0 0
  %4325 = vmatpush1.bf16.msra.mxu0 %v4313
  %4326 = vmatprep.subr.bf16.mxu0 0
  %4327 = vmatpush1.bf16.msra.mxu0 %v4314
  %4328 = vmatprep.subr.bf16.mxu0 0
  %4329 = vmatpush1.bf16.msra.mxu0 %v4315
  %4330 = vmatprep.subr.bf16.mxu0 0
  %4331 = vmatpush1.bf16.msra.mxu0 %v4316
  %4332 = vmatprep.subr.bf16.mxu0 0
  %4333 = vmatpush1.bf16.msra.mxu0 0
  %4334 = vmatprep.subr.bf16.mxu0 0
  %4335 = vmatpush1.bf16.msra.mxu0 0
  %4336 = vmatprep.subr.bf16.mxu0 0
  %4337 = vmatpush1.bf16.msra.mxu0 0
  %4338 = vmatprep.subr.bf16.mxu0 0
  %4339 = vmatpush1.bf16.msra.mxu0 0
  %4340 = vmatprep.subr.bf16.mxu0 0
  %4341 = vmatpush1.bf16.msra.mxu0 0
  %4342 = vmatprep.subr.bf16.mxu0 0
  %4343 = vmatpush1.bf16.msra.mxu0 0
  %4344 = vmatprep.subr.bf16.mxu0 0
  %4345 = vmatpush1.bf16.msra.mxu0 0
  %4346 = vmatprep.subr.bf16.mxu0 0
  %4347 = vmatpush1.bf16.msra.mxu0 0
  %4348 = vmatprep.subr.bf16.mxu0 0
  %4349 = vmatpush1.bf16.msra.mxu0 0
  %4350 = vmatprep.subr.bf16.mxu0 0
  %4351 = vmatpush1.bf16.msra.mxu0 0
  %4352 = vmatprep.subr.bf16.mxu0 0
  %4353 = vmatpush1.bf16.msra.mxu0 0
  %4354 = vmatprep.subr.bf16.mxu0 0
  %4355 = vmatpush1.bf16.msra.mxu0 0
  %4356 = vmatprep.mubr.bf16.mxu0 0
  %4357 = vmatmul.mubr.bf16.gmra.mrb[0].mxu0 %v4322
  %v4358 = vpop.f32.mrb[0].mxu0
  %v4359 = vadd.f32 %v4296, %v4358
  %v4360 = vpop.f32.mrb[0].mxu0
  %v4361 = vpop.f32.mrb[0].mxu0
  %v4362 = vadd.f32 %v4296, %v4361
  %v4363 = vpop.f32.mrb[0].mxu0
  %4364 = vdwg.mxu0
  %v4365 = vadd.f32 %v4359, %v4197
  %v4366 = vadd.f32 %v4362, %v4198
  %v4367 = vsel %vm46, %v4365, 0.0
  %4368 = vadd.xlane.f32.xlu0 %v4367
  %v4369 = vpop.xlane.xlu0 %4368
  %v4370 = vsel %vm1002, %v4366, 0.0
  %4371 = vadd.xlane.f32.xlu0 %v4370
  %v4372 = vpop.xlane.xlu0 %4371
  %v4373 = vmul.f32 %v4369, %v53
  %v4374 = vmul.f32 %v4372, %v53
  %v4375 = vsub.f32 %v4365, %v4373
  %v4376 = vsub.f32 %v4366, %v4374
  %v4377 = vmul.f32 %v4375, %v4375
  %v4378 = vmul.f32 %v4376, %v4376
  %v4379 = vsel %vm46, %v4377, 0.0
  %4380 = vadd.xlane.f32.xlu0 %v4379
  %v4381 = vpop.xlane.xlu0 %4380
  %v4382 = vsel %vm1002, %v4378, 0.0
  %4383 = vadd.xlane.f32.xlu0 %v4382
  %v4384 = vpop.xlane.xlu0 %4383
  %v4385 = vmul.f32 %v4381, %v53
  %v4386 = vmul.f32 %v4384, %v53
  %v4387 = vadd.f32 %v4385, 1e-12
  %v4388 = vadd.f32 %v4386, 1e-12
  %v4389 = vrsqrt.pop %v4387
  %v4390 = vrsqrt.pop %v4388
  %v4391 = vmul.f32 %v4375, %v4389
  %v4392 = vmul.f32 %v4376, %v4390
  %v4393 = vlaneseq
  %v4394 = vshrl.u32 %v4393, 7
  %v4395 = vsub.s32 1, %v4394
  %v4396 = vrot.slane %v35, %v4395
  %v4397 = vmul.f32 %v4391, %v4396
  %v4398 = vmul.f32 %v4392, %v4396
  %v4399 = vlaneseq
  %v4400 = vshrl.u32 %v4399, 7
  %v4401 = vsub.s32 2, %v4400
  %v4402 = vrot.slane %v35, %v4401
  %v4403 = vadd.f32 %v4397, %v4402
  %v4404 = vadd.f32 %v4398, %v4402
  %s4405 = scalar_lea.vmem %s7, 32
  %v4406 = vld [vmem:[%s4405] sm:$0xf]
  %v4407 = vld [vmem:[%s4405 + $0x4] sm:$0xf]
  %v4408 = vld [vmem:[%s4405 + $0x8] sm:$0xf]
  %v4409 = vld [vmem:[%s4405 + $0xc] sm:$0xf]
  %v4410 = vpack.c.bf16 %v4404, %v4403
  %v4415 = vunpack.c.l.b16 %v4406
  %v4416 = vunpack.c.l.b16 %v4407
  %v4417 = vunpack.c.l.b16 %v4408
  %v4418 = vunpack.c.l.b16 %v4409
  %v4419 = vpack.c.b16 %v4416, %v4415
  %v4420 = vpack.c.b16 %v4418, %v4417
  %v4424 = vsel %vm46, %v4410, 0
  %4426 = vmatprep.subr.bf16.mxu0 0
  %4427 = vmatpush1.bf16.msra.mxu0 %v4419
  %4428 = vmatprep.subr.bf16.mxu0 0
  %4429 = vmatpush1.bf16.msra.mxu0 %v4420
  %4430 = vmatprep.subr.bf16.mxu0 0
  %4431 = vmatpush1.bf16.msra.mxu0 0
  %4432 = vmatprep.subr.bf16.mxu0 0
  %4433 = vmatpush1.bf16.msra.mxu0 0
  %4434 = vmatprep.subr.bf16.mxu0 0
  %4435 = vmatpush1.bf16.msra.mxu0 0
  %4436 = vmatprep.subr.bf16.mxu0 0
  %4437 = vmatpush1.bf16.msra.mxu0 0
  %4438 = vmatprep.subr.bf16.mxu0 0
  %4439 = vmatpush1.bf16.msra.mxu0 0
  %4440 = vmatprep.subr.bf16.mxu0 0
  %4441 = vmatpush1.bf16.msra.mxu0 0
  %4442 = vmatprep.subr.bf16.mxu0 0
  %4443 = vmatpush1.bf16.msra.mxu0 0
  %4444 = vmatprep.subr.bf16.mxu0 0
  %4445 = vmatpush1.bf16.msra.mxu0 0
  %4446 = vmatprep.subr.bf16.mxu0 0
  %4447 = vmatpush1.bf16.msra.mxu0 0
  %4448 = vmatprep.subr.bf16.mxu0 0
  %4449 = vmatpush1.bf16.msra.mxu0 0
  %4450 = vmatprep.subr.bf16.mxu0 0
  %4451 = vmatpush1.bf16.msra.mxu0 0
  %4452 = vmatprep.subr.bf16.mxu0 0
  %4453 = vmatpush1.bf16.msra.mxu0 0
  %4454 = vmatprep.subr.bf16.mxu0 0
  %4455 = vmatpush1.bf16.msra.mxu0 0
  %4456 = vmatprep.subr.bf16.mxu0 0
  %4457 = vmatpush1.bf16.msra.mxu0 0
  %4458 = vmatprep.mubr.bf16.mxu0 0
  %4459 = vmatmul.mubr.bf16.gmra.mrb[0].mxu0 %v4424
  %v4460 = vpop.f32.mrb[0].mxu0
  %v4461 = vadd.f32 0.0, %v4460
  %v4462 = vpop.f32.mrb[0].mxu0
  %v4463 = vpop.f32.mrb[0].mxu0
  %v4464 = vadd.f32 0.0, %v4463
  %v4465 = vpop.f32.mrb[0].mxu0
  %4466 = vdwg.mxu0
  %v4467 = vlaneseq
  %v4468 = vshrl.u32 %v4467, 7
  %v4469 = vsub.s32 3, %v4468
  %v4470 = vrot.slane %v35, %v4469
  %v4471 = vadd.f32 %v4461, %v4470
  %v4472 = vadd.f32 %v4464, %v4470
  %v4473 = vld [vmem:[%s7] sm:$0xf]
  %v4474 = vld [vmem:[%s7 + $0x4] sm:$0xf]
  %v4475 = vld [vmem:[%s7 + $0x8] sm:$0xf]
  %v4476 = vld [vmem:[%s7 + $0xc] sm:$0xf]
  %v4477 = vlaneseq
  %v4478 = vshrl.u32 %v4477, 7
  %v4479 = vsub.s32 4, %v4478
  %v4480 = vrot.slane %v35, %v4479
  %v4485 = vunpack.c.l.b16 %v4473
  %v4486 = vunpack.c.l.b16 %v4474
  %v4487 = vunpack.c.l.b16 %v4475
  %v4488 = vunpack.c.l.b16 %v4476
  %v4489 = vpack.c.b16 %v4486, %v4485
  %v4490 = vpack.c.b16 %v4488, %v4487
  %4493 = vmatprep.subr.bf16.mxu0 0
  %4494 = vmatpush1.bf16.msra.mxu0 %v4489
  %4495 = vmatprep.subr.bf16.mxu0 0
  %4496 = vmatpush1.bf16.msra.mxu0 %v4490
  %4497 = vmatprep.subr.bf16.mxu0 0
  %4498 = vmatpush1.bf16.msra.mxu0 0
  %4499 = vmatprep.subr.bf16.mxu0 0
  %4500 = vmatpush1.bf16.msra.mxu0 0
  %4501 = vmatprep.subr.bf16.mxu0 0
  %4502 = vmatpush1.bf16.msra.mxu0 0
  %4503 = vmatprep.subr.bf16.mxu0 0
  %4504 = vmatpush1.bf16.msra.mxu0 0
  %4505 = vmatprep.subr.bf16.mxu0 0
  %4506 = vmatpush1.bf16.msra.mxu0 0
  %4507 = vmatprep.subr.bf16.mxu0 0
  %4508 = vmatpush1.bf16.msra.mxu0 0
  %4509 = vmatprep.subr.bf16.mxu0 0
  %4510 = vmatpush1.bf16.msra.mxu0 0
  %4511 = vmatprep.subr.bf16.mxu0 0
  %4512 = vmatpush1.bf16.msra.mxu0 0
  %4513 = vmatprep.subr.bf16.mxu0 0
  %4514 = vmatpush1.bf16.msra.mxu0 0
  %4515 = vmatprep.subr.bf16.mxu0 0
  %4516 = vmatpush1.bf16.msra.mxu0 0
  %4517 = vmatprep.subr.bf16.mxu0 0
  %4518 = vmatpush1.bf16.msra.mxu0 0
  %4519 = vmatprep.subr.bf16.mxu0 0
  %4520 = vmatpush1.bf16.msra.mxu0 0
  %4521 = vmatprep.subr.bf16.mxu0 0
  %4522 = vmatpush1.bf16.msra.mxu0 0
  %4523 = vmatprep.subr.bf16.mxu0 0
  %4524 = vmatpush1.bf16.msra.mxu0 0
  %4525 = vmatprep.mubr.bf16.mxu0 0
  %4526 = vmatmul.mubr.bf16.gmra.mrb[0].mxu0 %v4424
  %v4527 = vpop.f32.mrb[0].mxu0
  %v4528 = vadd.f32 %v4480, %v4527
  %v4529 = vpop.f32.mrb[0].mxu0
  %v4530 = vpop.f32.mrb[0].mxu0
  %v4531 = vadd.f32 %v4480, %v4530
  %v4532 = vpop.f32.mrb[0].mxu0
  %4533 = vdwg.mxu0
  %s4534 = scalar_lea.vmem %s7, 16
  %v4535 = vld [vmem:[%s4534] sm:$0xf]
  %v4536 = vld [vmem:[%s4534 + $0x4] sm:$0xf]
  %v4537 = vld [vmem:[%s4534 + $0x8] sm:$0xf]
  %v4538 = vld [vmem:[%s4534 + $0xc] sm:$0xf]
  %v4539 = vlaneseq
  %v4540 = vshrl.u32 %v4539, 7
  %v4541 = vsub.s32 5, %v4540
  %v4542 = vrot.slane %v35, %v4541
  %v4547 = vunpack.c.l.b16 %v4535
  %v4548 = vunpack.c.l.b16 %v4536
  %v4549 = vunpack.c.l.b16 %v4537
  %v4550 = vunpack.c.l.b16 %v4538
  %v4551 = vpack.c.b16 %v4548, %v4547
  %v4552 = vpack.c.b16 %v4550, %v4549
  %4555 = vmatprep.subr.bf16.mxu0 0
  %4556 = vmatpush1.bf16.msra.mxu0 %v4551
  %4557 = vmatprep.subr.bf16.mxu0 0
  %4558 = vmatpush1.bf16.msra.mxu0 %v4552
  %4559 = vmatprep.subr.bf16.mxu0 0
  %4560 = vmatpush1.bf16.msra.mxu0 0
  %4561 = vmatprep.subr.bf16.mxu0 0
  %4562 = vmatpush1.bf16.msra.mxu0 0
  %4563 = vmatprep.subr.bf16.mxu0 0
  %4564 = vmatpush1.bf16.msra.mxu0 0
  %4565 = vmatprep.subr.bf16.mxu0 0
  %4566 = vmatpush1.bf16.msra.mxu0 0
  %4567 = vmatprep.subr.bf16.mxu0 0
  %4568 = vmatpush1.bf16.msra.mxu0 0
  %4569 = vmatprep.subr.bf16.mxu0 0
  %4570 = vmatpush1.bf16.msra.mxu0 0
  %4571 = vmatprep.subr.bf16.mxu0 0
  %4572 = vmatpush1.bf16.msra.mxu0 0
  %4573 = vmatprep.subr.bf16.mxu0 0
  %4574 = vmatpush1.bf16.msra.mxu0 0
  %4575 = vmatprep.subr.bf16.mxu0 0
  %4576 = vmatpush1.bf16.msra.mxu0 0
  %4577 = vmatprep.subr.bf16.mxu0 0
  %4578 = vmatpush1.bf16.msra.mxu0 0
  %4579 = vmatprep.subr.bf16.mxu0 0
  %4580 = vmatpush1.bf16.msra.mxu0 0
  %4581 = vmatprep.subr.bf16.mxu0 0
  %4582 = vmatpush1.bf16.msra.mxu0 0
  %4583 = vmatprep.subr.bf16.mxu0 0
  %4584 = vmatpush1.bf16.msra.mxu0 0
  %4585 = vmatprep.subr.bf16.mxu0 0
  %4586 = vmatpush1.bf16.msra.mxu0 0
  %4587 = vmatprep.mubr.bf16.mxu0 0
  %4588 = vmatmul.mubr.bf16.gmra.mrb[0].mxu0 %v1844
  %v4589 = vpop.f32.mrb[0].mxu0
  %v4590 = vadd.f32 %v4542, %v4589
  %v4591 = vpop.f32.mrb[0].mxu0
  %v4592 = vpop.f32.mrb[0].mxu0
  %v4593 = vadd.f32 %v4542, %v4592
  %v4594 = vpop.f32.mrb[0].mxu0
  %4595 = vdwg.mxu0
  %v4597 = vcombine.high %v4528, %v4528
  %v4599 = vunpack.c.l.s4 1966171168
  %v4600 = vunpack.c.0.s8 %v4599
  %v4601 = vlaneseq
  %v4602 = vshrl.u32 %v4601, 7
  %v4603 = vsub.s32 %v4600, %v4602
  %v4604 = vrot.slane %v4528, %v4603
  %v4606 = vunpack.c.l.s4 1966171168
  %v4607 = vunpack.c.0.s8 %v4606
  %v4608 = vlaneseq
  %v4609 = vshrl.u32 %v4608, 7
  %v4610 = vsub.s32 %v4607, %v4609
  %v4611 = vrot.slane %v4597, %v4610
  %v4612 = vcombine.high %v4604, %v4604
  %v4614 = vunpack.c.l.s4 1966171168
  %v4615 = vunpack.c.0.s8 %v4614
  %v4616 = vlaneseq
  %v4617 = vshrl.u32 %v4616, 7
  %v4618 = vsub.s32 %v4615, %v4617
  %v4619 = vrot.slane %v4604, %v4618
  %v4621 = vunpack.c.l.s4 1966171168
  %v4622 = vunpack.c.0.s8 %v4621
  %v4623 = vlaneseq
  %v4624 = vshrl.u32 %v4623, 7
  %v4625 = vsub.s32 %v4622, %v4624
  %v4626 = vrot.slane %v4611, %v4625
  %v4628 = vunpack.c.l.s4 1966171168
  %v4629 = vunpack.c.0.s8 %v4628
  %v4630 = vlaneseq
  %v4631 = vshrl.u32 %v4630, 7
  %v4632 = vsub.s32 %v4629, %v4631
  %v4633 = vrot.slane %v4612, %v4632
  %v4634 = vcombine.high %v4619, %v4619
  %v4635 = vcombine.high %v4633, %v4633
  %v4636 = vlaneseq
  %v4637 = vshrl.u32 %v4636, 7
  %v4638 = vsub.s32 0, %v4637
  %v4639 = vrot.slane %v4619, %v4638
  %v4640 = vlaneseq
  %v4641 = vshrl.u32 %v4640, 7
  %v4642 = vsub.s32 0, %v4641
  %v4643 = vrot.slane %v4633, %v4642
  %v4644 = vlaneseq
  %v4645 = vshrl.u32 %v4644, 7
  %v4646 = vsub.s32 0, %v4645
  %v4647 = vrot.slane %v4634, %v4646
  %v4648 = vlaneseq
  %v4649 = vshrl.u32 %v4648, 7
  %v4650 = vsub.s32 0, %v4649
  %v4651 = vrot.slane %v4635, %v4650
  %v4652 = vlaneseq
  %v4653 = vshrl.u32 %v4652, 7
  %v4654 = vsub.s32 0, %v4653
  %v4655 = vrot.slane %v4626, %v4654
  %v4661 = vadd.f32 %v4639, %v4590
  %v4662 = vadd.f32 %v4643, %v4590
  %v4663 = vadd.f32 %v4647, %v4590
  %v4664 = vadd.f32 %v4651, %v4590
  %v4665 = vadd.f32 %v4655, %v4590
  %v4666 = vtanh.pop %v4661
  %v4667 = vtanh.pop %v4662
  %v4668 = vtanh.pop %v4663
  %v4669 = vtanh.pop %v4664
  %v4670 = vtanh.pop %v4665
  %v4671 = vlaneseq
  %v4672 = vshrl.u32 %v4671, 7
  %v4673 = vsub.s32 6, %v4672
  %v4674 = vrot.slane %v35, %v4673
  %v4675 = vmul.f32 %v4666, %v4674
  %v4676 = vmul.f32 %v4667, %v4674
  %v4677 = vmul.f32 %v4668, %v4674
  %v4678 = vmul.f32 %v4669, %v4674
  %v4679 = vmul.f32 %v4670, %v4674
  %v4680 = vsel %vm46, %v4675, 0.0
  %4681 = vadd.xlane.f32.xlu0 %v4680
  %v4682 = vpop.xlane.xlu0 %4681
  %v4683 = vsel %vm46, %v4676, 0.0
  %4684 = vadd.xlane.f32.xlu0 %v4683
  %v4685 = vpop.xlane.xlu0 %4684
  %v4686 = vsel %vm46, %v4677, 0.0
  %4687 = vadd.xlane.f32.xlu0 %v4686
  %v4688 = vpop.xlane.xlu0 %4687
  %v4689 = vsel %vm46, %v4678, 0.0
  %4690 = vadd.xlane.f32.xlu0 %v4689
  %v4691 = vpop.xlane.xlu0 %4690
  %v4692 = vsel %vm46, %v4679, 0.0
  %4693 = vadd.xlane.f32.xlu0 %v4692
  %v4694 = vpop.xlane.xlu0 %4693
  %4700 = vrot.lane.b32.xlu0 %v4675, 96
  %v4701 = vpop.permute.xlu0 %4700
  %4702 = vrot.lane.b32.xlu0 %v4676, 96
  %v4703 = vpop.permute.xlu0 %4702
  %4704 = vrot.lane.b32.xlu0 %v4677, 96
  %v4705 = vpop.permute.xlu0 %4704
  %4706 = vrot.lane.b32.xlu0 %v4678, 96
  %v4707 = vpop.permute.xlu0 %4706
  %4708 = vrot.lane.b32.xlu0 %v4679, 96
  %v4709 = vpop.permute.xlu0 %4708
  %v4715 = vsel %vm46, %v4701, 0.0
  %4716 = vadd.xlane.f32.xlu0 %v4715
  %v4717 = vpop.xlane.xlu0 %4716
  %v4718 = vsel %vm46, %v4703, 0.0
  %4719 = vadd.xlane.f32.xlu0 %v4718
  %v4720 = vpop.xlane.xlu0 %4719
  %v4721 = vsel %vm46, %v4705, 0.0
  %4722 = vadd.xlane.f32.xlu0 %v4721
  %v4723 = vpop.xlane.xlu0 %4722
  %v4724 = vsel %vm46, %v4707, 0.0
  %4725 = vadd.xlane.f32.xlu0 %v4724
  %v4726 = vpop.xlane.xlu0 %4725
  %v4727 = vsel %vm46, %v4709, 0.0
  %4728 = vadd.xlane.f32.xlu0 %v4727
  %v4729 = vpop.xlane.xlu0 %4728
  %4730 = vrot.lane.b32.xlu0 %v4675, 64
  %v4731 = vpop.permute.xlu0 %4730
  %4732 = vrot.lane.b32.xlu0 %v4676, 64
  %v4733 = vpop.permute.xlu0 %4732
  %4734 = vrot.lane.b32.xlu0 %v4677, 64
  %v4735 = vpop.permute.xlu0 %4734
  %4736 = vrot.lane.b32.xlu0 %v4678, 64
  %v4737 = vpop.permute.xlu0 %4736
  %4738 = vrot.lane.b32.xlu0 %v4679, 64
  %v4739 = vpop.permute.xlu0 %4738
  %v4745 = vsel %vm46, %v4731, 0.0
  %4746 = vadd.xlane.f32.xlu0 %v4745
  %v4747 = vpop.xlane.xlu0 %4746
  %v4748 = vsel %vm46, %v4733, 0.0
  %4749 = vadd.xlane.f32.xlu0 %v4748
  %v4750 = vpop.xlane.xlu0 %4749
  %v4751 = vsel %vm46, %v4735, 0.0
  %4752 = vadd.xlane.f32.xlu0 %v4751
  %v4753 = vpop.xlane.xlu0 %4752
  %v4754 = vsel %vm46, %v4737, 0.0
  %4755 = vadd.xlane.f32.xlu0 %v4754
  %v4756 = vpop.xlane.xlu0 %4755
  %v4757 = vsel %vm46, %v4739, 0.0
  %4758 = vadd.xlane.f32.xlu0 %v4757
  %v4759 = vpop.xlane.xlu0 %4758
  %4760 = vrot.lane.b32.xlu0 %v4675, 32
  %v4761 = vpop.permute.xlu0 %4760
  %4762 = vrot.lane.b32.xlu0 %v4676, 32
  %v4763 = vpop.permute.xlu0 %4762
  %4764 = vrot.lane.b32.xlu0 %v4677, 32
  %v4765 = vpop.permute.xlu0 %4764
  %4766 = vrot.lane.b32.xlu0 %v4678, 32
  %v4767 = vpop.permute.xlu0 %4766
  %4768 = vrot.lane.b32.xlu0 %v4679, 32
  %v4769 = vpop.permute.xlu0 %4768
  %v4775 = vsel %vm46, %v4761, 0.0
  %4776 = vadd.xlane.f32.xlu0 %v4775
  %v4777 = vpop.xlane.xlu0 %4776
  %v4778 = vsel %vm46, %v4763, 0.0
  %4779 = vadd.xlane.f32.xlu0 %v4778
  %v4780 = vpop.xlane.xlu0 %4779
  %v4781 = vsel %vm46, %v4765, 0.0
  %4782 = vadd.xlane.f32.xlu0 %v4781
  %v4783 = vpop.xlane.xlu0 %4782
  %v4784 = vsel %vm46, %v4767, 0.0
  %4785 = vadd.xlane.f32.xlu0 %v4784
  %v4786 = vpop.xlane.xlu0 %4785
  %v4787 = vsel %vm46, %v4769, 0.0
  %4788 = vadd.xlane.f32.xlu0 %v4787
  %v4789 = vpop.xlane.xlu0 %4788
  %v4795 = vlaneseq
  %v4796 = vand.u32 %v4795, 127
  %v4797 = vlaneseq
  %v4798 = vshrl.u32 %v4797, 7
  %v4799 = vsub.s32 %v4796, %v4798
  %v4800 = vrot.slane %v4682, %v4799
  %v4801 = vlaneseq
  %v4802 = vshrl.u32 %v4801, 7
  %v4803 = vsub.s32 %v4796, %v4802
  %v4804 = vrot.slane %v4685, %v4803
  %v4805 = vlaneseq
  %v4806 = vshrl.u32 %v4805, 7
  %v4807 = vsub.s32 %v4796, %v4806
  %v4808 = vrot.slane %v4688, %v4807
  %v4809 = vlaneseq
  %v4810 = vshrl.u32 %v4809, 7
  %v4811 = vsub.s32 %v4796, %v4810
  %v4812 = vrot.slane %v4691, %v4811
  %v4813 = vlaneseq
  %v4814 = vshrl.u32 %v4813, 7
  %v4815 = vsub.s32 %v4796, %v4814
  %v4816 = vrot.slane %v4694, %v4815
  %vm4817 = vcmask 1041409
  %v4818 = vsel %vm4817, %v4804, %v4800
  %vm4819 = vcmask 1042434
  %v4820 = vsel %vm4819, %v4808, %v4818
  %vm4821 = vcmask 1043459
  %v4822 = vsel %vm4821, %v4812, %v4820
  %vm4823 = vcmask 1044484
  %v4824 = vsel %vm4823, %v4816, %v4822
  %v4831 = vadd.s32 %v4796, 4294967288
  %v4832 = vlaneseq
  %v4833 = vshrl.u32 %v4832, 7
  %v4834 = vsub.s32 %v4831, %v4833
  %v4835 = vrot.slane %v4717, %v4834
  %v4836 = vlaneseq
  %v4837 = vshrl.u32 %v4836, 7
  %v4838 = vsub.s32 %v4831, %v4837
  %v4839 = vrot.slane %v4720, %v4838
  %v4840 = vlaneseq
  %v4841 = vshrl.u32 %v4840, 7
  %v4842 = vsub.s32 %v4831, %v4841
  %v4843 = vrot.slane %v4723, %v4842
  %v4844 = vlaneseq
  %v4845 = vshrl.u32 %v4844, 7
  %v4846 = vsub.s32 %v4831, %v4845
  %v4847 = vrot.slane %v4726, %v4846
  %v4848 = vlaneseq
  %v4849 = vshrl.u32 %v4848, 7
  %v4850 = vsub.s32 %v4831, %v4849
  %v4851 = vrot.slane %v4729, %v4850
  %v4852 = vsel %vm4817, %v4839, %v4835
  %v4853 = vsel %vm4819, %v4843, %v4852
  %v4854 = vsel %vm4821, %v4847, %v4853
  %v4855 = vsel %vm4823, %v4851, %v4854
  %v4862 = vadd.s32 %v4796, 4294967280
  %v4863 = vlaneseq
  %v4864 = vshrl.u32 %v4863, 7
  %v4865 = vsub.s32 %v4862, %v4864
  %v4866 = vrot.slane %v4747, %v4865
  %v4867 = vlaneseq
  %v4868 = vshrl.u32 %v4867, 7
  %v4869 = vsub.s32 %v4862, %v4868
  %v4870 = vrot.slane %v4750, %v4869
  %v4871 = vlaneseq
  %v4872 = vshrl.u32 %v4871, 7
  %v4873 = vsub.s32 %v4862, %v4872
  %v4874 = vrot.slane %v4753, %v4873
  %v4875 = vlaneseq
  %v4876 = vshrl.u32 %v4875, 7
  %v4877 = vsub.s32 %v4862, %v4876
  %v4878 = vrot.slane %v4756, %v4877
  %v4879 = vlaneseq
  %v4880 = vshrl.u32 %v4879, 7
  %v4881 = vsub.s32 %v4862, %v4880
  %v4882 = vrot.slane %v4759, %v4881
  %v4883 = vsel %vm4817, %v4870, %v4866
  %v4884 = vsel %vm4819, %v4874, %v4883
  %v4885 = vsel %vm4821, %v4878, %v4884
  %v4886 = vsel %vm4823, %v4882, %v4885
  %v4893 = vadd.s32 %v4796, 4294967272
  %v4894 = vlaneseq
  %v4895 = vshrl.u32 %v4894, 7
  %v4896 = vsub.s32 %v4893, %v4895
  %v4897 = vrot.slane %v4777, %v4896
  %v4898 = vlaneseq
  %v4899 = vshrl.u32 %v4898, 7
  %v4900 = vsub.s32 %v4893, %v4899
  %v4901 = vrot.slane %v4780, %v4900
  %v4902 = vlaneseq
  %v4903 = vshrl.u32 %v4902, 7
  %v4904 = vsub.s32 %v4893, %v4903
  %v4905 = vrot.slane %v4783, %v4904
  %v4906 = vlaneseq
  %v4907 = vshrl.u32 %v4906, 7
  %v4908 = vsub.s32 %v4893, %v4907
  %v4909 = vrot.slane %v4786, %v4908
  %v4910 = vlaneseq
  %v4911 = vshrl.u32 %v4910, 7
  %v4912 = vsub.s32 %v4893, %v4911
  %v4913 = vrot.slane %v4789, %v4912
  %v4914 = vsel %vm4817, %v4901, %v4897
  %v4915 = vsel %vm4819, %v4905, %v4914
  %v4916 = vsel %vm4821, %v4909, %v4915
  %v4917 = vsel %vm4823, %v4913, %v4916
  %v4919 = vsel %vm159, %v4824, %v4855
  %v4920 = vsel %vm376, %v4919, %v4886
  %v4921 = vsel %vm685, %v4920, %v4917
  %v4923 = vcombine.high %v4611, %v4611
  %v4925 = vunpack.c.l.s4 1966171168
  %v4926 = vunpack.c.0.s8 %v4925
  %v4927 = vlaneseq
  %v4928 = vshrl.u32 %v4927, 7
  %v4929 = vsub.s32 %v4926, %v4928
  %v4930 = vrot.slane %v4923, %v4929
  %v4931 = vcombine.high %v4626, %v4626
  %v4932 = vcombine.high %v4930, %v4930
  %v4934 = vunpack.c.l.s4 1966171168
  %v4935 = vunpack.c.0.s8 %v4934
  %v4936 = vlaneseq
  %v4937 = vshrl.u32 %v4936, 7
  %v4938 = vsub.s32 %v4935, %v4937
  %v4939 = vrot.slane %v4531, %v4938
  %v4940 = vcombine.high %v4939, %v4939
  %v4942 = vunpack.c.l.s4 1966171168
  %v4943 = vunpack.c.0.s8 %v4942
  %v4944 = vlaneseq
  %v4945 = vshrl.u32 %v4944, 7
  %v4946 = vsub.s32 %v4943, %v4945
  %v4947 = vrot.slane %v4939, %v4946
  %v4949 = vunpack.c.l.s4 1966171168
  %v4950 = vunpack.c.0.s8 %v4949
  %v4951 = vlaneseq
  %v4952 = vshrl.u32 %v4951, 7
  %v4953 = vsub.s32 %v4950, %v4952
  %v4954 = vrot.slane %v4940, %v4953
  %v4955 = vlaneseq
  %v4956 = vshrl.u32 %v4955, 7
  %v4957 = vsub.s32 0, %v4956
  %v4958 = vrot.slane %v4930, %v4957
  %v4959 = vlaneseq
  %v4960 = vshrl.u32 %v4959, 7
  %v4961 = vsub.s32 0, %v4960
  %v4962 = vrot.slane %v4931, %v4961
  %v4963 = vlaneseq
  %v4964 = vshrl.u32 %v4963, 7
  %v4965 = vsub.s32 0, %v4964
  %v4966 = vrot.slane %v4932, %v4965
  %v4967 = vlaneseq
  %v4968 = vshrl.u32 %v4967, 7
  %v4969 = vsub.s32 0, %v4968
  %v4970 = vrot.slane %v4947, %v4969
  %v4971 = vlaneseq
  %v4972 = vshrl.u32 %v4971, 7
  %v4973 = vsub.s32 0, %v4972
  %v4974 = vrot.slane %v4954, %v4973
  %v4980 = vadd.f32 %v4958, %v4593
  %v4981 = vadd.f32 %v4962, %v4593
  %v4982 = vadd.f32 %v4966, %v4593
  %v4983 = vadd.f32 %v4970, %v4593
  %v4984 = vadd.f32 %v4974, %v4593
  %v4985 = vtanh.pop %v4980
  %v4986 = vtanh.pop %v4981
  %v4987 = vtanh.pop %v4982
  %v4988 = vtanh.pop %v4983
  %v4989 = vtanh.pop %v4984
  %v4990 = vmul.f32 %v4985, %v4674
  %v4991 = vmul.f32 %v4986, %v4674
  %v4992 = vmul.f32 %v4987, %v4674
  %v4993 = vmul.f32 %v4988, %v4674
  %v4994 = vmul.f32 %v4989, %v4674
  %v4995 = vsel %vm46, %v4990, 0.0
  %4996 = vadd.xlane.f32.xlu0 %v4995
  %v4997 = vpop.xlane.xlu0 %4996
  %v4998 = vsel %vm46, %v4991, 0.0
  %4999 = vadd.xlane.f32.xlu0 %v4998
  %v5000 = vpop.xlane.xlu0 %4999
  %v5001 = vsel %vm46, %v4992, 0.0
  %5002 = vadd.xlane.f32.xlu0 %v5001
  %v5003 = vpop.xlane.xlu0 %5002
  %v5004 = vsel %vm46, %v4993, 0.0
  %5005 = vadd.xlane.f32.xlu0 %v5004
  %v5006 = vpop.xlane.xlu0 %5005
  %v5007 = vsel %vm46, %v4994, 0.0
  %5008 = vadd.xlane.f32.xlu0 %v5007
  %v5009 = vpop.xlane.xlu0 %5008
  %5015 = vrot.lane.b32.xlu0 %v4990, 96
  %v5016 = vpop.permute.xlu0 %5015
  %5017 = vrot.lane.b32.xlu0 %v4991, 96
  %v5018 = vpop.permute.xlu0 %5017
  %5019 = vrot.lane.b32.xlu0 %v4992, 96
  %v5020 = vpop.permute.xlu0 %5019
  %5021 = vrot.lane.b32.xlu0 %v4993, 96
  %v5022 = vpop.permute.xlu0 %5021
  %5023 = vrot.lane.b32.xlu0 %v4994, 96
  %v5024 = vpop.permute.xlu0 %5023
  %v5030 = vsel %vm46, %v5016, 0.0
  %5031 = vadd.xlane.f32.xlu0 %v5030
  %v5032 = vpop.xlane.xlu0 %5031
  %v5033 = vsel %vm46, %v5018, 0.0
  %5034 = vadd.xlane.f32.xlu0 %v5033
  %v5035 = vpop.xlane.xlu0 %5034
  %v5036 = vsel %vm46, %v5020, 0.0
  %5037 = vadd.xlane.f32.xlu0 %v5036
  %v5038 = vpop.xlane.xlu0 %5037
  %v5039 = vsel %vm46, %v5022, 0.0
  %5040 = vadd.xlane.f32.xlu0 %v5039
  %v5041 = vpop.xlane.xlu0 %5040
  %v5042 = vsel %vm46, %v5024, 0.0
  %5043 = vadd.xlane.f32.xlu0 %v5042
  %v5044 = vpop.xlane.xlu0 %5043
  %5045 = vrot.lane.b32.xlu0 %v4990, 64
  %v5046 = vpop.permute.xlu0 %5045
  %5047 = vrot.lane.b32.xlu0 %v4991, 64
  %v5048 = vpop.permute.xlu0 %5047
  %5049 = vrot.lane.b32.xlu0 %v4992, 64
  %v5050 = vpop.permute.xlu0 %5049
  %5051 = vrot.lane.b32.xlu0 %v4993, 64
  %v5052 = vpop.permute.xlu0 %5051
  %5053 = vrot.lane.b32.xlu0 %v4994, 64
  %v5054 = vpop.permute.xlu0 %5053
  %v5060 = vsel %vm46, %v5046, 0.0
  %5061 = vadd.xlane.f32.xlu0 %v5060
  %v5062 = vpop.xlane.xlu0 %5061
  %v5063 = vsel %vm46, %v5048, 0.0
  %5064 = vadd.xlane.f32.xlu0 %v5063
  %v5065 = vpop.xlane.xlu0 %5064
  %v5066 = vsel %vm46, %v5050, 0.0
  %5067 = vadd.xlane.f32.xlu0 %v5066
  %v5068 = vpop.xlane.xlu0 %5067
  %v5069 = vsel %vm46, %v5052, 0.0
  %5070 = vadd.xlane.f32.xlu0 %v5069
  %v5071 = vpop.xlane.xlu0 %5070
  %v5072 = vsel %vm46, %v5054, 0.0
  %5073 = vadd.xlane.f32.xlu0 %v5072
  %v5074 = vpop.xlane.xlu0 %5073
  %5075 = vrot.lane.b32.xlu0 %v4990, 32
  %v5076 = vpop.permute.xlu0 %5075
  %5077 = vrot.lane.b32.xlu0 %v4991, 32
  %v5078 = vpop.permute.xlu0 %5077
  %5079 = vrot.lane.b32.xlu0 %v4992, 32
  %v5080 = vpop.permute.xlu0 %5079
  %5081 = vrot.lane.b32.xlu0 %v4993, 32
  %v5082 = vpop.permute.xlu0 %5081
  %5083 = vrot.lane.b32.xlu0 %v4994, 32
  %v5084 = vpop.permute.xlu0 %5083
  %v5090 = vsel %vm46, %v5076, 0.0
  %5091 = vadd.xlane.f32.xlu0 %v5090
  %v5092 = vpop.xlane.xlu0 %5091
  %v5093 = vsel %vm46, %v5078, 0.0
  %5094 = vadd.xlane.f32.xlu0 %v5093
  %v5095 = vpop.xlane.xlu0 %5094
  %v5096 = vsel %vm46, %v5080, 0.0
  %5097 = vadd.xlane.f32.xlu0 %v5096
  %v5098 = vpop.xlane.xlu0 %5097
  %v5099 = vsel %vm46, %v5082, 0.0
  %5100 = vadd.xlane.f32.xlu0 %v5099
  %v5101 = vpop.xlane.xlu0 %5100
  %v5102 = vsel %vm46, %v5084, 0.0
  %5103 = vadd.xlane.f32.xlu0 %v5102
  %v5104 = vpop.xlane.xlu0 %5103
  %v5110 = vlaneseq
  %v5111 = vshrl.u32 %v5110, 7
  %v5112 = vsub.s32 %v4796, %v5111
  %v5113 = vrot.slane %v4997, %v5112
  %v5114 = vlaneseq
  %v5115 = vshrl.u32 %v5114, 7
  %v5116 = vsub.s32 %v4796, %v5115
  %v5117 = vrot.slane %v5000, %v5116
  %v5118 = vlaneseq
  %v5119 = vshrl.u32 %v5118, 7
  %v5120 = vsub.s32 %v4796, %v5119
  %v5121 = vrot.slane %v5003, %v5120
  %v5122 = vlaneseq
  %v5123 = vshrl.u32 %v5122, 7
  %v5124 = vsub.s32 %v4796, %v5123
  %v5125 = vrot.slane %v5006, %v5124
  %v5126 = vlaneseq
  %v5127 = vshrl.u32 %v5126, 7
  %v5128 = vsub.s32 %v4796, %v5127
  %v5129 = vrot.slane %v5009, %v5128
  %v5130 = vsel %vm4817, %v5117, %v5113
  %v5131 = vsel %vm4819, %v5121, %v5130
  %v5132 = vsel %vm4821, %v5125, %v5131
  %v5133 = vsel %vm4823, %v5129, %v5132
  %v5140 = vlaneseq
  %v5141 = vshrl.u32 %v5140, 7
  %v5142 = vsub.s32 %v4831, %v5141
  %v5143 = vrot.slane %v5032, %v5142
  %v5144 = vlaneseq
  %v5145 = vshrl.u32 %v5144, 7
  %v5146 = vsub.s32 %v4831, %v5145
  %v5147 = vrot.slane %v5035, %v5146
  %v5148 = vlaneseq
  %v5149 = vshrl.u32 %v5148, 7
  %v5150 = vsub.s32 %v4831, %v5149
  %v5151 = vrot.slane %v5038, %v5150
  %v5152 = vlaneseq
  %v5153 = vshrl.u32 %v5152, 7
  %v5154 = vsub.s32 %v4831, %v5153
  %v5155 = vrot.slane %v5041, %v5154
  %v5156 = vlaneseq
  %v5157 = vshrl.u32 %v5156, 7
  %v5158 = vsub.s32 %v4831, %v5157
  %v5159 = vrot.slane %v5044, %v5158
  %v5160 = vsel %vm4817, %v5147, %v5143
  %v5161 = vsel %vm4819, %v5151, %v5160
  %v5162 = vsel %vm4821, %v5155, %v5161
  %v5163 = vsel %vm4823, %v5159, %v5162
  %v5170 = vlaneseq
  %v5171 = vshrl.u32 %v5170, 7
  %v5172 = vsub.s32 %v4862, %v5171
  %v5173 = vrot.slane %v5062, %v5172
  %v5174 = vlaneseq
  %v5175 = vshrl.u32 %v5174, 7
  %v5176 = vsub.s32 %v4862, %v5175
  %v5177 = vrot.slane %v5065, %v5176
  %v5178 = vlaneseq
  %v5179 = vshrl.u32 %v5178, 7
  %v5180 = vsub.s32 %v4862, %v5179
  %v5181 = vrot.slane %v5068, %v5180
  %v5182 = vlaneseq
  %v5183 = vshrl.u32 %v5182, 7
  %v5184 = vsub.s32 %v4862, %v5183
  %v5185 = vrot.slane %v5071, %v5184
  %v5186 = vlaneseq
  %v5187 = vshrl.u32 %v5186, 7
  %v5188 = vsub.s32 %v4862, %v5187
  %v5189 = vrot.slane %v5074, %v5188
  %v5190 = vsel %vm4817, %v5177, %v5173
  %v5191 = vsel %vm4819, %v5181, %v5190
  %v5192 = vsel %vm4821, %v5185, %v5191
  %v5193 = vsel %vm4823, %v5189, %v5192
  %v5200 = vlaneseq
  %v5201 = vshrl.u32 %v5200, 7
  %v5202 = vsub.s32 %v4893, %v5201
  %v5203 = vrot.slane %v5092, %v5202
  %v5204 = vlaneseq
  %v5205 = vshrl.u32 %v5204, 7
  %v5206 = vsub.s32 %v4893, %v5205
  %v5207 = vrot.slane %v5095, %v5206
  %v5208 = vlaneseq
  %v5209 = vshrl.u32 %v5208, 7
  %v5210 = vsub.s32 %v4893, %v5209
  %v5211 = vrot.slane %v5098, %v5210
  %v5212 = vlaneseq
  %v5213 = vshrl.u32 %v5212, 7
  %v5214 = vsub.s32 %v4893, %v5213
  %v5215 = vrot.slane %v5101, %v5214
  %v5216 = vlaneseq
  %v5217 = vshrl.u32 %v5216, 7
  %v5218 = vsub.s32 %v4893, %v5217
  %v5219 = vrot.slane %v5104, %v5218
  %v5220 = vsel %vm4817, %v5207, %v5203
  %v5221 = vsel %vm4819, %v5211, %v5220
  %v5222 = vsel %vm4821, %v5215, %v5221
  %v5223 = vsel %vm4823, %v5219, %v5222
  %v5225 = vsel %vm159, %v5133, %v5163
  %v5226 = vsel %vm376, %v5225, %v5193
  %v5227 = vsel %vm685, %v5226, %v5223
  %v5229 = vrot.slane %v5227, 3
  %v5231 = vsel %vm997, %v4921, %v5229
  %vm5232 = vcmp.gt.f32.partialorder %v42, 0.5
  %vm5233 = vcmp.gt.f32.partialorder %v43, 0.5
  %v5234 = vsel %vm5232, %v5231, -10000.0
  %v5235 = vsel %vm5233, %v5229, -10000.0
  %5238 = vrot.lane.b32.xlu0 %v4471, 32
  %v5239 = vpop.permute.xlu0 %5238
  %5240 = vrot.lane.b32.xlu0 %v4472, 32
  %v5241 = vpop.permute.xlu0 %5240
  %v5244 = vsel %vm46, %v5234, %v5239
  %v5245 = vsel %vm46, %v5235, %v5241
  %vm5246 = vcmask 318464
  %5247 = vst.msk [vmem:[%s8] sm:$0xff] %vm5246, %v5244
  %vm5248 = vcmask 312320
  %5249 = vst.msk [vmem:[%s8 + $0x8] sm:$0x3] %vm5248, %v5245
  // Predicated region
  $region34: #{set_pred4re_forward.1} parent=0 // pred_check
    _
  $region35: #{set_pred4re_forward.1} parent=0 // pred_check_branch
    %5251 = sbr.rel (0) target = $region37
  $region36: #{set_pred4re_forward.1} parent=0 // pred_region
    _
  $region37: #{set_pred4re_forward.1} parent=0 // pred_fallthru
    _
  // Predicated region
  $region38: #{set_pred4re_forward.1} parent=0 // pred_check
    _
  $region39: #{set_pred4re_forward.1} parent=0 // pred_check_branch
    %5253 = sbr.rel (0) target = $region41
  $region40: #{set_pred4re_forward.1} parent=0 // pred_region
    _
  $region41: #{set_pred4re_forward.1} parent=0 // pred_fallthru
    _

</llo_original>
